<compile_context>
chip_gen: v7x
topology: tpu7x:2x2x1
jax: 0.10.0
libtpu: 0.0.40
codegen_flags: <defaults>
</compile_context>

<pallas_src>
import functools

import jax
import jax.numpy as jnp
import numpy as np
from jax.experimental import pallas as pl
from jax.experimental.pallas import tpu as pltpu

FEATURE_DIM = 1280   # efficientnet_b0 feature_dim from the module
HIDDEN_DIM = 512     # Conv2d(1280, 512, 1) hidden width


def _round_up(v, m):
    return ((v + m - 1) // m) * m


def spatial_attention_kernel(x_ref, w1_ref, b1_ref, w2_ref, b2_ref, o_ref):
    """One (C, TM) spatial tile of the attention head, NCHW layout.

    x_ref  : (C, TM)  backbone features (C on sublanes, spatial on lanes), bf16
    w1_ref : (CH, C)  conv1x1 #1 weight, bf16 (PyTorch (out, in) layout)
    b1_ref : (CH, 1)  conv1x1 #1 bias, f32
    w2_ref : (CH, 1)  conv1x1 #2 weight (single output channel) as a column, f32
    b2_ref : (1,)     conv1x1 #2 bias (SMEM scalar)
    o_ref  : (C, TM)  attended features (same dtype as input)
    """
    x = x_ref[...]
    # Conv2d(C, CH, 1) + ReLU == bf16 MXU matmul (f32 accum) + bias + relu.
    # No cast needed when the features already arrive in w1's dtype (bf16).
    x_mxu = x if x.dtype == w1_ref.dtype else x.astype(w1_ref.dtype)
    h = jnp.dot(w1_ref[...], x_mxu, preferred_element_type=jnp.float32)  # (CH, TM)
    h = jnp.maximum(h + b1_ref[...], 0.0)
    # Conv2d(CH, 1, 1) + Sigmoid: VPU multiply + cross-sublane reduce (XLU).
    logit = jnp.sum(h * w2_ref[...], axis=0, keepdims=True) + b2_ref[0]
    attn = jax.nn.sigmoid(logit)                                  # (1, TM) f32
    # attended_features = features * attention (broadcast over channels).
    # x (bf16) * attn (f32) promotes to f32; one downcast on the way out.
    o_ref[...] = (x * attn).astype(o_ref.dtype)


@functools.partial(jax.jit, static_argnames=("tm", "donate_features"))
def spatial_feature_extractor_head(features_nchw, w1, b1, w2, b2, *,
                                   tm=512, donate_features=False):
    """Applies the spatial-attention head to backbone features (NCHW in/out).

    No layout transposes: (B, C, H, W) -> (B, C, H*W) merges the two minormost
    dims, which XLA lowers to a bitcast (zero extra HBM traffic).  The output
    dtype matches the feature dtype (run the backbone in bf16 for best perf).
    For very large feature maps on v6e, tm can be raised to 1024.
    """
    B, C, H, W = features_nchw.shape
    CH = w1.shape[0]
    HW = H * W
    assert tm % 128 == 0, "spatial tile must be a multiple of 128 lanes"

    x = features_nchw.reshape(B, C, HW)          # free bitcast reshape

    # Spatial tile selection:
    #   * HW > tm           : `tm` lanes + implicitly masked tail block.
    #   * B == 1, HW > 128  : split into >=2 lane-aligned steps so both v7x
    #                         TensorCores get work and DMA overlaps compute.
    #   * otherwise         : whole image in one (full-extent) tile.
    if HW > tm:
        tm_eff = tm
    elif B == 1 and HW > 128:
        tm_eff = _round_up(pl.cdiv(HW, 2), 128)
    else:
        tm_eff = HW
    grid = (B, pl.cdiv(HW, tm_eff))

    w1_bf = w1.astype(jnp.bfloat16)                       # (CH, C), resident
    b1_col = b1.reshape(CH, 1).astype(jnp.float32)
    w2_col = w2.reshape(CH, 1).astype(jnp.float32)
    b2_vec = b2.reshape(1).astype(jnp.float32)

    elem_bytes = features_nchw.dtype.itemsize
    cost = pl.CostEstimate(
        flops=2 * B * CH * C * HW + 2 * B * CH * HW + B * C * HW,
        transcendentals=B * HW,
        bytes_accessed=2 * B * C * HW * elem_bytes + CH * C * 2 + CH * 8 + 4,
    )

    # Grid-invariant operands: single-buffer (constant index_map -> fetched once).
    resident = dict(pipeline_mode=pl.Buffered(1))

    out = pl.pallas_call(
        spatial_attention_kernel,
        out_shape=jax.ShapeDtypeStruct((B, C, HW), features_nchw.dtype),
        grid=grid,
        in_specs=[
            pl.BlockSpec((None, C, tm_eff), lambda b, s: (b, 0, s)),   # x tile
            pl.BlockSpec((CH, C), lambda b, s: (0, 0), **resident),    # w1
            pl.BlockSpec((CH, 1), lambda b, s: (0, 0), **resident),    # b1
            pl.BlockSpec((CH, 1), lambda b, s: (0, 0), **resident),    # w2
            pl.BlockSpec(memory_space=pltpu.MemorySpace.SMEM),         # b2
        ],
        out_specs=pl.BlockSpec((None, C, tm_eff), lambda b, s: (b, 0, s)),
        compiler_params=pltpu.CompilerParams(
            dimension_semantics=("parallel", "parallel"),
            vmem_limit_bytes=32 * 1024 * 1024),
        cost_estimate=cost,
        # Only safe when the raw backbone features are dead after this op.
        input_output_aliases={0: 0} if donate_features else {},
    )(x, w1_bf, b1_col, w2_col, b2_vec)

    return out.reshape(B, C, H, W)               # free bitcast reshape back


def init_params(key, feature_dim=FEATURE_DIM, hidden_dim=HIDDEN_DIM):
    """Deterministic init matching nn.Conv2d(1280,512,1) / nn.Conv2d(512,1,1)."""
    k1, k2, k3, k4 = jax.random.split(key, 4)
    bound1 = 1.0 / np.sqrt(feature_dim)
    # PyTorch Conv2d weight layout (out, in, 1, 1) -> (out, in).
    w1 = jax.random.uniform(k1, (hidden_dim, feature_dim), jnp.float32,
                            -bound1, bound1)
    b1 = jax.random.uniform(k2, (hidden_dim,), jnp.float32, -bound1, bound1)
    bound2 = 1.0 / np.sqrt(hidden_dim)
    w2 = jax.random.uniform(k3, (hidden_dim,), jnp.float32, -bound2, bound2)
    b2 = jax.random.uniform(k4, (1,), jnp.float32, -bound2, bound2)
    return w1, b1, w2, b2


def reference_head(features_nchw, w1, b1, w2, b2):
    """Pure-JAX f32 reference of the same forward (NCHW semantics)."""
    B, C, H, W = features_nchw.shape
    x = features_nchw.reshape(B, C, H * W)                          # (B,C,HW)
    h = jnp.maximum(jnp.einsum("oc,bcs->bos", w1, x) + b1[None, :, None], 0.0)
    logit = jnp.einsum("o,bos->bs", w2, h)[:, None, :] + b2.reshape(1, 1, 1)
    attn = jax.nn.sigmoid(logit)                                    # (B,1,HW)
    return (x * attn).reshape(B, C, H, W)


if __name__ == "__main__":
    key = jax.random.PRNGKey(0)
    k_feat, k_param = jax.random.split(key)

    # Backbone feature-map stand-in (backbone(x) output), carried in bf16:
    # B=2, C=1280, 16x16 spatial.
    B, H, W = 2, 16, 16
    features = jax.random.normal(
        k_feat, (B, FEATURE_DIM, H, W), jnp.float32).astype(jnp.bfloat16)

    w1, b1, w2, b2 = init_params(k_param)

    out = spatial_feature_extractor_head(features, w1, b1, w2, b2, tm=512)
    out = jax.block_until_ready(out)
    assert out.shape == (B, FEATURE_DIM, H, W)
    assert out.dtype == features.dtype

    # f32 reference evaluated on the same (bf16-rounded) feature values.
    ref = jax.block_until_ready(
        reference_head(features.astype(jnp.float32), w1, b1, w2, b2))
    # bf16 features/weights on the MXU + bf16 output -> relaxed tolerance.
    np.testing.assert_allclose(np.asarray(out, dtype=np.float32),
                               np.asarray(ref), rtol=2e-2, atol=2e-2)

    print("KERNEL_OK")
</pallas_src>

<mosaic_0001>
module attributes {stable_mosaic.version = 11 : i64} {
  func.func @spatial_attention_kernel(%arg0: i32, %arg1: i32, %arg2: memref<1x1280x256xbf16, #tpu.memory_space<vmem>>, %arg3: memref<512x1280xbf16, #tpu.memory_space<vmem>>, %arg4: memref<512x1xf32, #tpu.memory_space<vmem>>, %arg5: memref<512x1xf32, #tpu.memory_space<vmem>>, %arg6: memref<1xf32, #tpu.memory_space<smem>>, %arg7: memref<1x1280x256xbf16, #tpu.memory_space<vmem>>) attributes {dimension_semantics = [#tpu.dimension_semantics<parallel>, #tpu.dimension_semantics<parallel>], iteration_bounds = array<i64: 2, 1>, scalar_prefetch = 0 : i64, scratch_operands = 0 : i64, tpu.core_type = #tpu.core_type<tc>, window_params = [{transform_indices = @transform_0, window_bounds = array<i64: 1, 1280, 256>}, {pipeline_mode = #tpu.pipeline_mode<synchronous>, transform_indices = @transform_1, window_bounds = array<i64: 512, 1280>}, {pipeline_mode = #tpu.pipeline_mode<synchronous>, transform_indices = @transform_2, window_bounds = array<i64: 512, 1>}, {pipeline_mode = #tpu.pipeline_mode<synchronous>, transform_indices = @transform_3, window_bounds = array<i64: 512, 1>}, {transform_indices = @transform_4, window_bounds = array<i64: 1>}, {transform_indices = @transform_5, window_bounds = array<i64: 1, 1280, 256>}]} {
    %c0 = arith.constant 0 : index
    %c0_0 = arith.constant 0 : index
    %c0_1 = arith.constant 0 : index
    %0 = vector.load %arg2[%c0, %c0_0, %c0_1] : memref<1x1280x256xbf16, #tpu.memory_space<vmem>>, vector<1x1280x256xbf16>
    %1 = vector.shape_cast %0 : vector<1x1280x256xbf16> to vector<1280x256xbf16>
    %c0_2 = arith.constant 0 : index
    %c0_3 = arith.constant 0 : index
    %2 = vector.load %arg3[%c0_2, %c0_3] : memref<512x1280xbf16, #tpu.memory_space<vmem>>, vector<512x1280xbf16>
    %cst = arith.constant dense<0.000000e+00> : vector<512x256xf32>
    %3 = tpu.matmul %2, %1, %cst {dimension_numbers = #tpu.dot_dimension_numbers<[1], [0], [0], [1], [0, 0, 1, 1], [], []>} : vector<512x1280xbf16>, vector<1280x256xbf16>, vector<512x256xf32> -> vector<512x256xf32>
    %c0_4 = arith.constant 0 : index
    %c0_5 = arith.constant 0 : index
    %4 = vector.load %arg4[%c0_4, %c0_5] : memref<512x1xf32, #tpu.memory_space<vmem>>, vector<512x1xf32>
    %5 = vector.broadcast %4 : vector<512x1xf32> to vector<512x256xf32>
    %6 = arith.addf %3, %5 : vector<512x256xf32>
    %cst_6 = arith.constant 0.000000e+00 : f32
    %7 = vector.broadcast %cst_6 : f32 to vector<512x256xf32>
    %8 = arith.maximumf %6, %7 : vector<512x256xf32>
    %c0_7 = arith.constant 0 : index
    %c0_8 = arith.constant 0 : index
    %9 = vector.load %arg5[%c0_7, %c0_8] : memref<512x1xf32, #tpu.memory_space<vmem>>, vector<512x1xf32>
    %10 = vector.broadcast %9 : vector<512x1xf32> to vector<512x256xf32>
    %11 = arith.mulf %8, %10 : vector<512x256xf32>
    %cst_9 = arith.constant dense<0.000000e+00> : vector<256xf32>
    %12 = vector.multi_reduction <add>, %11, %cst_9 [0] : vector<512x256xf32> to vector<256xf32>
    %13 = vector.shape_cast %12 : vector<256xf32> to vector<1x256xf32>
    %c0_10 = arith.constant 0 : index
    %14 = memref.load %arg6[%c0_10] : memref<1xf32, #tpu.memory_space<smem>>
    %15 = vector.broadcast %14 : f32 to vector<1x256xf32>
    %16 = arith.addf %13, %15 : vector<1x256xf32>
    %17 = arith.negf %16 : vector<1x256xf32>
    %18 = math.exp %17 : vector<1x256xf32>
    %cst_11 = arith.constant 1.000000e+00 : f32
    %19 = vector.broadcast %cst_11 : f32 to vector<1x256xf32>
    %20 = arith.addf %19, %18 : vector<1x256xf32>
    %21 = arith.divf %19, %20 : vector<1x256xf32>
    %22 = arith.extf %1 : vector<1280x256xbf16> to vector<1280x256xf32>
    %23 = vector.broadcast %21 : vector<1x256xf32> to vector<1280x256xf32>
    %24 = arith.mulf %22, %23 : vector<1280x256xf32>
    %25 = arith.truncf %24 : vector<1280x256xf32> to vector<1280x256xbf16>
    %c0_12 = arith.constant 0 : index
    %c0_13 = arith.constant 0 : index
    %c0_14 = arith.constant 0 : index
    %26 = vector.load %arg7[%c0_12, %c0_13, %c0_14] : memref<1x1280x256xbf16, #tpu.memory_space<vmem>>, vector<1x1280x256xbf16>
    %27 = vector.shape_cast %26 : vector<1x1280x256xbf16> to vector<1280x256xbf16>
    %28 = vector.shape_cast %25 : vector<1280x256xbf16> to vector<1x1280x256xbf16>
    tpu.vector_store %arg7[%c0_12, %c0_13, %c0_14], %28 {strides = array<i32>} : memref<1x1280x256xbf16, #tpu.memory_space<vmem>>, vector<1x1280x256xbf16>,
    return
  }
  func.func @transform_0(%arg0: i32, %arg1: i32) -> (i32, i32, i32) {
    %c0_i32 = arith.constant 0 : i32
    %c0_i32_0 = arith.constant 0 : i32
    return %arg0, %c0_i32, %arg1 : i32, i32, i32
  }
  func.func @transform_1(%arg0: i32, %arg1: i32) -> (i32, i32) {
    %c0_i32 = arith.constant 0 : i32
    %c0_i32_0 = arith.constant 0 : i32
    %c0_i32_1 = arith.constant 0 : i32
    return %c0_i32, %c0_i32_0 : i32, i32
  }
  func.func @transform_2(%arg0: i32, %arg1: i32) -> (i32, i32) {
    %c0_i32 = arith.constant 0 : i32
    %c0_i32_0 = arith.constant 0 : i32
    %c0_i32_1 = arith.constant 0 : i32
    return %c0_i32, %c0_i32_0 : i32, i32
  }
  func.func @transform_3(%arg0: i32, %arg1: i32) -> (i32, i32) {
    %c0_i32 = arith.constant 0 : i32
    %c0_i32_0 = arith.constant 0 : i32
    %c0_i32_1 = arith.constant 0 : i32
    return %c0_i32, %c0_i32_0 : i32, i32
  }
  func.func @transform_4(%arg0: i32, %arg1: i32) -> i32 {
    %c0_i32 = arith.constant 0 : i32
    %c0_i32_0 = arith.constant 0 : i32
    return %c0_i32 : i32
  }
  func.func @transform_5(%arg0: i32, %arg1: i32) -> (i32, i32, i32) {
    %c0_i32 = arith.constant 0 : i32
    %c0_i32_0 = arith.constant 0 : i32
    return %arg0, %c0_i32, %arg1 : i32, i32, i32
  }
}

</mosaic_0001>

<llo_original>
// kernel: spatial_feature_extractor_head.1
$region0: #{spatial_feature_extractor_head.1}
  #allocation0 [shape = 'u32[]', space=smem, size = 0x4, offset = 0x4, fixed_abs, tag = 'smem constant byte address 0x4 - core index']
  #allocation1 [shape = 'u32[144,128]{1,0:T(1,128)}', space=vmem, size = 0x12000, scoped, tag = 'internal scratch']
  #allocation2 [shape = 'f32[1]{0:T(128)S(6)}', space=smem, size = 0x200, scoped, tag = 'scoped memory for spatial_feature_extractor_head.1']
  %s0 = inlined_call_operand.vmem [shape: bf16[2,1280,256], index: 0, kind: input, shape index: {}]
  %s1 = inlined_call_operand.vmem [shape: bf16[512,1280], index: 1, kind: input, shape index: {}]
  %s2 = inlined_call_operand.vmem [shape: f32[512,1], index: 2, kind: input, shape index: {}]
  %s3 = inlined_call_operand.vmem [shape: f32[512,1], index: 3, kind: input, shape index: {}]
  %s4 = inlined_call_operand.<no memory space> [shape: f32[1], index: 4, kind: input, shape index: {}]
  %s5 = inlined_call_operand.vmem [shape: bf16[2,1280,256], index: 5, kind: output, shape index: {}]
  %s6 = sld [smem:[#allocation0]]
  $region53: #{spatial_feature_extractor_head.1} parent=0
    _
  %s8 = ssub.s32 1, %s6
  %s9 = scalar_select 0, %s8, %s6
  %10 = sst [smem:[#allocation2]] %s4
  loop: start=0, step=1, limit=4
  $region2: #{spatial_feature_extractor_head.1} parent=0 // loop_pre_header
    _
  $region3: #{spatial_feature_extractor_head.1} parent=0 // loop_header
    %s12 = sphi 0, %s16
    %p13 = scmp.ge.s32.totalorder %s12, 4
    %s19 = sphi 0, %s31
    %s20 = sphi 0, %s27
    %s21 = sphi 0, %s19
    %s22 = sphi 0, %s20
    %s23 = sphi 0, %s21
    %s24 = sphi 0, %s22
    %s36 = sphi 0, %s38
    %s39 = sphi 0, %s36
    %s40 = sphi 0, %s39
    %s56 = sphi 0, %s40
    %s60 = sphi 0, %s60
    %s62 = sphi 0, %s60
    %s63 = sphi 0, %s62
    %s77 = sphi 0, %s63
    %s81 = sphi 0, %s81
    %s83 = sphi 0, %s81
    %s84 = sphi 0, %s83
    %s98 = sphi 0, %s84
    %s102 = sphi 0, %s102
    %s104 = sphi 0, %s102
    %s105 = sphi 0, %s104
    %s119 = sphi 0, %s105
    %s123 = sphi 0, %s123
    %s125 = sphi 0, %s123
    %s126 = sphi 0, %s125
    %s140 = sphi 0, %s126
    %s148 = sphi 0, %s150
    %s151 = sphi 0, %s148
    %s152 = sphi 0, %s151
    %s168 = sphi 0, %s152
  $region4: #{spatial_feature_extractor_head.1} parent=0 // loop_header_branch
    %15 = sbr.rel (%p13) target = $region8
  $region5: #{spatial_feature_extractor_head.1} parent=0 // loop_body
    %s17 = ssub.s32 %s12, 1
    %s18 = ssub.s32 %s12, 2
    %s25 = sadd.s32 1, %s20
    %p26 = scmp.ge.s32.totalorder %s25, 1
    %s27 = scalar_select %p26, 0, %s25
    %s28 = sadd.s32 1, %s19
    %s29 = scalar_select %p26, %s28, %s19
    %p30 = scmp.ge.s32.totalorder %s29, 2
    %s31 = scalar_select %p30, 0, %s29
    %s32 = ssub.s32 %s19, %s31
    %s33 = ssub.s32 %s20, %s27
    %s34 = sor.u32 %s32, %s33
    %p35 = scmp.eq.s32.totalorder %s34, 0
    %s37 = sadd.s32 %s36, 1
    %s38 = scalar_select %p35, %s36, %s37
    %p41 = pneg %p35
    %p42 = scmp.eq.s32.totalorder %s12, 1
    %p43 = por %p41, %p42
    %p44 = scmp.ne.s32.totalorder %s36, %s39
    %p45 = scmp.eq.s32.totalorder %s12, 0
    %p46 = por %p44, %p45
    %p47 = scmp.ne.s32.totalorder %s36, %s39
    %p48 = scmp.eq.s32.totalorder %s17, 1
    %p49 = por %p47, %p48
    %p50 = scmp.ne.s32.totalorder %s39, %s40
    %p51 = scmp.eq.s32.totalorder %s17, 0
    %p52 = por %p50, %p51
    %p53 = scmp.ne.s32.totalorder %s39, %s40
    %p54 = scmp.eq.s32.totalorder %s18, 1
    %p55 = por %p53, %p54
    %p57 = scmp.ne.s32.totalorder %s40, %s56
    %p58 = scmp.eq.s32.totalorder %s18, 0
    %p59 = por %p57, %p58
    %s61 = sadd.s32 %s60, 1
    %p64 = scmp.eq.s32.totalorder %s12, 1
    %p65 = scmp.ne.s32.totalorder %s60, %s62
    %p66 = scmp.eq.s32.totalorder %s12, 0
    %p67 = por %p65, %p66
    %p68 = scmp.ne.s32.totalorder %s60, %s62
    %p69 = scmp.eq.s32.totalorder %s17, 1
    %p70 = por %p68, %p69
    %p71 = scmp.ne.s32.totalorder %s62, %s63
    %p72 = scmp.eq.s32.totalorder %s17, 0
    %p73 = por %p71, %p72
    %p74 = scmp.ne.s32.totalorder %s62, %s63
    %p75 = scmp.eq.s32.totalorder %s18, 1
    %p76 = por %p74, %p75
    %p78 = scmp.ne.s32.totalorder %s63, %s77
    %p79 = scmp.eq.s32.totalorder %s18, 0
    %p80 = por %p78, %p79
    %s82 = sadd.s32 %s81, 1
    %p85 = scmp.eq.s32.totalorder %s12, 1
    %p86 = scmp.ne.s32.totalorder %s81, %s83
    %p87 = scmp.eq.s32.totalorder %s12, 0
    %p88 = por %p86, %p87
    %p89 = scmp.ne.s32.totalorder %s81, %s83
    %p90 = scmp.eq.s32.totalorder %s17, 1
    %p91 = por %p89, %p90
    %p92 = scmp.ne.s32.totalorder %s83, %s84
    %p93 = scmp.eq.s32.totalorder %s17, 0
    %p94 = por %p92, %p93
    %p95 = scmp.ne.s32.totalorder %s83, %s84
    %p96 = scmp.eq.s32.totalorder %s18, 1
    %p97 = por %p95, %p96
    %p99 = scmp.ne.s32.totalorder %s84, %s98
    %p100 = scmp.eq.s32.totalorder %s18, 0
    %p101 = por %p99, %p100
    %s103 = sadd.s32 %s102, 1
    %p106 = scmp.eq.s32.totalorder %s12, 1
    %p107 = scmp.ne.s32.totalorder %s102, %s104
    %p108 = scmp.eq.s32.totalorder %s12, 0
    %p109 = por %p107, %p108
    %p110 = scmp.ne.s32.totalorder %s102, %s104
    %p111 = scmp.eq.s32.totalorder %s17, 1
    %p112 = por %p110, %p111
    %p113 = scmp.ne.s32.totalorder %s104, %s105
    %p114 = scmp.eq.s32.totalorder %s17, 0
    %p115 = por %p113, %p114
    %p116 = scmp.ne.s32.totalorder %s104, %s105
    %p117 = scmp.eq.s32.totalorder %s18, 1
    %p118 = por %p116, %p117
    %p120 = scmp.ne.s32.totalorder %s105, %s119
    %p121 = scmp.eq.s32.totalorder %s18, 0
    %p122 = por %p120, %p121
    %s124 = sadd.s32 %s123, 1
    %p127 = scmp.eq.s32.totalorder %s12, 1
    %p128 = scmp.ne.s32.totalorder %s123, %s125
    %p129 = scmp.eq.s32.totalorder %s12, 0
    %p130 = por %p128, %p129
    %p131 = scmp.ne.s32.totalorder %s123, %s125
    %p132 = scmp.eq.s32.totalorder %s17, 1
    %p133 = por %p131, %p132
    %p134 = scmp.ne.s32.totalorder %s125, %s126
    %p135 = scmp.eq.s32.totalorder %s17, 0
    %p136 = por %p134, %p135
    %p137 = scmp.ne.s32.totalorder %s125, %s126
    %p138 = scmp.eq.s32.totalorder %s18, 1
    %p139 = por %p137, %p138
    %p141 = scmp.ne.s32.totalorder %s126, %s140
    %p142 = scmp.eq.s32.totalorder %s18, 0
    %p143 = por %p141, %p142
    %s144 = ssub.s32 %s19, %s31
    %s145 = ssub.s32 %s20, %s27
    %s146 = sor.u32 %s144, %s145
    %p147 = scmp.eq.s32.totalorder %s146, 0
    %s149 = sadd.s32 %s148, 1
    %s150 = scalar_select %p147, %s148, %s149
    %p153 = pneg %p147
    %p154 = scmp.eq.s32.totalorder %s12, 1
    %p155 = por %p153, %p154
    %p156 = scmp.ne.s32.totalorder %s148, %s151
    %p157 = scmp.eq.s32.totalorder %s12, 0
    %p158 = por %p156, %p157
    %p159 = scmp.ne.s32.totalorder %s148, %s151
    %p160 = scmp.eq.s32.totalorder %s17, 1
    %p161 = por %p159, %p160
    %p162 = scmp.ne.s32.totalorder %s151, %s152
    %p163 = scmp.eq.s32.totalorder %s17, 0
    %p164 = por %p162, %p163
    %p165 = scmp.ne.s32.totalorder %s151, %s152
    %p166 = scmp.eq.s32.totalorder %s18, 1
    %p167 = por %p165, %p166
    %p169 = scmp.ne.s32.totalorder %s152, %s168
    %p170 = scmp.eq.s32.totalorder %s18, 0
    %p171 = por %p169, %p170
    %p172 = scmp.le.s32.totalorder 1, %s12
    %p173 = scmp.lt.s32.totalorder %s12, 3
    %p174 = pnand %p172, %p173
    %p175 = pneg %p174
    // Predicated region
    $region9: #{spatial_feature_extractor_head.1} parent=5 // pred_check
      _
    $region10: #{spatial_feature_extractor_head.1} parent=5 // pred_check_branch
      %177 = sbr.rel (%p174) target = $region12
    $region11: #{spatial_feature_extractor_head.1} parent=5 // pred_region
      %s178 = ssub.s32 %s12, 1
      // Predicated region
      $region13: #{spatial_feature_extractor_head.1} parent=11 // pred_check
        %p179 = pneg %p73
      $region14: #{spatial_feature_extractor_head.1} parent=11 // pred_check_branch
        %181 = sbr.rel (%p179) target = $region16
      $region15: #{spatial_feature_extractor_head.1} parent=11 // pred_region
        _
      $region16: #{spatial_feature_extractor_head.1} parent=11 // pred_fallthru
        _
      // Predicated region
      $region17: #{spatial_feature_extractor_head.1} parent=11 // pred_check
        %p182 = pneg %p94
      $region18: #{spatial_feature_extractor_head.1} parent=11 // pred_check_branch
        %184 = sbr.rel (%p182) target = $region20
      $region19: #{spatial_feature_extractor_head.1} parent=11 // pred_region
        _
      $region20: #{spatial_feature_extractor_head.1} parent=11 // pred_fallthru
        _
      // Predicated region
      $region21: #{spatial_feature_extractor_head.1} parent=11 // pred_check
        %p185 = pneg %p115
      $region22: #{spatial_feature_extractor_head.1} parent=11 // pred_check_branch
        %187 = sbr.rel (%p185) target = $region24
      $region23: #{spatial_feature_extractor_head.1} parent=11 // pred_region
        _
      $region24: #{spatial_feature_extractor_head.1} parent=11 // pred_fallthru
        _
      // Predicated region
      $region25: #{spatial_feature_extractor_head.1} parent=11 // pred_check
        %p188 = pneg %p136
      $region26: #{spatial_feature_extractor_head.1} parent=11 // pred_check_branch
        %190 = sbr.rel (%p188) target = $region28
      $region27: #{spatial_feature_extractor_head.1} parent=11 // pred_region
        _
      $region28: #{spatial_feature_extractor_head.1} parent=11 // pred_fallthru
        _
    $region12: #{spatial_feature_extractor_head.1} parent=5 // pred_fallthru
      _
    %p191 = scmp.lt.s32.totalorder %s12, 2
    // Predicated region
    $region29: #{spatial_feature_extractor_head.1} parent=5 // pred_check
      %p192 = pneg %p191
    $region30: #{spatial_feature_extractor_head.1} parent=5 // pred_check_branch
      %194 = sbr.rel (%p192) target = $region32
    $region31: #{spatial_feature_extractor_head.1} parent=5 // pred_region
      // Predicated region
      $region33: #{spatial_feature_extractor_head.1} parent=31 // pred_check
        %p195 = pneg %p46
      $region34: #{spatial_feature_extractor_head.1} parent=31 // pred_check_branch
        %197 = sbr.rel (%p195) target = $region36
      $region35: #{spatial_feature_extractor_head.1} parent=31 // pred_region
        %s198 = smul.u32 2, %s20
        %p199 = scmp.lt.s32.totalorder %s19, 1
        %s200 = scalar_select %p199, %s19, 1
        %p201 = scmp.lt.s32.totalorder %s198, 1
        %s202 = scalar_select %p201, %s198, 1
        %s203 = smul.addr %s200, 320
        %s204 = sadd.s32 %s202, %s203
        %s205 = smul.addr %s204, 4
        %s206 = scalar_lea.vmem %s0, %s205
        %s207 = smul.u32 2, %s20
      $region36: #{spatial_feature_extractor_head.1} parent=31 // pred_fallthru
        _
    $region32: #{spatial_feature_extractor_head.1} parent=5 // pred_fallthru
      _
    %p208 = scmp.le.s32.totalorder 1, %s12
    %p209 = scmp.lt.s32.totalorder %s12, 3
    %p210 = pnand %p208, %p209
    %p211 = pneg %p210
    // Predicated region
    $region37: #{spatial_feature_extractor_head.1} parent=5 // pred_check
      _
    $region38: #{spatial_feature_extractor_head.1} parent=5 // pred_check_branch
      %213 = sbr.rel (%p210) target = $region40
    $region39: #{spatial_feature_extractor_head.1} parent=5 // pred_region
      %s214 = ssub.s32 %s12, 1
      %s215 = smul.u32 2, %s22
      %p216 = scmp.lt.s32.totalorder %s21, 1
      %s217 = scalar_select %p216, %s21, 1
      %p218 = scmp.lt.s32.totalorder %s215, 1
      %s219 = scalar_select %p218, %s215, 1
      %s220 = smul.addr %s217, 320
      %s221 = sadd.s32 %s219, %s220
      %s222 = smul.addr %s221, 4
      %s223 = scalar_lea.vmem %s0, %s222
      %p224 = pneg %p52
      %p225 = pneg %p49
      %p226 = pneg %p73
      %p227 = pneg %p70
      %p228 = pneg %p94
      %p229 = pneg %p91
      %p230 = pneg %p115
      %p231 = pneg %p112
      %p232 = pneg %p136
      %p233 = pneg %p133
      %p234 = pneg %p164
      %p235 = pneg %p161
      %s236 = smul.u32 2, %s22
      %p237 = scmp.lt.s32.totalorder %s21, 1
      %s238 = scalar_select %p237, %s21, 1
      %p239 = scmp.lt.s32.totalorder %s236, 1
      %s240 = scalar_select %p239, %s236, 1
      %s241 = smul.addr %s238, 320
      %s242 = sadd.s32 %s240, %s241
      %s243 = smul.addr %s242, 4
      %s244 = scalar_lea.vmem %s5, %s243
      %s245 = smul.u32 2, %s22
      %p246 = scmp.lt.s32.totalorder %s21, 1
      %s247 = scalar_select %p246, %s21, 1
      %p248 = scmp.lt.s32.totalorder %s245, 1
      %s249 = scalar_select %p248, %s245, 1
      %s250 = smul.addr %s247, 320
      %s251 = sadd.s32 %s249, %s250
      %s252 = smul.addr %s251, 4
      %s253 = scalar_lea.vmem %s0, %s252
      %s254 = smul.u32 2, %s22
      %s255 = smul.u32 2, %s22
      %p256 = scmp.lt.s32.totalorder %s21, 1
      %s257 = scalar_select %p256, %s21, 1
      %p258 = scmp.lt.s32.totalorder %s255, 1
      %s259 = scalar_select %p258, %s255, 1
      %s260 = smul.addr %s257, 320
      %s261 = sadd.s32 %s259, %s260
      %s262 = smul.addr %s261, 4
      %s263 = scalar_lea.vmem %s5, %s262
      %s264 = smul.u32 2, %s22
      %v265 = vld [vmem:[%s253] sm:$0xff]
      %v266 = vld [vmem:[%s253 + $0x8] sm:$0xff]
      %v267 = vld [vmem:[%s253 + $0x10] sm:$0xff]
      %v268 = vld [vmem:[%s253 + $0x18] sm:$0xff]
      %v269 = vld [vmem:[%s253 + $0x20] sm:$0xff]
      %v270 = vld [vmem:[%s253 + $0x28] sm:$0xff]
      %v271 = vld [vmem:[%s253 + $0x30] sm:$0xff]
      %v272 = vld [vmem:[%s253 + $0x38] sm:$0xff]
      %v273 = vld [vmem:[%s253 + $0x40] sm:$0xff]
      %v274 = vld [vmem:[%s253 + $0x48] sm:$0xff]
      %v275 = vld [vmem:[%s253 + $0x50] sm:$0xff]
      %v276 = vld [vmem:[%s253 + $0x58] sm:$0xff]
      %v277 = vld [vmem:[%s253 + $0x60] sm:$0xff]
      %v278 = vld [vmem:[%s253 + $0x68] sm:$0xff]
      %v279 = vld [vmem:[%s253 + $0x70] sm:$0xff]
      %v280 = vld [vmem:[%s253 + $0x78] sm:$0xff]
      %v281 = vld [vmem:[%s253 + $0x80] sm:$0xff]
      %v282 = vld [vmem:[%s253 + $0x88] sm:$0xff]
      %v283 = vld [vmem:[%s253 + $0x90] sm:$0xff]
      %v284 = vld [vmem:[%s253 + $0x98] sm:$0xff]
      %v285 = vld [vmem:[%s253 + $0xa0] sm:$0xff]
      %v286 = vld [vmem:[%s253 + $0xa8] sm:$0xff]
      %v287 = vld [vmem:[%s253 + $0xb0] sm:$0xff]
      %v288 = vld [vmem:[%s253 + $0xb8] sm:$0xff]
      %v289 = vld [vmem:[%s253 + $0xc0] sm:$0xff]
      %v290 = vld [vmem:[%s253 + $0xc8] sm:$0xff]
      %v291 = vld [vmem:[%s253 + $0xd0] sm:$0xff]
      %v292 = vld [vmem:[%s253 + $0xd8] sm:$0xff]
      %v293 = vld [vmem:[%s253 + $0xe0] sm:$0xff]
      %v294 = vld [vmem:[%s253 + $0xe8] sm:$0xff]
      %v295 = vld [vmem:[%s253 + $0xf0] sm:$0xff]
      %v296 = vld [vmem:[%s253 + $0xf8] sm:$0xff]
      %v297 = vld [vmem:[%s253 + $0x100] sm:$0xff]
      %v298 = vld [vmem:[%s253 + $0x108] sm:$0xff]
      %v299 = vld [vmem:[%s253 + $0x110] sm:$0xff]
      %v300 = vld [vmem:[%s253 + $0x118] sm:$0xff]
      %v301 = vld [vmem:[%s253 + $0x120] sm:$0xff]
      %v302 = vld [vmem:[%s253 + $0x128] sm:$0xff]
      %v303 = vld [vmem:[%s253 + $0x130] sm:$0xff]
      %v304 = vld [vmem:[%s253 + $0x138] sm:$0xff]
      %v305 = vld [vmem:[%s253 + $0x140] sm:$0xff]
      %v306 = vld [vmem:[%s253 + $0x148] sm:$0xff]
      %v307 = vld [vmem:[%s253 + $0x150] sm:$0xff]
      %v308 = vld [vmem:[%s253 + $0x158] sm:$0xff]
      %v309 = vld [vmem:[%s253 + $0x160] sm:$0xff]
      %v310 = vld [vmem:[%s253 + $0x168] sm:$0xff]
      %v311 = vld [vmem:[%s253 + $0x170] sm:$0xff]
      %v312 = vld [vmem:[%s253 + $0x178] sm:$0xff]
      %v313 = vld [vmem:[%s253 + $0x180] sm:$0xff]
      %v314 = vld [vmem:[%s253 + $0x188] sm:$0xff]
      %v315 = vld [vmem:[%s253 + $0x190] sm:$0xff]
      %v316 = vld [vmem:[%s253 + $0x198] sm:$0xff]
      %v317 = vld [vmem:[%s253 + $0x1a0] sm:$0xff]
      %v318 = vld [vmem:[%s253 + $0x1a8] sm:$0xff]
      %v319 = vld [vmem:[%s253 + $0x1b0] sm:$0xff]
      %v320 = vld [vmem:[%s253 + $0x1b8] sm:$0xff]
      %v321 = vld [vmem:[%s253 + $0x1c0] sm:$0xff]
      %v322 = vld [vmem:[%s253 + $0x1c8] sm:$0xff]
      %v323 = vld [vmem:[%s253 + $0x1d0] sm:$0xff]
      %v324 = vld [vmem:[%s253 + $0x1d8] sm:$0xff]
      %v325 = vld [vmem:[%s253 + $0x1e0] sm:$0xff]
      %v326 = vld [vmem:[%s253 + $0x1e8] sm:$0xff]
      %v327 = vld [vmem:[%s253 + $0x1f0] sm:$0xff]
      %v328 = vld [vmem:[%s253 + $0x1f8] sm:$0xff]
      %v329 = vld [vmem:[%s253 + $0x200] sm:$0xff]
      %v330 = vld [vmem:[%s253 + $0x208] sm:$0xff]
      %v331 = vld [vmem:[%s253 + $0x210] sm:$0xff]
      %v332 = vld [vmem:[%s253 + $0x218] sm:$0xff]
      %v333 = vld [vmem:[%s253 + $0x220] sm:$0xff]
      %v334 = vld [vmem:[%s253 + $0x228] sm:$0xff]
      %v335 = vld [vmem:[%s253 + $0x230] sm:$0xff]
      %v336 = vld [vmem:[%s253 + $0x238] sm:$0xff]
      %v337 = vld [vmem:[%s253 + $0x240] sm:$0xff]
      %v338 = vld [vmem:[%s253 + $0x248] sm:$0xff]
      %v339 = vld [vmem:[%s253 + $0x250] sm:$0xff]
      %v340 = vld [vmem:[%s253 + $0x258] sm:$0xff]
      %v341 = vld [vmem:[%s253 + $0x260] sm:$0xff]
      %v342 = vld [vmem:[%s253 + $0x268] sm:$0xff]
      %v343 = vld [vmem:[%s253 + $0x270] sm:$0xff]
      %v344 = vld [vmem:[%s253 + $0x278] sm:$0xff]
      %v345 = vld [vmem:[%s253 + $0x280] sm:$0xff]
      %v346 = vld [vmem:[%s253 + $0x288] sm:$0xff]
      %v347 = vld [vmem:[%s253 + $0x290] sm:$0xff]
      %v348 = vld [vmem:[%s253 + $0x298] sm:$0xff]
      %v349 = vld [vmem:[%s253 + $0x2a0] sm:$0xff]
      %v350 = vld [vmem:[%s253 + $0x2a8] sm:$0xff]
      %v351 = vld [vmem:[%s253 + $0x2b0] sm:$0xff]
      %v352 = vld [vmem:[%s253 + $0x2b8] sm:$0xff]
      %v353 = vld [vmem:[%s253 + $0x2c0] sm:$0xff]
      %v354 = vld [vmem:[%s253 + $0x2c8] sm:$0xff]
      %v355 = vld [vmem:[%s253 + $0x2d0] sm:$0xff]
      %v356 = vld [vmem:[%s253 + $0x2d8] sm:$0xff]
      %v357 = vld [vmem:[%s253 + $0x2e0] sm:$0xff]
      %v358 = vld [vmem:[%s253 + $0x2e8] sm:$0xff]
      %v359 = vld [vmem:[%s253 + $0x2f0] sm:$0xff]
      %v360 = vld [vmem:[%s253 + $0x2f8] sm:$0xff]
      %v361 = vld [vmem:[%s253 + $0x300] sm:$0xff]
      %v362 = vld [vmem:[%s253 + $0x308] sm:$0xff]
      %v363 = vld [vmem:[%s253 + $0x310] sm:$0xff]
      %v364 = vld [vmem:[%s253 + $0x318] sm:$0xff]
      %v365 = vld [vmem:[%s253 + $0x320] sm:$0xff]
      %v366 = vld [vmem:[%s253 + $0x328] sm:$0xff]
      %v367 = vld [vmem:[%s253 + $0x330] sm:$0xff]
      %v368 = vld [vmem:[%s253 + $0x338] sm:$0xff]
      %v369 = vld [vmem:[%s253 + $0x340] sm:$0xff]
      %v370 = vld [vmem:[%s253 + $0x348] sm:$0xff]
      %v371 = vld [vmem:[%s253 + $0x350] sm:$0xff]
      %v372 = vld [vmem:[%s253 + $0x358] sm:$0xff]
      %v373 = vld [vmem:[%s253 + $0x360] sm:$0xff]
      %v374 = vld [vmem:[%s253 + $0x368] sm:$0xff]
      %v375 = vld [vmem:[%s253 + $0x370] sm:$0xff]
      %v376 = vld [vmem:[%s253 + $0x378] sm:$0xff]
      %v377 = vld [vmem:[%s253 + $0x380] sm:$0xff]
      %v378 = vld [vmem:[%s253 + $0x388] sm:$0xff]
      %v379 = vld [vmem:[%s253 + $0x390] sm:$0xff]
      %v380 = vld [vmem:[%s253 + $0x398] sm:$0xff]
      %v381 = vld [vmem:[%s253 + $0x3a0] sm:$0xff]
      %v382 = vld [vmem:[%s253 + $0x3a8] sm:$0xff]
      %v383 = vld [vmem:[%s253 + $0x3b0] sm:$0xff]
      %v384 = vld [vmem:[%s253 + $0x3b8] sm:$0xff]
      %v385 = vld [vmem:[%s253 + $0x3c0] sm:$0xff]
      %v386 = vld [vmem:[%s253 + $0x3c8] sm:$0xff]
      %v387 = vld [vmem:[%s253 + $0x3d0] sm:$0xff]
      %v388 = vld [vmem:[%s253 + $0x3d8] sm:$0xff]
      %v389 = vld [vmem:[%s253 + $0x3e0] sm:$0xff]
      %v390 = vld [vmem:[%s253 + $0x3e8] sm:$0xff]
      %v391 = vld [vmem:[%s253 + $0x3f0] sm:$0xff]
      %v392 = vld [vmem:[%s253 + $0x3f8] sm:$0xff]
      %v393 = vld [vmem:[%s253 + $0x400] sm:$0xff]
      %v394 = vld [vmem:[%s253 + $0x408] sm:$0xff]
      %v395 = vld [vmem:[%s253 + $0x410] sm:$0xff]
      %v396 = vld [vmem:[%s253 + $0x418] sm:$0xff]
      %v397 = vld [vmem:[%s253 + $0x420] sm:$0xff]
      %v398 = vld [vmem:[%s253 + $0x428] sm:$0xff]
      %v399 = vld [vmem:[%s253 + $0x430] sm:$0xff]
      %v400 = vld [vmem:[%s253 + $0x438] sm:$0xff]
      %v401 = vld [vmem:[%s253 + $0x440] sm:$0xff]
      %v402 = vld [vmem:[%s253 + $0x448] sm:$0xff]
      %v403 = vld [vmem:[%s253 + $0x450] sm:$0xff]
      %v404 = vld [vmem:[%s253 + $0x458] sm:$0xff]
      %v405 = vld [vmem:[%s253 + $0x460] sm:$0xff]
      %v406 = vld [vmem:[%s253 + $0x468] sm:$0xff]
      %v407 = vld [vmem:[%s253 + $0x470] sm:$0xff]
      %v408 = vld [vmem:[%s253 + $0x478] sm:$0xff]
      %v409 = vld [vmem:[%s253 + $0x480] sm:$0xff]
      %v410 = vld [vmem:[%s253 + $0x488] sm:$0xff]
      %v411 = vld [vmem:[%s253 + $0x490] sm:$0xff]
      %v412 = vld [vmem:[%s253 + $0x498] sm:$0xff]
      %v413 = vld [vmem:[%s253 + $0x4a0] sm:$0xff]
      %v414 = vld [vmem:[%s253 + $0x4a8] sm:$0xff]
      %v415 = vld [vmem:[%s253 + $0x4b0] sm:$0xff]
      %v416 = vld [vmem:[%s253 + $0x4b8] sm:$0xff]
      %v417 = vld [vmem:[%s253 + $0x4c0] sm:$0xff]
      %v418 = vld [vmem:[%s253 + $0x4c8] sm:$0xff]
      %v419 = vld [vmem:[%s253 + $0x4d0] sm:$0xff]
      %v420 = vld [vmem:[%s253 + $0x4d8] sm:$0xff]
      %v421 = vld [vmem:[%s253 + $0x4e0] sm:$0xff]
      %v422 = vld [vmem:[%s253 + $0x4e8] sm:$0xff]
      %v423 = vld [vmem:[%s253 + $0x4f0] sm:$0xff]
      %v424 = vld [vmem:[%s253 + $0x4f8] sm:$0xff]
      %v425 = vld [vmem:[%s1] sm:$0xff]
      %v426 = vld [vmem:[%s1 + $0x8] sm:$0xff]
      %v427 = vld [vmem:[%s1 + $0x10] sm:$0xff]
      %v428 = vld [vmem:[%s1 + $0x18] sm:$0xff]
      %v429 = vld [vmem:[%s1 + $0x20] sm:$0xff]
      %v430 = vld [vmem:[%s1 + $0x28] sm:$0xff]
      %v431 = vld [vmem:[%s1 + $0x30] sm:$0xff]
      %v432 = vld [vmem:[%s1 + $0x38] sm:$0xff]
      %v433 = vld [vmem:[%s1 + $0x40] sm:$0xff]
      %v434 = vld [vmem:[%s1 + $0x48] sm:$0xff]
      %v435 = vld [vmem:[%s1 + $0x50] sm:$0xff]
      %v436 = vld [vmem:[%s1 + $0x58] sm:$0xff]
      %v437 = vld [vmem:[%s1 + $0x60] sm:$0xff]
      %v438 = vld [vmem:[%s1 + $0x68] sm:$0xff]
      %v439 = vld [vmem:[%s1 + $0x70] sm:$0xff]
      %v440 = vld [vmem:[%s1 + $0x78] sm:$0xff]
      %v441 = vld [vmem:[%s1 + $0x80] sm:$0xff]
      %v442 = vld [vmem:[%s1 + $0x88] sm:$0xff]
      %v443 = vld [vmem:[%s1 + $0x90] sm:$0xff]
      %v444 = vld [vmem:[%s1 + $0x98] sm:$0xff]
      %v445 = vld [vmem:[%s1 + $0xa0] sm:$0xff]
      %v446 = vld [vmem:[%s1 + $0xa8] sm:$0xff]
      %v447 = vld [vmem:[%s1 + $0xb0] sm:$0xff]
      %v448 = vld [vmem:[%s1 + $0xb8] sm:$0xff]
      %v449 = vld [vmem:[%s1 + $0xc0] sm:$0xff]
      %v450 = vld [vmem:[%s1 + $0xc8] sm:$0xff]
      %v451 = vld [vmem:[%s1 + $0xd0] sm:$0xff]
      %v452 = vld [vmem:[%s1 + $0xd8] sm:$0xff]
      %v453 = vld [vmem:[%s1 + $0xe0] sm:$0xff]
      %v454 = vld [vmem:[%s1 + $0xe8] sm:$0xff]
      %v455 = vld [vmem:[%s1 + $0xf0] sm:$0xff]
      %v456 = vld [vmem:[%s1 + $0xf8] sm:$0xff]
      %v457 = vld [vmem:[%s1 + $0x100] sm:$0xff]
      %v458 = vld [vmem:[%s1 + $0x108] sm:$0xff]
      %v459 = vld [vmem:[%s1 + $0x110] sm:$0xff]
      %v460 = vld [vmem:[%s1 + $0x118] sm:$0xff]
      %v461 = vld [vmem:[%s1 + $0x120] sm:$0xff]
      %v462 = vld [vmem:[%s1 + $0x128] sm:$0xff]
      %v463 = vld [vmem:[%s1 + $0x130] sm:$0xff]
      %v464 = vld [vmem:[%s1 + $0x138] sm:$0xff]
      %v465 = vld [vmem:[%s1 + $0x140] sm:$0xff]
      %v466 = vld [vmem:[%s1 + $0x148] sm:$0xff]
      %v467 = vld [vmem:[%s1 + $0x150] sm:$0xff]
      %v468 = vld [vmem:[%s1 + $0x158] sm:$0xff]
      %v469 = vld [vmem:[%s1 + $0x160] sm:$0xff]
      %v470 = vld [vmem:[%s1 + $0x168] sm:$0xff]
      %v471 = vld [vmem:[%s1 + $0x170] sm:$0xff]
      %v472 = vld [vmem:[%s1 + $0x178] sm:$0xff]
      %v473 = vld [vmem:[%s1 + $0x180] sm:$0xff]
      %v474 = vld [vmem:[%s1 + $0x188] sm:$0xff]
      %v475 = vld [vmem:[%s1 + $0x190] sm:$0xff]
      %v476 = vld [vmem:[%s1 + $0x198] sm:$0xff]
      %v477 = vld [vmem:[%s1 + $0x1a0] sm:$0xff]
      %v478 = vld [vmem:[%s1 + $0x1a8] sm:$0xff]
      %v479 = vld [vmem:[%s1 + $0x1b0] sm:$0xff]
      %v480 = vld [vmem:[%s1 + $0x1b8] sm:$0xff]
      %v481 = vld [vmem:[%s1 + $0x1c0] sm:$0xff]
      %v482 = vld [vmem:[%s1 + $0x1c8] sm:$0xff]
      %v483 = vld [vmem:[%s1 + $0x1d0] sm:$0xff]
      %v484 = vld [vmem:[%s1 + $0x1d8] sm:$0xff]
      %v485 = vld [vmem:[%s1 + $0x1e0] sm:$0xff]
      %v486 = vld [vmem:[%s1 + $0x1e8] sm:$0xff]
      %v487 = vld [vmem:[%s1 + $0x1f0] sm:$0xff]
      %v488 = vld [vmem:[%s1 + $0x1f8] sm:$0xff]
      %v489 = vld [vmem:[%s1 + $0x200] sm:$0xff]
      %v490 = vld [vmem:[%s1 + $0x208] sm:$0xff]
      %v491 = vld [vmem:[%s1 + $0x210] sm:$0xff]
      %v492 = vld [vmem:[%s1 + $0x218] sm:$0xff]
      %v493 = vld [vmem:[%s1 + $0x220] sm:$0xff]
      %v494 = vld [vmem:[%s1 + $0x228] sm:$0xff]
      %v495 = vld [vmem:[%s1 + $0x230] sm:$0xff]
      %v496 = vld [vmem:[%s1 + $0x238] sm:$0xff]
      %v497 = vld [vmem:[%s1 + $0x240] sm:$0xff]
      %v498 = vld [vmem:[%s1 + $0x248] sm:$0xff]
      %v499 = vld [vmem:[%s1 + $0x250] sm:$0xff]
      %v500 = vld [vmem:[%s1 + $0x258] sm:$0xff]
      %v501 = vld [vmem:[%s1 + $0x260] sm:$0xff]
      %v502 = vld [vmem:[%s1 + $0x268] sm:$0xff]
      %v503 = vld [vmem:[%s1 + $0x270] sm:$0xff]
      %v504 = vld [vmem:[%s1 + $0x278] sm:$0xff]
      %v505 = vld [vmem:[%s1 + $0x280] sm:$0xff]
      %v506 = vld [vmem:[%s1 + $0x288] sm:$0xff]
      %v507 = vld [vmem:[%s1 + $0x290] sm:$0xff]
      %v508 = vld [vmem:[%s1 + $0x298] sm:$0xff]
      %v509 = vld [vmem:[%s1 + $0x2a0] sm:$0xff]
      %v510 = vld [vmem:[%s1 + $0x2a8] sm:$0xff]
      %v511 = vld [vmem:[%s1 + $0x2b0] sm:$0xff]
      %v512 = vld [vmem:[%s1 + $0x2b8] sm:$0xff]
      %v513 = vld [vmem:[%s1 + $0x2c0] sm:$0xff]
      %v514 = vld [vmem:[%s1 + $0x2c8] sm:$0xff]
      %v515 = vld [vmem:[%s1 + $0x2d0] sm:$0xff]
      %v516 = vld [vmem:[%s1 + $0x2d8] sm:$0xff]
      %v517 = vld [vmem:[%s1 + $0x2e0] sm:$0xff]
      %v518 = vld [vmem:[%s1 + $0x2e8] sm:$0xff]
      %v519 = vld [vmem:[%s1 + $0x2f0] sm:$0xff]
      %v520 = vld [vmem:[%s1 + $0x2f8] sm:$0xff]
      %v521 = vld [vmem:[%s1 + $0x300] sm:$0xff]
      %v522 = vld [vmem:[%s1 + $0x308] sm:$0xff]
      %v523 = vld [vmem:[%s1 + $0x310] sm:$0xff]
      %v524 = vld [vmem:[%s1 + $0x318] sm:$0xff]
      %v525 = vld [vmem:[%s1 + $0x320] sm:$0xff]
      %v526 = vld [vmem:[%s1 + $0x328] sm:$0xff]
      %v527 = vld [vmem:[%s1 + $0x330] sm:$0xff]
      %v528 = vld [vmem:[%s1 + $0x338] sm:$0xff]
      %v529 = vld [vmem:[%s1 + $0x340] sm:$0xff]
      %v530 = vld [vmem:[%s1 + $0x348] sm:$0xff]
      %v531 = vld [vmem:[%s1 + $0x350] sm:$0xff]
      %v532 = vld [vmem:[%s1 + $0x358] sm:$0xff]
      %v533 = vld [vmem:[%s1 + $0x360] sm:$0xff]
      %v534 = vld [vmem:[%s1 + $0x368] sm:$0xff]
      %v535 = vld [vmem:[%s1 + $0x370] sm:$0xff]
      %v536 = vld [vmem:[%s1 + $0x378] sm:$0xff]
      %v537 = vld [vmem:[%s1 + $0x380] sm:$0xff]
      %v538 = vld [vmem:[%s1 + $0x388] sm:$0xff]
      %v539 = vld [vmem:[%s1 + $0x390] sm:$0xff]
      %v540 = vld [vmem:[%s1 + $0x398] sm:$0xff]
      %v541 = vld [vmem:[%s1 + $0x3a0] sm:$0xff]
      %v542 = vld [vmem:[%s1 + $0x3a8] sm:$0xff]
      %v543 = vld [vmem:[%s1 + $0x3b0] sm:$0xff]
      %v544 = vld [vmem:[%s1 + $0x3b8] sm:$0xff]
      %v545 = vld [vmem:[%s1 + $0x3c0] sm:$0xff]
      %v546 = vld [vmem:[%s1 + $0x3c8] sm:$0xff]
      %v547 = vld [vmem:[%s1 + $0x3d0] sm:$0xff]
      %v548 = vld [vmem:[%s1 + $0x3d8] sm:$0xff]
      %v549 = vld [vmem:[%s1 + $0x3e0] sm:$0xff]
      %v550 = vld [vmem:[%s1 + $0x3e8] sm:$0xff]
      %v551 = vld [vmem:[%s1 + $0x3f0] sm:$0xff]
      %v552 = vld [vmem:[%s1 + $0x3f8] sm:$0xff]
      %v553 = vld [vmem:[%s1 + $0x400] sm:$0xff]
      %v554 = vld [vmem:[%s1 + $0x408] sm:$0xff]
      %v555 = vld [vmem:[%s1 + $0x410] sm:$0xff]
      %v556 = vld [vmem:[%s1 + $0x418] sm:$0xff]
      %v557 = vld [vmem:[%s1 + $0x420] sm:$0xff]
      %v558 = vld [vmem:[%s1 + $0x428] sm:$0xff]
      %v559 = vld [vmem:[%s1 + $0x430] sm:$0xff]
      %v560 = vld [vmem:[%s1 + $0x438] sm:$0xff]
      %v561 = vld [vmem:[%s1 + $0x440] sm:$0xff]
      %v562 = vld [vmem:[%s1 + $0x448] sm:$0xff]
      %v563 = vld [vmem:[%s1 + $0x450] sm:$0xff]
      %v564 = vld [vmem:[%s1 + $0x458] sm:$0xff]
      %v565 = vld [vmem:[%s1 + $0x460] sm:$0xff]
      %v566 = vld [vmem:[%s1 + $0x468] sm:$0xff]
      %v567 = vld [vmem:[%s1 + $0x470] sm:$0xff]
      %v568 = vld [vmem:[%s1 + $0x478] sm:$0xff]
      %v569 = vld [vmem:[%s1 + $0x480] sm:$0xff]
      %v570 = vld [vmem:[%s1 + $0x488] sm:$0xff]
      %v571 = vld [vmem:[%s1 + $0x490] sm:$0xff]
      %v572 = vld [vmem:[%s1 + $0x498] sm:$0xff]
      %v573 = vld [vmem:[%s1 + $0x4a0] sm:$0xff]
      %v574 = vld [vmem:[%s1 + $0x4a8] sm:$0xff]
      %v575 = vld [vmem:[%s1 + $0x4b0] sm:$0xff]
      %v576 = vld [vmem:[%s1 + $0x4b8] sm:$0xff]
      %v577 = vld [vmem:[%s1 + $0x4c0] sm:$0xff]
      %v578 = vld [vmem:[%s1 + $0x4c8] sm:$0xff]
      %v579 = vld [vmem:[%s1 + $0x4d0] sm:$0xff]
      %v580 = vld [vmem:[%s1 + $0x4d8] sm:$0xff]
      %v581 = vld [vmem:[%s1 + $0x4e0] sm:$0xff]
      %v582 = vld [vmem:[%s1 + $0x4e8] sm:$0xff]
      %v583 = vld [vmem:[%s1 + $0x4f0] sm:$0xff]
      %v584 = vld [vmem:[%s1 + $0x4f8] sm:$0xff]
      %v585 = vld [vmem:[%s1 + $0x500] sm:$0xff]
      %v586 = vld [vmem:[%s1 + $0x508] sm:$0xff]
      %v587 = vld [vmem:[%s1 + $0x510] sm:$0xff]
      %v588 = vld [vmem:[%s1 + $0x518] sm:$0xff]
      %v589 = vld [vmem:[%s1 + $0x520] sm:$0xff]
      %v590 = vld [vmem:[%s1 + $0x528] sm:$0xff]
      %v591 = vld [vmem:[%s1 + $0x530] sm:$0xff]
      %v592 = vld [vmem:[%s1 + $0x538] sm:$0xff]
      %v593 = vld [vmem:[%s1 + $0x540] sm:$0xff]
      %v594 = vld [vmem:[%s1 + $0x548] sm:$0xff]
      %v595 = vld [vmem:[%s1 + $0x550] sm:$0xff]
      %v596 = vld [vmem:[%s1 + $0x558] sm:$0xff]
      %v597 = vld [vmem:[%s1 + $0x560] sm:$0xff]
      %v598 = vld [vmem:[%s1 + $0x568] sm:$0xff]
      %v599 = vld [vmem:[%s1 + $0x570] sm:$0xff]
      %v600 = vld [vmem:[%s1 + $0x578] sm:$0xff]
      %v601 = vld [vmem:[%s1 + $0x580] sm:$0xff]
      %v602 = vld [vmem:[%s1 + $0x588] sm:$0xff]
      %v603 = vld [vmem:[%s1 + $0x590] sm:$0xff]
      %v604 = vld [vmem:[%s1 + $0x598] sm:$0xff]
      %v605 = vld [vmem:[%s1 + $0x5a0] sm:$0xff]
      %v606 = vld [vmem:[%s1 + $0x5a8] sm:$0xff]
      %v607 = vld [vmem:[%s1 + $0x5b0] sm:$0xff]
      %v608 = vld [vmem:[%s1 + $0x5b8] sm:$0xff]
      %v609 = vld [vmem:[%s1 + $0x5c0] sm:$0xff]
      %v610 = vld [vmem:[%s1 + $0x5c8] sm:$0xff]
      %v611 = vld [vmem:[%s1 + $0x5d0] sm:$0xff]
      %v612 = vld [vmem:[%s1 + $0x5d8] sm:$0xff]
      %v613 = vld [vmem:[%s1 + $0x5e0] sm:$0xff]
      %v614 = vld [vmem:[%s1 + $0x5e8] sm:$0xff]
      %v615 = vld [vmem:[%s1 + $0x5f0] sm:$0xff]
      %v616 = vld [vmem:[%s1 + $0x5f8] sm:$0xff]
      %v617 = vld [vmem:[%s1 + $0x600] sm:$0xff]
      %v618 = vld [vmem:[%s1 + $0x608] sm:$0xff]
      %v619 = vld [vmem:[%s1 + $0x610] sm:$0xff]
      %v620 = vld [vmem:[%s1 + $0x618] sm:$0xff]
      %v621 = vld [vmem:[%s1 + $0x620] sm:$0xff]
      %v622 = vld [vmem:[%s1 + $0x628] sm:$0xff]
      %v623 = vld [vmem:[%s1 + $0x630] sm:$0xff]
      %v624 = vld [vmem:[%s1 + $0x638] sm:$0xff]
      %v625 = vld [vmem:[%s1 + $0x640] sm:$0xff]
      %v626 = vld [vmem:[%s1 + $0x648] sm:$0xff]
      %v627 = vld [vmem:[%s1 + $0x650] sm:$0xff]
      %v628 = vld [vmem:[%s1 + $0x658] sm:$0xff]
      %v629 = vld [vmem:[%s1 + $0x660] sm:$0xff]
      %v630 = vld [vmem:[%s1 + $0x668] sm:$0xff]
      %v631 = vld [vmem:[%s1 + $0x670] sm:$0xff]
      %v632 = vld [vmem:[%s1 + $0x678] sm:$0xff]
      %v633 = vld [vmem:[%s1 + $0x680] sm:$0xff]
      %v634 = vld [vmem:[%s1 + $0x688] sm:$0xff]
      %v635 = vld [vmem:[%s1 + $0x690] sm:$0xff]
      %v636 = vld [vmem:[%s1 + $0x698] sm:$0xff]
      %v637 = vld [vmem:[%s1 + $0x6a0] sm:$0xff]
      %v638 = vld [vmem:[%s1 + $0x6a8] sm:$0xff]
      %v639 = vld [vmem:[%s1 + $0x6b0] sm:$0xff]
      %v640 = vld [vmem:[%s1 + $0x6b8] sm:$0xff]
      %v641 = vld [vmem:[%s1 + $0x6c0] sm:$0xff]
      %v642 = vld [vmem:[%s1 + $0x6c8] sm:$0xff]
      %v643 = vld [vmem:[%s1 + $0x6d0] sm:$0xff]
      %v644 = vld [vmem:[%s1 + $0x6d8] sm:$0xff]
      %v645 = vld [vmem:[%s1 + $0x6e0] sm:$0xff]
      %v646 = vld [vmem:[%s1 + $0x6e8] sm:$0xff]
      %v647 = vld [vmem:[%s1 + $0x6f0] sm:$0xff]
      %v648 = vld [vmem:[%s1 + $0x6f8] sm:$0xff]
      %v649 = vld [vmem:[%s1 + $0x700] sm:$0xff]
      %v650 = vld [vmem:[%s1 + $0x708] sm:$0xff]
      %v651 = vld [vmem:[%s1 + $0x710] sm:$0xff]
      %v652 = vld [vmem:[%s1 + $0x718] sm:$0xff]
      %v653 = vld [vmem:[%s1 + $0x720] sm:$0xff]
      %v654 = vld [vmem:[%s1 + $0x728] sm:$0xff]
      %v655 = vld [vmem:[%s1 + $0x730] sm:$0xff]
      %v656 = vld [vmem:[%s1 + $0x738] sm:$0xff]
      %v657 = vld [vmem:[%s1 + $0x740] sm:$0xff]
      %v658 = vld [vmem:[%s1 + $0x748] sm:$0xff]
      %v659 = vld [vmem:[%s1 + $0x750] sm:$0xff]
      %v660 = vld [vmem:[%s1 + $0x758] sm:$0xff]
      %v661 = vld [vmem:[%s1 + $0x760] sm:$0xff]
      %v662 = vld [vmem:[%s1 + $0x768] sm:$0xff]
      %v663 = vld [vmem:[%s1 + $0x770] sm:$0xff]
      %v664 = vld [vmem:[%s1 + $0x778] sm:$0xff]
      %v665 = vld [vmem:[%s1 + $0x780] sm:$0xff]
      %v666 = vld [vmem:[%s1 + $0x788] sm:$0xff]
      %v667 = vld [vmem:[%s1 + $0x790] sm:$0xff]
      %v668 = vld [vmem:[%s1 + $0x798] sm:$0xff]
      %v669 = vld [vmem:[%s1 + $0x7a0] sm:$0xff]
      %v670 = vld [vmem:[%s1 + $0x7a8] sm:$0xff]
      %v671 = vld [vmem:[%s1 + $0x7b0] sm:$0xff]
      %v672 = vld [vmem:[%s1 + $0x7b8] sm:$0xff]
      %v673 = vld [vmem:[%s1 + $0x7c0] sm:$0xff]
      %v674 = vld [vmem:[%s1 + $0x7c8] sm:$0xff]
      %v675 = vld [vmem:[%s1 + $0x7d0] sm:$0xff]
      %v676 = vld [vmem:[%s1 + $0x7d8] sm:$0xff]
      %v677 = vld [vmem:[%s1 + $0x7e0] sm:$0xff]
      %v678 = vld [vmem:[%s1 + $0x7e8] sm:$0xff]
      %v679 = vld [vmem:[%s1 + $0x7f0] sm:$0xff]
      %v680 = vld [vmem:[%s1 + $0x7f8] sm:$0xff]
      %v681 = vld [vmem:[%s1 + $0x800] sm:$0xff]
      %v682 = vld [vmem:[%s1 + $0x808] sm:$0xff]
      %v683 = vld [vmem:[%s1 + $0x810] sm:$0xff]
      %v684 = vld [vmem:[%s1 + $0x818] sm:$0xff]
      %v685 = vld [vmem:[%s1 + $0x820] sm:$0xff]
      %v686 = vld [vmem:[%s1 + $0x828] sm:$0xff]
      %v687 = vld [vmem:[%s1 + $0x830] sm:$0xff]
      %v688 = vld [vmem:[%s1 + $0x838] sm:$0xff]
      %v689 = vld [vmem:[%s1 + $0x840] sm:$0xff]
      %v690 = vld [vmem:[%s1 + $0x848] sm:$0xff]
      %v691 = vld [vmem:[%s1 + $0x850] sm:$0xff]
      %v692 = vld [vmem:[%s1 + $0x858] sm:$0xff]
      %v693 = vld [vmem:[%s1 + $0x860] sm:$0xff]
      %v694 = vld [vmem:[%s1 + $0x868] sm:$0xff]
      %v695 = vld [vmem:[%s1 + $0x870] sm:$0xff]
      %v696 = vld [vmem:[%s1 + $0x878] sm:$0xff]
      %v697 = vld [vmem:[%s1 + $0x880] sm:$0xff]
      %v698 = vld [vmem:[%s1 + $0x888] sm:$0xff]
      %v699 = vld [vmem:[%s1 + $0x890] sm:$0xff]
      %v700 = vld [vmem:[%s1 + $0x898] sm:$0xff]
      %v701 = vld [vmem:[%s1 + $0x8a0] sm:$0xff]
      %v702 = vld [vmem:[%s1 + $0x8a8] sm:$0xff]
      %v703 = vld [vmem:[%s1 + $0x8b0] sm:$0xff]
      %v704 = vld [vmem:[%s1 + $0x8b8] sm:$0xff]
      %v705 = vld [vmem:[%s1 + $0x8c0] sm:$0xff]
      %v706 = vld [vmem:[%s1 + $0x8c8] sm:$0xff]
      %v707 = vld [vmem:[%s1 + $0x8d0] sm:$0xff]
      %v708 = vld [vmem:[%s1 + $0x8d8] sm:$0xff]
      %v709 = vld [vmem:[%s1 + $0x8e0] sm:$0xff]
      %v710 = vld [vmem:[%s1 + $0x8e8] sm:$0xff]
      %v711 = vld [vmem:[%s1 + $0x8f0] sm:$0xff]
      %v712 = vld [vmem:[%s1 + $0x8f8] sm:$0xff]
      %v713 = vld [vmem:[%s1 + $0x900] sm:$0xff]
      %v714 = vld [vmem:[%s1 + $0x908] sm:$0xff]
      %v715 = vld [vmem:[%s1 + $0x910] sm:$0xff]
      %v716 = vld [vmem:[%s1 + $0x918] sm:$0xff]
      %v717 = vld [vmem:[%s1 + $0x920] sm:$0xff]
      %v718 = vld [vmem:[%s1 + $0x928] sm:$0xff]
      %v719 = vld [vmem:[%s1 + $0x930] sm:$0xff]
      %v720 = vld [vmem:[%s1 + $0x938] sm:$0xff]
      %v721 = vld [vmem:[%s1 + $0x940] sm:$0xff]
      %v722 = vld [vmem:[%s1 + $0x948] sm:$0xff]
      %v723 = vld [vmem:[%s1 + $0x950] sm:$0xff]
      %v724 = vld [vmem:[%s1 + $0x958] sm:$0xff]
      %v725 = vld [vmem:[%s1 + $0x960] sm:$0xff]
      %v726 = vld [vmem:[%s1 + $0x968] sm:$0xff]
      %v727 = vld [vmem:[%s1 + $0x970] sm:$0xff]
      %v728 = vld [vmem:[%s1 + $0x978] sm:$0xff]
      %v729 = vld [vmem:[%s1 + $0x980] sm:$0xff]
      %v730 = vld [vmem:[%s1 + $0x988] sm:$0xff]
      %v731 = vld [vmem:[%s1 + $0x990] sm:$0xff]
      %v732 = vld [vmem:[%s1 + $0x998] sm:$0xff]
      %v733 = vld [vmem:[%s1 + $0x9a0] sm:$0xff]
      %v734 = vld [vmem:[%s1 + $0x9a8] sm:$0xff]
      %v735 = vld [vmem:[%s1 + $0x9b0] sm:$0xff]
      %v736 = vld [vmem:[%s1 + $0x9b8] sm:$0xff]
      %v737 = vld [vmem:[%s1 + $0x9c0] sm:$0xff]
      %v738 = vld [vmem:[%s1 + $0x9c8] sm:$0xff]
      %v739 = vld [vmem:[%s1 + $0x9d0] sm:$0xff]
      %v740 = vld [vmem:[%s1 + $0x9d8] sm:$0xff]
      %v741 = vld [vmem:[%s1 + $0x9e0] sm:$0xff]
      %v742 = vld [vmem:[%s1 + $0x9e8] sm:$0xff]
      %v743 = vld [vmem:[%s1 + $0x9f0] sm:$0xff]
      %v744 = vld [vmem:[%s1 + $0x9f8] sm:$0xff]
      %v745 = vld [vmem:[%s2] sm:$0xff]
      %v746 = vld [vmem:[%s2 + $0x8] sm:$0xff]
      %v747 = vld [vmem:[%s2 + $0x10] sm:$0xff]
      %v748 = vld [vmem:[%s2 + $0x18] sm:$0xff]
      %v749 = vld [vmem:[%s2 + $0x20] sm:$0xff]
      %v750 = vld [vmem:[%s2 + $0x28] sm:$0xff]
      %v751 = vld [vmem:[%s2 + $0x30] sm:$0xff]
      %v752 = vld [vmem:[%s2 + $0x38] sm:$0xff]
      %v753 = vld [vmem:[%s2 + $0x40] sm:$0xff]
      %v754 = vld [vmem:[%s2 + $0x48] sm:$0xff]
      %v755 = vld [vmem:[%s2 + $0x50] sm:$0xff]
      %v756 = vld [vmem:[%s2 + $0x58] sm:$0xff]
      %v757 = vld [vmem:[%s2 + $0x60] sm:$0xff]
      %v758 = vld [vmem:[%s2 + $0x68] sm:$0xff]
      %v759 = vld [vmem:[%s2 + $0x70] sm:$0xff]
      %v760 = vld [vmem:[%s2 + $0x78] sm:$0xff]
      %v761 = vld [vmem:[%s2 + $0x80] sm:$0xff]
      %v762 = vld [vmem:[%s2 + $0x88] sm:$0xff]
      %v763 = vld [vmem:[%s2 + $0x90] sm:$0xff]
      %v764 = vld [vmem:[%s2 + $0x98] sm:$0xff]
      %v765 = vld [vmem:[%s2 + $0xa0] sm:$0xff]
      %v766 = vld [vmem:[%s2 + $0xa8] sm:$0xff]
      %v767 = vld [vmem:[%s2 + $0xb0] sm:$0xff]
      %v768 = vld [vmem:[%s2 + $0xb8] sm:$0xff]
      %v769 = vld [vmem:[%s2 + $0xc0] sm:$0xff]
      %v770 = vld [vmem:[%s2 + $0xc8] sm:$0xff]
      %v771 = vld [vmem:[%s2 + $0xd0] sm:$0xff]
      %v772 = vld [vmem:[%s2 + $0xd8] sm:$0xff]
      %v773 = vld [vmem:[%s2 + $0xe0] sm:$0xff]
      %v774 = vld [vmem:[%s2 + $0xe8] sm:$0xff]
      %v775 = vld [vmem:[%s2 + $0xf0] sm:$0xff]
      %v776 = vld [vmem:[%s2 + $0xf8] sm:$0xff]
      %v777 = vld [vmem:[%s2 + $0x100] sm:$0xff]
      %v778 = vld [vmem:[%s2 + $0x108] sm:$0xff]
      %v779 = vld [vmem:[%s2 + $0x110] sm:$0xff]
      %v780 = vld [vmem:[%s2 + $0x118] sm:$0xff]
      %v781 = vld [vmem:[%s2 + $0x120] sm:$0xff]
      %v782 = vld [vmem:[%s2 + $0x128] sm:$0xff]
      %v783 = vld [vmem:[%s2 + $0x130] sm:$0xff]
      %v784 = vld [vmem:[%s2 + $0x138] sm:$0xff]
      %v785 = vld [vmem:[%s2 + $0x140] sm:$0xff]
      %v786 = vld [vmem:[%s2 + $0x148] sm:$0xff]
      %v787 = vld [vmem:[%s2 + $0x150] sm:$0xff]
      %v788 = vld [vmem:[%s2 + $0x158] sm:$0xff]
      %v789 = vld [vmem:[%s2 + $0x160] sm:$0xff]
      %v790 = vld [vmem:[%s2 + $0x168] sm:$0xff]
      %v791 = vld [vmem:[%s2 + $0x170] sm:$0xff]
      %v792 = vld [vmem:[%s2 + $0x178] sm:$0xff]
      %v793 = vld [vmem:[%s2 + $0x180] sm:$0xff]
      %v794 = vld [vmem:[%s2 + $0x188] sm:$0xff]
      %v795 = vld [vmem:[%s2 + $0x190] sm:$0xff]
      %v796 = vld [vmem:[%s2 + $0x198] sm:$0xff]
      %v797 = vld [vmem:[%s2 + $0x1a0] sm:$0xff]
      %v798 = vld [vmem:[%s2 + $0x1a8] sm:$0xff]
      %v799 = vld [vmem:[%s2 + $0x1b0] sm:$0xff]
      %v800 = vld [vmem:[%s2 + $0x1b8] sm:$0xff]
      %v801 = vld [vmem:[%s2 + $0x1c0] sm:$0xff]
      %v802 = vld [vmem:[%s2 + $0x1c8] sm:$0xff]
      %v803 = vld [vmem:[%s2 + $0x1d0] sm:$0xff]
      %v804 = vld [vmem:[%s2 + $0x1d8] sm:$0xff]
      %v805 = vld [vmem:[%s2 + $0x1e0] sm:$0xff]
      %v806 = vld [vmem:[%s2 + $0x1e8] sm:$0xff]
      %v807 = vld [vmem:[%s2 + $0x1f0] sm:$0xff]
      %v808 = vld [vmem:[%s2 + $0x1f8] sm:$0xff]
      %810 = vset.pattern.permute.xlu0 0
      %811 = vperm.xlu0 %810, %v745
      %v812 = vpop.permute.xlu0 %811
      %815 = vset.pattern.permute.xlu0 0
      %816 = vperm.xlu0 %815, %v746
      %v817 = vpop.permute.xlu0 %816
      %820 = vset.pattern.permute.xlu0 0
      %821 = vperm.xlu0 %820, %v747
      %v822 = vpop.permute.xlu0 %821
      %825 = vset.pattern.permute.xlu0 0
      %826 = vperm.xlu0 %825, %v748
      %v827 = vpop.permute.xlu0 %826
      %830 = vset.pattern.permute.xlu0 0
      %831 = vperm.xlu0 %830, %v749
      %v832 = vpop.permute.xlu0 %831
      %835 = vset.pattern.permute.xlu0 0
      %836 = vperm.xlu0 %835, %v750
      %v837 = vpop.permute.xlu0 %836
      %840 = vset.pattern.permute.xlu0 0
      %841 = vperm.xlu0 %840, %v751
      %v842 = vpop.permute.xlu0 %841
      %845 = vset.pattern.permute.xlu0 0
      %846 = vperm.xlu0 %845, %v752
      %v847 = vpop.permute.xlu0 %846
      %850 = vset.pattern.permute.xlu0 0
      %851 = vperm.xlu0 %850, %v753
      %v852 = vpop.permute.xlu0 %851
      %855 = vset.pattern.permute.xlu0 0
      %856 = vperm.xlu0 %855, %v754
      %v857 = vpop.permute.xlu0 %856
      %860 = vset.pattern.permute.xlu0 0
      %861 = vperm.xlu0 %860, %v755
      %v862 = vpop.permute.xlu0 %861
      %865 = vset.pattern.permute.xlu0 0
      %866 = vperm.xlu0 %865, %v756
      %v867 = vpop.permute.xlu0 %866
      %870 = vset.pattern.permute.xlu0 0
      %871 = vperm.xlu0 %870, %v757
      %v872 = vpop.permute.xlu0 %871
      %875 = vset.pattern.permute.xlu0 0
      %876 = vperm.xlu0 %875, %v758
      %v877 = vpop.permute.xlu0 %876
      %880 = vset.pattern.permute.xlu0 0
      %881 = vperm.xlu0 %880, %v759
      %v882 = vpop.permute.xlu0 %881
      %885 = vset.pattern.permute.xlu0 0
      %886 = vperm.xlu0 %885, %v760
      %v887 = vpop.permute.xlu0 %886
      %890 = vset.pattern.permute.xlu0 0
      %891 = vperm.xlu0 %890, %v761
      %v892 = vpop.permute.xlu0 %891
      %895 = vset.pattern.permute.xlu0 0
      %896 = vperm.xlu0 %895, %v762
      %v897 = vpop.permute.xlu0 %896
      %900 = vset.pattern.permute.xlu0 0
      %901 = vperm.xlu0 %900, %v763
      %v902 = vpop.permute.xlu0 %901
      %905 = vset.pattern.permute.xlu0 0
      %906 = vperm.xlu0 %905, %v764
      %v907 = vpop.permute.xlu0 %906
      %910 = vset.pattern.permute.xlu0 0
      %911 = vperm.xlu0 %910, %v765
      %v912 = vpop.permute.xlu0 %911
      %915 = vset.pattern.permute.xlu0 0
      %916 = vperm.xlu0 %915, %v766
      %v917 = vpop.permute.xlu0 %916
      %920 = vset.pattern.permute.xlu0 0
      %921 = vperm.xlu0 %920, %v767
      %v922 = vpop.permute.xlu0 %921
      %925 = vset.pattern.permute.xlu0 0
      %926 = vperm.xlu0 %925, %v768
      %v927 = vpop.permute.xlu0 %926
      %930 = vset.pattern.permute.xlu0 0
      %931 = vperm.xlu0 %930, %v769
      %v932 = vpop.permute.xlu0 %931
      %935 = vset.pattern.permute.xlu0 0
      %936 = vperm.xlu0 %935, %v770
      %v937 = vpop.permute.xlu0 %936
      %940 = vset.pattern.permute.xlu0 0
      %941 = vperm.xlu0 %940, %v771
      %v942 = vpop.permute.xlu0 %941
      %945 = vset.pattern.permute.xlu0 0
      %946 = vperm.xlu0 %945, %v772
      %v947 = vpop.permute.xlu0 %946
      %950 = vset.pattern.permute.xlu0 0
      %951 = vperm.xlu0 %950, %v773
      %v952 = vpop.permute.xlu0 %951
      %955 = vset.pattern.permute.xlu0 0
      %956 = vperm.xlu0 %955, %v774
      %v957 = vpop.permute.xlu0 %956
      %960 = vset.pattern.permute.xlu0 0
      %961 = vperm.xlu0 %960, %v775
      %v962 = vpop.permute.xlu0 %961
      %965 = vset.pattern.permute.xlu0 0
      %966 = vperm.xlu0 %965, %v776
      %v967 = vpop.permute.xlu0 %966
      %970 = vset.pattern.permute.xlu0 0
      %971 = vperm.xlu0 %970, %v777
      %v972 = vpop.permute.xlu0 %971
      %975 = vset.pattern.permute.xlu0 0
      %976 = vperm.xlu0 %975, %v778
      %v977 = vpop.permute.xlu0 %976
      %980 = vset.pattern.permute.xlu0 0
      %981 = vperm.xlu0 %980, %v779
      %v982 = vpop.permute.xlu0 %981
      %985 = vset.pattern.permute.xlu0 0
      %986 = vperm.xlu0 %985, %v780
      %v987 = vpop.permute.xlu0 %986
      %990 = vset.pattern.permute.xlu0 0
      %991 = vperm.xlu0 %990, %v781
      %v992 = vpop.permute.xlu0 %991
      %995 = vset.pattern.permute.xlu0 0
      %996 = vperm.xlu0 %995, %v782
      %v997 = vpop.permute.xlu0 %996
      %1000 = vset.pattern.permute.xlu0 0
      %1001 = vperm.xlu0 %1000, %v783
      %v1002 = vpop.permute.xlu0 %1001
      %1005 = vset.pattern.permute.xlu0 0
      %1006 = vperm.xlu0 %1005, %v784
      %v1007 = vpop.permute.xlu0 %1006
      %1010 = vset.pattern.permute.xlu0 0
      %1011 = vperm.xlu0 %1010, %v785
      %v1012 = vpop.permute.xlu0 %1011
      %1015 = vset.pattern.permute.xlu0 0
      %1016 = vperm.xlu0 %1015, %v786
      %v1017 = vpop.permute.xlu0 %1016
      %1020 = vset.pattern.permute.xlu0 0
      %1021 = vperm.xlu0 %1020, %v787
      %v1022 = vpop.permute.xlu0 %1021
      %1025 = vset.pattern.permute.xlu0 0
      %1026 = vperm.xlu0 %1025, %v788
      %v1027 = vpop.permute.xlu0 %1026
      %1030 = vset.pattern.permute.xlu0 0
      %1031 = vperm.xlu0 %1030, %v789
      %v1032 = vpop.permute.xlu0 %1031
      %1035 = vset.pattern.permute.xlu0 0
      %1036 = vperm.xlu0 %1035, %v790
      %v1037 = vpop.permute.xlu0 %1036
      %1040 = vset.pattern.permute.xlu0 0
      %1041 = vperm.xlu0 %1040, %v791
      %v1042 = vpop.permute.xlu0 %1041
      %1045 = vset.pattern.permute.xlu0 0
      %1046 = vperm.xlu0 %1045, %v792
      %v1047 = vpop.permute.xlu0 %1046
      %1050 = vset.pattern.permute.xlu0 0
      %1051 = vperm.xlu0 %1050, %v793
      %v1052 = vpop.permute.xlu0 %1051
      %1055 = vset.pattern.permute.xlu0 0
      %1056 = vperm.xlu0 %1055, %v794
      %v1057 = vpop.permute.xlu0 %1056
      %1060 = vset.pattern.permute.xlu0 0
      %1061 = vperm.xlu0 %1060, %v795
      %v1062 = vpop.permute.xlu0 %1061
      %1065 = vset.pattern.permute.xlu0 0
      %1066 = vperm.xlu0 %1065, %v796
      %v1067 = vpop.permute.xlu0 %1066
      %1070 = vset.pattern.permute.xlu0 0
      %1071 = vperm.xlu0 %1070, %v797
      %v1072 = vpop.permute.xlu0 %1071
      %1075 = vset.pattern.permute.xlu0 0
      %1076 = vperm.xlu0 %1075, %v798
      %v1077 = vpop.permute.xlu0 %1076
      %1080 = vset.pattern.permute.xlu0 0
      %1081 = vperm.xlu0 %1080, %v799
      %v1082 = vpop.permute.xlu0 %1081
      %1085 = vset.pattern.permute.xlu0 0
      %1086 = vperm.xlu0 %1085, %v800
      %v1087 = vpop.permute.xlu0 %1086
      %1090 = vset.pattern.permute.xlu0 0
      %1091 = vperm.xlu0 %1090, %v801
      %v1092 = vpop.permute.xlu0 %1091
      %1095 = vset.pattern.permute.xlu0 0
      %1096 = vperm.xlu0 %1095, %v802
      %v1097 = vpop.permute.xlu0 %1096
      %1100 = vset.pattern.permute.xlu0 0
      %1101 = vperm.xlu0 %1100, %v803
      %v1102 = vpop.permute.xlu0 %1101
      %1105 = vset.pattern.permute.xlu0 0
      %1106 = vperm.xlu0 %1105, %v804
      %v1107 = vpop.permute.xlu0 %1106
      %1110 = vset.pattern.permute.xlu0 0
      %1111 = vperm.xlu0 %1110, %v805
      %v1112 = vpop.permute.xlu0 %1111
      %1115 = vset.pattern.permute.xlu0 0
      %1116 = vperm.xlu0 %1115, %v806
      %v1117 = vpop.permute.xlu0 %1116
      %1120 = vset.pattern.permute.xlu0 0
      %1121 = vperm.xlu0 %1120, %v807
      %v1122 = vpop.permute.xlu0 %1121
      %1125 = vset.pattern.permute.xlu0 0
      %1126 = vperm.xlu0 %1125, %v808
      %v1127 = vpop.permute.xlu0 %1126
      %v1449 = vunpack.c.l.b16 %v425
      %v1450 = vunpack.c.h.b16 %v425
      %v1451 = vunpack.c.l.b16 %v426
      %v1452 = vunpack.c.h.b16 %v426
      %v1453 = vunpack.c.l.b16 %v427
      %v1454 = vunpack.c.h.b16 %v427
      %v1455 = vunpack.c.l.b16 %v428
      %v1456 = vunpack.c.h.b16 %v428
      %v1457 = vunpack.c.l.b16 %v429
      %v1458 = vunpack.c.h.b16 %v429
      %v1459 = vunpack.c.l.b16 %v430
      %v1460 = vunpack.c.h.b16 %v430
      %v1461 = vunpack.c.l.b16 %v431
      %v1462 = vunpack.c.h.b16 %v431
      %v1463 = vunpack.c.l.b16 %v432
      %v1464 = vunpack.c.h.b16 %v432
      %v1465 = vunpack.c.l.b16 %v433
      %v1466 = vunpack.c.h.b16 %v433
      %v1467 = vunpack.c.l.b16 %v434
      %v1468 = vunpack.c.h.b16 %v434
      %v1469 = vunpack.c.l.b16 %v435
      %v1470 = vunpack.c.h.b16 %v435
      %v1471 = vunpack.c.l.b16 %v436
      %v1472 = vunpack.c.h.b16 %v436
      %v1473 = vunpack.c.l.b16 %v437
      %v1474 = vunpack.c.h.b16 %v437
      %v1475 = vunpack.c.l.b16 %v438
      %v1476 = vunpack.c.h.b16 %v438
      %v1477 = vunpack.c.l.b16 %v439
      %v1478 = vunpack.c.h.b16 %v439
      %v1479 = vunpack.c.l.b16 %v440
      %v1480 = vunpack.c.h.b16 %v440
      %v1481 = vunpack.c.l.b16 %v441
      %v1482 = vunpack.c.h.b16 %v441
      %v1483 = vunpack.c.l.b16 %v442
      %v1484 = vunpack.c.h.b16 %v442
      %v1485 = vunpack.c.l.b16 %v443
      %v1486 = vunpack.c.h.b16 %v443
      %v1487 = vunpack.c.l.b16 %v444
      %v1488 = vunpack.c.h.b16 %v444
      %v1489 = vunpack.c.l.b16 %v445
      %v1490 = vunpack.c.h.b16 %v445
      %v1491 = vunpack.c.l.b16 %v446
      %v1492 = vunpack.c.h.b16 %v446
      %v1493 = vunpack.c.l.b16 %v447
      %v1494 = vunpack.c.h.b16 %v447
      %v1495 = vunpack.c.l.b16 %v448
      %v1496 = vunpack.c.h.b16 %v448
      %v1497 = vunpack.c.l.b16 %v449
      %v1498 = vunpack.c.h.b16 %v449
      %v1499 = vunpack.c.l.b16 %v450
      %v1500 = vunpack.c.h.b16 %v450
      %v1501 = vunpack.c.l.b16 %v451
      %v1502 = vunpack.c.h.b16 %v451
      %v1503 = vunpack.c.l.b16 %v452
      %v1504 = vunpack.c.h.b16 %v452
      %v1505 = vunpack.c.l.b16 %v453
      %v1506 = vunpack.c.h.b16 %v453
      %v1507 = vunpack.c.l.b16 %v454
      %v1508 = vunpack.c.h.b16 %v454
      %v1509 = vunpack.c.l.b16 %v455
      %v1510 = vunpack.c.h.b16 %v455
      %v1511 = vunpack.c.l.b16 %v456
      %v1512 = vunpack.c.h.b16 %v456
      %v1513 = vunpack.c.l.b16 %v457
      %v1514 = vunpack.c.h.b16 %v457
      %v1515 = vunpack.c.l.b16 %v458
      %v1516 = vunpack.c.h.b16 %v458
      %v1517 = vunpack.c.l.b16 %v459
      %v1518 = vunpack.c.h.b16 %v459
      %v1519 = vunpack.c.l.b16 %v460
      %v1520 = vunpack.c.h.b16 %v460
      %v1521 = vunpack.c.l.b16 %v461
      %v1522 = vunpack.c.h.b16 %v461
      %v1523 = vunpack.c.l.b16 %v462
      %v1524 = vunpack.c.h.b16 %v462
      %v1525 = vunpack.c.l.b16 %v463
      %v1526 = vunpack.c.h.b16 %v463
      %v1527 = vunpack.c.l.b16 %v464
      %v1528 = vunpack.c.h.b16 %v464
      %v1529 = vunpack.c.l.b16 %v465
      %v1530 = vunpack.c.h.b16 %v465
      %v1531 = vunpack.c.l.b16 %v466
      %v1532 = vunpack.c.h.b16 %v466
      %v1533 = vunpack.c.l.b16 %v467
      %v1534 = vunpack.c.h.b16 %v467
      %v1535 = vunpack.c.l.b16 %v468
      %v1536 = vunpack.c.h.b16 %v468
      %v1537 = vunpack.c.l.b16 %v469
      %v1538 = vunpack.c.h.b16 %v469
      %v1539 = vunpack.c.l.b16 %v470
      %v1540 = vunpack.c.h.b16 %v470
      %v1541 = vunpack.c.l.b16 %v471
      %v1542 = vunpack.c.h.b16 %v471
      %v1543 = vunpack.c.l.b16 %v472
      %v1544 = vunpack.c.h.b16 %v472
      %v1545 = vunpack.c.l.b16 %v473
      %v1546 = vunpack.c.h.b16 %v473
      %v1547 = vunpack.c.l.b16 %v474
      %v1548 = vunpack.c.h.b16 %v474
      %v1549 = vunpack.c.l.b16 %v475
      %v1550 = vunpack.c.h.b16 %v475
      %v1551 = vunpack.c.l.b16 %v476
      %v1552 = vunpack.c.h.b16 %v476
      %v1553 = vunpack.c.l.b16 %v477
      %v1554 = vunpack.c.h.b16 %v477
      %v1555 = vunpack.c.l.b16 %v478
      %v1556 = vunpack.c.h.b16 %v478
      %v1557 = vunpack.c.l.b16 %v479
      %v1558 = vunpack.c.h.b16 %v479
      %v1559 = vunpack.c.l.b16 %v480
      %v1560 = vunpack.c.h.b16 %v480
      %v1561 = vunpack.c.l.b16 %v481
      %v1562 = vunpack.c.h.b16 %v481
      %v1563 = vunpack.c.l.b16 %v482
      %v1564 = vunpack.c.h.b16 %v482
      %v1565 = vunpack.c.l.b16 %v483
      %v1566 = vunpack.c.h.b16 %v483
      %v1567 = vunpack.c.l.b16 %v484
      %v1568 = vunpack.c.h.b16 %v484
      %v1569 = vunpack.c.l.b16 %v485
      %v1570 = vunpack.c.h.b16 %v485
      %v1571 = vunpack.c.l.b16 %v486
      %v1572 = vunpack.c.h.b16 %v486
      %v1573 = vunpack.c.l.b16 %v487
      %v1574 = vunpack.c.h.b16 %v487
      %v1575 = vunpack.c.l.b16 %v488
      %v1576 = vunpack.c.h.b16 %v488
      %v1577 = vunpack.c.l.b16 %v489
      %v1578 = vunpack.c.h.b16 %v489
      %v1579 = vunpack.c.l.b16 %v490
      %v1580 = vunpack.c.h.b16 %v490
      %v1581 = vunpack.c.l.b16 %v491
      %v1582 = vunpack.c.h.b16 %v491
      %v1583 = vunpack.c.l.b16 %v492
      %v1584 = vunpack.c.h.b16 %v492
      %v1585 = vunpack.c.l.b16 %v493
      %v1586 = vunpack.c.h.b16 %v493
      %v1587 = vunpack.c.l.b16 %v494
      %v1588 = vunpack.c.h.b16 %v494
      %v1589 = vunpack.c.l.b16 %v495
      %v1590 = vunpack.c.h.b16 %v495
      %v1591 = vunpack.c.l.b16 %v496
      %v1592 = vunpack.c.h.b16 %v496
      %v1593 = vunpack.c.l.b16 %v497
      %v1594 = vunpack.c.h.b16 %v497
      %v1595 = vunpack.c.l.b16 %v498
      %v1596 = vunpack.c.h.b16 %v498
      %v1597 = vunpack.c.l.b16 %v499
      %v1598 = vunpack.c.h.b16 %v499
      %v1599 = vunpack.c.l.b16 %v500
      %v1600 = vunpack.c.h.b16 %v500
      %v1601 = vunpack.c.l.b16 %v501
      %v1602 = vunpack.c.h.b16 %v501
      %v1603 = vunpack.c.l.b16 %v502
      %v1604 = vunpack.c.h.b16 %v502
      %v1605 = vunpack.c.l.b16 %v503
      %v1606 = vunpack.c.h.b16 %v503
      %v1607 = vunpack.c.l.b16 %v504
      %v1608 = vunpack.c.h.b16 %v504
      %v1609 = vunpack.c.l.b16 %v505
      %v1610 = vunpack.c.h.b16 %v505
      %v1611 = vunpack.c.l.b16 %v506
      %v1612 = vunpack.c.h.b16 %v506
      %v1613 = vunpack.c.l.b16 %v507
      %v1614 = vunpack.c.h.b16 %v507
      %v1615 = vunpack.c.l.b16 %v508
      %v1616 = vunpack.c.h.b16 %v508
      %v1617 = vunpack.c.l.b16 %v509
      %v1618 = vunpack.c.h.b16 %v509
      %v1619 = vunpack.c.l.b16 %v510
      %v1620 = vunpack.c.h.b16 %v510
      %v1621 = vunpack.c.l.b16 %v511
      %v1622 = vunpack.c.h.b16 %v511
      %v1623 = vunpack.c.l.b16 %v512
      %v1624 = vunpack.c.h.b16 %v512
      %v1625 = vunpack.c.l.b16 %v513
      %v1626 = vunpack.c.h.b16 %v513
      %v1627 = vunpack.c.l.b16 %v514
      %v1628 = vunpack.c.h.b16 %v514
      %v1629 = vunpack.c.l.b16 %v515
      %v1630 = vunpack.c.h.b16 %v515
      %v1631 = vunpack.c.l.b16 %v516
      %v1632 = vunpack.c.h.b16 %v516
      %v1633 = vunpack.c.l.b16 %v517
      %v1634 = vunpack.c.h.b16 %v517
      %v1635 = vunpack.c.l.b16 %v518
      %v1636 = vunpack.c.h.b16 %v518
      %v1637 = vunpack.c.l.b16 %v519
      %v1638 = vunpack.c.h.b16 %v519
      %v1639 = vunpack.c.l.b16 %v520
      %v1640 = vunpack.c.h.b16 %v520
      %v1641 = vunpack.c.l.b16 %v521
      %v1642 = vunpack.c.h.b16 %v521
      %v1643 = vunpack.c.l.b16 %v522
      %v1644 = vunpack.c.h.b16 %v522
      %v1645 = vunpack.c.l.b16 %v523
      %v1646 = vunpack.c.h.b16 %v523
      %v1647 = vunpack.c.l.b16 %v524
      %v1648 = vunpack.c.h.b16 %v524
      %v1649 = vunpack.c.l.b16 %v525
      %v1650 = vunpack.c.h.b16 %v525
      %v1651 = vunpack.c.l.b16 %v526
      %v1652 = vunpack.c.h.b16 %v526
      %v1653 = vunpack.c.l.b16 %v527
      %v1654 = vunpack.c.h.b16 %v527
      %v1655 = vunpack.c.l.b16 %v528
      %v1656 = vunpack.c.h.b16 %v528
      %v1657 = vunpack.c.l.b16 %v529
      %v1658 = vunpack.c.h.b16 %v529
      %v1659 = vunpack.c.l.b16 %v530
      %v1660 = vunpack.c.h.b16 %v530
      %v1661 = vunpack.c.l.b16 %v531
      %v1662 = vunpack.c.h.b16 %v531
      %v1663 = vunpack.c.l.b16 %v532
      %v1664 = vunpack.c.h.b16 %v532
      %v1665 = vunpack.c.l.b16 %v533
      %v1666 = vunpack.c.h.b16 %v533
      %v1667 = vunpack.c.l.b16 %v534
      %v1668 = vunpack.c.h.b16 %v534
      %v1669 = vunpack.c.l.b16 %v535
      %v1670 = vunpack.c.h.b16 %v535
      %v1671 = vunpack.c.l.b16 %v536
      %v1672 = vunpack.c.h.b16 %v536
      %v1673 = vunpack.c.l.b16 %v537
      %v1674 = vunpack.c.h.b16 %v537
      %v1675 = vunpack.c.l.b16 %v538
      %v1676 = vunpack.c.h.b16 %v538
      %v1677 = vunpack.c.l.b16 %v539
      %v1678 = vunpack.c.h.b16 %v539
      %v1679 = vunpack.c.l.b16 %v540
      %v1680 = vunpack.c.h.b16 %v540
      %v1681 = vunpack.c.l.b16 %v541
      %v1682 = vunpack.c.h.b16 %v541
      %v1683 = vunpack.c.l.b16 %v542
      %v1684 = vunpack.c.h.b16 %v542
      %v1685 = vunpack.c.l.b16 %v543
      %v1686 = vunpack.c.h.b16 %v543
      %v1687 = vunpack.c.l.b16 %v544
      %v1688 = vunpack.c.h.b16 %v544
      %v1689 = vunpack.c.l.b16 %v545
      %v1690 = vunpack.c.h.b16 %v545
      %v1691 = vunpack.c.l.b16 %v546
      %v1692 = vunpack.c.h.b16 %v546
      %v1693 = vunpack.c.l.b16 %v547
      %v1694 = vunpack.c.h.b16 %v547
      %v1695 = vunpack.c.l.b16 %v548
      %v1696 = vunpack.c.h.b16 %v548
      %v1697 = vunpack.c.l.b16 %v549
      %v1698 = vunpack.c.h.b16 %v549
      %v1699 = vunpack.c.l.b16 %v550
      %v1700 = vunpack.c.h.b16 %v550
      %v1701 = vunpack.c.l.b16 %v551
      %v1702 = vunpack.c.h.b16 %v551
      %v1703 = vunpack.c.l.b16 %v552
      %v1704 = vunpack.c.h.b16 %v552
      %v1705 = vunpack.c.l.b16 %v553
      %v1706 = vunpack.c.h.b16 %v553
      %v1707 = vunpack.c.l.b16 %v554
      %v1708 = vunpack.c.h.b16 %v554
      %v1709 = vunpack.c.l.b16 %v555
      %v1710 = vunpack.c.h.b16 %v555
      %v1711 = vunpack.c.l.b16 %v556
      %v1712 = vunpack.c.h.b16 %v556
      %v1713 = vunpack.c.l.b16 %v557
      %v1714 = vunpack.c.h.b16 %v557
      %v1715 = vunpack.c.l.b16 %v558
      %v1716 = vunpack.c.h.b16 %v558
      %v1717 = vunpack.c.l.b16 %v559
      %v1718 = vunpack.c.h.b16 %v559
      %v1719 = vunpack.c.l.b16 %v560
      %v1720 = vunpack.c.h.b16 %v560
      %v1721 = vunpack.c.l.b16 %v561
      %v1722 = vunpack.c.h.b16 %v561
      %v1723 = vunpack.c.l.b16 %v562
      %v1724 = vunpack.c.h.b16 %v562
      %v1725 = vunpack.c.l.b16 %v563
      %v1726 = vunpack.c.h.b16 %v563
      %v1727 = vunpack.c.l.b16 %v564
      %v1728 = vunpack.c.h.b16 %v564
      %v1729 = vunpack.c.l.b16 %v565
      %v1730 = vunpack.c.h.b16 %v565
      %v1731 = vunpack.c.l.b16 %v566
      %v1732 = vunpack.c.h.b16 %v566
      %v1733 = vunpack.c.l.b16 %v567
      %v1734 = vunpack.c.h.b16 %v567
      %v1735 = vunpack.c.l.b16 %v568
      %v1736 = vunpack.c.h.b16 %v568
      %v1737 = vunpack.c.l.b16 %v569
      %v1738 = vunpack.c.h.b16 %v569
      %v1739 = vunpack.c.l.b16 %v570
      %v1740 = vunpack.c.h.b16 %v570
      %v1741 = vunpack.c.l.b16 %v571
      %v1742 = vunpack.c.h.b16 %v571
      %v1743 = vunpack.c.l.b16 %v572
      %v1744 = vunpack.c.h.b16 %v572
      %v1745 = vunpack.c.l.b16 %v573
      %v1746 = vunpack.c.h.b16 %v573
      %v1747 = vunpack.c.l.b16 %v574
      %v1748 = vunpack.c.h.b16 %v574
      %v1749 = vunpack.c.l.b16 %v575
      %v1750 = vunpack.c.h.b16 %v575
      %v1751 = vunpack.c.l.b16 %v576
      %v1752 = vunpack.c.h.b16 %v576
      %v1753 = vunpack.c.l.b16 %v577
      %v1754 = vunpack.c.h.b16 %v577
      %v1755 = vunpack.c.l.b16 %v578
      %v1756 = vunpack.c.h.b16 %v578
      %v1757 = vunpack.c.l.b16 %v579
      %v1758 = vunpack.c.h.b16 %v579
      %v1759 = vunpack.c.l.b16 %v580
      %v1760 = vunpack.c.h.b16 %v580
      %v1761 = vunpack.c.l.b16 %v581
      %v1762 = vunpack.c.h.b16 %v581
      %v1763 = vunpack.c.l.b16 %v582
      %v1764 = vunpack.c.h.b16 %v582
      %v1765 = vunpack.c.l.b16 %v583
      %v1766 = vunpack.c.h.b16 %v583
      %v1767 = vunpack.c.l.b16 %v584
      %v1768 = vunpack.c.h.b16 %v584
      %v1769 = vunpack.c.l.b16 %v585
      %v1770 = vunpack.c.h.b16 %v585
      %v1771 = vunpack.c.l.b16 %v586
      %v1772 = vunpack.c.h.b16 %v586
      %v1773 = vunpack.c.l.b16 %v587
      %v1774 = vunpack.c.h.b16 %v587
      %v1775 = vunpack.c.l.b16 %v588
      %v1776 = vunpack.c.h.b16 %v588
      %v1777 = vunpack.c.l.b16 %v589
      %v1778 = vunpack.c.h.b16 %v589
      %v1779 = vunpack.c.l.b16 %v590
      %v1780 = vunpack.c.h.b16 %v590
      %v1781 = vunpack.c.l.b16 %v591
      %v1782 = vunpack.c.h.b16 %v591
      %v1783 = vunpack.c.l.b16 %v592
      %v1784 = vunpack.c.h.b16 %v592
      %v1785 = vunpack.c.l.b16 %v593
      %v1786 = vunpack.c.h.b16 %v593
      %v1787 = vunpack.c.l.b16 %v594
      %v1788 = vunpack.c.h.b16 %v594
      %v1789 = vunpack.c.l.b16 %v595
      %v1790 = vunpack.c.h.b16 %v595
      %v1791 = vunpack.c.l.b16 %v596
      %v1792 = vunpack.c.h.b16 %v596
      %v1793 = vunpack.c.l.b16 %v597
      %v1794 = vunpack.c.h.b16 %v597
      %v1795 = vunpack.c.l.b16 %v598
      %v1796 = vunpack.c.h.b16 %v598
      %v1797 = vunpack.c.l.b16 %v599
      %v1798 = vunpack.c.h.b16 %v599
      %v1799 = vunpack.c.l.b16 %v600
      %v1800 = vunpack.c.h.b16 %v600
      %v1801 = vunpack.c.l.b16 %v601
      %v1802 = vunpack.c.h.b16 %v601
      %v1803 = vunpack.c.l.b16 %v602
      %v1804 = vunpack.c.h.b16 %v602
      %v1805 = vunpack.c.l.b16 %v603
      %v1806 = vunpack.c.h.b16 %v603
      %v1807 = vunpack.c.l.b16 %v604
      %v1808 = vunpack.c.h.b16 %v604
      %v1809 = vunpack.c.l.b16 %v605
      %v1810 = vunpack.c.h.b16 %v605
      %v1811 = vunpack.c.l.b16 %v606
      %v1812 = vunpack.c.h.b16 %v606
      %v1813 = vunpack.c.l.b16 %v607
      %v1814 = vunpack.c.h.b16 %v607
      %v1815 = vunpack.c.l.b16 %v608
      %v1816 = vunpack.c.h.b16 %v608
      %v1817 = vunpack.c.l.b16 %v609
      %v1818 = vunpack.c.h.b16 %v609
      %v1819 = vunpack.c.l.b16 %v610
      %v1820 = vunpack.c.h.b16 %v610
      %v1821 = vunpack.c.l.b16 %v611
      %v1822 = vunpack.c.h.b16 %v611
      %v1823 = vunpack.c.l.b16 %v612
      %v1824 = vunpack.c.h.b16 %v612
      %v1825 = vunpack.c.l.b16 %v613
      %v1826 = vunpack.c.h.b16 %v613
      %v1827 = vunpack.c.l.b16 %v614
      %v1828 = vunpack.c.h.b16 %v614
      %v1829 = vunpack.c.l.b16 %v615
      %v1830 = vunpack.c.h.b16 %v615
      %v1831 = vunpack.c.l.b16 %v616
      %v1832 = vunpack.c.h.b16 %v616
      %v1833 = vunpack.c.l.b16 %v617
      %v1834 = vunpack.c.h.b16 %v617
      %v1835 = vunpack.c.l.b16 %v618
      %v1836 = vunpack.c.h.b16 %v618
      %v1837 = vunpack.c.l.b16 %v619
      %v1838 = vunpack.c.h.b16 %v619
      %v1839 = vunpack.c.l.b16 %v620
      %v1840 = vunpack.c.h.b16 %v620
      %v1841 = vunpack.c.l.b16 %v621
      %v1842 = vunpack.c.h.b16 %v621
      %v1843 = vunpack.c.l.b16 %v622
      %v1844 = vunpack.c.h.b16 %v622
      %v1845 = vunpack.c.l.b16 %v623
      %v1846 = vunpack.c.h.b16 %v623
      %v1847 = vunpack.c.l.b16 %v624
      %v1848 = vunpack.c.h.b16 %v624
      %v1849 = vunpack.c.l.b16 %v625
      %v1850 = vunpack.c.h.b16 %v625
      %v1851 = vunpack.c.l.b16 %v626
      %v1852 = vunpack.c.h.b16 %v626
      %v1853 = vunpack.c.l.b16 %v627
      %v1854 = vunpack.c.h.b16 %v627
      %v1855 = vunpack.c.l.b16 %v628
      %v1856 = vunpack.c.h.b16 %v628
      %v1857 = vunpack.c.l.b16 %v629
      %v1858 = vunpack.c.h.b16 %v629
      %v1859 = vunpack.c.l.b16 %v630
      %v1860 = vunpack.c.h.b16 %v630
      %v1861 = vunpack.c.l.b16 %v631
      %v1862 = vunpack.c.h.b16 %v631
      %v1863 = vunpack.c.l.b16 %v632
      %v1864 = vunpack.c.h.b16 %v632
      %v1865 = vunpack.c.l.b16 %v633
      %v1866 = vunpack.c.h.b16 %v633
      %v1867 = vunpack.c.l.b16 %v634
      %v1868 = vunpack.c.h.b16 %v634
      %v1869 = vunpack.c.l.b16 %v635
      %v1870 = vunpack.c.h.b16 %v635
      %v1871 = vunpack.c.l.b16 %v636
      %v1872 = vunpack.c.h.b16 %v636
      %v1873 = vunpack.c.l.b16 %v637
      %v1874 = vunpack.c.h.b16 %v637
      %v1875 = vunpack.c.l.b16 %v638
      %v1876 = vunpack.c.h.b16 %v638
      %v1877 = vunpack.c.l.b16 %v639
      %v1878 = vunpack.c.h.b16 %v639
      %v1879 = vunpack.c.l.b16 %v640
      %v1880 = vunpack.c.h.b16 %v640
      %v1881 = vunpack.c.l.b16 %v641
      %v1882 = vunpack.c.h.b16 %v641
      %v1883 = vunpack.c.l.b16 %v642
      %v1884 = vunpack.c.h.b16 %v642
      %v1885 = vunpack.c.l.b16 %v643
      %v1886 = vunpack.c.h.b16 %v643
      %v1887 = vunpack.c.l.b16 %v644
      %v1888 = vunpack.c.h.b16 %v644
      %v1889 = vunpack.c.l.b16 %v645
      %v1890 = vunpack.c.h.b16 %v645
      %v1891 = vunpack.c.l.b16 %v646
      %v1892 = vunpack.c.h.b16 %v646
      %v1893 = vunpack.c.l.b16 %v647
      %v1894 = vunpack.c.h.b16 %v647
      %v1895 = vunpack.c.l.b16 %v648
      %v1896 = vunpack.c.h.b16 %v648
      %v1897 = vunpack.c.l.b16 %v649
      %v1898 = vunpack.c.h.b16 %v649
      %v1899 = vunpack.c.l.b16 %v650
      %v1900 = vunpack.c.h.b16 %v650
      %v1901 = vunpack.c.l.b16 %v651
      %v1902 = vunpack.c.h.b16 %v651
      %v1903 = vunpack.c.l.b16 %v652
      %v1904 = vunpack.c.h.b16 %v652
      %v1905 = vunpack.c.l.b16 %v653
      %v1906 = vunpack.c.h.b16 %v653
      %v1907 = vunpack.c.l.b16 %v654
      %v1908 = vunpack.c.h.b16 %v654
      %v1909 = vunpack.c.l.b16 %v655
      %v1910 = vunpack.c.h.b16 %v655
      %v1911 = vunpack.c.l.b16 %v656
      %v1912 = vunpack.c.h.b16 %v656
      %v1913 = vunpack.c.l.b16 %v657
      %v1914 = vunpack.c.h.b16 %v657
      %v1915 = vunpack.c.l.b16 %v658
      %v1916 = vunpack.c.h.b16 %v658
      %v1917 = vunpack.c.l.b16 %v659
      %v1918 = vunpack.c.h.b16 %v659
      %v1919 = vunpack.c.l.b16 %v660
      %v1920 = vunpack.c.h.b16 %v660
      %v1921 = vunpack.c.l.b16 %v661
      %v1922 = vunpack.c.h.b16 %v661
      %v1923 = vunpack.c.l.b16 %v662
      %v1924 = vunpack.c.h.b16 %v662
      %v1925 = vunpack.c.l.b16 %v663
      %v1926 = vunpack.c.h.b16 %v663
      %v1927 = vunpack.c.l.b16 %v664
      %v1928 = vunpack.c.h.b16 %v664
      %v1929 = vunpack.c.l.b16 %v665
      %v1930 = vunpack.c.h.b16 %v665
      %v1931 = vunpack.c.l.b16 %v666
      %v1932 = vunpack.c.h.b16 %v666
      %v1933 = vunpack.c.l.b16 %v667
      %v1934 = vunpack.c.h.b16 %v667
      %v1935 = vunpack.c.l.b16 %v668
      %v1936 = vunpack.c.h.b16 %v668
      %v1937 = vunpack.c.l.b16 %v669
      %v1938 = vunpack.c.h.b16 %v669
      %v1939 = vunpack.c.l.b16 %v670
      %v1940 = vunpack.c.h.b16 %v670
      %v1941 = vunpack.c.l.b16 %v671
      %v1942 = vunpack.c.h.b16 %v671
      %v1943 = vunpack.c.l.b16 %v672
      %v1944 = vunpack.c.h.b16 %v672
      %v1945 = vunpack.c.l.b16 %v673
      %v1946 = vunpack.c.h.b16 %v673
      %v1947 = vunpack.c.l.b16 %v674
      %v1948 = vunpack.c.h.b16 %v674
      %v1949 = vunpack.c.l.b16 %v675
      %v1950 = vunpack.c.h.b16 %v675
      %v1951 = vunpack.c.l.b16 %v676
      %v1952 = vunpack.c.h.b16 %v676
      %v1953 = vunpack.c.l.b16 %v677
      %v1954 = vunpack.c.h.b16 %v677
      %v1955 = vunpack.c.l.b16 %v678
      %v1956 = vunpack.c.h.b16 %v678
      %v1957 = vunpack.c.l.b16 %v679
      %v1958 = vunpack.c.h.b16 %v679
      %v1959 = vunpack.c.l.b16 %v680
      %v1960 = vunpack.c.h.b16 %v680
      %v1961 = vunpack.c.l.b16 %v681
      %v1962 = vunpack.c.h.b16 %v681
      %v1963 = vunpack.c.l.b16 %v682
      %v1964 = vunpack.c.h.b16 %v682
      %v1965 = vunpack.c.l.b16 %v683
      %v1966 = vunpack.c.h.b16 %v683
      %v1967 = vunpack.c.l.b16 %v684
      %v1968 = vunpack.c.h.b16 %v684
      %v1969 = vunpack.c.l.b16 %v685
      %v1970 = vunpack.c.h.b16 %v685
      %v1971 = vunpack.c.l.b16 %v686
      %v1972 = vunpack.c.h.b16 %v686
      %v1973 = vunpack.c.l.b16 %v687
      %v1974 = vunpack.c.h.b16 %v687
      %v1975 = vunpack.c.l.b16 %v688
      %v1976 = vunpack.c.h.b16 %v688
      %v1977 = vunpack.c.l.b16 %v689
      %v1978 = vunpack.c.h.b16 %v689
      %v1979 = vunpack.c.l.b16 %v690
      %v1980 = vunpack.c.h.b16 %v690
      %v1981 = vunpack.c.l.b16 %v691
      %v1982 = vunpack.c.h.b16 %v691
      %v1983 = vunpack.c.l.b16 %v692
      %v1984 = vunpack.c.h.b16 %v692
      %v1985 = vunpack.c.l.b16 %v693
      %v1986 = vunpack.c.h.b16 %v693
      %v1987 = vunpack.c.l.b16 %v694
      %v1988 = vunpack.c.h.b16 %v694
      %v1989 = vunpack.c.l.b16 %v695
      %v1990 = vunpack.c.h.b16 %v695
      %v1991 = vunpack.c.l.b16 %v696
      %v1992 = vunpack.c.h.b16 %v696
      %v1993 = vunpack.c.l.b16 %v697
      %v1994 = vunpack.c.h.b16 %v697
      %v1995 = vunpack.c.l.b16 %v698
      %v1996 = vunpack.c.h.b16 %v698
      %v1997 = vunpack.c.l.b16 %v699
      %v1998 = vunpack.c.h.b16 %v699
      %v1999 = vunpack.c.l.b16 %v700
      %v2000 = vunpack.c.h.b16 %v700
      %v2001 = vunpack.c.l.b16 %v701
      %v2002 = vunpack.c.h.b16 %v701
      %v2003 = vunpack.c.l.b16 %v702
      %v2004 = vunpack.c.h.b16 %v702
      %v2005 = vunpack.c.l.b16 %v703
      %v2006 = vunpack.c.h.b16 %v703
      %v2007 = vunpack.c.l.b16 %v704
      %v2008 = vunpack.c.h.b16 %v704
      %v2009 = vunpack.c.l.b16 %v705
      %v2010 = vunpack.c.h.b16 %v705
      %v2011 = vunpack.c.l.b16 %v706
      %v2012 = vunpack.c.h.b16 %v706
      %v2013 = vunpack.c.l.b16 %v707
      %v2014 = vunpack.c.h.b16 %v707
      %v2015 = vunpack.c.l.b16 %v708
      %v2016 = vunpack.c.h.b16 %v708
      %v2017 = vunpack.c.l.b16 %v709
      %v2018 = vunpack.c.h.b16 %v709
      %v2019 = vunpack.c.l.b16 %v710
      %v2020 = vunpack.c.h.b16 %v710
      %v2021 = vunpack.c.l.b16 %v711
      %v2022 = vunpack.c.h.b16 %v711
      %v2023 = vunpack.c.l.b16 %v712
      %v2024 = vunpack.c.h.b16 %v712
      %v2025 = vunpack.c.l.b16 %v713
      %v2026 = vunpack.c.h.b16 %v713
      %v2027 = vunpack.c.l.b16 %v714
      %v2028 = vunpack.c.h.b16 %v714
      %v2029 = vunpack.c.l.b16 %v715
      %v2030 = vunpack.c.h.b16 %v715
      %v2031 = vunpack.c.l.b16 %v716
      %v2032 = vunpack.c.h.b16 %v716
      %v2033 = vunpack.c.l.b16 %v717
      %v2034 = vunpack.c.h.b16 %v717
      %v2035 = vunpack.c.l.b16 %v718
      %v2036 = vunpack.c.h.b16 %v718
      %v2037 = vunpack.c.l.b16 %v719
      %v2038 = vunpack.c.h.b16 %v719
      %v2039 = vunpack.c.l.b16 %v720
      %v2040 = vunpack.c.h.b16 %v720
      %v2041 = vunpack.c.l.b16 %v721
      %v2042 = vunpack.c.h.b16 %v721
      %v2043 = vunpack.c.l.b16 %v722
      %v2044 = vunpack.c.h.b16 %v722
      %v2045 = vunpack.c.l.b16 %v723
      %v2046 = vunpack.c.h.b16 %v723
      %v2047 = vunpack.c.l.b16 %v724
      %v2048 = vunpack.c.h.b16 %v724
      %v2049 = vunpack.c.l.b16 %v725
      %v2050 = vunpack.c.h.b16 %v725
      %v2051 = vunpack.c.l.b16 %v726
      %v2052 = vunpack.c.h.b16 %v726
      %v2053 = vunpack.c.l.b16 %v727
      %v2054 = vunpack.c.h.b16 %v727
      %v2055 = vunpack.c.l.b16 %v728
      %v2056 = vunpack.c.h.b16 %v728
      %v2057 = vunpack.c.l.b16 %v729
      %v2058 = vunpack.c.h.b16 %v729
      %v2059 = vunpack.c.l.b16 %v730
      %v2060 = vunpack.c.h.b16 %v730
      %v2061 = vunpack.c.l.b16 %v731
      %v2062 = vunpack.c.h.b16 %v731
      %v2063 = vunpack.c.l.b16 %v732
      %v2064 = vunpack.c.h.b16 %v732
      %v2065 = vunpack.c.l.b16 %v733
      %v2066 = vunpack.c.h.b16 %v733
      %v2067 = vunpack.c.l.b16 %v734
      %v2068 = vunpack.c.h.b16 %v734
      %v2069 = vunpack.c.l.b16 %v735
      %v2070 = vunpack.c.h.b16 %v735
      %v2071 = vunpack.c.l.b16 %v736
      %v2072 = vunpack.c.h.b16 %v736
      %v2073 = vunpack.c.l.b16 %v737
      %v2074 = vunpack.c.h.b16 %v737
      %v2075 = vunpack.c.l.b16 %v738
      %v2076 = vunpack.c.h.b16 %v738
      %v2077 = vunpack.c.l.b16 %v739
      %v2078 = vunpack.c.h.b16 %v739
      %v2079 = vunpack.c.l.b16 %v740
      %v2080 = vunpack.c.h.b16 %v740
      %v2081 = vunpack.c.l.b16 %v741
      %v2082 = vunpack.c.h.b16 %v741
      %v2083 = vunpack.c.l.b16 %v742
      %v2084 = vunpack.c.h.b16 %v742
      %v2085 = vunpack.c.l.b16 %v743
      %v2086 = vunpack.c.h.b16 %v743
      %v2087 = vunpack.c.l.b16 %v744
      %v2088 = vunpack.c.h.b16 %v744
      %v2089 = vpack.c.b16 %v1459, %v1449
      %v2090 = vpack.c.b16 %v1460, %v1450
      %v2091 = vpack.c.b16 %v1461, %v1451
      %v2092 = vpack.c.b16 %v1462, %v1452
      %v2093 = vpack.c.b16 %v1463, %v1453
      %v2094 = vpack.c.b16 %v1464, %v1454
      %v2095 = vpack.c.b16 %v1465, %v1455
      %v2096 = vpack.c.b16 %v1466, %v1456
      %v2097 = vpack.c.b16 %v1467, %v1457
      %v2098 = vpack.c.b16 %v1468, %v1458
      %v2099 = vpack.c.b16 %v1479, %v1469
      %v2100 = vpack.c.b16 %v1480, %v1470
      %v2101 = vpack.c.b16 %v1481, %v1471
      %v2102 = vpack.c.b16 %v1482, %v1472
      %v2103 = vpack.c.b16 %v1483, %v1473
      %v2104 = vpack.c.b16 %v1484, %v1474
      %v2105 = vpack.c.b16 %v1485, %v1475
      %v2106 = vpack.c.b16 %v1486, %v1476
      %v2107 = vpack.c.b16 %v1487, %v1477
      %v2108 = vpack.c.b16 %v1488, %v1478
      %v2109 = vpack.c.b16 %v1499, %v1489
      %v2110 = vpack.c.b16 %v1500, %v1490
      %v2111 = vpack.c.b16 %v1501, %v1491
      %v2112 = vpack.c.b16 %v1502, %v1492
      %v2113 = vpack.c.b16 %v1503, %v1493
      %v2114 = vpack.c.b16 %v1504, %v1494
      %v2115 = vpack.c.b16 %v1505, %v1495
      %v2116 = vpack.c.b16 %v1506, %v1496
      %v2117 = vpack.c.b16 %v1507, %v1497
      %v2118 = vpack.c.b16 %v1508, %v1498
      %v2119 = vpack.c.b16 %v1519, %v1509
      %v2120 = vpack.c.b16 %v1520, %v1510
      %v2121 = vpack.c.b16 %v1521, %v1511
      %v2122 = vpack.c.b16 %v1522, %v1512
      %v2123 = vpack.c.b16 %v1523, %v1513
      %v2124 = vpack.c.b16 %v1524, %v1514
      %v2125 = vpack.c.b16 %v1525, %v1515
      %v2126 = vpack.c.b16 %v1526, %v1516
      %v2127 = vpack.c.b16 %v1527, %v1517
      %v2128 = vpack.c.b16 %v1528, %v1518
      %v2129 = vpack.c.b16 %v1539, %v1529
      %v2130 = vpack.c.b16 %v1540, %v1530
      %v2131 = vpack.c.b16 %v1541, %v1531
      %v2132 = vpack.c.b16 %v1542, %v1532
      %v2133 = vpack.c.b16 %v1543, %v1533
      %v2134 = vpack.c.b16 %v1544, %v1534
      %v2135 = vpack.c.b16 %v1545, %v1535
      %v2136 = vpack.c.b16 %v1546, %v1536
      %v2137 = vpack.c.b16 %v1547, %v1537
      %v2138 = vpack.c.b16 %v1548, %v1538
      %v2139 = vpack.c.b16 %v1559, %v1549
      %v2140 = vpack.c.b16 %v1560, %v1550
      %v2141 = vpack.c.b16 %v1561, %v1551
      %v2142 = vpack.c.b16 %v1562, %v1552
      %v2143 = vpack.c.b16 %v1563, %v1553
      %v2144 = vpack.c.b16 %v1564, %v1554
      %v2145 = vpack.c.b16 %v1565, %v1555
      %v2146 = vpack.c.b16 %v1566, %v1556
      %v2147 = vpack.c.b16 %v1567, %v1557
      %v2148 = vpack.c.b16 %v1568, %v1558
      %v2149 = vpack.c.b16 %v1579, %v1569
      %v2150 = vpack.c.b16 %v1580, %v1570
      %v2151 = vpack.c.b16 %v1581, %v1571
      %v2152 = vpack.c.b16 %v1582, %v1572
      %v2153 = vpack.c.b16 %v1583, %v1573
      %v2154 = vpack.c.b16 %v1584, %v1574
      %v2155 = vpack.c.b16 %v1585, %v1575
      %v2156 = vpack.c.b16 %v1586, %v1576
      %v2157 = vpack.c.b16 %v1587, %v1577
      %v2158 = vpack.c.b16 %v1588, %v1578
      %v2159 = vpack.c.b16 %v1599, %v1589
      %v2160 = vpack.c.b16 %v1600, %v1590
      %v2161 = vpack.c.b16 %v1601, %v1591
      %v2162 = vpack.c.b16 %v1602, %v1592
      %v2163 = vpack.c.b16 %v1603, %v1593
      %v2164 = vpack.c.b16 %v1604, %v1594
      %v2165 = vpack.c.b16 %v1605, %v1595
      %v2166 = vpack.c.b16 %v1606, %v1596
      %v2167 = vpack.c.b16 %v1607, %v1597
      %v2168 = vpack.c.b16 %v1608, %v1598
      %v2169 = vpack.c.b16 %v1619, %v1609
      %v2170 = vpack.c.b16 %v1620, %v1610
      %v2171 = vpack.c.b16 %v1621, %v1611
      %v2172 = vpack.c.b16 %v1622, %v1612
      %v2173 = vpack.c.b16 %v1623, %v1613
      %v2174 = vpack.c.b16 %v1624, %v1614
      %v2175 = vpack.c.b16 %v1625, %v1615
      %v2176 = vpack.c.b16 %v1626, %v1616
      %v2177 = vpack.c.b16 %v1627, %v1617
      %v2178 = vpack.c.b16 %v1628, %v1618
      %v2179 = vpack.c.b16 %v1639, %v1629
      %v2180 = vpack.c.b16 %v1640, %v1630
      %v2181 = vpack.c.b16 %v1641, %v1631
      %v2182 = vpack.c.b16 %v1642, %v1632
      %v2183 = vpack.c.b16 %v1643, %v1633
      %v2184 = vpack.c.b16 %v1644, %v1634
      %v2185 = vpack.c.b16 %v1645, %v1635
      %v2186 = vpack.c.b16 %v1646, %v1636
      %v2187 = vpack.c.b16 %v1647, %v1637
      %v2188 = vpack.c.b16 %v1648, %v1638
      %v2189 = vpack.c.b16 %v1659, %v1649
      %v2190 = vpack.c.b16 %v1660, %v1650
      %v2191 = vpack.c.b16 %v1661, %v1651
      %v2192 = vpack.c.b16 %v1662, %v1652
      %v2193 = vpack.c.b16 %v1663, %v1653
      %v2194 = vpack.c.b16 %v1664, %v1654
      %v2195 = vpack.c.b16 %v1665, %v1655
      %v2196 = vpack.c.b16 %v1666, %v1656
      %v2197 = vpack.c.b16 %v1667, %v1657
      %v2198 = vpack.c.b16 %v1668, %v1658
      %v2199 = vpack.c.b16 %v1679, %v1669
      %v2200 = vpack.c.b16 %v1680, %v1670
      %v2201 = vpack.c.b16 %v1681, %v1671
      %v2202 = vpack.c.b16 %v1682, %v1672
      %v2203 = vpack.c.b16 %v1683, %v1673
      %v2204 = vpack.c.b16 %v1684, %v1674
      %v2205 = vpack.c.b16 %v1685, %v1675
      %v2206 = vpack.c.b16 %v1686, %v1676
      %v2207 = vpack.c.b16 %v1687, %v1677
      %v2208 = vpack.c.b16 %v1688, %v1678
      %v2209 = vpack.c.b16 %v1699, %v1689
      %v2210 = vpack.c.b16 %v1700, %v1690
      %v2211 = vpack.c.b16 %v1701, %v1691
      %v2212 = vpack.c.b16 %v1702, %v1692
      %v2213 = vpack.c.b16 %v1703, %v1693
      %v2214 = vpack.c.b16 %v1704, %v1694
      %v2215 = vpack.c.b16 %v1705, %v1695
      %v2216 = vpack.c.b16 %v1706, %v1696
      %v2217 = vpack.c.b16 %v1707, %v1697
      %v2218 = vpack.c.b16 %v1708, %v1698
      %v2219 = vpack.c.b16 %v1719, %v1709
      %v2220 = vpack.c.b16 %v1720, %v1710
      %v2221 = vpack.c.b16 %v1721, %v1711
      %v2222 = vpack.c.b16 %v1722, %v1712
      %v2223 = vpack.c.b16 %v1723, %v1713
      %v2224 = vpack.c.b16 %v1724, %v1714
      %v2225 = vpack.c.b16 %v1725, %v1715
      %v2226 = vpack.c.b16 %v1726, %v1716
      %v2227 = vpack.c.b16 %v1727, %v1717
      %v2228 = vpack.c.b16 %v1728, %v1718
      %v2229 = vpack.c.b16 %v1739, %v1729
      %v2230 = vpack.c.b16 %v1740, %v1730
      %v2231 = vpack.c.b16 %v1741, %v1731
      %v2232 = vpack.c.b16 %v1742, %v1732
      %v2233 = vpack.c.b16 %v1743, %v1733
      %v2234 = vpack.c.b16 %v1744, %v1734
      %v2235 = vpack.c.b16 %v1745, %v1735
      %v2236 = vpack.c.b16 %v1746, %v1736
      %v2237 = vpack.c.b16 %v1747, %v1737
      %v2238 = vpack.c.b16 %v1748, %v1738
      %v2239 = vpack.c.b16 %v1759, %v1749
      %v2240 = vpack.c.b16 %v1760, %v1750
      %v2241 = vpack.c.b16 %v1761, %v1751
      %v2242 = vpack.c.b16 %v1762, %v1752
      %v2243 = vpack.c.b16 %v1763, %v1753
      %v2244 = vpack.c.b16 %v1764, %v1754
      %v2245 = vpack.c.b16 %v1765, %v1755
      %v2246 = vpack.c.b16 %v1766, %v1756
      %v2247 = vpack.c.b16 %v1767, %v1757
      %v2248 = vpack.c.b16 %v1768, %v1758
      %v2249 = vpack.c.b16 %v1779, %v1769
      %v2250 = vpack.c.b16 %v1780, %v1770
      %v2251 = vpack.c.b16 %v1781, %v1771
      %v2252 = vpack.c.b16 %v1782, %v1772
      %v2253 = vpack.c.b16 %v1783, %v1773
      %v2254 = vpack.c.b16 %v1784, %v1774
      %v2255 = vpack.c.b16 %v1785, %v1775
      %v2256 = vpack.c.b16 %v1786, %v1776
      %v2257 = vpack.c.b16 %v1787, %v1777
      %v2258 = vpack.c.b16 %v1788, %v1778
      %v2259 = vpack.c.b16 %v1799, %v1789
      %v2260 = vpack.c.b16 %v1800, %v1790
      %v2261 = vpack.c.b16 %v1801, %v1791
      %v2262 = vpack.c.b16 %v1802, %v1792
      %v2263 = vpack.c.b16 %v1803, %v1793
      %v2264 = vpack.c.b16 %v1804, %v1794
      %v2265 = vpack.c.b16 %v1805, %v1795
      %v2266 = vpack.c.b16 %v1806, %v1796
      %v2267 = vpack.c.b16 %v1807, %v1797
      %v2268 = vpack.c.b16 %v1808, %v1798
      %v2269 = vpack.c.b16 %v1819, %v1809
      %v2270 = vpack.c.b16 %v1820, %v1810
      %v2271 = vpack.c.b16 %v1821, %v1811
      %v2272 = vpack.c.b16 %v1822, %v1812
      %v2273 = vpack.c.b16 %v1823, %v1813
      %v2274 = vpack.c.b16 %v1824, %v1814
      %v2275 = vpack.c.b16 %v1825, %v1815
      %v2276 = vpack.c.b16 %v1826, %v1816
      %v2277 = vpack.c.b16 %v1827, %v1817
      %v2278 = vpack.c.b16 %v1828, %v1818
      %v2279 = vpack.c.b16 %v1839, %v1829
      %v2280 = vpack.c.b16 %v1840, %v1830
      %v2281 = vpack.c.b16 %v1841, %v1831
      %v2282 = vpack.c.b16 %v1842, %v1832
      %v2283 = vpack.c.b16 %v1843, %v1833
      %v2284 = vpack.c.b16 %v1844, %v1834
      %v2285 = vpack.c.b16 %v1845, %v1835
      %v2286 = vpack.c.b16 %v1846, %v1836
      %v2287 = vpack.c.b16 %v1847, %v1837
      %v2288 = vpack.c.b16 %v1848, %v1838
      %v2289 = vpack.c.b16 %v1859, %v1849
      %v2290 = vpack.c.b16 %v1860, %v1850
      %v2291 = vpack.c.b16 %v1861, %v1851
      %v2292 = vpack.c.b16 %v1862, %v1852
      %v2293 = vpack.c.b16 %v1863, %v1853
      %v2294 = vpack.c.b16 %v1864, %v1854
      %v2295 = vpack.c.b16 %v1865, %v1855
      %v2296 = vpack.c.b16 %v1866, %v1856
      %v2297 = vpack.c.b16 %v1867, %v1857
      %v2298 = vpack.c.b16 %v1868, %v1858
      %v2299 = vpack.c.b16 %v1879, %v1869
      %v2300 = vpack.c.b16 %v1880, %v1870
      %v2301 = vpack.c.b16 %v1881, %v1871
      %v2302 = vpack.c.b16 %v1882, %v1872
      %v2303 = vpack.c.b16 %v1883, %v1873
      %v2304 = vpack.c.b16 %v1884, %v1874
      %v2305 = vpack.c.b16 %v1885, %v1875
      %v2306 = vpack.c.b16 %v1886, %v1876
      %v2307 = vpack.c.b16 %v1887, %v1877
      %v2308 = vpack.c.b16 %v1888, %v1878
      %v2309 = vpack.c.b16 %v1899, %v1889
      %v2310 = vpack.c.b16 %v1900, %v1890
      %v2311 = vpack.c.b16 %v1901, %v1891
      %v2312 = vpack.c.b16 %v1902, %v1892
      %v2313 = vpack.c.b16 %v1903, %v1893
      %v2314 = vpack.c.b16 %v1904, %v1894
      %v2315 = vpack.c.b16 %v1905, %v1895
      %v2316 = vpack.c.b16 %v1906, %v1896
      %v2317 = vpack.c.b16 %v1907, %v1897
      %v2318 = vpack.c.b16 %v1908, %v1898
      %v2319 = vpack.c.b16 %v1919, %v1909
      %v2320 = vpack.c.b16 %v1920, %v1910
      %v2321 = vpack.c.b16 %v1921, %v1911
      %v2322 = vpack.c.b16 %v1922, %v1912
      %v2323 = vpack.c.b16 %v1923, %v1913
      %v2324 = vpack.c.b16 %v1924, %v1914
      %v2325 = vpack.c.b16 %v1925, %v1915
      %v2326 = vpack.c.b16 %v1926, %v1916
      %v2327 = vpack.c.b16 %v1927, %v1917
      %v2328 = vpack.c.b16 %v1928, %v1918
      %v2329 = vpack.c.b16 %v1939, %v1929
      %v2330 = vpack.c.b16 %v1940, %v1930
      %v2331 = vpack.c.b16 %v1941, %v1931
      %v2332 = vpack.c.b16 %v1942, %v1932
      %v2333 = vpack.c.b16 %v1943, %v1933
      %v2334 = vpack.c.b16 %v1944, %v1934
      %v2335 = vpack.c.b16 %v1945, %v1935
      %v2336 = vpack.c.b16 %v1946, %v1936
      %v2337 = vpack.c.b16 %v1947, %v1937
      %v2338 = vpack.c.b16 %v1948, %v1938
      %v2339 = vpack.c.b16 %v1959, %v1949
      %v2340 = vpack.c.b16 %v1960, %v1950
      %v2341 = vpack.c.b16 %v1961, %v1951
      %v2342 = vpack.c.b16 %v1962, %v1952
      %v2343 = vpack.c.b16 %v1963, %v1953
      %v2344 = vpack.c.b16 %v1964, %v1954
      %v2345 = vpack.c.b16 %v1965, %v1955
      %v2346 = vpack.c.b16 %v1966, %v1956
      %v2347 = vpack.c.b16 %v1967, %v1957
      %v2348 = vpack.c.b16 %v1968, %v1958
      %v2349 = vpack.c.b16 %v1979, %v1969
      %v2350 = vpack.c.b16 %v1980, %v1970
      %v2351 = vpack.c.b16 %v1981, %v1971
      %v2352 = vpack.c.b16 %v1982, %v1972
      %v2353 = vpack.c.b16 %v1983, %v1973
      %v2354 = vpack.c.b16 %v1984, %v1974
      %v2355 = vpack.c.b16 %v1985, %v1975
      %v2356 = vpack.c.b16 %v1986, %v1976
      %v2357 = vpack.c.b16 %v1987, %v1977
      %v2358 = vpack.c.b16 %v1988, %v1978
      %v2359 = vpack.c.b16 %v1999, %v1989
      %v2360 = vpack.c.b16 %v2000, %v1990
      %v2361 = vpack.c.b16 %v2001, %v1991
      %v2362 = vpack.c.b16 %v2002, %v1992
      %v2363 = vpack.c.b16 %v2003, %v1993
      %v2364 = vpack.c.b16 %v2004, %v1994
      %v2365 = vpack.c.b16 %v2005, %v1995
      %v2366 = vpack.c.b16 %v2006, %v1996
      %v2367 = vpack.c.b16 %v2007, %v1997
      %v2368 = vpack.c.b16 %v2008, %v1998
      %v2369 = vpack.c.b16 %v2019, %v2009
      %v2370 = vpack.c.b16 %v2020, %v2010
      %v2371 = vpack.c.b16 %v2021, %v2011
      %v2372 = vpack.c.b16 %v2022, %v2012
      %v2373 = vpack.c.b16 %v2023, %v2013
      %v2374 = vpack.c.b16 %v2024, %v2014
      %v2375 = vpack.c.b16 %v2025, %v2015
      %v2376 = vpack.c.b16 %v2026, %v2016
      %v2377 = vpack.c.b16 %v2027, %v2017
      %v2378 = vpack.c.b16 %v2028, %v2018
      %v2379 = vpack.c.b16 %v2039, %v2029
      %v2380 = vpack.c.b16 %v2040, %v2030
      %v2381 = vpack.c.b16 %v2041, %v2031
      %v2382 = vpack.c.b16 %v2042, %v2032
      %v2383 = vpack.c.b16 %v2043, %v2033
      %v2384 = vpack.c.b16 %v2044, %v2034
      %v2385 = vpack.c.b16 %v2045, %v2035
      %v2386 = vpack.c.b16 %v2046, %v2036
      %v2387 = vpack.c.b16 %v2047, %v2037
      %v2388 = vpack.c.b16 %v2048, %v2038
      %v2389 = vpack.c.b16 %v2059, %v2049
      %v2390 = vpack.c.b16 %v2060, %v2050
      %v2391 = vpack.c.b16 %v2061, %v2051
      %v2392 = vpack.c.b16 %v2062, %v2052
      %v2393 = vpack.c.b16 %v2063, %v2053
      %v2394 = vpack.c.b16 %v2064, %v2054
      %v2395 = vpack.c.b16 %v2065, %v2055
      %v2396 = vpack.c.b16 %v2066, %v2056
      %v2397 = vpack.c.b16 %v2067, %v2057
      %v2398 = vpack.c.b16 %v2068, %v2058
      %v2399 = vpack.c.b16 %v2079, %v2069
      %v2400 = vpack.c.b16 %v2080, %v2070
      %v2401 = vpack.c.b16 %v2081, %v2071
      %v2402 = vpack.c.b16 %v2082, %v2072
      %v2403 = vpack.c.b16 %v2083, %v2073
      %v2404 = vpack.c.b16 %v2084, %v2074
      %v2405 = vpack.c.b16 %v2085, %v2075
      %v2406 = vpack.c.b16 %v2086, %v2076
      %v2407 = vpack.c.b16 %v2087, %v2077
      %v2408 = vpack.c.b16 %v2088, %v2078
      %v2889 = vunpack.c.l.b16 %v265
      %v2890 = vunpack.c.h.b16 %v265
      %v2891 = vunpack.c.l.b16 %v266
      %v2892 = vunpack.c.h.b16 %v266
      %v2893 = vunpack.c.l.b16 %v267
      %v2894 = vunpack.c.h.b16 %v267
      %v2895 = vunpack.c.l.b16 %v268
      %v2896 = vunpack.c.h.b16 %v268
      %v2897 = vunpack.c.l.b16 %v269
      %v2898 = vunpack.c.h.b16 %v269
      %v2899 = vunpack.c.l.b16 %v270
      %v2900 = vunpack.c.h.b16 %v270
      %v2901 = vunpack.c.l.b16 %v271
      %v2902 = vunpack.c.h.b16 %v271
      %v2903 = vunpack.c.l.b16 %v272
      %v2904 = vunpack.c.h.b16 %v272
      %v2905 = vunpack.c.l.b16 %v273
      %v2906 = vunpack.c.h.b16 %v273
      %v2907 = vunpack.c.l.b16 %v274
      %v2908 = vunpack.c.h.b16 %v274
      %v2909 = vunpack.c.l.b16 %v275
      %v2910 = vunpack.c.h.b16 %v275
      %v2911 = vunpack.c.l.b16 %v276
      %v2912 = vunpack.c.h.b16 %v276
      %v2913 = vunpack.c.l.b16 %v277
      %v2914 = vunpack.c.h.b16 %v277
      %v2915 = vunpack.c.l.b16 %v278
      %v2916 = vunpack.c.h.b16 %v278
      %v2917 = vunpack.c.l.b16 %v279
      %v2918 = vunpack.c.h.b16 %v279
      %v2919 = vunpack.c.l.b16 %v280
      %v2920 = vunpack.c.h.b16 %v280
      %v2921 = vunpack.c.l.b16 %v281
      %v2922 = vunpack.c.h.b16 %v281
      %v2923 = vunpack.c.l.b16 %v282
      %v2924 = vunpack.c.h.b16 %v282
      %v2925 = vunpack.c.l.b16 %v283
      %v2926 = vunpack.c.h.b16 %v283
      %v2927 = vunpack.c.l.b16 %v284
      %v2928 = vunpack.c.h.b16 %v284
      %v2929 = vunpack.c.l.b16 %v285
      %v2930 = vunpack.c.h.b16 %v285
      %v2931 = vunpack.c.l.b16 %v286
      %v2932 = vunpack.c.h.b16 %v286
      %v2933 = vunpack.c.l.b16 %v287
      %v2934 = vunpack.c.h.b16 %v287
      %v2935 = vunpack.c.l.b16 %v288
      %v2936 = vunpack.c.h.b16 %v288
      %v2937 = vunpack.c.l.b16 %v289
      %v2938 = vunpack.c.h.b16 %v289
      %v2939 = vunpack.c.l.b16 %v290
      %v2940 = vunpack.c.h.b16 %v290
      %v2941 = vunpack.c.l.b16 %v291
      %v2942 = vunpack.c.h.b16 %v291
      %v2943 = vunpack.c.l.b16 %v292
      %v2944 = vunpack.c.h.b16 %v292
      %v2945 = vunpack.c.l.b16 %v293
      %v2946 = vunpack.c.h.b16 %v293
      %v2947 = vunpack.c.l.b16 %v294
      %v2948 = vunpack.c.h.b16 %v294
      %v2949 = vunpack.c.l.b16 %v295
      %v2950 = vunpack.c.h.b16 %v295
      %v2951 = vunpack.c.l.b16 %v296
      %v2952 = vunpack.c.h.b16 %v296
      %v2953 = vunpack.c.l.b16 %v297
      %v2954 = vunpack.c.h.b16 %v297
      %v2955 = vunpack.c.l.b16 %v298
      %v2956 = vunpack.c.h.b16 %v298
      %v2957 = vunpack.c.l.b16 %v299
      %v2958 = vunpack.c.h.b16 %v299
      %v2959 = vunpack.c.l.b16 %v300
      %v2960 = vunpack.c.h.b16 %v300
      %v2961 = vunpack.c.l.b16 %v301
      %v2962 = vunpack.c.h.b16 %v301
      %v2963 = vunpack.c.l.b16 %v302
      %v2964 = vunpack.c.h.b16 %v302
      %v2965 = vunpack.c.l.b16 %v303
      %v2966 = vunpack.c.h.b16 %v303
      %v2967 = vunpack.c.l.b16 %v304
      %v2968 = vunpack.c.h.b16 %v304
      %v2969 = vunpack.c.l.b16 %v305
      %v2970 = vunpack.c.h.b16 %v305
      %v2971 = vunpack.c.l.b16 %v306
      %v2972 = vunpack.c.h.b16 %v306
      %v2973 = vunpack.c.l.b16 %v307
      %v2974 = vunpack.c.h.b16 %v307
      %v2975 = vunpack.c.l.b16 %v308
      %v2976 = vunpack.c.h.b16 %v308
      %v2977 = vunpack.c.l.b16 %v309
      %v2978 = vunpack.c.h.b16 %v309
      %v2979 = vunpack.c.l.b16 %v310
      %v2980 = vunpack.c.h.b16 %v310
      %v2981 = vunpack.c.l.b16 %v311
      %v2982 = vunpack.c.h.b16 %v311
      %v2983 = vunpack.c.l.b16 %v312
      %v2984 = vunpack.c.h.b16 %v312
      %v2985 = vunpack.c.l.b16 %v313
      %v2986 = vunpack.c.h.b16 %v313
      %v2987 = vunpack.c.l.b16 %v314
      %v2988 = vunpack.c.h.b16 %v314
      %v2989 = vunpack.c.l.b16 %v315
      %v2990 = vunpack.c.h.b16 %v315
      %v2991 = vunpack.c.l.b16 %v316
      %v2992 = vunpack.c.h.b16 %v316
      %v2993 = vunpack.c.l.b16 %v317
      %v2994 = vunpack.c.h.b16 %v317
      %v2995 = vunpack.c.l.b16 %v318
      %v2996 = vunpack.c.h.b16 %v318
      %v2997 = vunpack.c.l.b16 %v319
      %v2998 = vunpack.c.h.b16 %v319
      %v2999 = vunpack.c.l.b16 %v320
      %v3000 = vunpack.c.h.b16 %v320
      %v3001 = vunpack.c.l.b16 %v321
      %v3002 = vunpack.c.h.b16 %v321
      %v3003 = vunpack.c.l.b16 %v322
      %v3004 = vunpack.c.h.b16 %v322
      %v3005 = vunpack.c.l.b16 %v323
      %v3006 = vunpack.c.h.b16 %v323
      %v3007 = vunpack.c.l.b16 %v324
      %v3008 = vunpack.c.h.b16 %v324
      %v3009 = vunpack.c.l.b16 %v325
      %v3010 = vunpack.c.h.b16 %v325
      %v3011 = vunpack.c.l.b16 %v326
      %v3012 = vunpack.c.h.b16 %v326
      %v3013 = vunpack.c.l.b16 %v327
      %v3014 = vunpack.c.h.b16 %v327
      %v3015 = vunpack.c.l.b16 %v328
      %v3016 = vunpack.c.h.b16 %v328
      %v3017 = vunpack.c.l.b16 %v329
      %v3018 = vunpack.c.h.b16 %v329
      %v3019 = vunpack.c.l.b16 %v330
      %v3020 = vunpack.c.h.b16 %v330
      %v3021 = vunpack.c.l.b16 %v331
      %v3022 = vunpack.c.h.b16 %v331
      %v3023 = vunpack.c.l.b16 %v332
      %v3024 = vunpack.c.h.b16 %v332
      %v3025 = vunpack.c.l.b16 %v333
      %v3026 = vunpack.c.h.b16 %v333
      %v3027 = vunpack.c.l.b16 %v334
      %v3028 = vunpack.c.h.b16 %v334
      %v3029 = vunpack.c.l.b16 %v335
      %v3030 = vunpack.c.h.b16 %v335
      %v3031 = vunpack.c.l.b16 %v336
      %v3032 = vunpack.c.h.b16 %v336
      %v3033 = vunpack.c.l.b16 %v337
      %v3034 = vunpack.c.h.b16 %v337
      %v3035 = vunpack.c.l.b16 %v338
      %v3036 = vunpack.c.h.b16 %v338
      %v3037 = vunpack.c.l.b16 %v339
      %v3038 = vunpack.c.h.b16 %v339
      %v3039 = vunpack.c.l.b16 %v340
      %v3040 = vunpack.c.h.b16 %v340
      %v3041 = vunpack.c.l.b16 %v341
      %v3042 = vunpack.c.h.b16 %v341
      %v3043 = vunpack.c.l.b16 %v342
      %v3044 = vunpack.c.h.b16 %v342
      %v3045 = vunpack.c.l.b16 %v343
      %v3046 = vunpack.c.h.b16 %v343
      %v3047 = vunpack.c.l.b16 %v344
      %v3048 = vunpack.c.h.b16 %v344
      %v3049 = vunpack.c.l.b16 %v345
      %v3050 = vunpack.c.h.b16 %v345
      %v3051 = vunpack.c.l.b16 %v346
      %v3052 = vunpack.c.h.b16 %v346
      %v3053 = vunpack.c.l.b16 %v347
      %v3054 = vunpack.c.h.b16 %v347
      %v3055 = vunpack.c.l.b16 %v348
      %v3056 = vunpack.c.h.b16 %v348
      %v3057 = vunpack.c.l.b16 %v349
      %v3058 = vunpack.c.h.b16 %v349
      %v3059 = vunpack.c.l.b16 %v350
      %v3060 = vunpack.c.h.b16 %v350
      %v3061 = vunpack.c.l.b16 %v351
      %v3062 = vunpack.c.h.b16 %v351
      %v3063 = vunpack.c.l.b16 %v352
      %v3064 = vunpack.c.h.b16 %v352
      %v3065 = vunpack.c.l.b16 %v353
      %v3066 = vunpack.c.h.b16 %v353
      %v3067 = vunpack.c.l.b16 %v354
      %v3068 = vunpack.c.h.b16 %v354
      %v3069 = vunpack.c.l.b16 %v355
      %v3070 = vunpack.c.h.b16 %v355
      %v3071 = vunpack.c.l.b16 %v356
      %v3072 = vunpack.c.h.b16 %v356
      %v3073 = vunpack.c.l.b16 %v357
      %v3074 = vunpack.c.h.b16 %v357
      %v3075 = vunpack.c.l.b16 %v358
      %v3076 = vunpack.c.h.b16 %v358
      %v3077 = vunpack.c.l.b16 %v359
      %v3078 = vunpack.c.h.b16 %v359
      %v3079 = vunpack.c.l.b16 %v360
      %v3080 = vunpack.c.h.b16 %v360
      %v3081 = vunpack.c.l.b16 %v361
      %v3082 = vunpack.c.h.b16 %v361
      %v3083 = vunpack.c.l.b16 %v362
      %v3084 = vunpack.c.h.b16 %v362
      %v3085 = vunpack.c.l.b16 %v363
      %v3086 = vunpack.c.h.b16 %v363
      %v3087 = vunpack.c.l.b16 %v364
      %v3088 = vunpack.c.h.b16 %v364
      %v3089 = vunpack.c.l.b16 %v365
      %v3090 = vunpack.c.h.b16 %v365
      %v3091 = vunpack.c.l.b16 %v366
      %v3092 = vunpack.c.h.b16 %v366
      %v3093 = vunpack.c.l.b16 %v367
      %v3094 = vunpack.c.h.b16 %v367
      %v3095 = vunpack.c.l.b16 %v368
      %v3096 = vunpack.c.h.b16 %v368
      %v3097 = vunpack.c.l.b16 %v369
      %v3098 = vunpack.c.h.b16 %v369
      %v3099 = vunpack.c.l.b16 %v370
      %v3100 = vunpack.c.h.b16 %v370
      %v3101 = vunpack.c.l.b16 %v371
      %v3102 = vunpack.c.h.b16 %v371
      %v3103 = vunpack.c.l.b16 %v372
      %v3104 = vunpack.c.h.b16 %v372
      %v3105 = vunpack.c.l.b16 %v373
      %v3106 = vunpack.c.h.b16 %v373
      %v3107 = vunpack.c.l.b16 %v374
      %v3108 = vunpack.c.h.b16 %v374
      %v3109 = vunpack.c.l.b16 %v375
      %v3110 = vunpack.c.h.b16 %v375
      %v3111 = vunpack.c.l.b16 %v376
      %v3112 = vunpack.c.h.b16 %v376
      %v3113 = vunpack.c.l.b16 %v377
      %v3114 = vunpack.c.h.b16 %v377
      %v3115 = vunpack.c.l.b16 %v378
      %v3116 = vunpack.c.h.b16 %v378
      %v3117 = vunpack.c.l.b16 %v379
      %v3118 = vunpack.c.h.b16 %v379
      %v3119 = vunpack.c.l.b16 %v380
      %v3120 = vunpack.c.h.b16 %v380
      %v3121 = vunpack.c.l.b16 %v381
      %v3122 = vunpack.c.h.b16 %v381
      %v3123 = vunpack.c.l.b16 %v382
      %v3124 = vunpack.c.h.b16 %v382
      %v3125 = vunpack.c.l.b16 %v383
      %v3126 = vunpack.c.h.b16 %v383
      %v3127 = vunpack.c.l.b16 %v384
      %v3128 = vunpack.c.h.b16 %v384
      %v3129 = vunpack.c.l.b16 %v385
      %v3130 = vunpack.c.h.b16 %v385
      %v3131 = vunpack.c.l.b16 %v386
      %v3132 = vunpack.c.h.b16 %v386
      %v3133 = vunpack.c.l.b16 %v387
      %v3134 = vunpack.c.h.b16 %v387
      %v3135 = vunpack.c.l.b16 %v388
      %v3136 = vunpack.c.h.b16 %v388
      %v3137 = vunpack.c.l.b16 %v389
      %v3138 = vunpack.c.h.b16 %v389
      %v3139 = vunpack.c.l.b16 %v390
      %v3140 = vunpack.c.h.b16 %v390
      %v3141 = vunpack.c.l.b16 %v391
      %v3142 = vunpack.c.h.b16 %v391
      %v3143 = vunpack.c.l.b16 %v392
      %v3144 = vunpack.c.h.b16 %v392
      %v3145 = vunpack.c.l.b16 %v393
      %v3146 = vunpack.c.h.b16 %v393
      %v3147 = vunpack.c.l.b16 %v394
      %v3148 = vunpack.c.h.b16 %v394
      %v3149 = vunpack.c.l.b16 %v395
      %v3150 = vunpack.c.h.b16 %v395
      %v3151 = vunpack.c.l.b16 %v396
      %v3152 = vunpack.c.h.b16 %v396
      %v3153 = vunpack.c.l.b16 %v397
      %v3154 = vunpack.c.h.b16 %v397
      %v3155 = vunpack.c.l.b16 %v398
      %v3156 = vunpack.c.h.b16 %v398
      %v3157 = vunpack.c.l.b16 %v399
      %v3158 = vunpack.c.h.b16 %v399
      %v3159 = vunpack.c.l.b16 %v400
      %v3160 = vunpack.c.h.b16 %v400
      %v3161 = vunpack.c.l.b16 %v401
      %v3162 = vunpack.c.h.b16 %v401
      %v3163 = vunpack.c.l.b16 %v402
      %v3164 = vunpack.c.h.b16 %v402
      %v3165 = vunpack.c.l.b16 %v403
      %v3166 = vunpack.c.h.b16 %v403
      %v3167 = vunpack.c.l.b16 %v404
      %v3168 = vunpack.c.h.b16 %v404
      %v3169 = vunpack.c.l.b16 %v405
      %v3170 = vunpack.c.h.b16 %v405
      %v3171 = vunpack.c.l.b16 %v406
      %v3172 = vunpack.c.h.b16 %v406
      %v3173 = vunpack.c.l.b16 %v407
      %v3174 = vunpack.c.h.b16 %v407
      %v3175 = vunpack.c.l.b16 %v408
      %v3176 = vunpack.c.h.b16 %v408
      %v3177 = vunpack.c.l.b16 %v409
      %v3178 = vunpack.c.h.b16 %v409
      %v3179 = vunpack.c.l.b16 %v410
      %v3180 = vunpack.c.h.b16 %v410
      %v3181 = vunpack.c.l.b16 %v411
      %v3182 = vunpack.c.h.b16 %v411
      %v3183 = vunpack.c.l.b16 %v412
      %v3184 = vunpack.c.h.b16 %v412
      %v3185 = vunpack.c.l.b16 %v413
      %v3186 = vunpack.c.h.b16 %v413
      %v3187 = vunpack.c.l.b16 %v414
      %v3188 = vunpack.c.h.b16 %v414
      %v3189 = vunpack.c.l.b16 %v415
      %v3190 = vunpack.c.h.b16 %v415
      %v3191 = vunpack.c.l.b16 %v416
      %v3192 = vunpack.c.h.b16 %v416
      %v3193 = vunpack.c.l.b16 %v417
      %v3194 = vunpack.c.h.b16 %v417
      %v3195 = vunpack.c.l.b16 %v418
      %v3196 = vunpack.c.h.b16 %v418
      %v3197 = vunpack.c.l.b16 %v419
      %v3198 = vunpack.c.h.b16 %v419
      %v3199 = vunpack.c.l.b16 %v420
      %v3200 = vunpack.c.h.b16 %v420
      %v3201 = vunpack.c.l.b16 %v421
      %v3202 = vunpack.c.h.b16 %v421
      %v3203 = vunpack.c.l.b16 %v422
      %v3204 = vunpack.c.h.b16 %v422
      %v3205 = vunpack.c.l.b16 %v423
      %v3206 = vunpack.c.h.b16 %v423
      %v3207 = vunpack.c.l.b16 %v424
      %v3208 = vunpack.c.h.b16 %v424
      %v3209 = vpack.c.b16 %v2891, %v2889
      %v3210 = vpack.c.b16 %v2892, %v2890
      %v3211 = vpack.c.b16 %v2895, %v2893
      %v3212 = vpack.c.b16 %v2896, %v2894
      %v3213 = vpack.c.b16 %v2899, %v2897
      %v3214 = vpack.c.b16 %v2900, %v2898
      %v3215 = vpack.c.b16 %v2903, %v2901
      %v3216 = vpack.c.b16 %v2904, %v2902
      %v3217 = vpack.c.b16 %v2907, %v2905
      %v3218 = vpack.c.b16 %v2908, %v2906
      %v3219 = vpack.c.b16 %v2911, %v2909
      %v3220 = vpack.c.b16 %v2912, %v2910
      %v3221 = vpack.c.b16 %v2915, %v2913
      %v3222 = vpack.c.b16 %v2916, %v2914
      %v3223 = vpack.c.b16 %v2919, %v2917
      %v3224 = vpack.c.b16 %v2920, %v2918
      %v3225 = vpack.c.b16 %v2923, %v2921
      %v3226 = vpack.c.b16 %v2924, %v2922
      %v3227 = vpack.c.b16 %v2927, %v2925
      %v3228 = vpack.c.b16 %v2928, %v2926
      %v3229 = vpack.c.b16 %v2931, %v2929
      %v3230 = vpack.c.b16 %v2932, %v2930
      %v3231 = vpack.c.b16 %v2935, %v2933
      %v3232 = vpack.c.b16 %v2936, %v2934
      %v3233 = vpack.c.b16 %v2939, %v2937
      %v3234 = vpack.c.b16 %v2940, %v2938
      %v3235 = vpack.c.b16 %v2943, %v2941
      %v3236 = vpack.c.b16 %v2944, %v2942
      %v3237 = vpack.c.b16 %v2947, %v2945
      %v3238 = vpack.c.b16 %v2948, %v2946
      %v3239 = vpack.c.b16 %v2951, %v2949
      %v3240 = vpack.c.b16 %v2952, %v2950
      %v3241 = vpack.c.b16 %v2955, %v2953
      %v3242 = vpack.c.b16 %v2956, %v2954
      %v3243 = vpack.c.b16 %v2959, %v2957
      %v3244 = vpack.c.b16 %v2960, %v2958
      %v3245 = vpack.c.b16 %v2963, %v2961
      %v3246 = vpack.c.b16 %v2964, %v2962
      %v3247 = vpack.c.b16 %v2967, %v2965
      %v3248 = vpack.c.b16 %v2968, %v2966
      %v3249 = vpack.c.b16 %v2971, %v2969
      %v3250 = vpack.c.b16 %v2972, %v2970
      %v3251 = vpack.c.b16 %v2975, %v2973
      %v3252 = vpack.c.b16 %v2976, %v2974
      %v3253 = vpack.c.b16 %v2979, %v2977
      %v3254 = vpack.c.b16 %v2980, %v2978
      %v3255 = vpack.c.b16 %v2983, %v2981
      %v3256 = vpack.c.b16 %v2984, %v2982
      %v3257 = vpack.c.b16 %v2987, %v2985
      %v3258 = vpack.c.b16 %v2988, %v2986
      %v3259 = vpack.c.b16 %v2991, %v2989
      %v3260 = vpack.c.b16 %v2992, %v2990
      %v3261 = vpack.c.b16 %v2995, %v2993
      %v3262 = vpack.c.b16 %v2996, %v2994
      %v3263 = vpack.c.b16 %v2999, %v2997
      %v3264 = vpack.c.b16 %v3000, %v2998
      %v3265 = vpack.c.b16 %v3003, %v3001
      %v3266 = vpack.c.b16 %v3004, %v3002
      %v3267 = vpack.c.b16 %v3007, %v3005
      %v3268 = vpack.c.b16 %v3008, %v3006
      %v3269 = vpack.c.b16 %v3011, %v3009
      %v3270 = vpack.c.b16 %v3012, %v3010
      %v3271 = vpack.c.b16 %v3015, %v3013
      %v3272 = vpack.c.b16 %v3016, %v3014
      %v3273 = vpack.c.b16 %v3019, %v3017
      %v3274 = vpack.c.b16 %v3020, %v3018
      %v3275 = vpack.c.b16 %v3023, %v3021
      %v3276 = vpack.c.b16 %v3024, %v3022
      %v3277 = vpack.c.b16 %v3027, %v3025
      %v3278 = vpack.c.b16 %v3028, %v3026
      %v3279 = vpack.c.b16 %v3031, %v3029
      %v3280 = vpack.c.b16 %v3032, %v3030
      %v3281 = vpack.c.b16 %v3035, %v3033
      %v3282 = vpack.c.b16 %v3036, %v3034
      %v3283 = vpack.c.b16 %v3039, %v3037
      %v3284 = vpack.c.b16 %v3040, %v3038
      %v3285 = vpack.c.b16 %v3043, %v3041
      %v3286 = vpack.c.b16 %v3044, %v3042
      %v3287 = vpack.c.b16 %v3047, %v3045
      %v3288 = vpack.c.b16 %v3048, %v3046
      %v3289 = vpack.c.b16 %v3051, %v3049
      %v3290 = vpack.c.b16 %v3052, %v3050
      %v3291 = vpack.c.b16 %v3055, %v3053
      %v3292 = vpack.c.b16 %v3056, %v3054
      %v3293 = vpack.c.b16 %v3059, %v3057
      %v3294 = vpack.c.b16 %v3060, %v3058
      %v3295 = vpack.c.b16 %v3063, %v3061
      %v3296 = vpack.c.b16 %v3064, %v3062
      %v3297 = vpack.c.b16 %v3067, %v3065
      %v3298 = vpack.c.b16 %v3068, %v3066
      %v3299 = vpack.c.b16 %v3071, %v3069
      %v3300 = vpack.c.b16 %v3072, %v3070
      %v3301 = vpack.c.b16 %v3075, %v3073
      %v3302 = vpack.c.b16 %v3076, %v3074
      %v3303 = vpack.c.b16 %v3079, %v3077
      %v3304 = vpack.c.b16 %v3080, %v3078
      %v3305 = vpack.c.b16 %v3083, %v3081
      %v3306 = vpack.c.b16 %v3084, %v3082
      %v3307 = vpack.c.b16 %v3087, %v3085
      %v3308 = vpack.c.b16 %v3088, %v3086
      %v3309 = vpack.c.b16 %v3091, %v3089
      %v3310 = vpack.c.b16 %v3092, %v3090
      %v3311 = vpack.c.b16 %v3095, %v3093
      %v3312 = vpack.c.b16 %v3096, %v3094
      %v3313 = vpack.c.b16 %v3099, %v3097
      %v3314 = vpack.c.b16 %v3100, %v3098
      %v3315 = vpack.c.b16 %v3103, %v3101
      %v3316 = vpack.c.b16 %v3104, %v3102
      %v3317 = vpack.c.b16 %v3107, %v3105
      %v3318 = vpack.c.b16 %v3108, %v3106
      %v3319 = vpack.c.b16 %v3111, %v3109
      %v3320 = vpack.c.b16 %v3112, %v3110
      %v3321 = vpack.c.b16 %v3115, %v3113
      %v3322 = vpack.c.b16 %v3116, %v3114
      %v3323 = vpack.c.b16 %v3119, %v3117
      %v3324 = vpack.c.b16 %v3120, %v3118
      %v3325 = vpack.c.b16 %v3123, %v3121
      %v3326 = vpack.c.b16 %v3124, %v3122
      %v3327 = vpack.c.b16 %v3127, %v3125
      %v3328 = vpack.c.b16 %v3128, %v3126
      %v3329 = vpack.c.b16 %v3131, %v3129
      %v3330 = vpack.c.b16 %v3132, %v3130
      %v3331 = vpack.c.b16 %v3135, %v3133
      %v3332 = vpack.c.b16 %v3136, %v3134
      %v3333 = vpack.c.b16 %v3139, %v3137
      %v3334 = vpack.c.b16 %v3140, %v3138
      %v3335 = vpack.c.b16 %v3143, %v3141
      %v3336 = vpack.c.b16 %v3144, %v3142
      %v3337 = vpack.c.b16 %v3147, %v3145
      %v3338 = vpack.c.b16 %v3148, %v3146
      %v3339 = vpack.c.b16 %v3151, %v3149
      %v3340 = vpack.c.b16 %v3152, %v3150
      %v3341 = vpack.c.b16 %v3155, %v3153
      %v3342 = vpack.c.b16 %v3156, %v3154
      %v3343 = vpack.c.b16 %v3159, %v3157
      %v3344 = vpack.c.b16 %v3160, %v3158
      %v3345 = vpack.c.b16 %v3163, %v3161
      %v3346 = vpack.c.b16 %v3164, %v3162
      %v3347 = vpack.c.b16 %v3167, %v3165
      %v3348 = vpack.c.b16 %v3168, %v3166
      %v3349 = vpack.c.b16 %v3171, %v3169
      %v3350 = vpack.c.b16 %v3172, %v3170
      %v3351 = vpack.c.b16 %v3175, %v3173
      %v3352 = vpack.c.b16 %v3176, %v3174
      %v3353 = vpack.c.b16 %v3179, %v3177
      %v3354 = vpack.c.b16 %v3180, %v3178
      %v3355 = vpack.c.b16 %v3183, %v3181
      %v3356 = vpack.c.b16 %v3184, %v3182
      %v3357 = vpack.c.b16 %v3187, %v3185
      %v3358 = vpack.c.b16 %v3188, %v3186
      %v3359 = vpack.c.b16 %v3191, %v3189
      %v3360 = vpack.c.b16 %v3192, %v3190
      %v3361 = vpack.c.b16 %v3195, %v3193
      %v3362 = vpack.c.b16 %v3196, %v3194
      %v3363 = vpack.c.b16 %v3199, %v3197
      %v3364 = vpack.c.b16 %v3200, %v3198
      %v3365 = vpack.c.b16 %v3203, %v3201
      %v3366 = vpack.c.b16 %v3204, %v3202
      %v3367 = vpack.c.b16 %v3207, %v3205
      %v3368 = vpack.c.b16 %v3208, %v3206
      %3529 = vmatprep.subr.bf16.mxu0 %v3210
      %3530 = vmatpush1.bf16.msra.mxu0 %v3209
      %3531 = vmatprep.subr.bf16.mxu0 %v3212
      %3532 = vmatpush1.bf16.msra.mxu0 %v3211
      %3533 = vmatprep.subr.bf16.mxu0 %v3214
      %3534 = vmatpush1.bf16.msra.mxu0 %v3213
      %3535 = vmatprep.subr.bf16.mxu0 %v3216
      %3536 = vmatpush1.bf16.msra.mxu0 %v3215
      %3537 = vmatprep.subr.bf16.mxu0 %v3218
      %3538 = vmatpush1.bf16.msra.mxu0 %v3217
      %3539 = vmatprep.subr.bf16.mxu0 %v3220
      %3540 = vmatpush1.bf16.msra.mxu0 %v3219
      %3541 = vmatprep.subr.bf16.mxu0 %v3222
      %3542 = vmatpush1.bf16.msra.mxu0 %v3221
      %3543 = vmatprep.subr.bf16.mxu0 %v3224
      %3544 = vmatpush1.bf16.msra.mxu0 %v3223
      %3545 = vmatprep.subr.bf16.mxu0 %v3226
      %3546 = vmatpush1.bf16.msra.mxu0 %v3225
      %3547 = vmatprep.subr.bf16.mxu0 %v3228
      %3548 = vmatpush1.bf16.msra.mxu0 %v3227
      %3549 = vmatprep.subr.bf16.mxu0 %v3230
      %3550 = vmatpush1.bf16.msra.mxu0 %v3229
      %3551 = vmatprep.subr.bf16.mxu0 %v3232
      %3552 = vmatpush1.bf16.msra.mxu0 %v3231
      %3553 = vmatprep.subr.bf16.mxu0 %v3234
      %3554 = vmatpush1.bf16.msra.mxu0 %v3233
      %3555 = vmatprep.subr.bf16.mxu0 %v3236
      %3556 = vmatpush1.bf16.msra.mxu0 %v3235
      %3557 = vmatprep.subr.bf16.mxu0 %v3238
      %3558 = vmatpush1.bf16.msra.mxu0 %v3237
      %3559 = vmatprep.subr.bf16.mxu0 %v3240
      %3560 = vmatpush1.bf16.msra.mxu0 %v3239
      %3561 = vmatprep.mubr.bf16.mxu0 %v2090
      %3562 = vmatmul.mubr.bf16.gmra.mrb[0].mxu0 %v2089
      %v3563 = vpop.f32.mrb[0].mxu0
      %v3564 = vadd.f32 %v812, %v3563
      %v3565 = vpop.f32.mrb[0].mxu0
      %v3566 = vadd.f32 %v812, %v3565
      %v3567 = vpop.f32.mrb[0].mxu0
      %v3568 = vadd.f32 %v817, %v3567
      %v3569 = vpop.f32.mrb[0].mxu0
      %v3570 = vadd.f32 %v817, %v3569
      %3571 = vmatprep.mubr.bf16.mxu0 %v2100
      %3572 = vmatmul.mubr.bf16.gmra.mrb[0].mxu0 %v2099
      %v3573 = vpop.f32.mrb[0].mxu0
      %v3574 = vadd.f32 %v822, %v3573
      %v3575 = vpop.f32.mrb[0].mxu0
      %v3576 = vadd.f32 %v822, %v3575
      %v3577 = vpop.f32.mrb[0].mxu0
      %v3578 = vadd.f32 %v827, %v3577
      %v3579 = vpop.f32.mrb[0].mxu0
      %v3580 = vadd.f32 %v827, %v3579
      %3581 = vmatprep.mubr.bf16.mxu0 %v2110
      %3582 = vmatmul.mubr.bf16.gmra.mrb[0].mxu0 %v2109
      %v3583 = vpop.f32.mrb[0].mxu0
      %v3584 = vadd.f32 %v832, %v3583
      %v3585 = vpop.f32.mrb[0].mxu0
      %v3586 = vadd.f32 %v832, %v3585
      %v3587 = vpop.f32.mrb[0].mxu0
      %v3588 = vadd.f32 %v837, %v3587
      %v3589 = vpop.f32.mrb[0].mxu0
      %v3590 = vadd.f32 %v837, %v3589
      %3591 = vmatprep.mubr.bf16.mxu0 %v2120
      %3592 = vmatmul.mubr.bf16.gmra.mrb[0].mxu0 %v2119
      %v3593 = vpop.f32.mrb[0].mxu0
      %v3594 = vadd.f32 %v842, %v3593
      %v3595 = vpop.f32.mrb[0].mxu0
      %v3596 = vadd.f32 %v842, %v3595
      %v3597 = vpop.f32.mrb[0].mxu0
      %v3598 = vadd.f32 %v847, %v3597
      %v3599 = vpop.f32.mrb[0].mxu0
      %v3600 = vadd.f32 %v847, %v3599
      %3601 = vmatprep.mubr.bf16.mxu0 %v2130
      %3602 = vmatmul.mubr.bf16.gmra.mrb[0].mxu0 %v2129
      %v3603 = vpop.f32.mrb[0].mxu0
      %v3604 = vadd.f32 %v852, %v3603
      %v3605 = vpop.f32.mrb[0].mxu0
      %v3606 = vadd.f32 %v852, %v3605
      %v3607 = vpop.f32.mrb[0].mxu0
      %v3608 = vadd.f32 %v857, %v3607
      %v3609 = vpop.f32.mrb[0].mxu0
      %v3610 = vadd.f32 %v857, %v3609
      %3611 = vmatprep.mubr.bf16.mxu0 %v2140
      %3612 = vmatmul.mubr.bf16.gmra.mrb[0].mxu0 %v2139
      %v3613 = vpop.f32.mrb[0].mxu0
      %v3614 = vadd.f32 %v862, %v3613
      %v3615 = vpop.f32.mrb[0].mxu0
      %v3616 = vadd.f32 %v862, %v3615
      %v3617 = vpop.f32.mrb[0].mxu0
      %v3618 = vadd.f32 %v867, %v3617
      %v3619 = vpop.f32.mrb[0].mxu0
      %v3620 = vadd.f32 %v867, %v3619
      %3621 = vmatprep.mubr.bf16.mxu0 %v2150
      %3622 = vmatmul.mubr.bf16.gmra.mrb[0].mxu0 %v2149
      %v3623 = vpop.f32.mrb[0].mxu0
      %v3624 = vadd.f32 %v872, %v3623
      %v3625 = vpop.f32.mrb[0].mxu0
      %v3626 = vadd.f32 %v872, %v3625
      %v3627 = vpop.f32.mrb[0].mxu0
      %v3628 = vadd.f32 %v877, %v3627
      %v3629 = vpop.f32.mrb[0].mxu0
      %v3630 = vadd.f32 %v877, %v3629
      %3631 = vmatprep.mubr.bf16.mxu0 %v2160
      %3632 = vmatmul.mubr.bf16.gmra.mrb[0].mxu0 %v2159
      %v3633 = vpop.f32.mrb[0].mxu0
      %v3634 = vadd.f32 %v882, %v3633
      %v3635 = vpop.f32.mrb[0].mxu0
      %v3636 = vadd.f32 %v882, %v3635
      %v3637 = vpop.f32.mrb[0].mxu0
      %v3638 = vadd.f32 %v887, %v3637
      %v3639 = vpop.f32.mrb[0].mxu0
      %v3640 = vadd.f32 %v887, %v3639
      %3641 = vmatprep.mubr.bf16.mxu0 %v2170
      %3642 = vmatmul.mubr.bf16.gmra.mrb[0].mxu0 %v2169
      %v3643 = vpop.f32.mrb[0].mxu0
      %v3644 = vadd.f32 %v892, %v3643
      %v3645 = vpop.f32.mrb[0].mxu0
      %v3646 = vadd.f32 %v892, %v3645
      %v3647 = vpop.f32.mrb[0].mxu0
      %v3648 = vadd.f32 %v897, %v3647
      %v3649 = vpop.f32.mrb[0].mxu0
      %v3650 = vadd.f32 %v897, %v3649
      %3651 = vmatprep.mubr.bf16.mxu0 %v2180
      %3652 = vmatmul.mubr.bf16.gmra.mrb[0].mxu0 %v2179
      %v3653 = vpop.f32.mrb[0].mxu0
      %v3654 = vadd.f32 %v902, %v3653
      %v3655 = vpop.f32.mrb[0].mxu0
      %v3656 = vadd.f32 %v902, %v3655
      %v3657 = vpop.f32.mrb[0].mxu0
      %v3658 = vadd.f32 %v907, %v3657
      %v3659 = vpop.f32.mrb[0].mxu0
      %v3660 = vadd.f32 %v907, %v3659
      %3661 = vmatprep.mubr.bf16.mxu0 %v2190
      %3662 = vmatmul.mubr.bf16.gmra.mrb[0].mxu0 %v2189
      %v3663 = vpop.f32.mrb[0].mxu0
      %v3664 = vadd.f32 %v912, %v3663
      %v3665 = vpop.f32.mrb[0].mxu0
      %v3666 = vadd.f32 %v912, %v3665
      %v3667 = vpop.f32.mrb[0].mxu0
      %v3668 = vadd.f32 %v917, %v3667
      %v3669 = vpop.f32.mrb[0].mxu0
      %v3670 = vadd.f32 %v917, %v3669
      %3671 = vmatprep.mubr.bf16.mxu0 %v2200
      %3672 = vmatmul.mubr.bf16.gmra.mrb[0].mxu0 %v2199
      %v3673 = vpop.f32.mrb[0].mxu0
      %v3674 = vadd.f32 %v922, %v3673
      %v3675 = vpop.f32.mrb[0].mxu0
      %v3676 = vadd.f32 %v922, %v3675
      %v3677 = vpop.f32.mrb[0].mxu0
      %v3678 = vadd.f32 %v927, %v3677
      %v3679 = vpop.f32.mrb[0].mxu0
      %v3680 = vadd.f32 %v927, %v3679
      %3681 = vmatprep.mubr.bf16.mxu0 %v2210
      %3682 = vmatmul.mubr.bf16.gmra.mrb[0].mxu0 %v2209
      %v3683 = vpop.f32.mrb[0].mxu0
      %v3684 = vadd.f32 %v932, %v3683
      %v3685 = vpop.f32.mrb[0].mxu0
      %v3686 = vadd.f32 %v932, %v3685
      %v3687 = vpop.f32.mrb[0].mxu0
      %v3688 = vadd.f32 %v937, %v3687
      %v3689 = vpop.f32.mrb[0].mxu0
      %v3690 = vadd.f32 %v937, %v3689
      %3691 = vmatprep.mubr.bf16.mxu0 %v2220
      %3692 = vmatmul.mubr.bf16.gmra.mrb[0].mxu0 %v2219
      %v3693 = vpop.f32.mrb[0].mxu0
      %v3694 = vadd.f32 %v942, %v3693
      %v3695 = vpop.f32.mrb[0].mxu0
      %v3696 = vadd.f32 %v942, %v3695
      %v3697 = vpop.f32.mrb[0].mxu0
      %v3698 = vadd.f32 %v947, %v3697
      %v3699 = vpop.f32.mrb[0].mxu0
      %v3700 = vadd.f32 %v947, %v3699
      %3701 = vmatprep.mubr.bf16.mxu0 %v2230
      %3702 = vmatmul.mubr.bf16.gmra.mrb[0].mxu0 %v2229
      %v3703 = vpop.f32.mrb[0].mxu0
      %v3704 = vadd.f32 %v952, %v3703
      %v3705 = vpop.f32.mrb[0].mxu0
      %v3706 = vadd.f32 %v952, %v3705
      %v3707 = vpop.f32.mrb[0].mxu0
      %v3708 = vadd.f32 %v957, %v3707
      %v3709 = vpop.f32.mrb[0].mxu0
      %v3710 = vadd.f32 %v957, %v3709
      %3711 = vmatprep.mubr.bf16.mxu0 %v2240
      %3712 = vmatmul.mubr.bf16.gmra.mrb[0].mxu0 %v2239
      %v3713 = vpop.f32.mrb[0].mxu0
      %v3714 = vadd.f32 %v962, %v3713
      %v3715 = vpop.f32.mrb[0].mxu0
      %v3716 = vadd.f32 %v962, %v3715
      %v3717 = vpop.f32.mrb[0].mxu0
      %v3718 = vadd.f32 %v967, %v3717
      %v3719 = vpop.f32.mrb[0].mxu0
      %v3720 = vadd.f32 %v967, %v3719
      %3721 = vmatprep.mubr.bf16.mxu0 %v2250
      %3722 = vmatmul.mubr.bf16.gmra.mrb[0].mxu0 %v2249
      %v3723 = vpop.f32.mrb[0].mxu0
      %v3724 = vadd.f32 %v972, %v3723
      %v3725 = vpop.f32.mrb[0].mxu0
      %v3726 = vadd.f32 %v972, %v3725
      %v3727 = vpop.f32.mrb[0].mxu0
      %v3728 = vadd.f32 %v977, %v3727
      %v3729 = vpop.f32.mrb[0].mxu0
      %v3730 = vadd.f32 %v977, %v3729
      %3731 = vmatprep.mubr.bf16.mxu0 %v2260
      %3732 = vmatmul.mubr.bf16.gmra.mrb[0].mxu0 %v2259
      %v3733 = vpop.f32.mrb[0].mxu0
      %v3734 = vadd.f32 %v982, %v3733
      %v3735 = vpop.f32.mrb[0].mxu0
      %v3736 = vadd.f32 %v982, %v3735
      %v3737 = vpop.f32.mrb[0].mxu0
      %v3738 = vadd.f32 %v987, %v3737
      %v3739 = vpop.f32.mrb[0].mxu0
      %v3740 = vadd.f32 %v987, %v3739
      %3741 = vmatprep.mubr.bf16.mxu0 %v2270
      %3742 = vmatmul.mubr.bf16.gmra.mrb[0].mxu0 %v2269
      %v3743 = vpop.f32.mrb[0].mxu0
      %v3744 = vadd.f32 %v992, %v3743
      %v3745 = vpop.f32.mrb[0].mxu0
      %v3746 = vadd.f32 %v992, %v3745
      %v3747 = vpop.f32.mrb[0].mxu0
      %v3748 = vadd.f32 %v997, %v3747
      %v3749 = vpop.f32.mrb[0].mxu0
      %v3750 = vadd.f32 %v997, %v3749
      %3751 = vmatprep.mubr.bf16.mxu0 %v2280
      %3752 = vmatmul.mubr.bf16.gmra.mrb[0].mxu0 %v2279
      %v3753 = vpop.f32.mrb[0].mxu0
      %v3754 = vadd.f32 %v1002, %v3753
      %v3755 = vpop.f32.mrb[0].mxu0
      %v3756 = vadd.f32 %v1002, %v3755
      %v3757 = vpop.f32.mrb[0].mxu0
      %v3758 = vadd.f32 %v1007, %v3757
      %v3759 = vpop.f32.mrb[0].mxu0
      %v3760 = vadd.f32 %v1007, %v3759
      %3761 = vmatprep.mubr.bf16.mxu0 %v2290
      %3762 = vmatmul.mubr.bf16.gmra.mrb[0].mxu0 %v2289
      %v3763 = vpop.f32.mrb[0].mxu0
      %v3764 = vadd.f32 %v1012, %v3763
      %v3765 = vpop.f32.mrb[0].mxu0
      %v3766 = vadd.f32 %v1012, %v3765
      %v3767 = vpop.f32.mrb[0].mxu0
      %v3768 = vadd.f32 %v1017, %v3767
      %v3769 = vpop.f32.mrb[0].mxu0
      %v3770 = vadd.f32 %v1017, %v3769
      %3771 = vmatprep.mubr.bf16.mxu0 %v2300
      %3772 = vmatmul.mubr.bf16.gmra.mrb[0].mxu0 %v2299
      %v3773 = vpop.f32.mrb[0].mxu0
      %v3774 = vadd.f32 %v1022, %v3773
      %v3775 = vpop.f32.mrb[0].mxu0
      %v3776 = vadd.f32 %v1022, %v3775
      %v3777 = vpop.f32.mrb[0].mxu0
      %v3778 = vadd.f32 %v1027, %v3777
      %v3779 = vpop.f32.mrb[0].mxu0
      %v3780 = vadd.f32 %v1027, %v3779
      %3781 = vmatprep.mubr.bf16.mxu0 %v2310
      %3782 = vmatmul.mubr.bf16.gmra.mrb[0].mxu0 %v2309
      %v3783 = vpop.f32.mrb[0].mxu0
      %v3784 = vadd.f32 %v1032, %v3783
      %v3785 = vpop.f32.mrb[0].mxu0
      %v3786 = vadd.f32 %v1032, %v3785
      %v3787 = vpop.f32.mrb[0].mxu0
      %v3788 = vadd.f32 %v1037, %v3787
      %v3789 = vpop.f32.mrb[0].mxu0
      %v3790 = vadd.f32 %v1037, %v3789
      %3791 = vmatprep.mubr.bf16.mxu0 %v2320
      %3792 = vmatmul.mubr.bf16.gmra.mrb[0].mxu0 %v2319
      %v3793 = vpop.f32.mrb[0].mxu0
      %v3794 = vadd.f32 %v1042, %v3793
      %v3795 = vpop.f32.mrb[0].mxu0
      %v3796 = vadd.f32 %v1042, %v3795
      %v3797 = vpop.f32.mrb[0].mxu0
      %v3798 = vadd.f32 %v1047, %v3797
      %v3799 = vpop.f32.mrb[0].mxu0
      %v3800 = vadd.f32 %v1047, %v3799
      %3801 = vmatprep.mubr.bf16.mxu0 %v2330
      %3802 = vmatmul.mubr.bf16.gmra.mrb[0].mxu0 %v2329
      %v3803 = vpop.f32.mrb[0].mxu0
      %v3804 = vadd.f32 %v1052, %v3803
      %v3805 = vpop.f32.mrb[0].mxu0
      %v3806 = vadd.f32 %v1052, %v3805
      %v3807 = vpop.f32.mrb[0].mxu0
      %v3808 = vadd.f32 %v1057, %v3807
      %v3809 = vpop.f32.mrb[0].mxu0
      %v3810 = vadd.f32 %v1057, %v3809
      %3811 = vmatprep.mubr.bf16.mxu0 %v2340
      %3812 = vmatmul.mubr.bf16.gmra.mrb[0].mxu0 %v2339
      %v3813 = vpop.f32.mrb[0].mxu0
      %v3814 = vadd.f32 %v1062, %v3813
      %v3815 = vpop.f32.mrb[0].mxu0
      %v3816 = vadd.f32 %v1062, %v3815
      %v3817 = vpop.f32.mrb[0].mxu0
      %v3818 = vadd.f32 %v1067, %v3817
      %v3819 = vpop.f32.mrb[0].mxu0
      %v3820 = vadd.f32 %v1067, %v3819
      %3821 = vmatprep.mubr.bf16.mxu0 %v2350
      %3822 = vmatmul.mubr.bf16.gmra.mrb[0].mxu0 %v2349
      %v3823 = vpop.f32.mrb[0].mxu0
      %v3824 = vadd.f32 %v1072, %v3823
      %v3825 = vpop.f32.mrb[0].mxu0
      %v3826 = vadd.f32 %v1072, %v3825
      %v3827 = vpop.f32.mrb[0].mxu0
      %v3828 = vadd.f32 %v1077, %v3827
      %v3829 = vpop.f32.mrb[0].mxu0
      %v3830 = vadd.f32 %v1077, %v3829
      %3831 = vmatprep.mubr.bf16.mxu0 %v2360
      %3832 = vmatmul.mubr.bf16.gmra.mrb[0].mxu0 %v2359
      %v3833 = vpop.f32.mrb[0].mxu0
      %v3834 = vadd.f32 %v1082, %v3833
      %v3835 = vpop.f32.mrb[0].mxu0
      %v3836 = vadd.f32 %v1082, %v3835
      %v3837 = vpop.f32.mrb[0].mxu0
      %v3838 = vadd.f32 %v1087, %v3837
      %v3839 = vpop.f32.mrb[0].mxu0
      %v3840 = vadd.f32 %v1087, %v3839
      %3841 = vmatprep.mubr.bf16.mxu0 %v2370
      %3842 = vmatmul.mubr.bf16.gmra.mrb[0].mxu0 %v2369
      %v3843 = vpop.f32.mrb[0].mxu0
      %v3844 = vadd.f32 %v1092, %v3843
      %v3845 = vpop.f32.mrb[0].mxu0
      %v3846 = vadd.f32 %v1092, %v3845
      %v3847 = vpop.f32.mrb[0].mxu0
      %v3848 = vadd.f32 %v1097, %v3847
      %v3849 = vpop.f32.mrb[0].mxu0
      %v3850 = vadd.f32 %v1097, %v3849
      %3851 = vmatprep.mubr.bf16.mxu0 %v2380
      %3852 = vmatmul.mubr.bf16.gmra.mrb[0].mxu0 %v2379
      %v3853 = vpop.f32.mrb[0].mxu0
      %v3854 = vadd.f32 %v1102, %v3853
      %v3855 = vpop.f32.mrb[0].mxu0
      %v3856 = vadd.f32 %v1102, %v3855
      %v3857 = vpop.f32.mrb[0].mxu0
      %v3858 = vadd.f32 %v1107, %v3857
      %v3859 = vpop.f32.mrb[0].mxu0
      %v3860 = vadd.f32 %v1107, %v3859
      %3861 = vmatprep.mubr.bf16.mxu0 %v2390
      %3862 = vmatmul.mubr.bf16.gmra.mrb[0].mxu0 %v2389
      %v3863 = vpop.f32.mrb[0].mxu0
      %v3864 = vadd.f32 %v1112, %v3863
      %v3865 = vpop.f32.mrb[0].mxu0
      %v3866 = vadd.f32 %v1112, %v3865
      %v3867 = vpop.f32.mrb[0].mxu0
      %v3868 = vadd.f32 %v1117, %v3867
      %v3869 = vpop.f32.mrb[0].mxu0
      %v3870 = vadd.f32 %v1117, %v3869
      %3871 = vmatprep.mubr.bf16.mxu0 %v2400
      %3872 = vmatmul.mubr.bf16.gmra.mrb[0].mxu0 %v2399
      %v3873 = vpop.f32.mrb[0].mxu0
      %v3874 = vadd.f32 %v1122, %v3873
      %v3875 = vpop.f32.mrb[0].mxu0
      %v3876 = vadd.f32 %v1122, %v3875
      %v3877 = vpop.f32.mrb[0].mxu0
      %v3878 = vadd.f32 %v1127, %v3877
      %v3879 = vpop.f32.mrb[0].mxu0
      %v3880 = vadd.f32 %v1127, %v3879
      %3881 = vdwg.mxu0
      %3882 = vmatprep.subr.bf16.mxu0 %v3242
      %3883 = vmatpush1.bf16.msra.mxu0 %v3241
      %3884 = vmatprep.subr.bf16.mxu0 %v3244
      %3885 = vmatpush1.bf16.msra.mxu0 %v3243
      %3886 = vmatprep.subr.bf16.mxu0 %v3246
      %3887 = vmatpush1.bf16.msra.mxu0 %v3245
      %3888 = vmatprep.subr.bf16.mxu0 %v3248
      %3889 = vmatpush1.bf16.msra.mxu0 %v3247
      %3890 = vmatprep.subr.bf16.mxu0 %v3250
      %3891 = vmatpush1.bf16.msra.mxu0 %v3249
      %3892 = vmatprep.subr.bf16.mxu0 %v3252
      %3893 = vmatpush1.bf16.msra.mxu0 %v3251
      %3894 = vmatprep.subr.bf16.mxu0 %v3254
      %3895 = vmatpush1.bf16.msra.mxu0 %v3253
      %3896 = vmatprep.subr.bf16.mxu0 %v3256
      %3897 = vmatpush1.bf16.msra.mxu0 %v3255
      %3898 = vmatprep.subr.bf16.mxu0 %v3258
      %3899 = vmatpush1.bf16.msra.mxu0 %v3257
      %3900 = vmatprep.subr.bf16.mxu0 %v3260
      %3901 = vmatpush1.bf16.msra.mxu0 %v3259
      %3902 = vmatprep.subr.bf16.mxu0 %v3262
      %3903 = vmatpush1.bf16.msra.mxu0 %v3261
      %3904 = vmatprep.subr.bf16.mxu0 %v3264
      %3905 = vmatpush1.bf16.msra.mxu0 %v3263
      %3906 = vmatprep.subr.bf16.mxu0 %v3266
      %3907 = vmatpush1.bf16.msra.mxu0 %v3265
      %3908 = vmatprep.subr.bf16.mxu0 %v3268
      %3909 = vmatpush1.bf16.msra.mxu0 %v3267
      %3910 = vmatprep.subr.bf16.mxu0 %v3270
      %3911 = vmatpush1.bf16.msra.mxu0 %v3269
      %3912 = vmatprep.subr.bf16.mxu0 %v3272
      %3913 = vmatpush1.bf16.msra.mxu0 %v3271
      %3914 = vmatprep.mubr.bf16.mxu0 %v2092
      %3915 = vmatmul.mubr.bf16.gmra.mrb[0].mxu0 %v2091
      %v3916 = vpop.f32.mrb[0].mxu0
      %v3917 = vadd.f32 %v3564, %v3916
      %v3918 = vpop.f32.mrb[0].mxu0
      %v3919 = vadd.f32 %v3566, %v3918
      %v3920 = vpop.f32.mrb[0].mxu0
      %v3921 = vadd.f32 %v3568, %v3920
      %v3922 = vpop.f32.mrb[0].mxu0
      %v3923 = vadd.f32 %v3570, %v3922
      %3924 = vmatprep.mubr.bf16.mxu0 %v2102
      %3925 = vmatmul.mubr.bf16.gmra.mrb[0].mxu0 %v2101
      %v3926 = vpop.f32.mrb[0].mxu0
      %v3927 = vadd.f32 %v3574, %v3926
      %v3928 = vpop.f32.mrb[0].mxu0
      %v3929 = vadd.f32 %v3576, %v3928
      %v3930 = vpop.f32.mrb[0].mxu0
      %v3931 = vadd.f32 %v3578, %v3930
      %v3932 = vpop.f32.mrb[0].mxu0
      %v3933 = vadd.f32 %v3580, %v3932
      %3934 = vmatprep.mubr.bf16.mxu0 %v2112
      %3935 = vmatmul.mubr.bf16.gmra.mrb[0].mxu0 %v2111
      %v3936 = vpop.f32.mrb[0].mxu0
      %v3937 = vadd.f32 %v3584, %v3936
      %v3938 = vpop.f32.mrb[0].mxu0
      %v3939 = vadd.f32 %v3586, %v3938
      %v3940 = vpop.f32.mrb[0].mxu0
      %v3941 = vadd.f32 %v3588, %v3940
      %v3942 = vpop.f32.mrb[0].mxu0
      %v3943 = vadd.f32 %v3590, %v3942
      %3944 = vmatprep.mubr.bf16.mxu0 %v2122
      %3945 = vmatmul.mubr.bf16.gmra.mrb[0].mxu0 %v2121
      %v3946 = vpop.f32.mrb[0].mxu0
      %v3947 = vadd.f32 %v3594, %v3946
      %v3948 = vpop.f32.mrb[0].mxu0
      %v3949 = vadd.f32 %v3596, %v3948
      %v3950 = vpop.f32.mrb[0].mxu0
      %v3951 = vadd.f32 %v3598, %v3950
      %v3952 = vpop.f32.mrb[0].mxu0
      %v3953 = vadd.f32 %v3600, %v3952
      %3954 = vmatprep.mubr.bf16.mxu0 %v2132
      %3955 = vmatmul.mubr.bf16.gmra.mrb[0].mxu0 %v2131
      %v3956 = vpop.f32.mrb[0].mxu0
      %v3957 = vadd.f32 %v3604, %v3956
      %v3958 = vpop.f32.mrb[0].mxu0
      %v3959 = vadd.f32 %v3606, %v3958
      %v3960 = vpop.f32.mrb[0].mxu0
      %v3961 = vadd.f32 %v3608, %v3960
      %v3962 = vpop.f32.mrb[0].mxu0
      %v3963 = vadd.f32 %v3610, %v3962
      %3964 = vmatprep.mubr.bf16.mxu0 %v2142
      %3965 = vmatmul.mubr.bf16.gmra.mrb[0].mxu0 %v2141
      %v3966 = vpop.f32.mrb[0].mxu0
      %v3967 = vadd.f32 %v3614, %v3966
      %v3968 = vpop.f32.mrb[0].mxu0
      %v3969 = vadd.f32 %v3616, %v3968
      %v3970 = vpop.f32.mrb[0].mxu0
      %v3971 = vadd.f32 %v3618, %v3970
      %v3972 = vpop.f32.mrb[0].mxu0
      %v3973 = vadd.f32 %v3620, %v3972
      %3974 = vmatprep.mubr.bf16.mxu0 %v2152
      %3975 = vmatmul.mubr.bf16.gmra.mrb[0].mxu0 %v2151
      %v3976 = vpop.f32.mrb[0].mxu0
      %v3977 = vadd.f32 %v3624, %v3976
      %v3978 = vpop.f32.mrb[0].mxu0
      %v3979 = vadd.f32 %v3626, %v3978
      %v3980 = vpop.f32.mrb[0].mxu0
      %v3981 = vadd.f32 %v3628, %v3980
      %v3982 = vpop.f32.mrb[0].mxu0
      %v3983 = vadd.f32 %v3630, %v3982
      %3984 = vmatprep.mubr.bf16.mxu0 %v2162
      %3985 = vmatmul.mubr.bf16.gmra.mrb[0].mxu0 %v2161
      %v3986 = vpop.f32.mrb[0].mxu0
      %v3987 = vadd.f32 %v3634, %v3986
      %v3988 = vpop.f32.mrb[0].mxu0
      %v3989 = vadd.f32 %v3636, %v3988
      %v3990 = vpop.f32.mrb[0].mxu0
      %v3991 = vadd.f32 %v3638, %v3990
      %v3992 = vpop.f32.mrb[0].mxu0
      %v3993 = vadd.f32 %v3640, %v3992
      %3994 = vmatprep.mubr.bf16.mxu0 %v2172
      %3995 = vmatmul.mubr.bf16.gmra.mrb[0].mxu0 %v2171
      %v3996 = vpop.f32.mrb[0].mxu0
      %v3997 = vadd.f32 %v3644, %v3996
      %v3998 = vpop.f32.mrb[0].mxu0
      %v3999 = vadd.f32 %v3646, %v3998
      %v4000 = vpop.f32.mrb[0].mxu0
      %v4001 = vadd.f32 %v3648, %v4000
      %v4002 = vpop.f32.mrb[0].mxu0
      %v4003 = vadd.f32 %v3650, %v4002
      %4004 = vmatprep.mubr.bf16.mxu0 %v2182
      %4005 = vmatmul.mubr.bf16.gmra.mrb[0].mxu0 %v2181
      %v4006 = vpop.f32.mrb[0].mxu0
      %v4007 = vadd.f32 %v3654, %v4006
      %v4008 = vpop.f32.mrb[0].mxu0
      %v4009 = vadd.f32 %v3656, %v4008
      %v4010 = vpop.f32.mrb[0].mxu0
      %v4011 = vadd.f32 %v3658, %v4010
      %v4012 = vpop.f32.mrb[0].mxu0
      %v4013 = vadd.f32 %v3660, %v4012
      %4014 = vmatprep.mubr.bf16.mxu0 %v2192
      %4015 = vmatmul.mubr.bf16.gmra.mrb[0].mxu0 %v2191
      %v4016 = vpop.f32.mrb[0].mxu0
      %v4017 = vadd.f32 %v3664, %v4016
      %v4018 = vpop.f32.mrb[0].mxu0
      %v4019 = vadd.f32 %v3666, %v4018
      %v4020 = vpop.f32.mrb[0].mxu0
      %v4021 = vadd.f32 %v3668, %v4020
      %v4022 = vpop.f32.mrb[0].mxu0
      %v4023 = vadd.f32 %v3670, %v4022
      %4024 = vmatprep.mubr.bf16.mxu0 %v2202
      %4025 = vmatmul.mubr.bf16.gmra.mrb[0].mxu0 %v2201
      %v4026 = vpop.f32.mrb[0].mxu0
      %v4027 = vadd.f32 %v3674, %v4026
      %v4028 = vpop.f32.mrb[0].mxu0
      %v4029 = vadd.f32 %v3676, %v4028
      %v4030 = vpop.f32.mrb[0].mxu0
      %v4031 = vadd.f32 %v3678, %v4030
      %v4032 = vpop.f32.mrb[0].mxu0
      %v4033 = vadd.f32 %v3680, %v4032
      %4034 = vmatprep.mubr.bf16.mxu0 %v2212
      %4035 = vmatmul.mubr.bf16.gmra.mrb[0].mxu0 %v2211
      %v4036 = vpop.f32.mrb[0].mxu0
      %v4037 = vadd.f32 %v3684, %v4036
      %v4038 = vpop.f32.mrb[0].mxu0
      %v4039 = vadd.f32 %v3686, %v4038
      %v4040 = vpop.f32.mrb[0].mxu0
      %v4041 = vadd.f32 %v3688, %v4040
      %v4042 = vpop.f32.mrb[0].mxu0
      %v4043 = vadd.f32 %v3690, %v4042
      %4044 = vmatprep.mubr.bf16.mxu0 %v2222
      %4045 = vmatmul.mubr.bf16.gmra.mrb[0].mxu0 %v2221
      %v4046 = vpop.f32.mrb[0].mxu0
      %v4047 = vadd.f32 %v3694, %v4046
      %v4048 = vpop.f32.mrb[0].mxu0
      %v4049 = vadd.f32 %v3696, %v4048
      %v4050 = vpop.f32.mrb[0].mxu0
      %v4051 = vadd.f32 %v3698, %v4050
      %v4052 = vpop.f32.mrb[0].mxu0
      %v4053 = vadd.f32 %v3700, %v4052
      %4054 = vmatprep.mubr.bf16.mxu0 %v2232
      %4055 = vmatmul.mubr.bf16.gmra.mrb[0].mxu0 %v2231
      %v4056 = vpop.f32.mrb[0].mxu0
      %v4057 = vadd.f32 %v3704, %v4056
      %v4058 = vpop.f32.mrb[0].mxu0
      %v4059 = vadd.f32 %v3706, %v4058
      %v4060 = vpop.f32.mrb[0].mxu0
      %v4061 = vadd.f32 %v3708, %v4060
      %v4062 = vpop.f32.mrb[0].mxu0
      %v4063 = vadd.f32 %v3710, %v4062
      %4064 = vmatprep.mubr.bf16.mxu0 %v2242
      %4065 = vmatmul.mubr.bf16.gmra.mrb[0].mxu0 %v2241
      %v4066 = vpop.f32.mrb[0].mxu0
      %v4067 = vadd.f32 %v3714, %v4066
      %v4068 = vpop.f32.mrb[0].mxu0
      %v4069 = vadd.f32 %v3716, %v4068
      %v4070 = vpop.f32.mrb[0].mxu0
      %v4071 = vadd.f32 %v3718, %v4070
      %v4072 = vpop.f32.mrb[0].mxu0
      %v4073 = vadd.f32 %v3720, %v4072
      %4074 = vmatprep.mubr.bf16.mxu0 %v2252
      %4075 = vmatmul.mubr.bf16.gmra.mrb[0].mxu0 %v2251
      %v4076 = vpop.f32.mrb[0].mxu0
      %v4077 = vadd.f32 %v3724, %v4076
      %v4078 = vpop.f32.mrb[0].mxu0
      %v4079 = vadd.f32 %v3726, %v4078
      %v4080 = vpop.f32.mrb[0].mxu0
      %v4081 = vadd.f32 %v3728, %v4080
      %v4082 = vpop.f32.mrb[0].mxu0
      %v4083 = vadd.f32 %v3730, %v4082
      %4084 = vmatprep.mubr.bf16.mxu0 %v2262
      %4085 = vmatmul.mubr.bf16.gmra.mrb[0].mxu0 %v2261
      %v4086 = vpop.f32.mrb[0].mxu0
      %v4087 = vadd.f32 %v3734, %v4086
      %v4088 = vpop.f32.mrb[0].mxu0
      %v4089 = vadd.f32 %v3736, %v4088
      %v4090 = vpop.f32.mrb[0].mxu0
      %v4091 = vadd.f32 %v3738, %v4090
      %v4092 = vpop.f32.mrb[0].mxu0
      %v4093 = vadd.f32 %v3740, %v4092
      %4094 = vmatprep.mubr.bf16.mxu0 %v2272
      %4095 = vmatmul.mubr.bf16.gmra.mrb[0].mxu0 %v2271
      %v4096 = vpop.f32.mrb[0].mxu0
      %v4097 = vadd.f32 %v3744, %v4096
      %v4098 = vpop.f32.mrb[0].mxu0
      %v4099 = vadd.f32 %v3746, %v4098
      %v4100 = vpop.f32.mrb[0].mxu0
      %v4101 = vadd.f32 %v3748, %v4100
      %v4102 = vpop.f32.mrb[0].mxu0
      %v4103 = vadd.f32 %v3750, %v4102
      %4104 = vmatprep.mubr.bf16.mxu0 %v2282
      %4105 = vmatmul.mubr.bf16.gmra.mrb[0].mxu0 %v2281
      %v4106 = vpop.f32.mrb[0].mxu0
      %v4107 = vadd.f32 %v3754, %v4106
      %v4108 = vpop.f32.mrb[0].mxu0
      %v4109 = vadd.f32 %v3756, %v4108
      %v4110 = vpop.f32.mrb[0].mxu0
      %v4111 = vadd.f32 %v3758, %v4110
      %v4112 = vpop.f32.mrb[0].mxu0
      %v4113 = vadd.f32 %v3760, %v4112
      %4114 = vmatprep.mubr.bf16.mxu0 %v2292
      %4115 = vmatmul.mubr.bf16.gmra.mrb[0].mxu0 %v2291
      %v4116 = vpop.f32.mrb[0].mxu0
      %v4117 = vadd.f32 %v3764, %v4116
      %v4118 = vpop.f32.mrb[0].mxu0
      %v4119 = vadd.f32 %v3766, %v4118
      %v4120 = vpop.f32.mrb[0].mxu0
      %v4121 = vadd.f32 %v3768, %v4120
      %v4122 = vpop.f32.mrb[0].mxu0
      %v4123 = vadd.f32 %v3770, %v4122
      %4124 = vmatprep.mubr.bf16.mxu0 %v2302
      %4125 = vmatmul.mubr.bf16.gmra.mrb[0].mxu0 %v2301
      %v4126 = vpop.f32.mrb[0].mxu0
      %v4127 = vadd.f32 %v3774, %v4126
      %v4128 = vpop.f32.mrb[0].mxu0
      %v4129 = vadd.f32 %v3776, %v4128
      %v4130 = vpop.f32.mrb[0].mxu0
      %v4131 = vadd.f32 %v3778, %v4130
      %v4132 = vpop.f32.mrb[0].mxu0
      %v4133 = vadd.f32 %v3780, %v4132
      %4134 = vmatprep.mubr.bf16.mxu0 %v2312
      %4135 = vmatmul.mubr.bf16.gmra.mrb[0].mxu0 %v2311
      %v4136 = vpop.f32.mrb[0].mxu0
      %v4137 = vadd.f32 %v3784, %v4136
      %v4138 = vpop.f32.mrb[0].mxu0
      %v4139 = vadd.f32 %v3786, %v4138
      %v4140 = vpop.f32.mrb[0].mxu0
      %v4141 = vadd.f32 %v3788, %v4140
      %v4142 = vpop.f32.mrb[0].mxu0
      %v4143 = vadd.f32 %v3790, %v4142
      %4144 = vmatprep.mubr.bf16.mxu0 %v2322
      %4145 = vmatmul.mubr.bf16.gmra.mrb[0].mxu0 %v2321
      %v4146 = vpop.f32.mrb[0].mxu0
      %v4147 = vadd.f32 %v3794, %v4146
      %v4148 = vpop.f32.mrb[0].mxu0
      %v4149 = vadd.f32 %v3796, %v4148
      %v4150 = vpop.f32.mrb[0].mxu0
      %v4151 = vadd.f32 %v3798, %v4150
      %v4152 = vpop.f32.mrb[0].mxu0
      %v4153 = vadd.f32 %v3800, %v4152
      %4154 = vmatprep.mubr.bf16.mxu0 %v2332
      %4155 = vmatmul.mubr.bf16.gmra.mrb[0].mxu0 %v2331
      %v4156 = vpop.f32.mrb[0].mxu0
      %v4157 = vadd.f32 %v3804, %v4156
      %v4158 = vpop.f32.mrb[0].mxu0
      %v4159 = vadd.f32 %v3806, %v4158
      %v4160 = vpop.f32.mrb[0].mxu0
      %v4161 = vadd.f32 %v3808, %v4160
      %v4162 = vpop.f32.mrb[0].mxu0
      %v4163 = vadd.f32 %v3810, %v4162
      %4164 = vmatprep.mubr.bf16.mxu0 %v2342
      %4165 = vmatmul.mubr.bf16.gmra.mrb[0].mxu0 %v2341
      %v4166 = vpop.f32.mrb[0].mxu0
      %v4167 = vadd.f32 %v3814, %v4166
      %v4168 = vpop.f32.mrb[0].mxu0
      %v4169 = vadd.f32 %v3816, %v4168
      %v4170 = vpop.f32.mrb[0].mxu0
      %v4171 = vadd.f32 %v3818, %v4170
      %v4172 = vpop.f32.mrb[0].mxu0
      %v4173 = vadd.f32 %v3820, %v4172
      %4174 = vmatprep.mubr.bf16.mxu0 %v2352
      %4175 = vmatmul.mubr.bf16.gmra.mrb[0].mxu0 %v2351
      %v4176 = vpop.f32.mrb[0].mxu0
      %v4177 = vadd.f32 %v3824, %v4176
      %v4178 = vpop.f32.mrb[0].mxu0
      %v4179 = vadd.f32 %v3826, %v4178
      %v4180 = vpop.f32.mrb[0].mxu0
      %v4181 = vadd.f32 %v3828, %v4180
      %v4182 = vpop.f32.mrb[0].mxu0
      %v4183 = vadd.f32 %v3830, %v4182
      %4184 = vmatprep.mubr.bf16.mxu0 %v2362
      %4185 = vmatmul.mubr.bf16.gmra.mrb[0].mxu0 %v2361
      %v4186 = vpop.f32.mrb[0].mxu0
      %v4187 = vadd.f32 %v3834, %v4186
      %v4188 = vpop.f32.mrb[0].mxu0
      %v4189 = vadd.f32 %v3836, %v4188
      %v4190 = vpop.f32.mrb[0].mxu0
      %v4191 = vadd.f32 %v3838, %v4190
      %v4192 = vpop.f32.mrb[0].mxu0
      %v4193 = vadd.f32 %v3840, %v4192
      %4194 = vmatprep.mubr.bf16.mxu0 %v2372
      %4195 = vmatmul.mubr.bf16.gmra.mrb[0].mxu0 %v2371
      %v4196 = vpop.f32.mrb[0].mxu0
      %v4197 = vadd.f32 %v3844, %v4196
      %v4198 = vpop.f32.mrb[0].mxu0
      %v4199 = vadd.f32 %v3846, %v4198
      %v4200 = vpop.f32.mrb[0].mxu0
      %v4201 = vadd.f32 %v3848, %v4200
      %v4202 = vpop.f32.mrb[0].mxu0
      %v4203 = vadd.f32 %v3850, %v4202
      %4204 = vmatprep.mubr.bf16.mxu0 %v2382
      %4205 = vmatmul.mubr.bf16.gmra.mrb[0].mxu0 %v2381
      %v4206 = vpop.f32.mrb[0].mxu0
      %v4207 = vadd.f32 %v3854, %v4206
      %v4208 = vpop.f32.mrb[0].mxu0
      %v4209 = vadd.f32 %v3856, %v4208
      %v4210 = vpop.f32.mrb[0].mxu0
      %v4211 = vadd.f32 %v3858, %v4210
      %v4212 = vpop.f32.mrb[0].mxu0
      %v4213 = vadd.f32 %v3860, %v4212
      %4214 = vmatprep.mubr.bf16.mxu0 %v2392
      %4215 = vmatmul.mubr.bf16.gmra.mrb[0].mxu0 %v2391
      %v4216 = vpop.f32.mrb[0].mxu0
      %v4217 = vadd.f32 %v3864, %v4216
      %v4218 = vpop.f32.mrb[0].mxu0
      %v4219 = vadd.f32 %v3866, %v4218
      %v4220 = vpop.f32.mrb[0].mxu0
      %v4221 = vadd.f32 %v3868, %v4220
      %v4222 = vpop.f32.mrb[0].mxu0
      %v4223 = vadd.f32 %v3870, %v4222
      %4224 = vmatprep.mubr.bf16.mxu0 %v2402
      %4225 = vmatmul.mubr.bf16.gmra.mrb[0].mxu0 %v2401
      %v4226 = vpop.f32.mrb[0].mxu0
      %v4227 = vadd.f32 %v3874, %v4226
      %v4228 = vpop.f32.mrb[0].mxu0
      %v4229 = vadd.f32 %v3876, %v4228
      %v4230 = vpop.f32.mrb[0].mxu0
      %v4231 = vadd.f32 %v3878, %v4230
      %v4232 = vpop.f32.mrb[0].mxu0
      %v4233 = vadd.f32 %v3880, %v4232
      %4234 = vdwg.mxu0
      %4235 = vmatprep.subr.bf16.mxu0 %v3274
      %4236 = vmatpush1.bf16.msra.mxu0 %v3273
      %4237 = vmatprep.subr.bf16.mxu0 %v3276
      %4238 = vmatpush1.bf16.msra.mxu0 %v3275
      %4239 = vmatprep.subr.bf16.mxu0 %v3278
      %4240 = vmatpush1.bf16.msra.mxu0 %v3277
      %4241 = vmatprep.subr.bf16.mxu0 %v3280
      %4242 = vmatpush1.bf16.msra.mxu0 %v3279
      %4243 = vmatprep.subr.bf16.mxu0 %v3282
      %4244 = vmatpush1.bf16.msra.mxu0 %v3281
      %4245 = vmatprep.subr.bf16.mxu0 %v3284
      %4246 = vmatpush1.bf16.msra.mxu0 %v3283
      %4247 = vmatprep.subr.bf16.mxu0 %v3286
      %4248 = vmatpush1.bf16.msra.mxu0 %v3285
      %4249 = vmatprep.subr.bf16.mxu0 %v3288
      %4250 = vmatpush1.bf16.msra.mxu0 %v3287
      %4251 = vmatprep.subr.bf16.mxu0 %v3290
      %4252 = vmatpush1.bf16.msra.mxu0 %v3289
      %4253 = vmatprep.subr.bf16.mxu0 %v3292
      %4254 = vmatpush1.bf16.msra.mxu0 %v3291
      %4255 = vmatprep.subr.bf16.mxu0 %v3294
      %4256 = vmatpush1.bf16.msra.mxu0 %v3293
      %4257 = vmatprep.subr.bf16.mxu0 %v3296
      %4258 = vmatpush1.bf16.msra.mxu0 %v3295
      %4259 = vmatprep.subr.bf16.mxu0 %v3298
      %4260 = vmatpush1.bf16.msra.mxu0 %v3297
      %4261 = vmatprep.subr.bf16.mxu0 %v3300
      %4262 = vmatpush1.bf16.msra.mxu0 %v3299
      %4263 = vmatprep.subr.bf16.mxu0 %v3302
      %4264 = vmatpush1.bf16.msra.mxu0 %v3301
      %4265 = vmatprep.subr.bf16.mxu0 %v3304
      %4266 = vmatpush1.bf16.msra.mxu0 %v3303
      %4267 = vmatprep.mubr.bf16.mxu0 %v2094
      %4268 = vmatmul.mubr.bf16.gmra.mrb[0].mxu0 %v2093
      %v4269 = vpop.f32.mrb[0].mxu0
      %v4270 = vadd.f32 %v3917, %v4269
      %v4271 = vpop.f32.mrb[0].mxu0
      %v4272 = vadd.f32 %v3919, %v4271
      %v4273 = vpop.f32.mrb[0].mxu0
      %v4274 = vadd.f32 %v3921, %v4273
      %v4275 = vpop.f32.mrb[0].mxu0
      %v4276 = vadd.f32 %v3923, %v4275
      %4277 = vmatprep.mubr.bf16.mxu0 %v2104
      %4278 = vmatmul.mubr.bf16.gmra.mrb[0].mxu0 %v2103
      %v4279 = vpop.f32.mrb[0].mxu0
      %v4280 = vadd.f32 %v3927, %v4279
      %v4281 = vpop.f32.mrb[0].mxu0
      %v4282 = vadd.f32 %v3929, %v4281
      %v4283 = vpop.f32.mrb[0].mxu0
      %v4284 = vadd.f32 %v3931, %v4283
      %v4285 = vpop.f32.mrb[0].mxu0
      %v4286 = vadd.f32 %v3933, %v4285
      %4287 = vmatprep.mubr.bf16.mxu0 %v2114
      %4288 = vmatmul.mubr.bf16.gmra.mrb[0].mxu0 %v2113
      %v4289 = vpop.f32.mrb[0].mxu0
      %v4290 = vadd.f32 %v3937, %v4289
      %v4291 = vpop.f32.mrb[0].mxu0
      %v4292 = vadd.f32 %v3939, %v4291
      %v4293 = vpop.f32.mrb[0].mxu0
      %v4294 = vadd.f32 %v3941, %v4293
      %v4295 = vpop.f32.mrb[0].mxu0
      %v4296 = vadd.f32 %v3943, %v4295
      %4297 = vmatprep.mubr.bf16.mxu0 %v2124
      %4298 = vmatmul.mubr.bf16.gmra.mrb[0].mxu0 %v2123
      %v4299 = vpop.f32.mrb[0].mxu0
      %v4300 = vadd.f32 %v3947, %v4299
      %v4301 = vpop.f32.mrb[0].mxu0
      %v4302 = vadd.f32 %v3949, %v4301
      %v4303 = vpop.f32.mrb[0].mxu0
      %v4304 = vadd.f32 %v3951, %v4303
      %v4305 = vpop.f32.mrb[0].mxu0
      %v4306 = vadd.f32 %v3953, %v4305
      %4307 = vmatprep.mubr.bf16.mxu0 %v2134
      %4308 = vmatmul.mubr.bf16.gmra.mrb[0].mxu0 %v2133
      %v4309 = vpop.f32.mrb[0].mxu0
      %v4310 = vadd.f32 %v3957, %v4309
      %v4311 = vpop.f32.mrb[0].mxu0
      %v4312 = vadd.f32 %v3959, %v4311
      %v4313 = vpop.f32.mrb[0].mxu0
      %v4314 = vadd.f32 %v3961, %v4313
      %v4315 = vpop.f32.mrb[0].mxu0
      %v4316 = vadd.f32 %v3963, %v4315
      %4317 = vmatprep.mubr.bf16.mxu0 %v2144
      %4318 = vmatmul.mubr.bf16.gmra.mrb[0].mxu0 %v2143
      %v4319 = vpop.f32.mrb[0].mxu0
      %v4320 = vadd.f32 %v3967, %v4319
      %v4321 = vpop.f32.mrb[0].mxu0
      %v4322 = vadd.f32 %v3969, %v4321
      %v4323 = vpop.f32.mrb[0].mxu0
      %v4324 = vadd.f32 %v3971, %v4323
      %v4325 = vpop.f32.mrb[0].mxu0
      %v4326 = vadd.f32 %v3973, %v4325
      %4327 = vmatprep.mubr.bf16.mxu0 %v2154
      %4328 = vmatmul.mubr.bf16.gmra.mrb[0].mxu0 %v2153
      %v4329 = vpop.f32.mrb[0].mxu0
      %v4330 = vadd.f32 %v3977, %v4329
      %v4331 = vpop.f32.mrb[0].mxu0
      %v4332 = vadd.f32 %v3979, %v4331
      %v4333 = vpop.f32.mrb[0].mxu0
      %v4334 = vadd.f32 %v3981, %v4333
      %v4335 = vpop.f32.mrb[0].mxu0
      %v4336 = vadd.f32 %v3983, %v4335
      %4337 = vmatprep.mubr.bf16.mxu0 %v2164
      %4338 = vmatmul.mubr.bf16.gmra.mrb[0].mxu0 %v2163
      %v4339 = vpop.f32.mrb[0].mxu0
      %v4340 = vadd.f32 %v3987, %v4339
      %v4341 = vpop.f32.mrb[0].mxu0
      %v4342 = vadd.f32 %v3989, %v4341
      %v4343 = vpop.f32.mrb[0].mxu0
      %v4344 = vadd.f32 %v3991, %v4343
      %v4345 = vpop.f32.mrb[0].mxu0
      %v4346 = vadd.f32 %v3993, %v4345
      %4347 = vmatprep.mubr.bf16.mxu0 %v2174
      %4348 = vmatmul.mubr.bf16.gmra.mrb[0].mxu0 %v2173
      %v4349 = vpop.f32.mrb[0].mxu0
      %v4350 = vadd.f32 %v3997, %v4349
      %v4351 = vpop.f32.mrb[0].mxu0
      %v4352 = vadd.f32 %v3999, %v4351
      %v4353 = vpop.f32.mrb[0].mxu0
      %v4354 = vadd.f32 %v4001, %v4353
      %v4355 = vpop.f32.mrb[0].mxu0
      %v4356 = vadd.f32 %v4003, %v4355
      %4357 = vmatprep.mubr.bf16.mxu0 %v2184
      %4358 = vmatmul.mubr.bf16.gmra.mrb[0].mxu0 %v2183
      %v4359 = vpop.f32.mrb[0].mxu0
      %v4360 = vadd.f32 %v4007, %v4359
      %v4361 = vpop.f32.mrb[0].mxu0
      %v4362 = vadd.f32 %v4009, %v4361
      %v4363 = vpop.f32.mrb[0].mxu0
      %v4364 = vadd.f32 %v4011, %v4363
      %v4365 = vpop.f32.mrb[0].mxu0
      %v4366 = vadd.f32 %v4013, %v4365
      %4367 = vmatprep.mubr.bf16.mxu0 %v2194
      %4368 = vmatmul.mubr.bf16.gmra.mrb[0].mxu0 %v2193
      %v4369 = vpop.f32.mrb[0].mxu0
      %v4370 = vadd.f32 %v4017, %v4369
      %v4371 = vpop.f32.mrb[0].mxu0
      %v4372 = vadd.f32 %v4019, %v4371
      %v4373 = vpop.f32.mrb[0].mxu0
      %v4374 = vadd.f32 %v4021, %v4373
      %v4375 = vpop.f32.mrb[0].mxu0
      %v4376 = vadd.f32 %v4023, %v4375
      %4377 = vmatprep.mubr.bf16.mxu0 %v2204
      %4378 = vmatmul.mubr.bf16.gmra.mrb[0].mxu0 %v2203
      %v4379 = vpop.f32.mrb[0].mxu0
      %v4380 = vadd.f32 %v4027, %v4379
      %v4381 = vpop.f32.mrb[0].mxu0
      %v4382 = vadd.f32 %v4029, %v4381
      %v4383 = vpop.f32.mrb[0].mxu0
      %v4384 = vadd.f32 %v4031, %v4383
      %v4385 = vpop.f32.mrb[0].mxu0
      %v4386 = vadd.f32 %v4033, %v4385
      %4387 = vmatprep.mubr.bf16.mxu0 %v2214
      %4388 = vmatmul.mubr.bf16.gmra.mrb[0].mxu0 %v2213
      %v4389 = vpop.f32.mrb[0].mxu0
      %v4390 = vadd.f32 %v4037, %v4389
      %v4391 = vpop.f32.mrb[0].mxu0
      %v4392 = vadd.f32 %v4039, %v4391
      %v4393 = vpop.f32.mrb[0].mxu0
      %v4394 = vadd.f32 %v4041, %v4393
      %v4395 = vpop.f32.mrb[0].mxu0
      %v4396 = vadd.f32 %v4043, %v4395
      %4397 = vmatprep.mubr.bf16.mxu0 %v2224
      %4398 = vmatmul.mubr.bf16.gmra.mrb[0].mxu0 %v2223
      %v4399 = vpop.f32.mrb[0].mxu0
      %v4400 = vadd.f32 %v4047, %v4399
      %v4401 = vpop.f32.mrb[0].mxu0
      %v4402 = vadd.f32 %v4049, %v4401
      %v4403 = vpop.f32.mrb[0].mxu0
      %v4404 = vadd.f32 %v4051, %v4403
      %v4405 = vpop.f32.mrb[0].mxu0
      %v4406 = vadd.f32 %v4053, %v4405
      %4407 = vmatprep.mubr.bf16.mxu0 %v2234
      %4408 = vmatmul.mubr.bf16.gmra.mrb[0].mxu0 %v2233
      %v4409 = vpop.f32.mrb[0].mxu0
      %v4410 = vadd.f32 %v4057, %v4409
      %v4411 = vpop.f32.mrb[0].mxu0
      %v4412 = vadd.f32 %v4059, %v4411
      %v4413 = vpop.f32.mrb[0].mxu0
      %v4414 = vadd.f32 %v4061, %v4413
      %v4415 = vpop.f32.mrb[0].mxu0
      %v4416 = vadd.f32 %v4063, %v4415
      %4417 = vmatprep.mubr.bf16.mxu0 %v2244
      %4418 = vmatmul.mubr.bf16.gmra.mrb[0].mxu0 %v2243
      %v4419 = vpop.f32.mrb[0].mxu0
      %v4420 = vadd.f32 %v4067, %v4419
      %v4421 = vpop.f32.mrb[0].mxu0
      %v4422 = vadd.f32 %v4069, %v4421
      %v4423 = vpop.f32.mrb[0].mxu0
      %v4424 = vadd.f32 %v4071, %v4423
      %v4425 = vpop.f32.mrb[0].mxu0
      %v4426 = vadd.f32 %v4073, %v4425
      %4427 = vmatprep.mubr.bf16.mxu0 %v2254
      %4428 = vmatmul.mubr.bf16.gmra.mrb[0].mxu0 %v2253
      %v4429 = vpop.f32.mrb[0].mxu0
      %v4430 = vadd.f32 %v4077, %v4429
      %v4431 = vpop.f32.mrb[0].mxu0
      %v4432 = vadd.f32 %v4079, %v4431
      %v4433 = vpop.f32.mrb[0].mxu0
      %v4434 = vadd.f32 %v4081, %v4433
      %v4435 = vpop.f32.mrb[0].mxu0
      %v4436 = vadd.f32 %v4083, %v4435
      %4437 = vmatprep.mubr.bf16.mxu0 %v2264
      %4438 = vmatmul.mubr.bf16.gmra.mrb[0].mxu0 %v2263
      %v4439 = vpop.f32.mrb[0].mxu0
      %v4440 = vadd.f32 %v4087, %v4439
      %v4441 = vpop.f32.mrb[0].mxu0
      %v4442 = vadd.f32 %v4089, %v4441
      %v4443 = vpop.f32.mrb[0].mxu0
      %v4444 = vadd.f32 %v4091, %v4443
      %v4445 = vpop.f32.mrb[0].mxu0
      %v4446 = vadd.f32 %v4093, %v4445
      %4447 = vmatprep.mubr.bf16.mxu0 %v2274
      %4448 = vmatmul.mubr.bf16.gmra.mrb[0].mxu0 %v2273
      %v4449 = vpop.f32.mrb[0].mxu0
      %v4450 = vadd.f32 %v4097, %v4449
      %v4451 = vpop.f32.mrb[0].mxu0
      %v4452 = vadd.f32 %v4099, %v4451
      %v4453 = vpop.f32.mrb[0].mxu0
      %v4454 = vadd.f32 %v4101, %v4453
      %v4455 = vpop.f32.mrb[0].mxu0
      %v4456 = vadd.f32 %v4103, %v4455
      %4457 = vmatprep.mubr.bf16.mxu0 %v2284
      %4458 = vmatmul.mubr.bf16.gmra.mrb[0].mxu0 %v2283
      %v4459 = vpop.f32.mrb[0].mxu0
      %v4460 = vadd.f32 %v4107, %v4459
      %v4461 = vpop.f32.mrb[0].mxu0
      %v4462 = vadd.f32 %v4109, %v4461
      %v4463 = vpop.f32.mrb[0].mxu0
      %v4464 = vadd.f32 %v4111, %v4463
      %v4465 = vpop.f32.mrb[0].mxu0
      %v4466 = vadd.f32 %v4113, %v4465
      %4467 = vmatprep.mubr.bf16.mxu0 %v2294
      %4468 = vmatmul.mubr.bf16.gmra.mrb[0].mxu0 %v2293
      %v4469 = vpop.f32.mrb[0].mxu0
      %v4470 = vadd.f32 %v4117, %v4469
      %v4471 = vpop.f32.mrb[0].mxu0
      %v4472 = vadd.f32 %v4119, %v4471
      %v4473 = vpop.f32.mrb[0].mxu0
      %v4474 = vadd.f32 %v4121, %v4473
      %v4475 = vpop.f32.mrb[0].mxu0
      %v4476 = vadd.f32 %v4123, %v4475
      %4477 = vmatprep.mubr.bf16.mxu0 %v2304
      %4478 = vmatmul.mubr.bf16.gmra.mrb[0].mxu0 %v2303
      %v4479 = vpop.f32.mrb[0].mxu0
      %v4480 = vadd.f32 %v4127, %v4479
      %v4481 = vpop.f32.mrb[0].mxu0
      %v4482 = vadd.f32 %v4129, %v4481
      %v4483 = vpop.f32.mrb[0].mxu0
      %v4484 = vadd.f32 %v4131, %v4483
      %v4485 = vpop.f32.mrb[0].mxu0
      %v4486 = vadd.f32 %v4133, %v4485
      %4487 = vmatprep.mubr.bf16.mxu0 %v2314
      %4488 = vmatmul.mubr.bf16.gmra.mrb[0].mxu0 %v2313
      %v4489 = vpop.f32.mrb[0].mxu0
      %v4490 = vadd.f32 %v4137, %v4489
      %v4491 = vpop.f32.mrb[0].mxu0
      %v4492 = vadd.f32 %v4139, %v4491
      %v4493 = vpop.f32.mrb[0].mxu0
      %v4494 = vadd.f32 %v4141, %v4493
      %v4495 = vpop.f32.mrb[0].mxu0
      %v4496 = vadd.f32 %v4143, %v4495
      %4497 = vmatprep.mubr.bf16.mxu0 %v2324
      %4498 = vmatmul.mubr.bf16.gmra.mrb[0].mxu0 %v2323
      %v4499 = vpop.f32.mrb[0].mxu0
      %v4500 = vadd.f32 %v4147, %v4499
      %v4501 = vpop.f32.mrb[0].mxu0
      %v4502 = vadd.f32 %v4149, %v4501
      %v4503 = vpop.f32.mrb[0].mxu0
      %v4504 = vadd.f32 %v4151, %v4503
      %v4505 = vpop.f32.mrb[0].mxu0
      %v4506 = vadd.f32 %v4153, %v4505
      %4507 = vmatprep.mubr.bf16.mxu0 %v2334
      %4508 = vmatmul.mubr.bf16.gmra.mrb[0].mxu0 %v2333
      %v4509 = vpop.f32.mrb[0].mxu0
      %v4510 = vadd.f32 %v4157, %v4509
      %v4511 = vpop.f32.mrb[0].mxu0
      %v4512 = vadd.f32 %v4159, %v4511
      %v4513 = vpop.f32.mrb[0].mxu0
      %v4514 = vadd.f32 %v4161, %v4513
      %v4515 = vpop.f32.mrb[0].mxu0
      %v4516 = vadd.f32 %v4163, %v4515
      %4517 = vmatprep.mubr.bf16.mxu0 %v2344
      %4518 = vmatmul.mubr.bf16.gmra.mrb[0].mxu0 %v2343
      %v4519 = vpop.f32.mrb[0].mxu0
      %v4520 = vadd.f32 %v4167, %v4519
      %v4521 = vpop.f32.mrb[0].mxu0
      %v4522 = vadd.f32 %v4169, %v4521
      %v4523 = vpop.f32.mrb[0].mxu0
      %v4524 = vadd.f32 %v4171, %v4523
      %v4525 = vpop.f32.mrb[0].mxu0
      %v4526 = vadd.f32 %v4173, %v4525
      %4527 = vmatprep.mubr.bf16.mxu0 %v2354
      %4528 = vmatmul.mubr.bf16.gmra.mrb[0].mxu0 %v2353
      %v4529 = vpop.f32.mrb[0].mxu0
      %v4530 = vadd.f32 %v4177, %v4529
      %v4531 = vpop.f32.mrb[0].mxu0
      %v4532 = vadd.f32 %v4179, %v4531
      %v4533 = vpop.f32.mrb[0].mxu0
      %v4534 = vadd.f32 %v4181, %v4533
      %v4535 = vpop.f32.mrb[0].mxu0
      %v4536 = vadd.f32 %v4183, %v4535
      %4537 = vmatprep.mubr.bf16.mxu0 %v2364
      %4538 = vmatmul.mubr.bf16.gmra.mrb[0].mxu0 %v2363
      %v4539 = vpop.f32.mrb[0].mxu0
      %v4540 = vadd.f32 %v4187, %v4539
      %v4541 = vpop.f32.mrb[0].mxu0
      %v4542 = vadd.f32 %v4189, %v4541
      %v4543 = vpop.f32.mrb[0].mxu0
      %v4544 = vadd.f32 %v4191, %v4543
      %v4545 = vpop.f32.mrb[0].mxu0
      %v4546 = vadd.f32 %v4193, %v4545
      %4547 = vmatprep.mubr.bf16.mxu0 %v2374
      %4548 = vmatmul.mubr.bf16.gmra.mrb[0].mxu0 %v2373
      %v4549 = vpop.f32.mrb[0].mxu0
      %v4550 = vadd.f32 %v4197, %v4549
      %v4551 = vpop.f32.mrb[0].mxu0
      %v4552 = vadd.f32 %v4199, %v4551
      %v4553 = vpop.f32.mrb[0].mxu0
      %v4554 = vadd.f32 %v4201, %v4553
      %v4555 = vpop.f32.mrb[0].mxu0
      %v4556 = vadd.f32 %v4203, %v4555
      %4557 = vmatprep.mubr.bf16.mxu0 %v2384
      %4558 = vmatmul.mubr.bf16.gmra.mrb[0].mxu0 %v2383
      %v4559 = vpop.f32.mrb[0].mxu0
      %v4560 = vadd.f32 %v4207, %v4559
      %v4561 = vpop.f32.mrb[0].mxu0
      %v4562 = vadd.f32 %v4209, %v4561
      %v4563 = vpop.f32.mrb[0].mxu0
      %v4564 = vadd.f32 %v4211, %v4563
      %v4565 = vpop.f32.mrb[0].mxu0
      %v4566 = vadd.f32 %v4213, %v4565
      %4567 = vmatprep.mubr.bf16.mxu0 %v2394
      %4568 = vmatmul.mubr.bf16.gmra.mrb[0].mxu0 %v2393
      %v4569 = vpop.f32.mrb[0].mxu0
      %v4570 = vadd.f32 %v4217, %v4569
      %v4571 = vpop.f32.mrb[0].mxu0
      %v4572 = vadd.f32 %v4219, %v4571
      %v4573 = vpop.f32.mrb[0].mxu0
      %v4574 = vadd.f32 %v4221, %v4573
      %v4575 = vpop.f32.mrb[0].mxu0
      %v4576 = vadd.f32 %v4223, %v4575
      %4577 = vmatprep.mubr.bf16.mxu0 %v2404
      %4578 = vmatmul.mubr.bf16.gmra.mrb[0].mxu0 %v2403
      %v4579 = vpop.f32.mrb[0].mxu0
      %v4580 = vadd.f32 %v4227, %v4579
      %v4581 = vpop.f32.mrb[0].mxu0
      %v4582 = vadd.f32 %v4229, %v4581
      %v4583 = vpop.f32.mrb[0].mxu0
      %v4584 = vadd.f32 %v4231, %v4583
      %v4585 = vpop.f32.mrb[0].mxu0
      %v4586 = vadd.f32 %v4233, %v4585
      %4587 = vdwg.mxu0
      %4588 = vmatprep.subr.bf16.mxu0 %v3306
      %4589 = vmatpush1.bf16.msra.mxu0 %v3305
      %4590 = vmatprep.subr.bf16.mxu0 %v3308
      %4591 = vmatpush1.bf16.msra.mxu0 %v3307
      %4592 = vmatprep.subr.bf16.mxu0 %v3310
      %4593 = vmatpush1.bf16.msra.mxu0 %v3309
      %4594 = vmatprep.subr.bf16.mxu0 %v3312
      %4595 = vmatpush1.bf16.msra.mxu0 %v3311
      %4596 = vmatprep.subr.bf16.mxu0 %v3314
      %4597 = vmatpush1.bf16.msra.mxu0 %v3313
      %4598 = vmatprep.subr.bf16.mxu0 %v3316
      %4599 = vmatpush1.bf16.msra.mxu0 %v3315
      %4600 = vmatprep.subr.bf16.mxu0 %v3318
      %4601 = vmatpush1.bf16.msra.mxu0 %v3317
      %4602 = vmatprep.subr.bf16.mxu0 %v3320
      %4603 = vmatpush1.bf16.msra.mxu0 %v3319
      %4604 = vmatprep.subr.bf16.mxu0 %v3322
      %4605 = vmatpush1.bf16.msra.mxu0 %v3321
      %4606 = vmatprep.subr.bf16.mxu0 %v3324
      %4607 = vmatpush1.bf16.msra.mxu0 %v3323
      %4608 = vmatprep.subr.bf16.mxu0 %v3326
      %4609 = vmatpush1.bf16.msra.mxu0 %v3325
      %4610 = vmatprep.subr.bf16.mxu0 %v3328
      %4611 = vmatpush1.bf16.msra.mxu0 %v3327
      %4612 = vmatprep.subr.bf16.mxu0 %v3330
      %4613 = vmatpush1.bf16.msra.mxu0 %v3329
      %4614 = vmatprep.subr.bf16.mxu0 %v3332
      %4615 = vmatpush1.bf16.msra.mxu0 %v3331
      %4616 = vmatprep.subr.bf16.mxu0 %v3334
      %4617 = vmatpush1.bf16.msra.mxu0 %v3333
      %4618 = vmatprep.subr.bf16.mxu0 %v3336
      %4619 = vmatpush1.bf16.msra.mxu0 %v3335
      %4620 = vmatprep.mubr.bf16.mxu0 %v2096
      %4621 = vmatmul.mubr.bf16.gmra.mrb[0].mxu0 %v2095
      %v4622 = vpop.f32.mrb[0].mxu0
      %v4623 = vadd.f32 %v4270, %v4622
      %v4624 = vpop.f32.mrb[0].mxu0
      %v4625 = vadd.f32 %v4272, %v4624
      %v4626 = vpop.f32.mrb[0].mxu0
      %v4627 = vadd.f32 %v4274, %v4626
      %v4628 = vpop.f32.mrb[0].mxu0
      %v4629 = vadd.f32 %v4276, %v4628
      %4630 = vmatprep.mubr.bf16.mxu0 %v2106
      %4631 = vmatmul.mubr.bf16.gmra.mrb[0].mxu0 %v2105
      %v4632 = vpop.f32.mrb[0].mxu0
      %v4633 = vadd.f32 %v4280, %v4632
      %v4634 = vpop.f32.mrb[0].mxu0
      %v4635 = vadd.f32 %v4282, %v4634
      %v4636 = vpop.f32.mrb[0].mxu0
      %v4637 = vadd.f32 %v4284, %v4636
      %v4638 = vpop.f32.mrb[0].mxu0
      %v4639 = vadd.f32 %v4286, %v4638
      %4640 = vmatprep.mubr.bf16.mxu0 %v2116
      %4641 = vmatmul.mubr.bf16.gmra.mrb[0].mxu0 %v2115
      %v4642 = vpop.f32.mrb[0].mxu0
      %v4643 = vadd.f32 %v4290, %v4642
      %v4644 = vpop.f32.mrb[0].mxu0
      %v4645 = vadd.f32 %v4292, %v4644
      %v4646 = vpop.f32.mrb[0].mxu0
      %v4647 = vadd.f32 %v4294, %v4646
      %v4648 = vpop.f32.mrb[0].mxu0
      %v4649 = vadd.f32 %v4296, %v4648
      %4650 = vmatprep.mubr.bf16.mxu0 %v2126
      %4651 = vmatmul.mubr.bf16.gmra.mrb[0].mxu0 %v2125
      %v4652 = vpop.f32.mrb[0].mxu0
      %v4653 = vadd.f32 %v4300, %v4652
      %v4654 = vpop.f32.mrb[0].mxu0
      %v4655 = vadd.f32 %v4302, %v4654
      %v4656 = vpop.f32.mrb[0].mxu0
      %v4657 = vadd.f32 %v4304, %v4656
      %v4658 = vpop.f32.mrb[0].mxu0
      %v4659 = vadd.f32 %v4306, %v4658
      %4660 = vmatprep.mubr.bf16.mxu0 %v2136
      %4661 = vmatmul.mubr.bf16.gmra.mrb[0].mxu0 %v2135
      %v4662 = vpop.f32.mrb[0].mxu0
      %v4663 = vadd.f32 %v4310, %v4662
      %v4664 = vpop.f32.mrb[0].mxu0
      %v4665 = vadd.f32 %v4312, %v4664
      %v4666 = vpop.f32.mrb[0].mxu0
      %v4667 = vadd.f32 %v4314, %v4666
      %v4668 = vpop.f32.mrb[0].mxu0
      %v4669 = vadd.f32 %v4316, %v4668
      %4670 = vmatprep.mubr.bf16.mxu0 %v2146
      %4671 = vmatmul.mubr.bf16.gmra.mrb[0].mxu0 %v2145
      %v4672 = vpop.f32.mrb[0].mxu0
      %v4673 = vadd.f32 %v4320, %v4672
      %v4674 = vpop.f32.mrb[0].mxu0
      %v4675 = vadd.f32 %v4322, %v4674
      %v4676 = vpop.f32.mrb[0].mxu0
      %v4677 = vadd.f32 %v4324, %v4676
      %v4678 = vpop.f32.mrb[0].mxu0
      %v4679 = vadd.f32 %v4326, %v4678
      %4680 = vmatprep.mubr.bf16.mxu0 %v2156
      %4681 = vmatmul.mubr.bf16.gmra.mrb[0].mxu0 %v2155
      %v4682 = vpop.f32.mrb[0].mxu0
      %v4683 = vadd.f32 %v4330, %v4682
      %v4684 = vpop.f32.mrb[0].mxu0
      %v4685 = vadd.f32 %v4332, %v4684
      %v4686 = vpop.f32.mrb[0].mxu0
      %v4687 = vadd.f32 %v4334, %v4686
      %v4688 = vpop.f32.mrb[0].mxu0
      %v4689 = vadd.f32 %v4336, %v4688
      %4690 = vmatprep.mubr.bf16.mxu0 %v2166
      %4691 = vmatmul.mubr.bf16.gmra.mrb[0].mxu0 %v2165
      %v4692 = vpop.f32.mrb[0].mxu0
      %v4693 = vadd.f32 %v4340, %v4692
      %v4694 = vpop.f32.mrb[0].mxu0
      %v4695 = vadd.f32 %v4342, %v4694
      %v4696 = vpop.f32.mrb[0].mxu0
      %v4697 = vadd.f32 %v4344, %v4696
      %v4698 = vpop.f32.mrb[0].mxu0
      %v4699 = vadd.f32 %v4346, %v4698
      %4700 = vmatprep.mubr.bf16.mxu0 %v2176
      %4701 = vmatmul.mubr.bf16.gmra.mrb[0].mxu0 %v2175
      %v4702 = vpop.f32.mrb[0].mxu0
      %v4703 = vadd.f32 %v4350, %v4702
      %v4704 = vpop.f32.mrb[0].mxu0
      %v4705 = vadd.f32 %v4352, %v4704
      %v4706 = vpop.f32.mrb[0].mxu0
      %v4707 = vadd.f32 %v4354, %v4706
      %v4708 = vpop.f32.mrb[0].mxu0
      %v4709 = vadd.f32 %v4356, %v4708
      %4710 = vmatprep.mubr.bf16.mxu0 %v2186
      %4711 = vmatmul.mubr.bf16.gmra.mrb[0].mxu0 %v2185
      %v4712 = vpop.f32.mrb[0].mxu0
      %v4713 = vadd.f32 %v4360, %v4712
      %v4714 = vpop.f32.mrb[0].mxu0
      %v4715 = vadd.f32 %v4362, %v4714
      %v4716 = vpop.f32.mrb[0].mxu0
      %v4717 = vadd.f32 %v4364, %v4716
      %v4718 = vpop.f32.mrb[0].mxu0
      %v4719 = vadd.f32 %v4366, %v4718
      %4720 = vmatprep.mubr.bf16.mxu0 %v2196
      %4721 = vmatmul.mubr.bf16.gmra.mrb[0].mxu0 %v2195
      %v4722 = vpop.f32.mrb[0].mxu0
      %v4723 = vadd.f32 %v4370, %v4722
      %v4724 = vpop.f32.mrb[0].mxu0
      %v4725 = vadd.f32 %v4372, %v4724
      %v4726 = vpop.f32.mrb[0].mxu0
      %v4727 = vadd.f32 %v4374, %v4726
      %v4728 = vpop.f32.mrb[0].mxu0
      %v4729 = vadd.f32 %v4376, %v4728
      %4730 = vmatprep.mubr.bf16.mxu0 %v2206
      %4731 = vmatmul.mubr.bf16.gmra.mrb[0].mxu0 %v2205
      %v4732 = vpop.f32.mrb[0].mxu0
      %v4733 = vadd.f32 %v4380, %v4732
      %v4734 = vpop.f32.mrb[0].mxu0
      %v4735 = vadd.f32 %v4382, %v4734
      %v4736 = vpop.f32.mrb[0].mxu0
      %v4737 = vadd.f32 %v4384, %v4736
      %v4738 = vpop.f32.mrb[0].mxu0
      %v4739 = vadd.f32 %v4386, %v4738
      %4740 = vmatprep.mubr.bf16.mxu0 %v2216
      %4741 = vmatmul.mubr.bf16.gmra.mrb[0].mxu0 %v2215
      %v4742 = vpop.f32.mrb[0].mxu0
      %v4743 = vadd.f32 %v4390, %v4742
      %v4744 = vpop.f32.mrb[0].mxu0
      %v4745 = vadd.f32 %v4392, %v4744
      %v4746 = vpop.f32.mrb[0].mxu0
      %v4747 = vadd.f32 %v4394, %v4746
      %v4748 = vpop.f32.mrb[0].mxu0
      %v4749 = vadd.f32 %v4396, %v4748
      %4750 = vmatprep.mubr.bf16.mxu0 %v2226
      %4751 = vmatmul.mubr.bf16.gmra.mrb[0].mxu0 %v2225
      %v4752 = vpop.f32.mrb[0].mxu0
      %v4753 = vadd.f32 %v4400, %v4752
      %v4754 = vpop.f32.mrb[0].mxu0
      %v4755 = vadd.f32 %v4402, %v4754
      %v4756 = vpop.f32.mrb[0].mxu0
      %v4757 = vadd.f32 %v4404, %v4756
      %v4758 = vpop.f32.mrb[0].mxu0
      %v4759 = vadd.f32 %v4406, %v4758
      %4760 = vmatprep.mubr.bf16.mxu0 %v2236
      %4761 = vmatmul.mubr.bf16.gmra.mrb[0].mxu0 %v2235
      %v4762 = vpop.f32.mrb[0].mxu0
      %v4763 = vadd.f32 %v4410, %v4762
      %v4764 = vpop.f32.mrb[0].mxu0
      %v4765 = vadd.f32 %v4412, %v4764
      %v4766 = vpop.f32.mrb[0].mxu0
      %v4767 = vadd.f32 %v4414, %v4766
      %v4768 = vpop.f32.mrb[0].mxu0
      %v4769 = vadd.f32 %v4416, %v4768
      %4770 = vmatprep.mubr.bf16.mxu0 %v2246
      %4771 = vmatmul.mubr.bf16.gmra.mrb[0].mxu0 %v2245
      %v4772 = vpop.f32.mrb[0].mxu0
      %v4773 = vadd.f32 %v4420, %v4772
      %v4774 = vpop.f32.mrb[0].mxu0
      %v4775 = vadd.f32 %v4422, %v4774
      %v4776 = vpop.f32.mrb[0].mxu0
      %v4777 = vadd.f32 %v4424, %v4776
      %v4778 = vpop.f32.mrb[0].mxu0
      %v4779 = vadd.f32 %v4426, %v4778
      %4780 = vmatprep.mubr.bf16.mxu0 %v2256
      %4781 = vmatmul.mubr.bf16.gmra.mrb[0].mxu0 %v2255
      %v4782 = vpop.f32.mrb[0].mxu0
      %v4783 = vadd.f32 %v4430, %v4782
      %v4784 = vpop.f32.mrb[0].mxu0
      %v4785 = vadd.f32 %v4432, %v4784
      %v4786 = vpop.f32.mrb[0].mxu0
      %v4787 = vadd.f32 %v4434, %v4786
      %v4788 = vpop.f32.mrb[0].mxu0
      %v4789 = vadd.f32 %v4436, %v4788
      %4790 = vmatprep.mubr.bf16.mxu0 %v2266
      %4791 = vmatmul.mubr.bf16.gmra.mrb[0].mxu0 %v2265
      %v4792 = vpop.f32.mrb[0].mxu0
      %v4793 = vadd.f32 %v4440, %v4792
      %v4794 = vpop.f32.mrb[0].mxu0
      %v4795 = vadd.f32 %v4442, %v4794
      %v4796 = vpop.f32.mrb[0].mxu0
      %v4797 = vadd.f32 %v4444, %v4796
      %v4798 = vpop.f32.mrb[0].mxu0
      %v4799 = vadd.f32 %v4446, %v4798
      %4800 = vmatprep.mubr.bf16.mxu0 %v2276
      %4801 = vmatmul.mubr.bf16.gmra.mrb[0].mxu0 %v2275
      %v4802 = vpop.f32.mrb[0].mxu0
      %v4803 = vadd.f32 %v4450, %v4802
      %v4804 = vpop.f32.mrb[0].mxu0
      %v4805 = vadd.f32 %v4452, %v4804
      %v4806 = vpop.f32.mrb[0].mxu0
      %v4807 = vadd.f32 %v4454, %v4806
      %v4808 = vpop.f32.mrb[0].mxu0
      %v4809 = vadd.f32 %v4456, %v4808
      %4810 = vmatprep.mubr.bf16.mxu0 %v2286
      %4811 = vmatmul.mubr.bf16.gmra.mrb[0].mxu0 %v2285
      %v4812 = vpop.f32.mrb[0].mxu0
      %v4813 = vadd.f32 %v4460, %v4812
      %v4814 = vpop.f32.mrb[0].mxu0
      %v4815 = vadd.f32 %v4462, %v4814
      %v4816 = vpop.f32.mrb[0].mxu0
      %v4817 = vadd.f32 %v4464, %v4816
      %v4818 = vpop.f32.mrb[0].mxu0
      %v4819 = vadd.f32 %v4466, %v4818
      %4820 = vmatprep.mubr.bf16.mxu0 %v2296
      %4821 = vmatmul.mubr.bf16.gmra.mrb[0].mxu0 %v2295
      %v4822 = vpop.f32.mrb[0].mxu0
      %v4823 = vadd.f32 %v4470, %v4822
      %v4824 = vpop.f32.mrb[0].mxu0
      %v4825 = vadd.f32 %v4472, %v4824
      %v4826 = vpop.f32.mrb[0].mxu0
      %v4827 = vadd.f32 %v4474, %v4826
      %v4828 = vpop.f32.mrb[0].mxu0
      %v4829 = vadd.f32 %v4476, %v4828
      %4830 = vmatprep.mubr.bf16.mxu0 %v2306
      %4831 = vmatmul.mubr.bf16.gmra.mrb[0].mxu0 %v2305
      %v4832 = vpop.f32.mrb[0].mxu0
      %v4833 = vadd.f32 %v4480, %v4832
      %v4834 = vpop.f32.mrb[0].mxu0
      %v4835 = vadd.f32 %v4482, %v4834
      %v4836 = vpop.f32.mrb[0].mxu0
      %v4837 = vadd.f32 %v4484, %v4836
      %v4838 = vpop.f32.mrb[0].mxu0
      %v4839 = vadd.f32 %v4486, %v4838
      %4840 = vmatprep.mubr.bf16.mxu0 %v2316
      %4841 = vmatmul.mubr.bf16.gmra.mrb[0].mxu0 %v2315
      %v4842 = vpop.f32.mrb[0].mxu0
      %v4843 = vadd.f32 %v4490, %v4842
      %v4844 = vpop.f32.mrb[0].mxu0
      %v4845 = vadd.f32 %v4492, %v4844
      %v4846 = vpop.f32.mrb[0].mxu0
      %v4847 = vadd.f32 %v4494, %v4846
      %v4848 = vpop.f32.mrb[0].mxu0
      %v4849 = vadd.f32 %v4496, %v4848
      %4850 = vmatprep.mubr.bf16.mxu0 %v2326
      %4851 = vmatmul.mubr.bf16.gmra.mrb[0].mxu0 %v2325
      %v4852 = vpop.f32.mrb[0].mxu0
      %v4853 = vadd.f32 %v4500, %v4852
      %v4854 = vpop.f32.mrb[0].mxu0
      %v4855 = vadd.f32 %v4502, %v4854
      %v4856 = vpop.f32.mrb[0].mxu0
      %v4857 = vadd.f32 %v4504, %v4856
      %v4858 = vpop.f32.mrb[0].mxu0
      %v4859 = vadd.f32 %v4506, %v4858
      %4860 = vmatprep.mubr.bf16.mxu0 %v2336
      %4861 = vmatmul.mubr.bf16.gmra.mrb[0].mxu0 %v2335
      %v4862 = vpop.f32.mrb[0].mxu0
      %v4863 = vadd.f32 %v4510, %v4862
      %v4864 = vpop.f32.mrb[0].mxu0
      %v4865 = vadd.f32 %v4512, %v4864
      %v4866 = vpop.f32.mrb[0].mxu0
      %v4867 = vadd.f32 %v4514, %v4866
      %v4868 = vpop.f32.mrb[0].mxu0
      %v4869 = vadd.f32 %v4516, %v4868
      %4870 = vmatprep.mubr.bf16.mxu0 %v2346
      %4871 = vmatmul.mubr.bf16.gmra.mrb[0].mxu0 %v2345
      %v4872 = vpop.f32.mrb[0].mxu0
      %v4873 = vadd.f32 %v4520, %v4872
      %v4874 = vpop.f32.mrb[0].mxu0
      %v4875 = vadd.f32 %v4522, %v4874
      %v4876 = vpop.f32.mrb[0].mxu0
      %v4877 = vadd.f32 %v4524, %v4876
      %v4878 = vpop.f32.mrb[0].mxu0
      %v4879 = vadd.f32 %v4526, %v4878
      %4880 = vmatprep.mubr.bf16.mxu0 %v2356
      %4881 = vmatmul.mubr.bf16.gmra.mrb[0].mxu0 %v2355
      %v4882 = vpop.f32.mrb[0].mxu0
      %v4883 = vadd.f32 %v4530, %v4882
      %v4884 = vpop.f32.mrb[0].mxu0
      %v4885 = vadd.f32 %v4532, %v4884
      %v4886 = vpop.f32.mrb[0].mxu0
      %v4887 = vadd.f32 %v4534, %v4886
      %v4888 = vpop.f32.mrb[0].mxu0
      %v4889 = vadd.f32 %v4536, %v4888
      %4890 = vmatprep.mubr.bf16.mxu0 %v2366
      %4891 = vmatmul.mubr.bf16.gmra.mrb[0].mxu0 %v2365
      %v4892 = vpop.f32.mrb[0].mxu0
      %v4893 = vadd.f32 %v4540, %v4892
      %v4894 = vpop.f32.mrb[0].mxu0
      %v4895 = vadd.f32 %v4542, %v4894
      %v4896 = vpop.f32.mrb[0].mxu0
      %v4897 = vadd.f32 %v4544, %v4896
      %v4898 = vpop.f32.mrb[0].mxu0
      %v4899 = vadd.f32 %v4546, %v4898
      %4900 = vmatprep.mubr.bf16.mxu0 %v2376
      %4901 = vmatmul.mubr.bf16.gmra.mrb[0].mxu0 %v2375
      %v4902 = vpop.f32.mrb[0].mxu0
      %v4903 = vadd.f32 %v4550, %v4902
      %v4904 = vpop.f32.mrb[0].mxu0
      %v4905 = vadd.f32 %v4552, %v4904
      %v4906 = vpop.f32.mrb[0].mxu0
      %v4907 = vadd.f32 %v4554, %v4906
      %v4908 = vpop.f32.mrb[0].mxu0
      %v4909 = vadd.f32 %v4556, %v4908
      %4910 = vmatprep.mubr.bf16.mxu0 %v2386
      %4911 = vmatmul.mubr.bf16.gmra.mrb[0].mxu0 %v2385
      %v4912 = vpop.f32.mrb[0].mxu0
      %v4913 = vadd.f32 %v4560, %v4912
      %v4914 = vpop.f32.mrb[0].mxu0
      %v4915 = vadd.f32 %v4562, %v4914
      %v4916 = vpop.f32.mrb[0].mxu0
      %v4917 = vadd.f32 %v4564, %v4916
      %v4918 = vpop.f32.mrb[0].mxu0
      %v4919 = vadd.f32 %v4566, %v4918
      %4920 = vmatprep.mubr.bf16.mxu0 %v2396
      %4921 = vmatmul.mubr.bf16.gmra.mrb[0].mxu0 %v2395
      %v4922 = vpop.f32.mrb[0].mxu0
      %v4923 = vadd.f32 %v4570, %v4922
      %v4924 = vpop.f32.mrb[0].mxu0
      %v4925 = vadd.f32 %v4572, %v4924
      %v4926 = vpop.f32.mrb[0].mxu0
      %v4927 = vadd.f32 %v4574, %v4926
      %v4928 = vpop.f32.mrb[0].mxu0
      %v4929 = vadd.f32 %v4576, %v4928
      %4930 = vmatprep.mubr.bf16.mxu0 %v2406
      %4931 = vmatmul.mubr.bf16.gmra.mrb[0].mxu0 %v2405
      %v4932 = vpop.f32.mrb[0].mxu0
      %v4933 = vadd.f32 %v4580, %v4932
      %v4934 = vpop.f32.mrb[0].mxu0
      %v4935 = vadd.f32 %v4582, %v4934
      %v4936 = vpop.f32.mrb[0].mxu0
      %v4937 = vadd.f32 %v4584, %v4936
      %v4938 = vpop.f32.mrb[0].mxu0
      %v4939 = vadd.f32 %v4586, %v4938
      %4940 = vdwg.mxu0
      %4941 = vmatprep.subr.bf16.mxu0 %v3338
      %4942 = vmatpush1.bf16.msra.mxu0 %v3337
      %4943 = vmatprep.subr.bf16.mxu0 %v3340
      %4944 = vmatpush1.bf16.msra.mxu0 %v3339
      %4945 = vmatprep.subr.bf16.mxu0 %v3342
      %4946 = vmatpush1.bf16.msra.mxu0 %v3341
      %4947 = vmatprep.subr.bf16.mxu0 %v3344
      %4948 = vmatpush1.bf16.msra.mxu0 %v3343
      %4949 = vmatprep.subr.bf16.mxu0 %v3346
      %4950 = vmatpush1.bf16.msra.mxu0 %v3345
      %4951 = vmatprep.subr.bf16.mxu0 %v3348
      %4952 = vmatpush1.bf16.msra.mxu0 %v3347
      %4953 = vmatprep.subr.bf16.mxu0 %v3350
      %4954 = vmatpush1.bf16.msra.mxu0 %v3349
      %4955 = vmatprep.subr.bf16.mxu0 %v3352
      %4956 = vmatpush1.bf16.msra.mxu0 %v3351
      %4957 = vmatprep.subr.bf16.mxu0 %v3354
      %4958 = vmatpush1.bf16.msra.mxu0 %v3353
      %4959 = vmatprep.subr.bf16.mxu0 %v3356
      %4960 = vmatpush1.bf16.msra.mxu0 %v3355
      %4961 = vmatprep.subr.bf16.mxu0 %v3358
      %4962 = vmatpush1.bf16.msra.mxu0 %v3357
      %4963 = vmatprep.subr.bf16.mxu0 %v3360
      %4964 = vmatpush1.bf16.msra.mxu0 %v3359
      %4965 = vmatprep.subr.bf16.mxu0 %v3362
      %4966 = vmatpush1.bf16.msra.mxu0 %v3361
      %4967 = vmatprep.subr.bf16.mxu0 %v3364
      %4968 = vmatpush1.bf16.msra.mxu0 %v3363
      %4969 = vmatprep.subr.bf16.mxu0 %v3366
      %4970 = vmatpush1.bf16.msra.mxu0 %v3365
      %4971 = vmatprep.subr.bf16.mxu0 %v3368
      %4972 = vmatpush1.bf16.msra.mxu0 %v3367
      %4973 = vmatprep.mubr.bf16.mxu0 %v2098
      %4974 = vmatmul.mubr.bf16.gmra.mrb[0].mxu0 %v2097
      %v4975 = vpop.f32.mrb[0].mxu0
      %v4976 = vadd.f32 %v4623, %v4975
      %v4977 = vpop.f32.mrb[0].mxu0
      %v4978 = vadd.f32 %v4625, %v4977
      %v4979 = vpop.f32.mrb[0].mxu0
      %v4980 = vadd.f32 %v4627, %v4979
      %v4981 = vpop.f32.mrb[0].mxu0
      %v4982 = vadd.f32 %v4629, %v4981
      %4983 = vmatprep.mubr.bf16.mxu0 %v2108
      %4984 = vmatmul.mubr.bf16.gmra.mrb[0].mxu0 %v2107
      %v4985 = vpop.f32.mrb[0].mxu0
      %v4986 = vadd.f32 %v4633, %v4985
      %v4987 = vpop.f32.mrb[0].mxu0
      %v4988 = vadd.f32 %v4635, %v4987
      %v4989 = vpop.f32.mrb[0].mxu0
      %v4990 = vadd.f32 %v4637, %v4989
      %v4991 = vpop.f32.mrb[0].mxu0
      %v4992 = vadd.f32 %v4639, %v4991
      %4993 = vmatprep.mubr.bf16.mxu0 %v2118
      %4994 = vmatmul.mubr.bf16.gmra.mrb[0].mxu0 %v2117
      %v4995 = vpop.f32.mrb[0].mxu0
      %v4996 = vadd.f32 %v4643, %v4995
      %v4997 = vpop.f32.mrb[0].mxu0
      %v4998 = vadd.f32 %v4645, %v4997
      %v4999 = vpop.f32.mrb[0].mxu0
      %v5000 = vadd.f32 %v4647, %v4999
      %v5001 = vpop.f32.mrb[0].mxu0
      %v5002 = vadd.f32 %v4649, %v5001
      %5003 = vmatprep.mubr.bf16.mxu0 %v2128
      %5004 = vmatmul.mubr.bf16.gmra.mrb[0].mxu0 %v2127
      %v5005 = vpop.f32.mrb[0].mxu0
      %v5006 = vadd.f32 %v4653, %v5005
      %v5007 = vpop.f32.mrb[0].mxu0
      %v5008 = vadd.f32 %v4655, %v5007
      %v5009 = vpop.f32.mrb[0].mxu0
      %v5010 = vadd.f32 %v4657, %v5009
      %v5011 = vpop.f32.mrb[0].mxu0
      %v5012 = vadd.f32 %v4659, %v5011
      %5013 = vmatprep.mubr.bf16.mxu0 %v2138
      %5014 = vmatmul.mubr.bf16.gmra.mrb[0].mxu0 %v2137
      %v5015 = vpop.f32.mrb[0].mxu0
      %v5016 = vadd.f32 %v4663, %v5015
      %v5017 = vpop.f32.mrb[0].mxu0
      %v5018 = vadd.f32 %v4665, %v5017
      %v5019 = vpop.f32.mrb[0].mxu0
      %v5020 = vadd.f32 %v4667, %v5019
      %v5021 = vpop.f32.mrb[0].mxu0
      %v5022 = vadd.f32 %v4669, %v5021
      %5023 = vmatprep.mubr.bf16.mxu0 %v2148
      %5024 = vmatmul.mubr.bf16.gmra.mrb[0].mxu0 %v2147
      %v5025 = vpop.f32.mrb[0].mxu0
      %v5026 = vadd.f32 %v4673, %v5025
      %v5027 = vpop.f32.mrb[0].mxu0
      %v5028 = vadd.f32 %v4675, %v5027
      %v5029 = vpop.f32.mrb[0].mxu0
      %v5030 = vadd.f32 %v4677, %v5029
      %v5031 = vpop.f32.mrb[0].mxu0
      %v5032 = vadd.f32 %v4679, %v5031
      %5033 = vmatprep.mubr.bf16.mxu0 %v2158
      %5034 = vmatmul.mubr.bf16.gmra.mrb[0].mxu0 %v2157
      %v5035 = vpop.f32.mrb[0].mxu0
      %v5036 = vadd.f32 %v4683, %v5035
      %v5037 = vpop.f32.mrb[0].mxu0
      %v5038 = vadd.f32 %v4685, %v5037
      %v5039 = vpop.f32.mrb[0].mxu0
      %v5040 = vadd.f32 %v4687, %v5039
      %v5041 = vpop.f32.mrb[0].mxu0
      %v5042 = vadd.f32 %v4689, %v5041
      %5043 = vmatprep.mubr.bf16.mxu0 %v2168
      %5044 = vmatmul.mubr.bf16.gmra.mrb[0].mxu0 %v2167
      %v5045 = vpop.f32.mrb[0].mxu0
      %v5046 = vadd.f32 %v4693, %v5045
      %v5047 = vpop.f32.mrb[0].mxu0
      %v5048 = vadd.f32 %v4695, %v5047
      %v5049 = vpop.f32.mrb[0].mxu0
      %v5050 = vadd.f32 %v4697, %v5049
      %v5051 = vpop.f32.mrb[0].mxu0
      %v5052 = vadd.f32 %v4699, %v5051
      %5053 = vmatprep.mubr.bf16.mxu0 %v2178
      %5054 = vmatmul.mubr.bf16.gmra.mrb[0].mxu0 %v2177
      %v5055 = vpop.f32.mrb[0].mxu0
      %v5056 = vadd.f32 %v4703, %v5055
      %v5057 = vpop.f32.mrb[0].mxu0
      %v5058 = vadd.f32 %v4705, %v5057
      %v5059 = vpop.f32.mrb[0].mxu0
      %v5060 = vadd.f32 %v4707, %v5059
      %v5061 = vpop.f32.mrb[0].mxu0
      %v5062 = vadd.f32 %v4709, %v5061
      %5063 = vmatprep.mubr.bf16.mxu0 %v2188
      %5064 = vmatmul.mubr.bf16.gmra.mrb[0].mxu0 %v2187
      %v5065 = vpop.f32.mrb[0].mxu0
      %v5066 = vadd.f32 %v4713, %v5065
      %v5067 = vpop.f32.mrb[0].mxu0
      %v5068 = vadd.f32 %v4715, %v5067
      %v5069 = vpop.f32.mrb[0].mxu0
      %v5070 = vadd.f32 %v4717, %v5069
      %v5071 = vpop.f32.mrb[0].mxu0
      %v5072 = vadd.f32 %v4719, %v5071
      %5073 = vmatprep.mubr.bf16.mxu0 %v2198
      %5074 = vmatmul.mubr.bf16.gmra.mrb[0].mxu0 %v2197
      %v5075 = vpop.f32.mrb[0].mxu0
      %v5076 = vadd.f32 %v4723, %v5075
      %v5077 = vpop.f32.mrb[0].mxu0
      %v5078 = vadd.f32 %v4725, %v5077
      %v5079 = vpop.f32.mrb[0].mxu0
      %v5080 = vadd.f32 %v4727, %v5079
      %v5081 = vpop.f32.mrb[0].mxu0
      %v5082 = vadd.f32 %v4729, %v5081
      %5083 = vmatprep.mubr.bf16.mxu0 %v2208
      %5084 = vmatmul.mubr.bf16.gmra.mrb[0].mxu0 %v2207
      %v5085 = vpop.f32.mrb[0].mxu0
      %v5086 = vadd.f32 %v4733, %v5085
      %v5087 = vpop.f32.mrb[0].mxu0
      %v5088 = vadd.f32 %v4735, %v5087
      %v5089 = vpop.f32.mrb[0].mxu0
      %v5090 = vadd.f32 %v4737, %v5089
      %v5091 = vpop.f32.mrb[0].mxu0
      %v5092 = vadd.f32 %v4739, %v5091
      %5093 = vmatprep.mubr.bf16.mxu0 %v2218
      %5094 = vmatmul.mubr.bf16.gmra.mrb[0].mxu0 %v2217
      %v5095 = vpop.f32.mrb[0].mxu0
      %v5096 = vadd.f32 %v4743, %v5095
      %v5097 = vpop.f32.mrb[0].mxu0
      %v5098 = vadd.f32 %v4745, %v5097
      %v5099 = vpop.f32.mrb[0].mxu0
      %v5100 = vadd.f32 %v4747, %v5099
      %v5101 = vpop.f32.mrb[0].mxu0
      %v5102 = vadd.f32 %v4749, %v5101
      %5103 = vmatprep.mubr.bf16.mxu0 %v2228
      %5104 = vmatmul.mubr.bf16.gmra.mrb[0].mxu0 %v2227
      %v5105 = vpop.f32.mrb[0].mxu0
      %v5106 = vadd.f32 %v4753, %v5105
      %v5107 = vpop.f32.mrb[0].mxu0
      %v5108 = vadd.f32 %v4755, %v5107
      %v5109 = vpop.f32.mrb[0].mxu0
      %v5110 = vadd.f32 %v4757, %v5109
      %v5111 = vpop.f32.mrb[0].mxu0
      %v5112 = vadd.f32 %v4759, %v5111
      %5113 = vmatprep.mubr.bf16.mxu0 %v2238
      %5114 = vmatmul.mubr.bf16.gmra.mrb[0].mxu0 %v2237
      %v5115 = vpop.f32.mrb[0].mxu0
      %v5116 = vadd.f32 %v4763, %v5115
      %v5117 = vpop.f32.mrb[0].mxu0
      %v5118 = vadd.f32 %v4765, %v5117
      %v5119 = vpop.f32.mrb[0].mxu0
      %v5120 = vadd.f32 %v4767, %v5119
      %v5121 = vpop.f32.mrb[0].mxu0
      %v5122 = vadd.f32 %v4769, %v5121
      %5123 = vmatprep.mubr.bf16.mxu0 %v2248
      %5124 = vmatmul.mubr.bf16.gmra.mrb[0].mxu0 %v2247
      %v5125 = vpop.f32.mrb[0].mxu0
      %v5126 = vadd.f32 %v4773, %v5125
      %v5127 = vpop.f32.mrb[0].mxu0
      %v5128 = vadd.f32 %v4775, %v5127
      %v5129 = vpop.f32.mrb[0].mxu0
      %v5130 = vadd.f32 %v4777, %v5129
      %v5131 = vpop.f32.mrb[0].mxu0
      %v5132 = vadd.f32 %v4779, %v5131
      %5133 = vmatprep.mubr.bf16.mxu0 %v2258
      %5134 = vmatmul.mubr.bf16.gmra.mrb[0].mxu0 %v2257
      %v5135 = vpop.f32.mrb[0].mxu0
      %v5136 = vadd.f32 %v4783, %v5135
      %v5137 = vpop.f32.mrb[0].mxu0
      %v5138 = vadd.f32 %v4785, %v5137
      %v5139 = vpop.f32.mrb[0].mxu0
      %v5140 = vadd.f32 %v4787, %v5139
      %v5141 = vpop.f32.mrb[0].mxu0
      %v5142 = vadd.f32 %v4789, %v5141
      %5143 = vmatprep.mubr.bf16.mxu0 %v2268
      %5144 = vmatmul.mubr.bf16.gmra.mrb[0].mxu0 %v2267
      %v5145 = vpop.f32.mrb[0].mxu0
      %v5146 = vadd.f32 %v4793, %v5145
      %v5147 = vpop.f32.mrb[0].mxu0
      %v5148 = vadd.f32 %v4795, %v5147
      %v5149 = vpop.f32.mrb[0].mxu0
      %v5150 = vadd.f32 %v4797, %v5149
      %v5151 = vpop.f32.mrb[0].mxu0
      %v5152 = vadd.f32 %v4799, %v5151
      %5153 = vmatprep.mubr.bf16.mxu0 %v2278
      %5154 = vmatmul.mubr.bf16.gmra.mrb[0].mxu0 %v2277
      %v5155 = vpop.f32.mrb[0].mxu0
      %v5156 = vadd.f32 %v4803, %v5155
      %v5157 = vpop.f32.mrb[0].mxu0
      %v5158 = vadd.f32 %v4805, %v5157
      %v5159 = vpop.f32.mrb[0].mxu0
      %v5160 = vadd.f32 %v4807, %v5159
      %v5161 = vpop.f32.mrb[0].mxu0
      %v5162 = vadd.f32 %v4809, %v5161
      %5163 = vmatprep.mubr.bf16.mxu0 %v2288
      %5164 = vmatmul.mubr.bf16.gmra.mrb[0].mxu0 %v2287
      %v5165 = vpop.f32.mrb[0].mxu0
      %v5166 = vadd.f32 %v4813, %v5165
      %v5167 = vpop.f32.mrb[0].mxu0
      %v5168 = vadd.f32 %v4815, %v5167
      %v5169 = vpop.f32.mrb[0].mxu0
      %v5170 = vadd.f32 %v4817, %v5169
      %v5171 = vpop.f32.mrb[0].mxu0
      %v5172 = vadd.f32 %v4819, %v5171
      %5173 = vmatprep.mubr.bf16.mxu0 %v2298
      %5174 = vmatmul.mubr.bf16.gmra.mrb[0].mxu0 %v2297
      %v5175 = vpop.f32.mrb[0].mxu0
      %v5176 = vadd.f32 %v4823, %v5175
      %v5177 = vpop.f32.mrb[0].mxu0
      %v5178 = vadd.f32 %v4825, %v5177
      %v5179 = vpop.f32.mrb[0].mxu0
      %v5180 = vadd.f32 %v4827, %v5179
      %v5181 = vpop.f32.mrb[0].mxu0
      %v5182 = vadd.f32 %v4829, %v5181
      %5183 = vmatprep.mubr.bf16.mxu0 %v2308
      %5184 = vmatmul.mubr.bf16.gmra.mrb[0].mxu0 %v2307
      %v5185 = vpop.f32.mrb[0].mxu0
      %v5186 = vadd.f32 %v4833, %v5185
      %v5187 = vpop.f32.mrb[0].mxu0
      %v5188 = vadd.f32 %v4835, %v5187
      %v5189 = vpop.f32.mrb[0].mxu0
      %v5190 = vadd.f32 %v4837, %v5189
      %v5191 = vpop.f32.mrb[0].mxu0
      %v5192 = vadd.f32 %v4839, %v5191
      %5193 = vmatprep.mubr.bf16.mxu0 %v2318
      %5194 = vmatmul.mubr.bf16.gmra.mrb[0].mxu0 %v2317
      %v5195 = vpop.f32.mrb[0].mxu0
      %v5196 = vadd.f32 %v4843, %v5195
      %v5197 = vpop.f32.mrb[0].mxu0
      %v5198 = vadd.f32 %v4845, %v5197
      %v5199 = vpop.f32.mrb[0].mxu0
      %v5200 = vadd.f32 %v4847, %v5199
      %v5201 = vpop.f32.mrb[0].mxu0
      %v5202 = vadd.f32 %v4849, %v5201
      %5203 = vmatprep.mubr.bf16.mxu0 %v2328
      %5204 = vmatmul.mubr.bf16.gmra.mrb[0].mxu0 %v2327
      %v5205 = vpop.f32.mrb[0].mxu0
      %v5206 = vadd.f32 %v4853, %v5205
      %v5207 = vpop.f32.mrb[0].mxu0
      %v5208 = vadd.f32 %v4855, %v5207
      %v5209 = vpop.f32.mrb[0].mxu0
      %v5210 = vadd.f32 %v4857, %v5209
      %v5211 = vpop.f32.mrb[0].mxu0
      %v5212 = vadd.f32 %v4859, %v5211
      %5213 = vmatprep.mubr.bf16.mxu0 %v2338
      %5214 = vmatmul.mubr.bf16.gmra.mrb[0].mxu0 %v2337
      %v5215 = vpop.f32.mrb[0].mxu0
      %v5216 = vadd.f32 %v4863, %v5215
      %v5217 = vpop.f32.mrb[0].mxu0
      %v5218 = vadd.f32 %v4865, %v5217
      %v5219 = vpop.f32.mrb[0].mxu0
      %v5220 = vadd.f32 %v4867, %v5219
      %v5221 = vpop.f32.mrb[0].mxu0
      %v5222 = vadd.f32 %v4869, %v5221
      %5223 = vmatprep.mubr.bf16.mxu0 %v2348
      %5224 = vmatmul.mubr.bf16.gmra.mrb[0].mxu0 %v2347
      %v5225 = vpop.f32.mrb[0].mxu0
      %v5226 = vadd.f32 %v4873, %v5225
      %v5227 = vpop.f32.mrb[0].mxu0
      %v5228 = vadd.f32 %v4875, %v5227
      %v5229 = vpop.f32.mrb[0].mxu0
      %v5230 = vadd.f32 %v4877, %v5229
      %v5231 = vpop.f32.mrb[0].mxu0
      %v5232 = vadd.f32 %v4879, %v5231
      %5233 = vmatprep.mubr.bf16.mxu0 %v2358
      %5234 = vmatmul.mubr.bf16.gmra.mrb[0].mxu0 %v2357
      %v5235 = vpop.f32.mrb[0].mxu0
      %v5236 = vadd.f32 %v4883, %v5235
      %v5237 = vpop.f32.mrb[0].mxu0
      %v5238 = vadd.f32 %v4885, %v5237
      %v5239 = vpop.f32.mrb[0].mxu0
      %v5240 = vadd.f32 %v4887, %v5239
      %v5241 = vpop.f32.mrb[0].mxu0
      %v5242 = vadd.f32 %v4889, %v5241
      %5243 = vmatprep.mubr.bf16.mxu0 %v2368
      %5244 = vmatmul.mubr.bf16.gmra.mrb[0].mxu0 %v2367
      %v5245 = vpop.f32.mrb[0].mxu0
      %v5246 = vadd.f32 %v4893, %v5245
      %v5247 = vpop.f32.mrb[0].mxu0
      %v5248 = vadd.f32 %v4895, %v5247
      %v5249 = vpop.f32.mrb[0].mxu0
      %v5250 = vadd.f32 %v4897, %v5249
      %v5251 = vpop.f32.mrb[0].mxu0
      %v5252 = vadd.f32 %v4899, %v5251
      %5253 = vmatprep.mubr.bf16.mxu0 %v2378
      %5254 = vmatmul.mubr.bf16.gmra.mrb[0].mxu0 %v2377
      %v5255 = vpop.f32.mrb[0].mxu0
      %v5256 = vadd.f32 %v4903, %v5255
      %v5257 = vpop.f32.mrb[0].mxu0
      %v5258 = vadd.f32 %v4905, %v5257
      %v5259 = vpop.f32.mrb[0].mxu0
      %v5260 = vadd.f32 %v4907, %v5259
      %v5261 = vpop.f32.mrb[0].mxu0
      %v5262 = vadd.f32 %v4909, %v5261
      %5263 = vmatprep.mubr.bf16.mxu0 %v2388
      %5264 = vmatmul.mubr.bf16.gmra.mrb[0].mxu0 %v2387
      %v5265 = vpop.f32.mrb[0].mxu0
      %v5266 = vadd.f32 %v4913, %v5265
      %v5267 = vpop.f32.mrb[0].mxu0
      %v5268 = vadd.f32 %v4915, %v5267
      %v5269 = vpop.f32.mrb[0].mxu0
      %v5270 = vadd.f32 %v4917, %v5269
      %v5271 = vpop.f32.mrb[0].mxu0
      %v5272 = vadd.f32 %v4919, %v5271
      %5273 = vmatprep.mubr.bf16.mxu0 %v2398
      %5274 = vmatmul.mubr.bf16.gmra.mrb[0].mxu0 %v2397
      %v5275 = vpop.f32.mrb[0].mxu0
      %v5276 = vadd.f32 %v4923, %v5275
      %v5277 = vpop.f32.mrb[0].mxu0
      %v5278 = vadd.f32 %v4925, %v5277
      %v5279 = vpop.f32.mrb[0].mxu0
      %v5280 = vadd.f32 %v4927, %v5279
      %v5281 = vpop.f32.mrb[0].mxu0
      %v5282 = vadd.f32 %v4929, %v5281
      %5283 = vmatprep.mubr.bf16.mxu0 %v2408
      %5284 = vmatmul.mubr.bf16.gmra.mrb[0].mxu0 %v2407
      %v5285 = vpop.f32.mrb[0].mxu0
      %v5286 = vadd.f32 %v4933, %v5285
      %v5287 = vpop.f32.mrb[0].mxu0
      %v5288 = vadd.f32 %v4935, %v5287
      %v5289 = vpop.f32.mrb[0].mxu0
      %v5290 = vadd.f32 %v4937, %v5289
      %v5291 = vpop.f32.mrb[0].mxu0
      %v5292 = vadd.f32 %v4939, %v5291
      %5293 = vdwg.mxu0
      %v5294 = vmax.f32 %v4976, 0.0
      %v5295 = vmax.f32 %v4978, 0.0
      %v5296 = vmax.f32 %v4980, 0.0
      %v5297 = vmax.f32 %v4982, 0.0
      %v5298 = vmax.f32 %v4986, 0.0
      %v5299 = vmax.f32 %v4988, 0.0
      %v5300 = vmax.f32 %v4990, 0.0
      %v5301 = vmax.f32 %v4992, 0.0
      %v5302 = vmax.f32 %v4996, 0.0
      %v5303 = vmax.f32 %v4998, 0.0
      %v5304 = vmax.f32 %v5000, 0.0
      %v5305 = vmax.f32 %v5002, 0.0
      %v5306 = vmax.f32 %v5006, 0.0
      %v5307 = vmax.f32 %v5008, 0.0
      %v5308 = vmax.f32 %v5010, 0.0
      %v5309 = vmax.f32 %v5012, 0.0
      %v5310 = vmax.f32 %v5016, 0.0
      %v5311 = vmax.f32 %v5018, 0.0
      %v5312 = vmax.f32 %v5020, 0.0
      %v5313 = vmax.f32 %v5022, 0.0
      %v5314 = vmax.f32 %v5026, 0.0
      %v5315 = vmax.f32 %v5028, 0.0
      %v5316 = vmax.f32 %v5030, 0.0
      %v5317 = vmax.f32 %v5032, 0.0
      %v5318 = vmax.f32 %v5036, 0.0
      %v5319 = vmax.f32 %v5038, 0.0
      %v5320 = vmax.f32 %v5040, 0.0
      %v5321 = vmax.f32 %v5042, 0.0
      %v5322 = vmax.f32 %v5046, 0.0
      %v5323 = vmax.f32 %v5048, 0.0
      %v5324 = vmax.f32 %v5050, 0.0
      %v5325 = vmax.f32 %v5052, 0.0
      %v5326 = vmax.f32 %v5056, 0.0
      %v5327 = vmax.f32 %v5058, 0.0
      %v5328 = vmax.f32 %v5060, 0.0
      %v5329 = vmax.f32 %v5062, 0.0
      %v5330 = vmax.f32 %v5066, 0.0
      %v5331 = vmax.f32 %v5068, 0.0
      %v5332 = vmax.f32 %v5070, 0.0
      %v5333 = vmax.f32 %v5072, 0.0
      %v5334 = vmax.f32 %v5076, 0.0
      %v5335 = vmax.f32 %v5078, 0.0
      %v5336 = vmax.f32 %v5080, 0.0
      %v5337 = vmax.f32 %v5082, 0.0
      %v5338 = vmax.f32 %v5086, 0.0
      %v5339 = vmax.f32 %v5088, 0.0
      %v5340 = vmax.f32 %v5090, 0.0
      %v5341 = vmax.f32 %v5092, 0.0
      %v5342 = vmax.f32 %v5096, 0.0
      %v5343 = vmax.f32 %v5098, 0.0
      %v5344 = vmax.f32 %v5100, 0.0
      %v5345 = vmax.f32 %v5102, 0.0
      %v5346 = vmax.f32 %v5106, 0.0
      %v5347 = vmax.f32 %v5108, 0.0
      %v5348 = vmax.f32 %v5110, 0.0
      %v5349 = vmax.f32 %v5112, 0.0
      %v5350 = vmax.f32 %v5116, 0.0
      %v5351 = vmax.f32 %v5118, 0.0
      %v5352 = vmax.f32 %v5120, 0.0
      %v5353 = vmax.f32 %v5122, 0.0
      %v5354 = vmax.f32 %v5126, 0.0
      %v5355 = vmax.f32 %v5128, 0.0
      %v5356 = vmax.f32 %v5130, 0.0
      %v5357 = vmax.f32 %v5132, 0.0
      %v5358 = vmax.f32 %v5136, 0.0
      %v5359 = vmax.f32 %v5138, 0.0
      %v5360 = vmax.f32 %v5140, 0.0
      %v5361 = vmax.f32 %v5142, 0.0
      %v5362 = vmax.f32 %v5146, 0.0
      %v5363 = vmax.f32 %v5148, 0.0
      %v5364 = vmax.f32 %v5150, 0.0
      %v5365 = vmax.f32 %v5152, 0.0
      %v5366 = vmax.f32 %v5156, 0.0
      %v5367 = vmax.f32 %v5158, 0.0
      %v5368 = vmax.f32 %v5160, 0.0
      %v5369 = vmax.f32 %v5162, 0.0
      %v5370 = vmax.f32 %v5166, 0.0
      %v5371 = vmax.f32 %v5168, 0.0
      %v5372 = vmax.f32 %v5170, 0.0
      %v5373 = vmax.f32 %v5172, 0.0
      %v5374 = vmax.f32 %v5176, 0.0
      %v5375 = vmax.f32 %v5178, 0.0
      %v5376 = vmax.f32 %v5180, 0.0
      %v5377 = vmax.f32 %v5182, 0.0
      %v5378 = vmax.f32 %v5186, 0.0
      %v5379 = vmax.f32 %v5188, 0.0
      %v5380 = vmax.f32 %v5190, 0.0
      %v5381 = vmax.f32 %v5192, 0.0
      %v5382 = vmax.f32 %v5196, 0.0
      %v5383 = vmax.f32 %v5198, 0.0
      %v5384 = vmax.f32 %v5200, 0.0
      %v5385 = vmax.f32 %v5202, 0.0
      %v5386 = vmax.f32 %v5206, 0.0
      %v5387 = vmax.f32 %v5208, 0.0
      %v5388 = vmax.f32 %v5210, 0.0
      %v5389 = vmax.f32 %v5212, 0.0
      %v5390 = vmax.f32 %v5216, 0.0
      %v5391 = vmax.f32 %v5218, 0.0
      %v5392 = vmax.f32 %v5220, 0.0
      %v5393 = vmax.f32 %v5222, 0.0
      %v5394 = vmax.f32 %v5226, 0.0
      %v5395 = vmax.f32 %v5228, 0.0
      %v5396 = vmax.f32 %v5230, 0.0
      %v5397 = vmax.f32 %v5232, 0.0
      %v5398 = vmax.f32 %v5236, 0.0
      %v5399 = vmax.f32 %v5238, 0.0
      %v5400 = vmax.f32 %v5240, 0.0
      %v5401 = vmax.f32 %v5242, 0.0
      %v5402 = vmax.f32 %v5246, 0.0
      %v5403 = vmax.f32 %v5248, 0.0
      %v5404 = vmax.f32 %v5250, 0.0
      %v5405 = vmax.f32 %v5252, 0.0
      %v5406 = vmax.f32 %v5256, 0.0
      %v5407 = vmax.f32 %v5258, 0.0
      %v5408 = vmax.f32 %v5260, 0.0
      %v5409 = vmax.f32 %v5262, 0.0
      %v5410 = vmax.f32 %v5266, 0.0
      %v5411 = vmax.f32 %v5268, 0.0
      %v5412 = vmax.f32 %v5270, 0.0
      %v5413 = vmax.f32 %v5272, 0.0
      %v5414 = vmax.f32 %v5276, 0.0
      %v5415 = vmax.f32 %v5278, 0.0
      %v5416 = vmax.f32 %v5280, 0.0
      %v5417 = vmax.f32 %v5282, 0.0
      %v5418 = vmax.f32 %v5286, 0.0
      %v5419 = vmax.f32 %v5288, 0.0
      %v5420 = vmax.f32 %v5290, 0.0
      %v5421 = vmax.f32 %v5292, 0.0
      %v5422 = vld [vmem:[%s3] sm:$0xff]
      %v5423 = vld [vmem:[%s3 + $0x8] sm:$0xff]
      %v5424 = vld [vmem:[%s3 + $0x10] sm:$0xff]
      %v5425 = vld [vmem:[%s3 + $0x18] sm:$0xff]
      %v5426 = vld [vmem:[%s3 + $0x20] sm:$0xff]
      %v5427 = vld [vmem:[%s3 + $0x28] sm:$0xff]
      %v5428 = vld [vmem:[%s3 + $0x30] sm:$0xff]
      %v5429 = vld [vmem:[%s3 + $0x38] sm:$0xff]
      %v5430 = vld [vmem:[%s3 + $0x40] sm:$0xff]
      %v5431 = vld [vmem:[%s3 + $0x48] sm:$0xff]
      %v5432 = vld [vmem:[%s3 + $0x50] sm:$0xff]
      %v5433 = vld [vmem:[%s3 + $0x58] sm:$0xff]
      %v5434 = vld [vmem:[%s3 + $0x60] sm:$0xff]
      %v5435 = vld [vmem:[%s3 + $0x68] sm:$0xff]
      %v5436 = vld [vmem:[%s3 + $0x70] sm:$0xff]
      %v5437 = vld [vmem:[%s3 + $0x78] sm:$0xff]
      %v5438 = vld [vmem:[%s3 + $0x80] sm:$0xff]
      %v5439 = vld [vmem:[%s3 + $0x88] sm:$0xff]
      %v5440 = vld [vmem:[%s3 + $0x90] sm:$0xff]
      %v5441 = vld [vmem:[%s3 + $0x98] sm:$0xff]
      %v5442 = vld [vmem:[%s3 + $0xa0] sm:$0xff]
      %v5443 = vld [vmem:[%s3 + $0xa8] sm:$0xff]
      %v5444 = vld [vmem:[%s3 + $0xb0] sm:$0xff]
      %v5445 = vld [vmem:[%s3 + $0xb8] sm:$0xff]
      %v5446 = vld [vmem:[%s3 + $0xc0] sm:$0xff]
      %v5447 = vld [vmem:[%s3 + $0xc8] sm:$0xff]
      %v5448 = vld [vmem:[%s3 + $0xd0] sm:$0xff]
      %v5449 = vld [vmem:[%s3 + $0xd8] sm:$0xff]
      %v5450 = vld [vmem:[%s3 + $0xe0] sm:$0xff]
      %v5451 = vld [vmem:[%s3 + $0xe8] sm:$0xff]
      %v5452 = vld [vmem:[%s3 + $0xf0] sm:$0xff]
      %v5453 = vld [vmem:[%s3 + $0xf8] sm:$0xff]
      %v5454 = vld [vmem:[%s3 + $0x100] sm:$0xff]
      %v5455 = vld [vmem:[%s3 + $0x108] sm:$0xff]
      %v5456 = vld [vmem:[%s3 + $0x110] sm:$0xff]
      %v5457 = vld [vmem:[%s3 + $0x118] sm:$0xff]
      %v5458 = vld [vmem:[%s3 + $0x120] sm:$0xff]
      %v5459 = vld [vmem:[%s3 + $0x128] sm:$0xff]
      %v5460 = vld [vmem:[%s3 + $0x130] sm:$0xff]
      %v5461 = vld [vmem:[%s3 + $0x138] sm:$0xff]
      %v5462 = vld [vmem:[%s3 + $0x140] sm:$0xff]
      %v5463 = vld [vmem:[%s3 + $0x148] sm:$0xff]
      %v5464 = vld [vmem:[%s3 + $0x150] sm:$0xff]
      %v5465 = vld [vmem:[%s3 + $0x158] sm:$0xff]
      %v5466 = vld [vmem:[%s3 + $0x160] sm:$0xff]
      %v5467 = vld [vmem:[%s3 + $0x168] sm:$0xff]
      %v5468 = vld [vmem:[%s3 + $0x170] sm:$0xff]
      %v5469 = vld [vmem:[%s3 + $0x178] sm:$0xff]
      %v5470 = vld [vmem:[%s3 + $0x180] sm:$0xff]
      %v5471 = vld [vmem:[%s3 + $0x188] sm:$0xff]
      %v5472 = vld [vmem:[%s3 + $0x190] sm:$0xff]
      %v5473 = vld [vmem:[%s3 + $0x198] sm:$0xff]
      %v5474 = vld [vmem:[%s3 + $0x1a0] sm:$0xff]
      %v5475 = vld [vmem:[%s3 + $0x1a8] sm:$0xff]
      %v5476 = vld [vmem:[%s3 + $0x1b0] sm:$0xff]
      %v5477 = vld [vmem:[%s3 + $0x1b8] sm:$0xff]
      %v5478 = vld [vmem:[%s3 + $0x1c0] sm:$0xff]
      %v5479 = vld [vmem:[%s3 + $0x1c8] sm:$0xff]
      %v5480 = vld [vmem:[%s3 + $0x1d0] sm:$0xff]
      %v5481 = vld [vmem:[%s3 + $0x1d8] sm:$0xff]
      %v5482 = vld [vmem:[%s3 + $0x1e0] sm:$0xff]
      %v5483 = vld [vmem:[%s3 + $0x1e8] sm:$0xff]
      %v5484 = vld [vmem:[%s3 + $0x1f0] sm:$0xff]
      %v5485 = vld [vmem:[%s3 + $0x1f8] sm:$0xff]
      %5487 = vset.pattern.permute.xlu0 0
      %5488 = vperm.xlu0 %5487, %v5422
      %v5489 = vpop.permute.xlu0 %5488
      %5492 = vset.pattern.permute.xlu0 0
      %5493 = vperm.xlu0 %5492, %v5423
      %v5494 = vpop.permute.xlu0 %5493
      %5497 = vset.pattern.permute.xlu0 0
      %5498 = vperm.xlu0 %5497, %v5424
      %v5499 = vpop.permute.xlu0 %5498
      %5502 = vset.pattern.permute.xlu0 0
      %5503 = vperm.xlu0 %5502, %v5425
      %v5504 = vpop.permute.xlu0 %5503
      %5507 = vset.pattern.permute.xlu0 0
      %5508 = vperm.xlu0 %5507, %v5426
      %v5509 = vpop.permute.xlu0 %5508
      %5512 = vset.pattern.permute.xlu0 0
      %5513 = vperm.xlu0 %5512, %v5427
      %v5514 = vpop.permute.xlu0 %5513
      %5517 = vset.pattern.permute.xlu0 0
      %5518 = vperm.xlu0 %5517, %v5428
      %v5519 = vpop.permute.xlu0 %5518
      %5522 = vset.pattern.permute.xlu0 0
      %5523 = vperm.xlu0 %5522, %v5429
      %v5524 = vpop.permute.xlu0 %5523
      %5527 = vset.pattern.permute.xlu0 0
      %5528 = vperm.xlu0 %5527, %v5430
      %v5529 = vpop.permute.xlu0 %5528
      %5532 = vset.pattern.permute.xlu0 0
      %5533 = vperm.xlu0 %5532, %v5431
      %v5534 = vpop.permute.xlu0 %5533
      %5537 = vset.pattern.permute.xlu0 0
      %5538 = vperm.xlu0 %5537, %v5432
      %v5539 = vpop.permute.xlu0 %5538
      %5542 = vset.pattern.permute.xlu0 0
      %5543 = vperm.xlu0 %5542, %v5433
      %v5544 = vpop.permute.xlu0 %5543
      %5547 = vset.pattern.permute.xlu0 0
      %5548 = vperm.xlu0 %5547, %v5434
      %v5549 = vpop.permute.xlu0 %5548
      %5552 = vset.pattern.permute.xlu0 0
      %5553 = vperm.xlu0 %5552, %v5435
      %v5554 = vpop.permute.xlu0 %5553
      %5557 = vset.pattern.permute.xlu0 0
      %5558 = vperm.xlu0 %5557, %v5436
      %v5559 = vpop.permute.xlu0 %5558
      %5562 = vset.pattern.permute.xlu0 0
      %5563 = vperm.xlu0 %5562, %v5437
      %v5564 = vpop.permute.xlu0 %5563
      %5567 = vset.pattern.permute.xlu0 0
      %5568 = vperm.xlu0 %5567, %v5438
      %v5569 = vpop.permute.xlu0 %5568
      %5572 = vset.pattern.permute.xlu0 0
      %5573 = vperm.xlu0 %5572, %v5439
      %v5574 = vpop.permute.xlu0 %5573
      %5577 = vset.pattern.permute.xlu0 0
      %5578 = vperm.xlu0 %5577, %v5440
      %v5579 = vpop.permute.xlu0 %5578
      %5582 = vset.pattern.permute.xlu0 0
      %5583 = vperm.xlu0 %5582, %v5441
      %v5584 = vpop.permute.xlu0 %5583
      %5587 = vset.pattern.permute.xlu0 0
      %5588 = vperm.xlu0 %5587, %v5442
      %v5589 = vpop.permute.xlu0 %5588
      %5592 = vset.pattern.permute.xlu0 0
      %5593 = vperm.xlu0 %5592, %v5443
      %v5594 = vpop.permute.xlu0 %5593
      %5597 = vset.pattern.permute.xlu0 0
      %5598 = vperm.xlu0 %5597, %v5444
      %v5599 = vpop.permute.xlu0 %5598
      %5602 = vset.pattern.permute.xlu0 0
      %5603 = vperm.xlu0 %5602, %v5445
      %v5604 = vpop.permute.xlu0 %5603
      %5607 = vset.pattern.permute.xlu0 0
      %5608 = vperm.xlu0 %5607, %v5446
      %v5609 = vpop.permute.xlu0 %5608
      %5612 = vset.pattern.permute.xlu0 0
      %5613 = vperm.xlu0 %5612, %v5447
      %v5614 = vpop.permute.xlu0 %5613
      %5617 = vset.pattern.permute.xlu0 0
      %5618 = vperm.xlu0 %5617, %v5448
      %v5619 = vpop.permute.xlu0 %5618
      %5622 = vset.pattern.permute.xlu0 0
      %5623 = vperm.xlu0 %5622, %v5449
      %v5624 = vpop.permute.xlu0 %5623
      %5627 = vset.pattern.permute.xlu0 0
      %5628 = vperm.xlu0 %5627, %v5450
      %v5629 = vpop.permute.xlu0 %5628
      %5632 = vset.pattern.permute.xlu0 0
      %5633 = vperm.xlu0 %5632, %v5451
      %v5634 = vpop.permute.xlu0 %5633
      %5637 = vset.pattern.permute.xlu0 0
      %5638 = vperm.xlu0 %5637, %v5452
      %v5639 = vpop.permute.xlu0 %5638
      %5642 = vset.pattern.permute.xlu0 0
      %5643 = vperm.xlu0 %5642, %v5453
      %v5644 = vpop.permute.xlu0 %5643
      %5647 = vset.pattern.permute.xlu0 0
      %5648 = vperm.xlu0 %5647, %v5454
      %v5649 = vpop.permute.xlu0 %5648
      %5652 = vset.pattern.permute.xlu0 0
      %5653 = vperm.xlu0 %5652, %v5455
      %v5654 = vpop.permute.xlu0 %5653
      %5657 = vset.pattern.permute.xlu0 0
      %5658 = vperm.xlu0 %5657, %v5456
      %v5659 = vpop.permute.xlu0 %5658
      %5662 = vset.pattern.permute.xlu0 0
      %5663 = vperm.xlu0 %5662, %v5457
      %v5664 = vpop.permute.xlu0 %5663
      %5667 = vset.pattern.permute.xlu0 0
      %5668 = vperm.xlu0 %5667, %v5458
      %v5669 = vpop.permute.xlu0 %5668
      %5672 = vset.pattern.permute.xlu0 0
      %5673 = vperm.xlu0 %5672, %v5459
      %v5674 = vpop.permute.xlu0 %5673
      %5677 = vset.pattern.permute.xlu0 0
      %5678 = vperm.xlu0 %5677, %v5460
      %v5679 = vpop.permute.xlu0 %5678
      %5682 = vset.pattern.permute.xlu0 0
      %5683 = vperm.xlu0 %5682, %v5461
      %v5684 = vpop.permute.xlu0 %5683
      %5687 = vset.pattern.permute.xlu0 0
      %5688 = vperm.xlu0 %5687, %v5462
      %v5689 = vpop.permute.xlu0 %5688
      %5692 = vset.pattern.permute.xlu0 0
      %5693 = vperm.xlu0 %5692, %v5463
      %v5694 = vpop.permute.xlu0 %5693
      %5697 = vset.pattern.permute.xlu0 0
      %5698 = vperm.xlu0 %5697, %v5464
      %v5699 = vpop.permute.xlu0 %5698
      %5702 = vset.pattern.permute.xlu0 0
      %5703 = vperm.xlu0 %5702, %v5465
      %v5704 = vpop.permute.xlu0 %5703
      %5707 = vset.pattern.permute.xlu0 0
      %5708 = vperm.xlu0 %5707, %v5466
      %v5709 = vpop.permute.xlu0 %5708
      %5712 = vset.pattern.permute.xlu0 0
      %5713 = vperm.xlu0 %5712, %v5467
      %v5714 = vpop.permute.xlu0 %5713
      %5717 = vset.pattern.permute.xlu0 0
      %5718 = vperm.xlu0 %5717, %v5468
      %v5719 = vpop.permute.xlu0 %5718
      %5722 = vset.pattern.permute.xlu0 0
      %5723 = vperm.xlu0 %5722, %v5469
      %v5724 = vpop.permute.xlu0 %5723
      %5727 = vset.pattern.permute.xlu0 0
      %5728 = vperm.xlu0 %5727, %v5470
      %v5729 = vpop.permute.xlu0 %5728
      %5732 = vset.pattern.permute.xlu0 0
      %5733 = vperm.xlu0 %5732, %v5471
      %v5734 = vpop.permute.xlu0 %5733
      %5737 = vset.pattern.permute.xlu0 0
      %5738 = vperm.xlu0 %5737, %v5472
      %v5739 = vpop.permute.xlu0 %5738
      %5742 = vset.pattern.permute.xlu0 0
      %5743 = vperm.xlu0 %5742, %v5473
      %v5744 = vpop.permute.xlu0 %5743
      %5747 = vset.pattern.permute.xlu0 0
      %5748 = vperm.xlu0 %5747, %v5474
      %v5749 = vpop.permute.xlu0 %5748
      %5752 = vset.pattern.permute.xlu0 0
      %5753 = vperm.xlu0 %5752, %v5475
      %v5754 = vpop.permute.xlu0 %5753
      %5757 = vset.pattern.permute.xlu0 0
      %5758 = vperm.xlu0 %5757, %v5476
      %v5759 = vpop.permute.xlu0 %5758
      %5762 = vset.pattern.permute.xlu0 0
      %5763 = vperm.xlu0 %5762, %v5477
      %v5764 = vpop.permute.xlu0 %5763
      %5767 = vset.pattern.permute.xlu0 0
      %5768 = vperm.xlu0 %5767, %v5478
      %v5769 = vpop.permute.xlu0 %5768
      %5772 = vset.pattern.permute.xlu0 0
      %5773 = vperm.xlu0 %5772, %v5479
      %v5774 = vpop.permute.xlu0 %5773
      %5777 = vset.pattern.permute.xlu0 0
      %5778 = vperm.xlu0 %5777, %v5480
      %v5779 = vpop.permute.xlu0 %5778
      %5782 = vset.pattern.permute.xlu0 0
      %5783 = vperm.xlu0 %5782, %v5481
      %v5784 = vpop.permute.xlu0 %5783
      %5787 = vset.pattern.permute.xlu0 0
      %5788 = vperm.xlu0 %5787, %v5482
      %v5789 = vpop.permute.xlu0 %5788
      %5792 = vset.pattern.permute.xlu0 0
      %5793 = vperm.xlu0 %5792, %v5483
      %v5794 = vpop.permute.xlu0 %5793
      %5797 = vset.pattern.permute.xlu0 0
      %5798 = vperm.xlu0 %5797, %v5484
      %v5799 = vpop.permute.xlu0 %5798
      %5802 = vset.pattern.permute.xlu0 0
      %5803 = vperm.xlu0 %5802, %v5485
      %v5804 = vpop.permute.xlu0 %5803
      %v5806 = vmul.f32 %v5294, %v5489
      %v5807 = vmul.f32 %v5295, %v5489
      %v5808 = vmul.f32 %v5296, %v5494
      %v5809 = vmul.f32 %v5297, %v5494
      %v5810 = vmul.f32 %v5298, %v5499
      %v5811 = vmul.f32 %v5299, %v5499
      %v5812 = vmul.f32 %v5300, %v5504
      %v5813 = vmul.f32 %v5301, %v5504
      %v5814 = vmul.f32 %v5302, %v5509
      %v5815 = vmul.f32 %v5303, %v5509
      %v5816 = vmul.f32 %v5304, %v5514
      %v5817 = vmul.f32 %v5305, %v5514
      %v5818 = vmul.f32 %v5306, %v5519
      %v5819 = vmul.f32 %v5307, %v5519
      %v5820 = vmul.f32 %v5308, %v5524
      %v5821 = vmul.f32 %v5309, %v5524
      %v5822 = vmul.f32 %v5310, %v5529
      %v5823 = vmul.f32 %v5311, %v5529
      %v5824 = vmul.f32 %v5312, %v5534
      %v5825 = vmul.f32 %v5313, %v5534
      %v5826 = vmul.f32 %v5314, %v5539
      %v5827 = vmul.f32 %v5315, %v5539
      %v5828 = vmul.f32 %v5316, %v5544
      %v5829 = vmul.f32 %v5317, %v5544
      %v5830 = vmul.f32 %v5318, %v5549
      %v5831 = vmul.f32 %v5319, %v5549
      %v5832 = vmul.f32 %v5320, %v5554
      %v5833 = vmul.f32 %v5321, %v5554
      %v5834 = vmul.f32 %v5322, %v5559
      %v5835 = vmul.f32 %v5323, %v5559
      %v5836 = vmul.f32 %v5324, %v5564
      %v5837 = vmul.f32 %v5325, %v5564
      %v5838 = vmul.f32 %v5326, %v5569
      %v5839 = vmul.f32 %v5327, %v5569
      %v5840 = vmul.f32 %v5328, %v5574
      %v5841 = vmul.f32 %v5329, %v5574
      %v5842 = vmul.f32 %v5330, %v5579
      %v5843 = vmul.f32 %v5331, %v5579
      %v5844 = vmul.f32 %v5332, %v5584
      %v5845 = vmul.f32 %v5333, %v5584
      %v5846 = vmul.f32 %v5334, %v5589
      %v5847 = vmul.f32 %v5335, %v5589
      %v5848 = vmul.f32 %v5336, %v5594
      %v5849 = vmul.f32 %v5337, %v5594
      %v5850 = vmul.f32 %v5338, %v5599
      %v5851 = vmul.f32 %v5339, %v5599
      %v5852 = vmul.f32 %v5340, %v5604
      %v5853 = vmul.f32 %v5341, %v5604
      %v5854 = vmul.f32 %v5342, %v5609
      %v5855 = vmul.f32 %v5343, %v5609
      %v5856 = vmul.f32 %v5344, %v5614
      %v5857 = vmul.f32 %v5345, %v5614
      %v5858 = vmul.f32 %v5346, %v5619
      %v5859 = vmul.f32 %v5347, %v5619
      %v5860 = vmul.f32 %v5348, %v5624
      %v5861 = vmul.f32 %v5349, %v5624
      %v5862 = vmul.f32 %v5350, %v5629
      %v5863 = vmul.f32 %v5351, %v5629
      %v5864 = vmul.f32 %v5352, %v5634
      %v5865 = vmul.f32 %v5353, %v5634
      %v5866 = vmul.f32 %v5354, %v5639
      %v5867 = vmul.f32 %v5355, %v5639
      %v5868 = vmul.f32 %v5356, %v5644
      %v5869 = vmul.f32 %v5357, %v5644
      %v5870 = vmul.f32 %v5358, %v5649
      %v5871 = vmul.f32 %v5359, %v5649
      %v5872 = vmul.f32 %v5360, %v5654
      %v5873 = vmul.f32 %v5361, %v5654
      %v5874 = vmul.f32 %v5362, %v5659
      %v5875 = vmul.f32 %v5363, %v5659
      %v5876 = vmul.f32 %v5364, %v5664
      %v5877 = vmul.f32 %v5365, %v5664
      %v5878 = vmul.f32 %v5366, %v5669
      %v5879 = vmul.f32 %v5367, %v5669
      %v5880 = vmul.f32 %v5368, %v5674
      %v5881 = vmul.f32 %v5369, %v5674
      %v5882 = vmul.f32 %v5370, %v5679
      %v5883 = vmul.f32 %v5371, %v5679
      %v5884 = vmul.f32 %v5372, %v5684
      %v5885 = vmul.f32 %v5373, %v5684
      %v5886 = vmul.f32 %v5374, %v5689
      %v5887 = vmul.f32 %v5375, %v5689
      %v5888 = vmul.f32 %v5376, %v5694
      %v5889 = vmul.f32 %v5377, %v5694
      %v5890 = vmul.f32 %v5378, %v5699
      %v5891 = vmul.f32 %v5379, %v5699
      %v5892 = vmul.f32 %v5380, %v5704
      %v5893 = vmul.f32 %v5381, %v5704
      %v5894 = vmul.f32 %v5382, %v5709
      %v5895 = vmul.f32 %v5383, %v5709
      %v5896 = vmul.f32 %v5384, %v5714
      %v5897 = vmul.f32 %v5385, %v5714
      %v5898 = vmul.f32 %v5386, %v5719
      %v5899 = vmul.f32 %v5387, %v5719
      %v5900 = vmul.f32 %v5388, %v5724
      %v5901 = vmul.f32 %v5389, %v5724
      %v5902 = vmul.f32 %v5390, %v5729
      %v5903 = vmul.f32 %v5391, %v5729
      %v5904 = vmul.f32 %v5392, %v5734
      %v5905 = vmul.f32 %v5393, %v5734
      %v5906 = vmul.f32 %v5394, %v5739
      %v5907 = vmul.f32 %v5395, %v5739
      %v5908 = vmul.f32 %v5396, %v5744
      %v5909 = vmul.f32 %v5397, %v5744
      %v5910 = vmul.f32 %v5398, %v5749
      %v5911 = vmul.f32 %v5399, %v5749
      %v5912 = vmul.f32 %v5400, %v5754
      %v5913 = vmul.f32 %v5401, %v5754
      %v5914 = vmul.f32 %v5402, %v5759
      %v5915 = vmul.f32 %v5403, %v5759
      %v5916 = vmul.f32 %v5404, %v5764
      %v5917 = vmul.f32 %v5405, %v5764
      %v5918 = vmul.f32 %v5406, %v5769
      %v5919 = vmul.f32 %v5407, %v5769
      %v5920 = vmul.f32 %v5408, %v5774
      %v5921 = vmul.f32 %v5409, %v5774
      %v5922 = vmul.f32 %v5410, %v5779
      %v5923 = vmul.f32 %v5411, %v5779
      %v5924 = vmul.f32 %v5412, %v5784
      %v5925 = vmul.f32 %v5413, %v5784
      %v5926 = vmul.f32 %v5414, %v5789
      %v5927 = vmul.f32 %v5415, %v5789
      %v5928 = vmul.f32 %v5416, %v5794
      %v5929 = vmul.f32 %v5417, %v5794
      %v5930 = vmul.f32 %v5418, %v5799
      %v5931 = vmul.f32 %v5419, %v5799
      %v5932 = vmul.f32 %v5420, %v5804
      %v5933 = vmul.f32 %v5421, %v5804
      %v5934 = vadd.f32 %v5806, %v5808
      %v5935 = vadd.f32 %v5934, %v5810
      %v5936 = vadd.f32 %v5935, %v5812
      %v5937 = vadd.f32 %v5936, %v5814
      %v5938 = vadd.f32 %v5937, %v5816
      %v5939 = vadd.f32 %v5938, %v5818
      %v5940 = vadd.f32 %v5939, %v5820
      %v5941 = vadd.f32 %v5940, %v5822
      %v5942 = vadd.f32 %v5941, %v5824
      %v5943 = vadd.f32 %v5942, %v5826
      %v5944 = vadd.f32 %v5943, %v5828
      %v5945 = vadd.f32 %v5944, %v5830
      %v5946 = vadd.f32 %v5945, %v5832
      %v5947 = vadd.f32 %v5946, %v5834
      %v5948 = vadd.f32 %v5947, %v5836
      %v5949 = vadd.f32 %v5948, %v5838
      %v5950 = vadd.f32 %v5949, %v5840
      %v5951 = vadd.f32 %v5950, %v5842
      %v5952 = vadd.f32 %v5951, %v5844
      %v5953 = vadd.f32 %v5952, %v5846
      %v5954 = vadd.f32 %v5953, %v5848
      %v5955 = vadd.f32 %v5954, %v5850
      %v5956 = vadd.f32 %v5955, %v5852
      %v5957 = vadd.f32 %v5956, %v5854
      %v5958 = vadd.f32 %v5957, %v5856
      %v5959 = vadd.f32 %v5958, %v5858
      %v5960 = vadd.f32 %v5959, %v5860
      %v5961 = vadd.f32 %v5960, %v5862
      %v5962 = vadd.f32 %v5961, %v5864
      %v5963 = vadd.f32 %v5962, %v5866
      %v5964 = vadd.f32 %v5963, %v5868
      %v5965 = vadd.f32 %v5964, %v5870
      %v5966 = vadd.f32 %v5965, %v5872
      %v5967 = vadd.f32 %v5966, %v5874
      %v5968 = vadd.f32 %v5967, %v5876
      %v5969 = vadd.f32 %v5968, %v5878
      %v5970 = vadd.f32 %v5969, %v5880
      %v5971 = vadd.f32 %v5970, %v5882
      %v5972 = vadd.f32 %v5971, %v5884
      %v5973 = vadd.f32 %v5972, %v5886
      %v5974 = vadd.f32 %v5973, %v5888
      %v5975 = vadd.f32 %v5974, %v5890
      %v5976 = vadd.f32 %v5975, %v5892
      %v5977 = vadd.f32 %v5976, %v5894
      %v5978 = vadd.f32 %v5977, %v5896
      %v5979 = vadd.f32 %v5978, %v5898
      %v5980 = vadd.f32 %v5979, %v5900
      %v5981 = vadd.f32 %v5980, %v5902
      %v5982 = vadd.f32 %v5981, %v5904
      %v5983 = vadd.f32 %v5982, %v5906
      %v5984 = vadd.f32 %v5983, %v5908
      %v5985 = vadd.f32 %v5984, %v5910
      %v5986 = vadd.f32 %v5985, %v5912
      %v5987 = vadd.f32 %v5986, %v5914
      %v5988 = vadd.f32 %v5987, %v5916
      %v5989 = vadd.f32 %v5988, %v5918
      %v5990 = vadd.f32 %v5989, %v5920
      %v5991 = vadd.f32 %v5990, %v5922
      %v5992 = vadd.f32 %v5991, %v5924
      %v5993 = vadd.f32 %v5992, %v5926
      %v5994 = vadd.f32 %v5993, %v5928
      %v5995 = vadd.f32 %v5994, %v5930
      %v5996 = vadd.f32 %v5995, %v5932
      %v5997 = vrot.slane %v5996, 4
      %v5998 = vadd.f32 %v5996, %v5997
      %v5999 = vrot.slane %v5998, 2
      %v6000 = vadd.f32 %v5998, %v5999
      %v6001 = vrot.slane %v6000, 1
      %v6002 = vadd.f32 %v6000, %v6001
      %v6003 = vadd.f32 %v5807, %v5809
      %v6004 = vadd.f32 %v6003, %v5811
      %v6005 = vadd.f32 %v6004, %v5813
      %v6006 = vadd.f32 %v6005, %v5815
      %v6007 = vadd.f32 %v6006, %v5817
      %v6008 = vadd.f32 %v6007, %v5819
      %v6009 = vadd.f32 %v6008, %v5821
      %v6010 = vadd.f32 %v6009, %v5823
      %v6011 = vadd.f32 %v6010, %v5825
      %v6012 = vadd.f32 %v6011, %v5827
      %v6013 = vadd.f32 %v6012, %v5829
      %v6014 = vadd.f32 %v6013, %v5831
      %v6015 = vadd.f32 %v6014, %v5833
      %v6016 = vadd.f32 %v6015, %v5835
      %v6017 = vadd.f32 %v6016, %v5837
      %v6018 = vadd.f32 %v6017, %v5839
      %v6019 = vadd.f32 %v6018, %v5841
      %v6020 = vadd.f32 %v6019, %v5843
      %v6021 = vadd.f32 %v6020, %v5845
      %v6022 = vadd.f32 %v6021, %v5847
      %v6023 = vadd.f32 %v6022, %v5849
      %v6024 = vadd.f32 %v6023, %v5851
      %v6025 = vadd.f32 %v6024, %v5853
      %v6026 = vadd.f32 %v6025, %v5855
      %v6027 = vadd.f32 %v6026, %v5857
      %v6028 = vadd.f32 %v6027, %v5859
      %v6029 = vadd.f32 %v6028, %v5861
      %v6030 = vadd.f32 %v6029, %v5863
      %v6031 = vadd.f32 %v6030, %v5865
      %v6032 = vadd.f32 %v6031, %v5867
      %v6033 = vadd.f32 %v6032, %v5869
      %v6034 = vadd.f32 %v6033, %v5871
      %v6035 = vadd.f32 %v6034, %v5873
      %v6036 = vadd.f32 %v6035, %v5875
      %v6037 = vadd.f32 %v6036, %v5877
      %v6038 = vadd.f32 %v6037, %v5879
      %v6039 = vadd.f32 %v6038, %v5881
      %v6040 = vadd.f32 %v6039, %v5883
      %v6041 = vadd.f32 %v6040, %v5885
      %v6042 = vadd.f32 %v6041, %v5887
      %v6043 = vadd.f32 %v6042, %v5889
      %v6044 = vadd.f32 %v6043, %v5891
      %v6045 = vadd.f32 %v6044, %v5893
      %v6046 = vadd.f32 %v6045, %v5895
      %v6047 = vadd.f32 %v6046, %v5897
      %v6048 = vadd.f32 %v6047, %v5899
      %v6049 = vadd.f32 %v6048, %v5901
      %v6050 = vadd.f32 %v6049, %v5903
      %v6051 = vadd.f32 %v6050, %v5905
      %v6052 = vadd.f32 %v6051, %v5907
      %v6053 = vadd.f32 %v6052, %v5909
      %v6054 = vadd.f32 %v6053, %v5911
      %v6055 = vadd.f32 %v6054, %v5913
      %v6056 = vadd.f32 %v6055, %v5915
      %v6057 = vadd.f32 %v6056, %v5917
      %v6058 = vadd.f32 %v6057, %v5919
      %v6059 = vadd.f32 %v6058, %v5921
      %v6060 = vadd.f32 %v6059, %v5923
      %v6061 = vadd.f32 %v6060, %v5925
      %v6062 = vadd.f32 %v6061, %v5927
      %v6063 = vadd.f32 %v6062, %v5929
      %v6064 = vadd.f32 %v6063, %v5931
      %v6065 = vadd.f32 %v6064, %v5933
      %v6066 = vrot.slane %v6065, 4
      %v6067 = vadd.f32 %v6065, %v6066
      %v6068 = vrot.slane %v6067, 2
      %v6069 = vadd.f32 %v6067, %v6068
      %v6070 = vrot.slane %v6069, 1
      %v6071 = vadd.f32 %v6069, %v6070
      %s6072 = sld [smem:[#allocation2]]
      %v6073 = vstv %s6072
      %v6074 = vadd.f32 %v6002, %v6073
      %v6075 = vadd.f32 %v6071, %v6073
      %v6076 = vxor.u32 %v6074, 2147483648
      %v6077 = vxor.u32 %v6075, 2147483648
      %v6078 = vmul.f32 %v6076, 1.442695
      %v6079 = vpow.pop %v6078
      %v6080 = vmul.f32 %v6077, 1.442695
      %v6081 = vpow.pop %v6080
      %v6082 = vadd.f32 %v6079, 1.0
      %v6083 = vadd.f32 %v6081, 1.0
      %v6084 = vrcp.pop %v6082
      %v6085 = vmul.f32 1.0, %v6084
      %v6086 = vrcp.pop %v6083
      %v6087 = vmul.f32 1.0, %v6086
      %v6088 = vunpack.c.l.bf16 %v265
      %v6089 = vunpack.c.h.bf16 %v265
      %v6090 = vunpack.c.l.bf16 %v266
      %v6091 = vunpack.c.h.bf16 %v266
      %v6092 = vunpack.c.l.bf16 %v267
      %v6093 = vunpack.c.h.bf16 %v267
      %v6094 = vunpack.c.l.bf16 %v268
      %v6095 = vunpack.c.h.bf16 %v268
      %v6096 = vunpack.c.l.bf16 %v269
      %v6097 = vunpack.c.h.bf16 %v269
      %v6098 = vunpack.c.l.bf16 %v270
      %v6099 = vunpack.c.h.bf16 %v270
      %v6100 = vunpack.c.l.bf16 %v271
      %v6101 = vunpack.c.h.bf16 %v271
      %v6102 = vunpack.c.l.bf16 %v272
      %v6103 = vunpack.c.h.bf16 %v272
      %v6104 = vunpack.c.l.bf16 %v273
      %v6105 = vunpack.c.h.bf16 %v273
      %v6106 = vunpack.c.l.bf16 %v274
      %v6107 = vunpack.c.h.bf16 %v274
      %v6108 = vunpack.c.l.bf16 %v275
      %v6109 = vunpack.c.h.bf16 %v275
      %v6110 = vunpack.c.l.bf16 %v276
      %v6111 = vunpack.c.h.bf16 %v276
      %v6112 = vunpack.c.l.bf16 %v277
      %v6113 = vunpack.c.h.bf16 %v277
      %v6114 = vunpack.c.l.bf16 %v278
      %v6115 = vunpack.c.h.bf16 %v278
      %v6116 = vunpack.c.l.bf16 %v279
      %v6117 = vunpack.c.h.bf16 %v279
      %v6118 = vunpack.c.l.bf16 %v280
      %v6119 = vunpack.c.h.bf16 %v280
      %v6120 = vunpack.c.l.bf16 %v281
      %v6121 = vunpack.c.h.bf16 %v281
      %v6122 = vunpack.c.l.bf16 %v282
      %v6123 = vunpack.c.h.bf16 %v282
      %v6124 = vunpack.c.l.bf16 %v283
      %v6125 = vunpack.c.h.bf16 %v283
      %v6126 = vunpack.c.l.bf16 %v284
      %v6127 = vunpack.c.h.bf16 %v284
      %v6128 = vunpack.c.l.bf16 %v285
      %v6129 = vunpack.c.h.bf16 %v285
      %v6130 = vunpack.c.l.bf16 %v286
      %v6131 = vunpack.c.h.bf16 %v286
      %v6132 = vunpack.c.l.bf16 %v287
      %v6133 = vunpack.c.h.bf16 %v287
      %v6134 = vunpack.c.l.bf16 %v288
      %v6135 = vunpack.c.h.bf16 %v288
      %v6136 = vunpack.c.l.bf16 %v289
      %v6137 = vunpack.c.h.bf16 %v289
      %v6138 = vunpack.c.l.bf16 %v290
      %v6139 = vunpack.c.h.bf16 %v290
      %v6140 = vunpack.c.l.bf16 %v291
      %v6141 = vunpack.c.h.bf16 %v291
      %v6142 = vunpack.c.l.bf16 %v292
      %v6143 = vunpack.c.h.bf16 %v292
      %v6144 = vunpack.c.l.bf16 %v293
      %v6145 = vunpack.c.h.bf16 %v293
      %v6146 = vunpack.c.l.bf16 %v294
      %v6147 = vunpack.c.h.bf16 %v294
      %v6148 = vunpack.c.l.bf16 %v295
      %v6149 = vunpack.c.h.bf16 %v295
      %v6150 = vunpack.c.l.bf16 %v296
      %v6151 = vunpack.c.h.bf16 %v296
      %v6152 = vunpack.c.l.bf16 %v297
      %v6153 = vunpack.c.h.bf16 %v297
      %v6154 = vunpack.c.l.bf16 %v298
      %v6155 = vunpack.c.h.bf16 %v298
      %v6156 = vunpack.c.l.bf16 %v299
      %v6157 = vunpack.c.h.bf16 %v299
      %v6158 = vunpack.c.l.bf16 %v300
      %v6159 = vunpack.c.h.bf16 %v300
      %v6160 = vunpack.c.l.bf16 %v301
      %v6161 = vunpack.c.h.bf16 %v301
      %v6162 = vunpack.c.l.bf16 %v302
      %v6163 = vunpack.c.h.bf16 %v302
      %v6164 = vunpack.c.l.bf16 %v303
      %v6165 = vunpack.c.h.bf16 %v303
      %v6166 = vunpack.c.l.bf16 %v304
      %v6167 = vunpack.c.h.bf16 %v304
      %v6168 = vunpack.c.l.bf16 %v305
      %v6169 = vunpack.c.h.bf16 %v305
      %v6170 = vunpack.c.l.bf16 %v306
      %v6171 = vunpack.c.h.bf16 %v306
      %v6172 = vunpack.c.l.bf16 %v307
      %v6173 = vunpack.c.h.bf16 %v307
      %v6174 = vunpack.c.l.bf16 %v308
      %v6175 = vunpack.c.h.bf16 %v308
      %v6176 = vunpack.c.l.bf16 %v309
      %v6177 = vunpack.c.h.bf16 %v309
      %v6178 = vunpack.c.l.bf16 %v310
      %v6179 = vunpack.c.h.bf16 %v310
      %v6180 = vunpack.c.l.bf16 %v311
      %v6181 = vunpack.c.h.bf16 %v311
      %v6182 = vunpack.c.l.bf16 %v312
      %v6183 = vunpack.c.h.bf16 %v312
      %v6184 = vunpack.c.l.bf16 %v313
      %v6185 = vunpack.c.h.bf16 %v313
      %v6186 = vunpack.c.l.bf16 %v314
      %v6187 = vunpack.c.h.bf16 %v314
      %v6188 = vunpack.c.l.bf16 %v315
      %v6189 = vunpack.c.h.bf16 %v315
      %v6190 = vunpack.c.l.bf16 %v316
      %v6191 = vunpack.c.h.bf16 %v316
      %v6192 = vunpack.c.l.bf16 %v317
      %v6193 = vunpack.c.h.bf16 %v317
      %v6194 = vunpack.c.l.bf16 %v318
      %v6195 = vunpack.c.h.bf16 %v318
      %v6196 = vunpack.c.l.bf16 %v319
      %v6197 = vunpack.c.h.bf16 %v319
      %v6198 = vunpack.c.l.bf16 %v320
      %v6199 = vunpack.c.h.bf16 %v320
      %v6200 = vunpack.c.l.bf16 %v321
      %v6201 = vunpack.c.h.bf16 %v321
      %v6202 = vunpack.c.l.bf16 %v322
      %v6203 = vunpack.c.h.bf16 %v322
      %v6204 = vunpack.c.l.bf16 %v323
      %v6205 = vunpack.c.h.bf16 %v323
      %v6206 = vunpack.c.l.bf16 %v324
      %v6207 = vunpack.c.h.bf16 %v324
      %v6208 = vunpack.c.l.bf16 %v325
      %v6209 = vunpack.c.h.bf16 %v325
      %v6210 = vunpack.c.l.bf16 %v326
      %v6211 = vunpack.c.h.bf16 %v326
      %v6212 = vunpack.c.l.bf16 %v327
      %v6213 = vunpack.c.h.bf16 %v327
      %v6214 = vunpack.c.l.bf16 %v328
      %v6215 = vunpack.c.h.bf16 %v328
      %v6216 = vunpack.c.l.bf16 %v329
      %v6217 = vunpack.c.h.bf16 %v329
      %v6218 = vunpack.c.l.bf16 %v330
      %v6219 = vunpack.c.h.bf16 %v330
      %v6220 = vunpack.c.l.bf16 %v331
      %v6221 = vunpack.c.h.bf16 %v331
      %v6222 = vunpack.c.l.bf16 %v332
      %v6223 = vunpack.c.h.bf16 %v332
      %v6224 = vunpack.c.l.bf16 %v333
      %v6225 = vunpack.c.h.bf16 %v333
      %v6226 = vunpack.c.l.bf16 %v334
      %v6227 = vunpack.c.h.bf16 %v334
      %v6228 = vunpack.c.l.bf16 %v335
      %v6229 = vunpack.c.h.bf16 %v335
      %v6230 = vunpack.c.l.bf16 %v336
      %v6231 = vunpack.c.h.bf16 %v336
      %v6232 = vunpack.c.l.bf16 %v337
      %v6233 = vunpack.c.h.bf16 %v337
      %v6234 = vunpack.c.l.bf16 %v338
      %v6235 = vunpack.c.h.bf16 %v338
      %v6236 = vunpack.c.l.bf16 %v339
      %v6237 = vunpack.c.h.bf16 %v339
      %v6238 = vunpack.c.l.bf16 %v340
      %v6239 = vunpack.c.h.bf16 %v340
      %v6240 = vunpack.c.l.bf16 %v341
      %v6241 = vunpack.c.h.bf16 %v341
      %v6242 = vunpack.c.l.bf16 %v342
      %v6243 = vunpack.c.h.bf16 %v342
      %v6244 = vunpack.c.l.bf16 %v343
      %v6245 = vunpack.c.h.bf16 %v343
      %v6246 = vunpack.c.l.bf16 %v344
      %v6247 = vunpack.c.h.bf16 %v344
      %v6248 = vunpack.c.l.bf16 %v345
      %v6249 = vunpack.c.h.bf16 %v345
      %v6250 = vunpack.c.l.bf16 %v346
      %v6251 = vunpack.c.h.bf16 %v346
      %v6252 = vunpack.c.l.bf16 %v347
      %v6253 = vunpack.c.h.bf16 %v347
      %v6254 = vunpack.c.l.bf16 %v348
      %v6255 = vunpack.c.h.bf16 %v348
      %v6256 = vunpack.c.l.bf16 %v349
      %v6257 = vunpack.c.h.bf16 %v349
      %v6258 = vunpack.c.l.bf16 %v350
      %v6259 = vunpack.c.h.bf16 %v350
      %v6260 = vunpack.c.l.bf16 %v351
      %v6261 = vunpack.c.h.bf16 %v351
      %v6262 = vunpack.c.l.bf16 %v352
      %v6263 = vunpack.c.h.bf16 %v352
      %v6264 = vunpack.c.l.bf16 %v353
      %v6265 = vunpack.c.h.bf16 %v353
      %v6266 = vunpack.c.l.bf16 %v354
      %v6267 = vunpack.c.h.bf16 %v354
      %v6268 = vunpack.c.l.bf16 %v355
      %v6269 = vunpack.c.h.bf16 %v355
      %v6270 = vunpack.c.l.bf16 %v356
      %v6271 = vunpack.c.h.bf16 %v356
      %v6272 = vunpack.c.l.bf16 %v357
      %v6273 = vunpack.c.h.bf16 %v357
      %v6274 = vunpack.c.l.bf16 %v358
      %v6275 = vunpack.c.h.bf16 %v358
      %v6276 = vunpack.c.l.bf16 %v359
      %v6277 = vunpack.c.h.bf16 %v359
      %v6278 = vunpack.c.l.bf16 %v360
      %v6279 = vunpack.c.h.bf16 %v360
      %v6280 = vunpack.c.l.bf16 %v361
      %v6281 = vunpack.c.h.bf16 %v361
      %v6282 = vunpack.c.l.bf16 %v362
      %v6283 = vunpack.c.h.bf16 %v362
      %v6284 = vunpack.c.l.bf16 %v363
      %v6285 = vunpack.c.h.bf16 %v363
      %v6286 = vunpack.c.l.bf16 %v364
      %v6287 = vunpack.c.h.bf16 %v364
      %v6288 = vunpack.c.l.bf16 %v365
      %v6289 = vunpack.c.h.bf16 %v365
      %v6290 = vunpack.c.l.bf16 %v366
      %v6291 = vunpack.c.h.bf16 %v366
      %v6292 = vunpack.c.l.bf16 %v367
      %v6293 = vunpack.c.h.bf16 %v367
      %v6294 = vunpack.c.l.bf16 %v368
      %v6295 = vunpack.c.h.bf16 %v368
      %v6296 = vunpack.c.l.bf16 %v369
      %v6297 = vunpack.c.h.bf16 %v369
      %v6298 = vunpack.c.l.bf16 %v370
      %v6299 = vunpack.c.h.bf16 %v370
      %v6300 = vunpack.c.l.bf16 %v371
      %v6301 = vunpack.c.h.bf16 %v371
      %v6302 = vunpack.c.l.bf16 %v372
      %v6303 = vunpack.c.h.bf16 %v372
      %v6304 = vunpack.c.l.bf16 %v373
      %v6305 = vunpack.c.h.bf16 %v373
      %v6306 = vunpack.c.l.bf16 %v374
      %v6307 = vunpack.c.h.bf16 %v374
      %v6308 = vunpack.c.l.bf16 %v375
      %v6309 = vunpack.c.h.bf16 %v375
      %v6310 = vunpack.c.l.bf16 %v376
      %v6311 = vunpack.c.h.bf16 %v376
      %v6312 = vunpack.c.l.bf16 %v377
      %v6313 = vunpack.c.h.bf16 %v377
      %v6314 = vunpack.c.l.bf16 %v378
      %v6315 = vunpack.c.h.bf16 %v378
      %v6316 = vunpack.c.l.bf16 %v379
      %v6317 = vunpack.c.h.bf16 %v379
      %v6318 = vunpack.c.l.bf16 %v380
      %v6319 = vunpack.c.h.bf16 %v380
      %v6320 = vunpack.c.l.bf16 %v381
      %v6321 = vunpack.c.h.bf16 %v381
      %v6322 = vunpack.c.l.bf16 %v382
      %v6323 = vunpack.c.h.bf16 %v382
      %v6324 = vunpack.c.l.bf16 %v383
      %v6325 = vunpack.c.h.bf16 %v383
      %v6326 = vunpack.c.l.bf16 %v384
      %v6327 = vunpack.c.h.bf16 %v384
      %v6328 = vunpack.c.l.bf16 %v385
      %v6329 = vunpack.c.h.bf16 %v385
      %v6330 = vunpack.c.l.bf16 %v386
      %v6331 = vunpack.c.h.bf16 %v386
      %v6332 = vunpack.c.l.bf16 %v387
      %v6333 = vunpack.c.h.bf16 %v387
      %v6334 = vunpack.c.l.bf16 %v388
      %v6335 = vunpack.c.h.bf16 %v388
      %v6336 = vunpack.c.l.bf16 %v389
      %v6337 = vunpack.c.h.bf16 %v389
      %v6338 = vunpack.c.l.bf16 %v390
      %v6339 = vunpack.c.h.bf16 %v390
      %v6340 = vunpack.c.l.bf16 %v391
      %v6341 = vunpack.c.h.bf16 %v391
      %v6342 = vunpack.c.l.bf16 %v392
      %v6343 = vunpack.c.h.bf16 %v392
      %v6344 = vunpack.c.l.bf16 %v393
      %v6345 = vunpack.c.h.bf16 %v393
      %v6346 = vunpack.c.l.bf16 %v394
      %v6347 = vunpack.c.h.bf16 %v394
      %v6348 = vunpack.c.l.bf16 %v395
      %v6349 = vunpack.c.h.bf16 %v395
      %v6350 = vunpack.c.l.bf16 %v396
      %v6351 = vunpack.c.h.bf16 %v396
      %v6352 = vunpack.c.l.bf16 %v397
      %v6353 = vunpack.c.h.bf16 %v397
      %v6354 = vunpack.c.l.bf16 %v398
      %v6355 = vunpack.c.h.bf16 %v398
      %v6356 = vunpack.c.l.bf16 %v399
      %v6357 = vunpack.c.h.bf16 %v399
      %v6358 = vunpack.c.l.bf16 %v400
      %v6359 = vunpack.c.h.bf16 %v400
      %v6360 = vunpack.c.l.bf16 %v401
      %v6361 = vunpack.c.h.bf16 %v401
      %v6362 = vunpack.c.l.bf16 %v402
      %v6363 = vunpack.c.h.bf16 %v402
      %v6364 = vunpack.c.l.bf16 %v403
      %v6365 = vunpack.c.h.bf16 %v403
      %v6366 = vunpack.c.l.bf16 %v404
      %v6367 = vunpack.c.h.bf16 %v404
      %v6368 = vunpack.c.l.bf16 %v405
      %v6369 = vunpack.c.h.bf16 %v405
      %v6370 = vunpack.c.l.bf16 %v406
      %v6371 = vunpack.c.h.bf16 %v406
      %v6372 = vunpack.c.l.bf16 %v407
      %v6373 = vunpack.c.h.bf16 %v407
      %v6374 = vunpack.c.l.bf16 %v408
      %v6375 = vunpack.c.h.bf16 %v408
      %v6376 = vunpack.c.l.bf16 %v409
      %v6377 = vunpack.c.h.bf16 %v409
      %v6378 = vunpack.c.l.bf16 %v410
      %v6379 = vunpack.c.h.bf16 %v410
      %v6380 = vunpack.c.l.bf16 %v411
      %v6381 = vunpack.c.h.bf16 %v411
      %v6382 = vunpack.c.l.bf16 %v412
      %v6383 = vunpack.c.h.bf16 %v412
      %v6384 = vunpack.c.l.bf16 %v413
      %v6385 = vunpack.c.h.bf16 %v413
      %v6386 = vunpack.c.l.bf16 %v414
      %v6387 = vunpack.c.h.bf16 %v414
      %v6388 = vunpack.c.l.bf16 %v415
      %v6389 = vunpack.c.h.bf16 %v415
      %v6390 = vunpack.c.l.bf16 %v416
      %v6391 = vunpack.c.h.bf16 %v416
      %v6392 = vunpack.c.l.bf16 %v417
      %v6393 = vunpack.c.h.bf16 %v417
      %v6394 = vunpack.c.l.bf16 %v418
      %v6395 = vunpack.c.h.bf16 %v418
      %v6396 = vunpack.c.l.bf16 %v419
      %v6397 = vunpack.c.h.bf16 %v419
      %v6398 = vunpack.c.l.bf16 %v420
      %v6399 = vunpack.c.h.bf16 %v420
      %v6400 = vunpack.c.l.bf16 %v421
      %v6401 = vunpack.c.h.bf16 %v421
      %v6402 = vunpack.c.l.bf16 %v422
      %v6403 = vunpack.c.h.bf16 %v422
      %v6404 = vunpack.c.l.bf16 %v423
      %v6405 = vunpack.c.h.bf16 %v423
      %v6406 = vunpack.c.l.bf16 %v424
      %v6407 = vunpack.c.h.bf16 %v424
      %v6408 = vmul.f32 %v6088, %v6085
      %v6409 = vmul.f32 %v6089, %v6087
      %v6410 = vmul.f32 %v6090, %v6085
      %v6411 = vmul.f32 %v6091, %v6087
      %v6412 = vmul.f32 %v6092, %v6085
      %v6413 = vmul.f32 %v6093, %v6087
      %v6414 = vmul.f32 %v6094, %v6085
      %v6415 = vmul.f32 %v6095, %v6087
      %v6416 = vmul.f32 %v6096, %v6085
      %v6417 = vmul.f32 %v6097, %v6087
      %v6418 = vmul.f32 %v6098, %v6085
      %v6419 = vmul.f32 %v6099, %v6087
      %v6420 = vmul.f32 %v6100, %v6085
      %v6421 = vmul.f32 %v6101, %v6087
      %v6422 = vmul.f32 %v6102, %v6085
      %v6423 = vmul.f32 %v6103, %v6087
      %v6424 = vmul.f32 %v6104, %v6085
      %v6425 = vmul.f32 %v6105, %v6087
      %v6426 = vmul.f32 %v6106, %v6085
      %v6427 = vmul.f32 %v6107, %v6087
      %v6428 = vmul.f32 %v6108, %v6085
      %v6429 = vmul.f32 %v6109, %v6087
      %v6430 = vmul.f32 %v6110, %v6085
      %v6431 = vmul.f32 %v6111, %v6087
      %v6432 = vmul.f32 %v6112, %v6085
      %v6433 = vmul.f32 %v6113, %v6087
      %v6434 = vmul.f32 %v6114, %v6085
      %v6435 = vmul.f32 %v6115, %v6087
      %v6436 = vmul.f32 %v6116, %v6085
      %v6437 = vmul.f32 %v6117, %v6087
      %v6438 = vmul.f32 %v6118, %v6085
      %v6439 = vmul.f32 %v6119, %v6087
      %v6440 = vmul.f32 %v6120, %v6085
      %v6441 = vmul.f32 %v6121, %v6087
      %v6442 = vmul.f32 %v6122, %v6085
      %v6443 = vmul.f32 %v6123, %v6087
      %v6444 = vmul.f32 %v6124, %v6085
      %v6445 = vmul.f32 %v6125, %v6087
      %v6446 = vmul.f32 %v6126, %v6085
      %v6447 = vmul.f32 %v6127, %v6087
      %v6448 = vmul.f32 %v6128, %v6085
      %v6449 = vmul.f32 %v6129, %v6087
      %v6450 = vmul.f32 %v6130, %v6085
      %v6451 = vmul.f32 %v6131, %v6087
      %v6452 = vmul.f32 %v6132, %v6085
      %v6453 = vmul.f32 %v6133, %v6087
      %v6454 = vmul.f32 %v6134, %v6085
      %v6455 = vmul.f32 %v6135, %v6087
      %v6456 = vmul.f32 %v6136, %v6085
      %v6457 = vmul.f32 %v6137, %v6087
      %v6458 = vmul.f32 %v6138, %v6085
      %v6459 = vmul.f32 %v6139, %v6087
      %v6460 = vmul.f32 %v6140, %v6085
      %v6461 = vmul.f32 %v6141, %v6087
      %v6462 = vmul.f32 %v6142, %v6085
      %v6463 = vmul.f32 %v6143, %v6087
      %v6464 = vmul.f32 %v6144, %v6085
      %v6465 = vmul.f32 %v6145, %v6087
      %v6466 = vmul.f32 %v6146, %v6085
      %v6467 = vmul.f32 %v6147, %v6087
      %v6468 = vmul.f32 %v6148, %v6085
      %v6469 = vmul.f32 %v6149, %v6087
      %v6470 = vmul.f32 %v6150, %v6085
      %v6471 = vmul.f32 %v6151, %v6087
      %v6472 = vmul.f32 %v6152, %v6085
      %v6473 = vmul.f32 %v6153, %v6087
      %v6474 = vmul.f32 %v6154, %v6085
      %v6475 = vmul.f32 %v6155, %v6087
      %v6476 = vmul.f32 %v6156, %v6085
      %v6477 = vmul.f32 %v6157, %v6087
      %v6478 = vmul.f32 %v6158, %v6085
      %v6479 = vmul.f32 %v6159, %v6087
      %v6480 = vmul.f32 %v6160, %v6085
      %v6481 = vmul.f32 %v6161, %v6087
      %v6482 = vmul.f32 %v6162, %v6085
      %v6483 = vmul.f32 %v6163, %v6087
      %v6484 = vmul.f32 %v6164, %v6085
      %v6485 = vmul.f32 %v6165, %v6087
      %v6486 = vmul.f32 %v6166, %v6085
      %v6487 = vmul.f32 %v6167, %v6087
      %v6488 = vmul.f32 %v6168, %v6085
      %v6489 = vmul.f32 %v6169, %v6087
      %v6490 = vmul.f32 %v6170, %v6085
      %v6491 = vmul.f32 %v6171, %v6087
      %v6492 = vmul.f32 %v6172, %v6085
      %v6493 = vmul.f32 %v6173, %v6087
      %v6494 = vmul.f32 %v6174, %v6085
      %v6495 = vmul.f32 %v6175, %v6087
      %v6496 = vmul.f32 %v6176, %v6085
      %v6497 = vmul.f32 %v6177, %v6087
      %v6498 = vmul.f32 %v6178, %v6085
      %v6499 = vmul.f32 %v6179, %v6087
      %v6500 = vmul.f32 %v6180, %v6085
      %v6501 = vmul.f32 %v6181, %v6087
      %v6502 = vmul.f32 %v6182, %v6085
      %v6503 = vmul.f32 %v6183, %v6087
      %v6504 = vmul.f32 %v6184, %v6085
      %v6505 = vmul.f32 %v6185, %v6087
      %v6506 = vmul.f32 %v6186, %v6085
      %v6507 = vmul.f32 %v6187, %v6087
      %v6508 = vmul.f32 %v6188, %v6085
      %v6509 = vmul.f32 %v6189, %v6087
      %v6510 = vmul.f32 %v6190, %v6085
      %v6511 = vmul.f32 %v6191, %v6087
      %v6512 = vmul.f32 %v6192, %v6085
      %v6513 = vmul.f32 %v6193, %v6087
      %v6514 = vmul.f32 %v6194, %v6085
      %v6515 = vmul.f32 %v6195, %v6087
      %v6516 = vmul.f32 %v6196, %v6085
      %v6517 = vmul.f32 %v6197, %v6087
      %v6518 = vmul.f32 %v6198, %v6085
      %v6519 = vmul.f32 %v6199, %v6087
      %v6520 = vmul.f32 %v6200, %v6085
      %v6521 = vmul.f32 %v6201, %v6087
      %v6522 = vmul.f32 %v6202, %v6085
      %v6523 = vmul.f32 %v6203, %v6087
      %v6524 = vmul.f32 %v6204, %v6085
      %v6525 = vmul.f32 %v6205, %v6087
      %v6526 = vmul.f32 %v6206, %v6085
      %v6527 = vmul.f32 %v6207, %v6087
      %v6528 = vmul.f32 %v6208, %v6085
      %v6529 = vmul.f32 %v6209, %v6087
      %v6530 = vmul.f32 %v6210, %v6085
      %v6531 = vmul.f32 %v6211, %v6087
      %v6532 = vmul.f32 %v6212, %v6085
      %v6533 = vmul.f32 %v6213, %v6087
      %v6534 = vmul.f32 %v6214, %v6085
      %v6535 = vmul.f32 %v6215, %v6087
      %v6536 = vmul.f32 %v6216, %v6085
      %v6537 = vmul.f32 %v6217, %v6087
      %v6538 = vmul.f32 %v6218, %v6085
      %v6539 = vmul.f32 %v6219, %v6087
      %v6540 = vmul.f32 %v6220, %v6085
      %v6541 = vmul.f32 %v6221, %v6087
      %v6542 = vmul.f32 %v6222, %v6085
      %v6543 = vmul.f32 %v6223, %v6087
      %v6544 = vmul.f32 %v6224, %v6085
      %v6545 = vmul.f32 %v6225, %v6087
      %v6546 = vmul.f32 %v6226, %v6085
      %v6547 = vmul.f32 %v6227, %v6087
      %v6548 = vmul.f32 %v6228, %v6085
      %v6549 = vmul.f32 %v6229, %v6087
      %v6550 = vmul.f32 %v6230, %v6085
      %v6551 = vmul.f32 %v6231, %v6087
      %v6552 = vmul.f32 %v6232, %v6085
      %v6553 = vmul.f32 %v6233, %v6087
      %v6554 = vmul.f32 %v6234, %v6085
      %v6555 = vmul.f32 %v6235, %v6087
      %v6556 = vmul.f32 %v6236, %v6085
      %v6557 = vmul.f32 %v6237, %v6087
      %v6558 = vmul.f32 %v6238, %v6085
      %v6559 = vmul.f32 %v6239, %v6087
      %v6560 = vmul.f32 %v6240, %v6085
      %v6561 = vmul.f32 %v6241, %v6087
      %v6562 = vmul.f32 %v6242, %v6085
      %v6563 = vmul.f32 %v6243, %v6087
      %v6564 = vmul.f32 %v6244, %v6085
      %v6565 = vmul.f32 %v6245, %v6087
      %v6566 = vmul.f32 %v6246, %v6085
      %v6567 = vmul.f32 %v6247, %v6087
      %v6568 = vmul.f32 %v6248, %v6085
      %v6569 = vmul.f32 %v6249, %v6087
      %v6570 = vmul.f32 %v6250, %v6085
      %v6571 = vmul.f32 %v6251, %v6087
      %v6572 = vmul.f32 %v6252, %v6085
      %v6573 = vmul.f32 %v6253, %v6087
      %v6574 = vmul.f32 %v6254, %v6085
      %v6575 = vmul.f32 %v6255, %v6087
      %v6576 = vmul.f32 %v6256, %v6085
      %v6577 = vmul.f32 %v6257, %v6087
      %v6578 = vmul.f32 %v6258, %v6085
      %v6579 = vmul.f32 %v6259, %v6087
      %v6580 = vmul.f32 %v6260, %v6085
      %v6581 = vmul.f32 %v6261, %v6087
      %v6582 = vmul.f32 %v6262, %v6085
      %v6583 = vmul.f32 %v6263, %v6087
      %v6584 = vmul.f32 %v6264, %v6085
      %v6585 = vmul.f32 %v6265, %v6087
      %v6586 = vmul.f32 %v6266, %v6085
      %v6587 = vmul.f32 %v6267, %v6087
      %v6588 = vmul.f32 %v6268, %v6085
      %v6589 = vmul.f32 %v6269, %v6087
      %v6590 = vmul.f32 %v6270, %v6085
      %v6591 = vmul.f32 %v6271, %v6087
      %v6592 = vmul.f32 %v6272, %v6085
      %v6593 = vmul.f32 %v6273, %v6087
      %v6594 = vmul.f32 %v6274, %v6085
      %v6595 = vmul.f32 %v6275, %v6087
      %v6596 = vmul.f32 %v6276, %v6085
      %v6597 = vmul.f32 %v6277, %v6087
      %v6598 = vmul.f32 %v6278, %v6085
      %v6599 = vmul.f32 %v6279, %v6087
      %v6600 = vmul.f32 %v6280, %v6085
      %v6601 = vmul.f32 %v6281, %v6087
      %v6602 = vmul.f32 %v6282, %v6085
      %v6603 = vmul.f32 %v6283, %v6087
      %v6604 = vmul.f32 %v6284, %v6085
      %v6605 = vmul.f32 %v6285, %v6087
      %v6606 = vmul.f32 %v6286, %v6085
      %v6607 = vmul.f32 %v6287, %v6087
      %v6608 = vmul.f32 %v6288, %v6085
      %v6609 = vmul.f32 %v6289, %v6087
      %v6610 = vmul.f32 %v6290, %v6085
      %v6611 = vmul.f32 %v6291, %v6087
      %v6612 = vmul.f32 %v6292, %v6085
      %v6613 = vmul.f32 %v6293, %v6087
      %v6614 = vmul.f32 %v6294, %v6085
      %v6615 = vmul.f32 %v6295, %v6087
      %v6616 = vmul.f32 %v6296, %v6085
      %v6617 = vmul.f32 %v6297, %v6087
      %v6618 = vmul.f32 %v6298, %v6085
      %v6619 = vmul.f32 %v6299, %v6087
      %v6620 = vmul.f32 %v6300, %v6085
      %v6621 = vmul.f32 %v6301, %v6087
      %v6622 = vmul.f32 %v6302, %v6085
      %v6623 = vmul.f32 %v6303, %v6087
      %v6624 = vmul.f32 %v6304, %v6085
      %v6625 = vmul.f32 %v6305, %v6087
      %v6626 = vmul.f32 %v6306, %v6085
      %v6627 = vmul.f32 %v6307, %v6087
      %v6628 = vmul.f32 %v6308, %v6085
      %v6629 = vmul.f32 %v6309, %v6087
      %v6630 = vmul.f32 %v6310, %v6085
      %v6631 = vmul.f32 %v6311, %v6087
      %v6632 = vmul.f32 %v6312, %v6085
      %v6633 = vmul.f32 %v6313, %v6087
      %v6634 = vmul.f32 %v6314, %v6085
      %v6635 = vmul.f32 %v6315, %v6087
      %v6636 = vmul.f32 %v6316, %v6085
      %v6637 = vmul.f32 %v6317, %v6087
      %v6638 = vmul.f32 %v6318, %v6085
      %v6639 = vmul.f32 %v6319, %v6087
      %v6640 = vmul.f32 %v6320, %v6085
      %v6641 = vmul.f32 %v6321, %v6087
      %v6642 = vmul.f32 %v6322, %v6085
      %v6643 = vmul.f32 %v6323, %v6087
      %v6644 = vmul.f32 %v6324, %v6085
      %v6645 = vmul.f32 %v6325, %v6087
      %v6646 = vmul.f32 %v6326, %v6085
      %v6647 = vmul.f32 %v6327, %v6087
      %v6648 = vmul.f32 %v6328, %v6085
      %v6649 = vmul.f32 %v6329, %v6087
      %v6650 = vmul.f32 %v6330, %v6085
      %v6651 = vmul.f32 %v6331, %v6087
      %v6652 = vmul.f32 %v6332, %v6085
      %v6653 = vmul.f32 %v6333, %v6087
      %v6654 = vmul.f32 %v6334, %v6085
      %v6655 = vmul.f32 %v6335, %v6087
      %v6656 = vmul.f32 %v6336, %v6085
      %v6657 = vmul.f32 %v6337, %v6087
      %v6658 = vmul.f32 %v6338, %v6085
      %v6659 = vmul.f32 %v6339, %v6087
      %v6660 = vmul.f32 %v6340, %v6085
      %v6661 = vmul.f32 %v6341, %v6087
      %v6662 = vmul.f32 %v6342, %v6085
      %v6663 = vmul.f32 %v6343, %v6087
      %v6664 = vmul.f32 %v6344, %v6085
      %v6665 = vmul.f32 %v6345, %v6087
      %v6666 = vmul.f32 %v6346, %v6085
      %v6667 = vmul.f32 %v6347, %v6087
      %v6668 = vmul.f32 %v6348, %v6085
      %v6669 = vmul.f32 %v6349, %v6087
      %v6670 = vmul.f32 %v6350, %v6085
      %v6671 = vmul.f32 %v6351, %v6087
      %v6672 = vmul.f32 %v6352, %v6085
      %v6673 = vmul.f32 %v6353, %v6087
      %v6674 = vmul.f32 %v6354, %v6085
      %v6675 = vmul.f32 %v6355, %v6087
      %v6676 = vmul.f32 %v6356, %v6085
      %v6677 = vmul.f32 %v6357, %v6087
      %v6678 = vmul.f32 %v6358, %v6085
      %v6679 = vmul.f32 %v6359, %v6087
      %v6680 = vmul.f32 %v6360, %v6085
      %v6681 = vmul.f32 %v6361, %v6087
      %v6682 = vmul.f32 %v6362, %v6085
      %v6683 = vmul.f32 %v6363, %v6087
      %v6684 = vmul.f32 %v6364, %v6085
      %v6685 = vmul.f32 %v6365, %v6087
      %v6686 = vmul.f32 %v6366, %v6085
      %v6687 = vmul.f32 %v6367, %v6087
      %v6688 = vmul.f32 %v6368, %v6085
      %v6689 = vmul.f32 %v6369, %v6087
      %v6690 = vmul.f32 %v6370, %v6085
      %v6691 = vmul.f32 %v6371, %v6087
      %v6692 = vmul.f32 %v6372, %v6085
      %v6693 = vmul.f32 %v6373, %v6087
      %v6694 = vmul.f32 %v6374, %v6085
      %v6695 = vmul.f32 %v6375, %v6087
      %v6696 = vmul.f32 %v6376, %v6085
      %v6697 = vmul.f32 %v6377, %v6087
      %v6698 = vmul.f32 %v6378, %v6085
      %v6699 = vmul.f32 %v6379, %v6087
      %v6700 = vmul.f32 %v6380, %v6085
      %v6701 = vmul.f32 %v6381, %v6087
      %v6702 = vmul.f32 %v6382, %v6085
      %v6703 = vmul.f32 %v6383, %v6087
      %v6704 = vmul.f32 %v6384, %v6085
      %v6705 = vmul.f32 %v6385, %v6087
      %v6706 = vmul.f32 %v6386, %v6085
      %v6707 = vmul.f32 %v6387, %v6087
      %v6708 = vmul.f32 %v6388, %v6085
      %v6709 = vmul.f32 %v6389, %v6087
      %v6710 = vmul.f32 %v6390, %v6085
      %v6711 = vmul.f32 %v6391, %v6087
      %v6712 = vmul.f32 %v6392, %v6085
      %v6713 = vmul.f32 %v6393, %v6087
      %v6714 = vmul.f32 %v6394, %v6085
      %v6715 = vmul.f32 %v6395, %v6087
      %v6716 = vmul.f32 %v6396, %v6085
      %v6717 = vmul.f32 %v6397, %v6087
      %v6718 = vmul.f32 %v6398, %v6085
      %v6719 = vmul.f32 %v6399, %v6087
      %v6720 = vmul.f32 %v6400, %v6085
      %v6721 = vmul.f32 %v6401, %v6087
      %v6722 = vmul.f32 %v6402, %v6085
      %v6723 = vmul.f32 %v6403, %v6087
      %v6724 = vmul.f32 %v6404, %v6085
      %v6725 = vmul.f32 %v6405, %v6087
      %v6726 = vmul.f32 %v6406, %v6085
      %v6727 = vmul.f32 %v6407, %v6087
      %v6728 = vpack.c.bf16 %v6410, %v6408
      %v6729 = vpack.c.bf16 %v6411, %v6409
      %v6730 = vpack.c.bf16 %v6414, %v6412
      %v6731 = vpack.c.bf16 %v6415, %v6413
      %v6732 = vpack.c.bf16 %v6418, %v6416
      %v6733 = vpack.c.bf16 %v6419, %v6417
      %v6734 = vpack.c.bf16 %v6422, %v6420
      %v6735 = vpack.c.bf16 %v6423, %v6421
      %v6736 = vpack.c.bf16 %v6426, %v6424
      %v6737 = vpack.c.bf16 %v6427, %v6425
      %v6738 = vpack.c.bf16 %v6430, %v6428
      %v6739 = vpack.c.bf16 %v6431, %v6429
      %v6740 = vpack.c.bf16 %v6434, %v6432
      %v6741 = vpack.c.bf16 %v6435, %v6433
      %v6742 = vpack.c.bf16 %v6438, %v6436
      %v6743 = vpack.c.bf16 %v6439, %v6437
      %v6744 = vpack.c.bf16 %v6442, %v6440
      %v6745 = vpack.c.bf16 %v6443, %v6441
      %v6746 = vpack.c.bf16 %v6446, %v6444
      %v6747 = vpack.c.bf16 %v6447, %v6445
      %v6748 = vpack.c.bf16 %v6450, %v6448
      %v6749 = vpack.c.bf16 %v6451, %v6449
      %v6750 = vpack.c.bf16 %v6454, %v6452
      %v6751 = vpack.c.bf16 %v6455, %v6453
      %v6752 = vpack.c.bf16 %v6458, %v6456
      %v6753 = vpack.c.bf16 %v6459, %v6457
      %v6754 = vpack.c.bf16 %v6462, %v6460
      %v6755 = vpack.c.bf16 %v6463, %v6461
      %v6756 = vpack.c.bf16 %v6466, %v6464
      %v6757 = vpack.c.bf16 %v6467, %v6465
      %v6758 = vpack.c.bf16 %v6470, %v6468
      %v6759 = vpack.c.bf16 %v6471, %v6469
      %v6760 = vpack.c.bf16 %v6474, %v6472
      %v6761 = vpack.c.bf16 %v6475, %v6473
      %v6762 = vpack.c.bf16 %v6478, %v6476
      %v6763 = vpack.c.bf16 %v6479, %v6477
      %v6764 = vpack.c.bf16 %v6482, %v6480
      %v6765 = vpack.c.bf16 %v6483, %v6481
      %v6766 = vpack.c.bf16 %v6486, %v6484
      %v6767 = vpack.c.bf16 %v6487, %v6485
      %v6768 = vpack.c.bf16 %v6490, %v6488
      %v6769 = vpack.c.bf16 %v6491, %v6489
      %v6770 = vpack.c.bf16 %v6494, %v6492
      %v6771 = vpack.c.bf16 %v6495, %v6493
      %v6772 = vpack.c.bf16 %v6498, %v6496
      %v6773 = vpack.c.bf16 %v6499, %v6497
      %v6774 = vpack.c.bf16 %v6502, %v6500
      %v6775 = vpack.c.bf16 %v6503, %v6501
      %v6776 = vpack.c.bf16 %v6506, %v6504
      %v6777 = vpack.c.bf16 %v6507, %v6505
      %v6778 = vpack.c.bf16 %v6510, %v6508
      %v6779 = vpack.c.bf16 %v6511, %v6509
      %v6780 = vpack.c.bf16 %v6514, %v6512
      %v6781 = vpack.c.bf16 %v6515, %v6513
      %v6782 = vpack.c.bf16 %v6518, %v6516
      %v6783 = vpack.c.bf16 %v6519, %v6517
      %v6784 = vpack.c.bf16 %v6522, %v6520
      %v6785 = vpack.c.bf16 %v6523, %v6521
      %v6786 = vpack.c.bf16 %v6526, %v6524
      %v6787 = vpack.c.bf16 %v6527, %v6525
      %v6788 = vpack.c.bf16 %v6530, %v6528
      %v6789 = vpack.c.bf16 %v6531, %v6529
      %v6790 = vpack.c.bf16 %v6534, %v6532
      %v6791 = vpack.c.bf16 %v6535, %v6533
      %v6792 = vpack.c.bf16 %v6538, %v6536
      %v6793 = vpack.c.bf16 %v6539, %v6537
      %v6794 = vpack.c.bf16 %v6542, %v6540
      %v6795 = vpack.c.bf16 %v6543, %v6541
      %v6796 = vpack.c.bf16 %v6546, %v6544
      %v6797 = vpack.c.bf16 %v6547, %v6545
      %v6798 = vpack.c.bf16 %v6550, %v6548
      %v6799 = vpack.c.bf16 %v6551, %v6549
      %v6800 = vpack.c.bf16 %v6554, %v6552
      %v6801 = vpack.c.bf16 %v6555, %v6553
      %v6802 = vpack.c.bf16 %v6558, %v6556
      %v6803 = vpack.c.bf16 %v6559, %v6557
      %v6804 = vpack.c.bf16 %v6562, %v6560
      %v6805 = vpack.c.bf16 %v6563, %v6561
      %v6806 = vpack.c.bf16 %v6566, %v6564
      %v6807 = vpack.c.bf16 %v6567, %v6565
      %v6808 = vpack.c.bf16 %v6570, %v6568
      %v6809 = vpack.c.bf16 %v6571, %v6569
      %v6810 = vpack.c.bf16 %v6574, %v6572
      %v6811 = vpack.c.bf16 %v6575, %v6573
      %v6812 = vpack.c.bf16 %v6578, %v6576
      %v6813 = vpack.c.bf16 %v6579, %v6577
      %v6814 = vpack.c.bf16 %v6582, %v6580
      %v6815 = vpack.c.bf16 %v6583, %v6581
      %v6816 = vpack.c.bf16 %v6586, %v6584
      %v6817 = vpack.c.bf16 %v6587, %v6585
      %v6818 = vpack.c.bf16 %v6590, %v6588
      %v6819 = vpack.c.bf16 %v6591, %v6589
      %v6820 = vpack.c.bf16 %v6594, %v6592
      %v6821 = vpack.c.bf16 %v6595, %v6593
      %v6822 = vpack.c.bf16 %v6598, %v6596
      %v6823 = vpack.c.bf16 %v6599, %v6597
      %v6824 = vpack.c.bf16 %v6602, %v6600
      %v6825 = vpack.c.bf16 %v6603, %v6601
      %v6826 = vpack.c.bf16 %v6606, %v6604
      %v6827 = vpack.c.bf16 %v6607, %v6605
      %v6828 = vpack.c.bf16 %v6610, %v6608
      %v6829 = vpack.c.bf16 %v6611, %v6609
      %v6830 = vpack.c.bf16 %v6614, %v6612
      %v6831 = vpack.c.bf16 %v6615, %v6613
      %v6832 = vpack.c.bf16 %v6618, %v6616
      %v6833 = vpack.c.bf16 %v6619, %v6617
      %v6834 = vpack.c.bf16 %v6622, %v6620
      %v6835 = vpack.c.bf16 %v6623, %v6621
      %v6836 = vpack.c.bf16 %v6626, %v6624
      %v6837 = vpack.c.bf16 %v6627, %v6625
      %v6838 = vpack.c.bf16 %v6630, %v6628
      %v6839 = vpack.c.bf16 %v6631, %v6629
      %v6840 = vpack.c.bf16 %v6634, %v6632
      %v6841 = vpack.c.bf16 %v6635, %v6633
      %v6842 = vpack.c.bf16 %v6638, %v6636
      %v6843 = vpack.c.bf16 %v6639, %v6637
      %v6844 = vpack.c.bf16 %v6642, %v6640
      %v6845 = vpack.c.bf16 %v6643, %v6641
      %v6846 = vpack.c.bf16 %v6646, %v6644
      %v6847 = vpack.c.bf16 %v6647, %v6645
      %v6848 = vpack.c.bf16 %v6650, %v6648
      %v6849 = vpack.c.bf16 %v6651, %v6649
      %v6850 = vpack.c.bf16 %v6654, %v6652
      %v6851 = vpack.c.bf16 %v6655, %v6653
      %v6852 = vpack.c.bf16 %v6658, %v6656
      %v6853 = vpack.c.bf16 %v6659, %v6657
      %v6854 = vpack.c.bf16 %v6662, %v6660
      %v6855 = vpack.c.bf16 %v6663, %v6661
      %v6856 = vpack.c.bf16 %v6666, %v6664
      %v6857 = vpack.c.bf16 %v6667, %v6665
      %v6858 = vpack.c.bf16 %v6670, %v6668
      %v6859 = vpack.c.bf16 %v6671, %v6669
      %v6860 = vpack.c.bf16 %v6674, %v6672
      %v6861 = vpack.c.bf16 %v6675, %v6673
      %v6862 = vpack.c.bf16 %v6678, %v6676
      %v6863 = vpack.c.bf16 %v6679, %v6677
      %v6864 = vpack.c.bf16 %v6682, %v6680
      %v6865 = vpack.c.bf16 %v6683, %v6681
      %v6866 = vpack.c.bf16 %v6686, %v6684
      %v6867 = vpack.c.bf16 %v6687, %v6685
      %v6868 = vpack.c.bf16 %v6690, %v6688
      %v6869 = vpack.c.bf16 %v6691, %v6689
      %v6870 = vpack.c.bf16 %v6694, %v6692
      %v6871 = vpack.c.bf16 %v6695, %v6693
      %v6872 = vpack.c.bf16 %v6698, %v6696
      %v6873 = vpack.c.bf16 %v6699, %v6697
      %v6874 = vpack.c.bf16 %v6702, %v6700
      %v6875 = vpack.c.bf16 %v6703, %v6701
      %v6876 = vpack.c.bf16 %v6706, %v6704
      %v6877 = vpack.c.bf16 %v6707, %v6705
      %v6878 = vpack.c.bf16 %v6710, %v6708
      %v6879 = vpack.c.bf16 %v6711, %v6709
      %v6880 = vpack.c.bf16 %v6714, %v6712
      %v6881 = vpack.c.bf16 %v6715, %v6713
      %v6882 = vpack.c.bf16 %v6718, %v6716
      %v6883 = vpack.c.bf16 %v6719, %v6717
      %v6884 = vpack.c.bf16 %v6722, %v6720
      %v6885 = vpack.c.bf16 %v6723, %v6721
      %v6886 = vpack.c.bf16 %v6726, %v6724
      %v6887 = vpack.c.bf16 %v6727, %v6725
      %v7048 = vunpack.c.l.b16 %v6728
      %v7049 = vunpack.c.l.b16 %v6729
      %v7050 = vunpack.c.h.b16 %v6728
      %v7051 = vunpack.c.h.b16 %v6729
      %v7052 = vunpack.c.l.b16 %v6730
      %v7053 = vunpack.c.l.b16 %v6731
      %v7054 = vunpack.c.h.b16 %v6730
      %v7055 = vunpack.c.h.b16 %v6731
      %v7056 = vunpack.c.l.b16 %v6732
      %v7057 = vunpack.c.l.b16 %v6733
      %v7058 = vunpack.c.h.b16 %v6732
      %v7059 = vunpack.c.h.b16 %v6733
      %v7060 = vunpack.c.l.b16 %v6734
      %v7061 = vunpack.c.l.b16 %v6735
      %v7062 = vunpack.c.h.b16 %v6734
      %v7063 = vunpack.c.h.b16 %v6735
      %v7064 = vunpack.c.l.b16 %v6736
      %v7065 = vunpack.c.l.b16 %v6737
      %v7066 = vunpack.c.h.b16 %v6736
      %v7067 = vunpack.c.h.b16 %v6737
      %v7068 = vunpack.c.l.b16 %v6738
      %v7069 = vunpack.c.l.b16 %v6739
      %v7070 = vunpack.c.h.b16 %v6738
      %v7071 = vunpack.c.h.b16 %v6739
      %v7072 = vunpack.c.l.b16 %v6740
      %v7073 = vunpack.c.l.b16 %v6741
      %v7074 = vunpack.c.h.b16 %v6740
      %v7075 = vunpack.c.h.b16 %v6741
      %v7076 = vunpack.c.l.b16 %v6742
      %v7077 = vunpack.c.l.b16 %v6743
      %v7078 = vunpack.c.h.b16 %v6742
      %v7079 = vunpack.c.h.b16 %v6743
      %v7080 = vunpack.c.l.b16 %v6744
      %v7081 = vunpack.c.l.b16 %v6745
      %v7082 = vunpack.c.h.b16 %v6744
      %v7083 = vunpack.c.h.b16 %v6745
      %v7084 = vunpack.c.l.b16 %v6746
      %v7085 = vunpack.c.l.b16 %v6747
      %v7086 = vunpack.c.h.b16 %v6746
      %v7087 = vunpack.c.h.b16 %v6747
      %v7088 = vunpack.c.l.b16 %v6748
      %v7089 = vunpack.c.l.b16 %v6749
      %v7090 = vunpack.c.h.b16 %v6748
      %v7091 = vunpack.c.h.b16 %v6749
      %v7092 = vunpack.c.l.b16 %v6750
      %v7093 = vunpack.c.l.b16 %v6751
      %v7094 = vunpack.c.h.b16 %v6750
      %v7095 = vunpack.c.h.b16 %v6751
      %v7096 = vunpack.c.l.b16 %v6752
      %v7097 = vunpack.c.l.b16 %v6753
      %v7098 = vunpack.c.h.b16 %v6752
      %v7099 = vunpack.c.h.b16 %v6753
      %v7100 = vunpack.c.l.b16 %v6754
      %v7101 = vunpack.c.l.b16 %v6755
      %v7102 = vunpack.c.h.b16 %v6754
      %v7103 = vunpack.c.h.b16 %v6755
      %v7104 = vunpack.c.l.b16 %v6756
      %v7105 = vunpack.c.l.b16 %v6757
      %v7106 = vunpack.c.h.b16 %v6756
      %v7107 = vunpack.c.h.b16 %v6757
      %v7108 = vunpack.c.l.b16 %v6758
      %v7109 = vunpack.c.l.b16 %v6759
      %v7110 = vunpack.c.h.b16 %v6758
      %v7111 = vunpack.c.h.b16 %v6759
      %v7112 = vunpack.c.l.b16 %v6760
      %v7113 = vunpack.c.l.b16 %v6761
      %v7114 = vunpack.c.h.b16 %v6760
      %v7115 = vunpack.c.h.b16 %v6761
      %v7116 = vunpack.c.l.b16 %v6762
      %v7117 = vunpack.c.l.b16 %v6763
      %v7118 = vunpack.c.h.b16 %v6762
      %v7119 = vunpack.c.h.b16 %v6763
      %v7120 = vunpack.c.l.b16 %v6764
      %v7121 = vunpack.c.l.b16 %v6765
      %v7122 = vunpack.c.h.b16 %v6764
      %v7123 = vunpack.c.h.b16 %v6765
      %v7124 = vunpack.c.l.b16 %v6766
      %v7125 = vunpack.c.l.b16 %v6767
      %v7126 = vunpack.c.h.b16 %v6766
      %v7127 = vunpack.c.h.b16 %v6767
      %v7128 = vunpack.c.l.b16 %v6768
      %v7129 = vunpack.c.l.b16 %v6769
      %v7130 = vunpack.c.h.b16 %v6768
      %v7131 = vunpack.c.h.b16 %v6769
      %v7132 = vunpack.c.l.b16 %v6770
      %v7133 = vunpack.c.l.b16 %v6771
      %v7134 = vunpack.c.h.b16 %v6770
      %v7135 = vunpack.c.h.b16 %v6771
      %v7136 = vunpack.c.l.b16 %v6772
      %v7137 = vunpack.c.l.b16 %v6773
      %v7138 = vunpack.c.h.b16 %v6772
      %v7139 = vunpack.c.h.b16 %v6773
      %v7140 = vunpack.c.l.b16 %v6774
      %v7141 = vunpack.c.l.b16 %v6775
      %v7142 = vunpack.c.h.b16 %v6774
      %v7143 = vunpack.c.h.b16 %v6775
      %v7144 = vunpack.c.l.b16 %v6776
      %v7145 = vunpack.c.l.b16 %v6777
      %v7146 = vunpack.c.h.b16 %v6776
      %v7147 = vunpack.c.h.b16 %v6777
      %v7148 = vunpack.c.l.b16 %v6778
      %v7149 = vunpack.c.l.b16 %v6779
      %v7150 = vunpack.c.h.b16 %v6778
      %v7151 = vunpack.c.h.b16 %v6779
      %v7152 = vunpack.c.l.b16 %v6780
      %v7153 = vunpack.c.l.b16 %v6781
      %v7154 = vunpack.c.h.b16 %v6780
      %v7155 = vunpack.c.h.b16 %v6781
      %v7156 = vunpack.c.l.b16 %v6782
      %v7157 = vunpack.c.l.b16 %v6783
      %v7158 = vunpack.c.h.b16 %v6782
      %v7159 = vunpack.c.h.b16 %v6783
      %v7160 = vunpack.c.l.b16 %v6784
      %v7161 = vunpack.c.l.b16 %v6785
      %v7162 = vunpack.c.h.b16 %v6784
      %v7163 = vunpack.c.h.b16 %v6785
      %v7164 = vunpack.c.l.b16 %v6786
      %v7165 = vunpack.c.l.b16 %v6787
      %v7166 = vunpack.c.h.b16 %v6786
      %v7167 = vunpack.c.h.b16 %v6787
      %v7168 = vunpack.c.l.b16 %v6788
      %v7169 = vunpack.c.l.b16 %v6789
      %v7170 = vunpack.c.h.b16 %v6788
      %v7171 = vunpack.c.h.b16 %v6789
      %v7172 = vunpack.c.l.b16 %v6790
      %v7173 = vunpack.c.l.b16 %v6791
      %v7174 = vunpack.c.h.b16 %v6790
      %v7175 = vunpack.c.h.b16 %v6791
      %v7176 = vunpack.c.l.b16 %v6792
      %v7177 = vunpack.c.l.b16 %v6793
      %v7178 = vunpack.c.h.b16 %v6792
      %v7179 = vunpack.c.h.b16 %v6793
      %v7180 = vunpack.c.l.b16 %v6794
      %v7181 = vunpack.c.l.b16 %v6795
      %v7182 = vunpack.c.h.b16 %v6794
      %v7183 = vunpack.c.h.b16 %v6795
      %v7184 = vunpack.c.l.b16 %v6796
      %v7185 = vunpack.c.l.b16 %v6797
      %v7186 = vunpack.c.h.b16 %v6796
      %v7187 = vunpack.c.h.b16 %v6797
      %v7188 = vunpack.c.l.b16 %v6798
      %v7189 = vunpack.c.l.b16 %v6799
      %v7190 = vunpack.c.h.b16 %v6798
      %v7191 = vunpack.c.h.b16 %v6799
      %v7192 = vunpack.c.l.b16 %v6800
      %v7193 = vunpack.c.l.b16 %v6801
      %v7194 = vunpack.c.h.b16 %v6800
      %v7195 = vunpack.c.h.b16 %v6801
      %v7196 = vunpack.c.l.b16 %v6802
      %v7197 = vunpack.c.l.b16 %v6803
      %v7198 = vunpack.c.h.b16 %v6802
      %v7199 = vunpack.c.h.b16 %v6803
      %v7200 = vunpack.c.l.b16 %v6804
      %v7201 = vunpack.c.l.b16 %v6805
      %v7202 = vunpack.c.h.b16 %v6804
      %v7203 = vunpack.c.h.b16 %v6805
      %v7204 = vunpack.c.l.b16 %v6806
      %v7205 = vunpack.c.l.b16 %v6807
      %v7206 = vunpack.c.h.b16 %v6806
      %v7207 = vunpack.c.h.b16 %v6807
      %v7208 = vunpack.c.l.b16 %v6808
      %v7209 = vunpack.c.l.b16 %v6809
      %v7210 = vunpack.c.h.b16 %v6808
      %v7211 = vunpack.c.h.b16 %v6809
      %v7212 = vunpack.c.l.b16 %v6810
      %v7213 = vunpack.c.l.b16 %v6811
      %v7214 = vunpack.c.h.b16 %v6810
      %v7215 = vunpack.c.h.b16 %v6811
      %v7216 = vunpack.c.l.b16 %v6812
      %v7217 = vunpack.c.l.b16 %v6813
      %v7218 = vunpack.c.h.b16 %v6812
      %v7219 = vunpack.c.h.b16 %v6813
      %v7220 = vunpack.c.l.b16 %v6814
      %v7221 = vunpack.c.l.b16 %v6815
      %v7222 = vunpack.c.h.b16 %v6814
      %v7223 = vunpack.c.h.b16 %v6815
      %v7224 = vunpack.c.l.b16 %v6816
      %v7225 = vunpack.c.l.b16 %v6817
      %v7226 = vunpack.c.h.b16 %v6816
      %v7227 = vunpack.c.h.b16 %v6817
      %v7228 = vunpack.c.l.b16 %v6818
      %v7229 = vunpack.c.l.b16 %v6819
      %v7230 = vunpack.c.h.b16 %v6818
      %v7231 = vunpack.c.h.b16 %v6819
      %v7232 = vunpack.c.l.b16 %v6820
      %v7233 = vunpack.c.l.b16 %v6821
      %v7234 = vunpack.c.h.b16 %v6820
      %v7235 = vunpack.c.h.b16 %v6821
      %v7236 = vunpack.c.l.b16 %v6822
      %v7237 = vunpack.c.l.b16 %v6823
      %v7238 = vunpack.c.h.b16 %v6822
      %v7239 = vunpack.c.h.b16 %v6823
      %v7240 = vunpack.c.l.b16 %v6824
      %v7241 = vunpack.c.l.b16 %v6825
      %v7242 = vunpack.c.h.b16 %v6824
      %v7243 = vunpack.c.h.b16 %v6825
      %v7244 = vunpack.c.l.b16 %v6826
      %v7245 = vunpack.c.l.b16 %v6827
      %v7246 = vunpack.c.h.b16 %v6826
      %v7247 = vunpack.c.h.b16 %v6827
      %v7248 = vunpack.c.l.b16 %v6828
      %v7249 = vunpack.c.l.b16 %v6829
      %v7250 = vunpack.c.h.b16 %v6828
      %v7251 = vunpack.c.h.b16 %v6829
      %v7252 = vunpack.c.l.b16 %v6830
      %v7253 = vunpack.c.l.b16 %v6831
      %v7254 = vunpack.c.h.b16 %v6830
      %v7255 = vunpack.c.h.b16 %v6831
      %v7256 = vunpack.c.l.b16 %v6832
      %v7257 = vunpack.c.l.b16 %v6833
      %v7258 = vunpack.c.h.b16 %v6832
      %v7259 = vunpack.c.h.b16 %v6833
      %v7260 = vunpack.c.l.b16 %v6834
      %v7261 = vunpack.c.l.b16 %v6835
      %v7262 = vunpack.c.h.b16 %v6834
      %v7263 = vunpack.c.h.b16 %v6835
      %v7264 = vunpack.c.l.b16 %v6836
      %v7265 = vunpack.c.l.b16 %v6837
      %v7266 = vunpack.c.h.b16 %v6836
      %v7267 = vunpack.c.h.b16 %v6837
      %v7268 = vunpack.c.l.b16 %v6838
      %v7269 = vunpack.c.l.b16 %v6839
      %v7270 = vunpack.c.h.b16 %v6838
      %v7271 = vunpack.c.h.b16 %v6839
      %v7272 = vunpack.c.l.b16 %v6840
      %v7273 = vunpack.c.l.b16 %v6841
      %v7274 = vunpack.c.h.b16 %v6840
      %v7275 = vunpack.c.h.b16 %v6841
      %v7276 = vunpack.c.l.b16 %v6842
      %v7277 = vunpack.c.l.b16 %v6843
      %v7278 = vunpack.c.h.b16 %v6842
      %v7279 = vunpack.c.h.b16 %v6843
      %v7280 = vunpack.c.l.b16 %v6844
      %v7281 = vunpack.c.l.b16 %v6845
      %v7282 = vunpack.c.h.b16 %v6844
      %v7283 = vunpack.c.h.b16 %v6845
      %v7284 = vunpack.c.l.b16 %v6846
      %v7285 = vunpack.c.l.b16 %v6847
      %v7286 = vunpack.c.h.b16 %v6846
      %v7287 = vunpack.c.h.b16 %v6847
      %v7288 = vunpack.c.l.b16 %v6848
      %v7289 = vunpack.c.l.b16 %v6849
      %v7290 = vunpack.c.h.b16 %v6848
      %v7291 = vunpack.c.h.b16 %v6849
      %v7292 = vunpack.c.l.b16 %v6850
      %v7293 = vunpack.c.l.b16 %v6851
      %v7294 = vunpack.c.h.b16 %v6850
      %v7295 = vunpack.c.h.b16 %v6851
      %v7296 = vunpack.c.l.b16 %v6852
      %v7297 = vunpack.c.l.b16 %v6853
      %v7298 = vunpack.c.h.b16 %v6852
      %v7299 = vunpack.c.h.b16 %v6853
      %v7300 = vunpack.c.l.b16 %v6854
      %v7301 = vunpack.c.l.b16 %v6855
      %v7302 = vunpack.c.h.b16 %v6854
      %v7303 = vunpack.c.h.b16 %v6855
      %v7304 = vunpack.c.l.b16 %v6856
      %v7305 = vunpack.c.l.b16 %v6857
      %v7306 = vunpack.c.h.b16 %v6856
      %v7307 = vunpack.c.h.b16 %v6857
      %v7308 = vunpack.c.l.b16 %v6858
      %v7309 = vunpack.c.l.b16 %v6859
      %v7310 = vunpack.c.h.b16 %v6858
      %v7311 = vunpack.c.h.b16 %v6859
      %v7312 = vunpack.c.l.b16 %v6860
      %v7313 = vunpack.c.l.b16 %v6861
      %v7314 = vunpack.c.h.b16 %v6860
      %v7315 = vunpack.c.h.b16 %v6861
      %v7316 = vunpack.c.l.b16 %v6862
      %v7317 = vunpack.c.l.b16 %v6863
      %v7318 = vunpack.c.h.b16 %v6862
      %v7319 = vunpack.c.h.b16 %v6863
      %v7320 = vunpack.c.l.b16 %v6864
      %v7321 = vunpack.c.l.b16 %v6865
      %v7322 = vunpack.c.h.b16 %v6864
      %v7323 = vunpack.c.h.b16 %v6865
      %v7324 = vunpack.c.l.b16 %v6866
      %v7325 = vunpack.c.l.b16 %v6867
      %v7326 = vunpack.c.h.b16 %v6866
      %v7327 = vunpack.c.h.b16 %v6867
      %v7328 = vunpack.c.l.b16 %v6868
      %v7329 = vunpack.c.l.b16 %v6869
      %v7330 = vunpack.c.h.b16 %v6868
      %v7331 = vunpack.c.h.b16 %v6869
      %v7332 = vunpack.c.l.b16 %v6870
      %v7333 = vunpack.c.l.b16 %v6871
      %v7334 = vunpack.c.h.b16 %v6870
      %v7335 = vunpack.c.h.b16 %v6871
      %v7336 = vunpack.c.l.b16 %v6872
      %v7337 = vunpack.c.l.b16 %v6873
      %v7338 = vunpack.c.h.b16 %v6872
      %v7339 = vunpack.c.h.b16 %v6873
      %v7340 = vunpack.c.l.b16 %v6874
      %v7341 = vunpack.c.l.b16 %v6875
      %v7342 = vunpack.c.h.b16 %v6874
      %v7343 = vunpack.c.h.b16 %v6875
      %v7344 = vunpack.c.l.b16 %v6876
      %v7345 = vunpack.c.l.b16 %v6877
      %v7346 = vunpack.c.h.b16 %v6876
      %v7347 = vunpack.c.h.b16 %v6877
      %v7348 = vunpack.c.l.b16 %v6878
      %v7349 = vunpack.c.l.b16 %v6879
      %v7350 = vunpack.c.h.b16 %v6878
      %v7351 = vunpack.c.h.b16 %v6879
      %v7352 = vunpack.c.l.b16 %v6880
      %v7353 = vunpack.c.l.b16 %v6881
      %v7354 = vunpack.c.h.b16 %v6880
      %v7355 = vunpack.c.h.b16 %v6881
      %v7356 = vunpack.c.l.b16 %v6882
      %v7357 = vunpack.c.l.b16 %v6883
      %v7358 = vunpack.c.h.b16 %v6882
      %v7359 = vunpack.c.h.b16 %v6883
      %v7360 = vunpack.c.l.b16 %v6884
      %v7361 = vunpack.c.l.b16 %v6885
      %v7362 = vunpack.c.h.b16 %v6884
      %v7363 = vunpack.c.h.b16 %v6885
      %v7364 = vunpack.c.l.b16 %v6886
      %v7365 = vunpack.c.l.b16 %v6887
      %v7366 = vunpack.c.h.b16 %v6886
      %v7367 = vunpack.c.h.b16 %v6887
      %v7368 = vpack.c.b16 %v7049, %v7048
      %v7369 = vpack.c.b16 %v7051, %v7050
      %v7370 = vpack.c.b16 %v7053, %v7052
      %v7371 = vpack.c.b16 %v7055, %v7054
      %v7372 = vpack.c.b16 %v7057, %v7056
      %v7373 = vpack.c.b16 %v7059, %v7058
      %v7374 = vpack.c.b16 %v7061, %v7060
      %v7375 = vpack.c.b16 %v7063, %v7062
      %v7376 = vpack.c.b16 %v7065, %v7064
      %v7377 = vpack.c.b16 %v7067, %v7066
      %v7378 = vpack.c.b16 %v7069, %v7068
      %v7379 = vpack.c.b16 %v7071, %v7070
      %v7380 = vpack.c.b16 %v7073, %v7072
      %v7381 = vpack.c.b16 %v7075, %v7074
      %v7382 = vpack.c.b16 %v7077, %v7076
      %v7383 = vpack.c.b16 %v7079, %v7078
      %v7384 = vpack.c.b16 %v7081, %v7080
      %v7385 = vpack.c.b16 %v7083, %v7082
      %v7386 = vpack.c.b16 %v7085, %v7084
      %v7387 = vpack.c.b16 %v7087, %v7086
      %v7388 = vpack.c.b16 %v7089, %v7088
      %v7389 = vpack.c.b16 %v7091, %v7090
      %v7390 = vpack.c.b16 %v7093, %v7092
      %v7391 = vpack.c.b16 %v7095, %v7094
      %v7392 = vpack.c.b16 %v7097, %v7096
      %v7393 = vpack.c.b16 %v7099, %v7098
      %v7394 = vpack.c.b16 %v7101, %v7100
      %v7395 = vpack.c.b16 %v7103, %v7102
      %v7396 = vpack.c.b16 %v7105, %v7104
      %v7397 = vpack.c.b16 %v7107, %v7106
      %v7398 = vpack.c.b16 %v7109, %v7108
      %v7399 = vpack.c.b16 %v7111, %v7110
      %v7400 = vpack.c.b16 %v7113, %v7112
      %v7401 = vpack.c.b16 %v7115, %v7114
      %v7402 = vpack.c.b16 %v7117, %v7116
      %v7403 = vpack.c.b16 %v7119, %v7118
      %v7404 = vpack.c.b16 %v7121, %v7120
      %v7405 = vpack.c.b16 %v7123, %v7122
      %v7406 = vpack.c.b16 %v7125, %v7124
      %v7407 = vpack.c.b16 %v7127, %v7126
      %v7408 = vpack.c.b16 %v7129, %v7128
      %v7409 = vpack.c.b16 %v7131, %v7130
      %v7410 = vpack.c.b16 %v7133, %v7132
      %v7411 = vpack.c.b16 %v7135, %v7134
      %v7412 = vpack.c.b16 %v7137, %v7136
      %v7413 = vpack.c.b16 %v7139, %v7138
      %v7414 = vpack.c.b16 %v7141, %v7140
      %v7415 = vpack.c.b16 %v7143, %v7142
      %v7416 = vpack.c.b16 %v7145, %v7144
      %v7417 = vpack.c.b16 %v7147, %v7146
      %v7418 = vpack.c.b16 %v7149, %v7148
      %v7419 = vpack.c.b16 %v7151, %v7150
      %v7420 = vpack.c.b16 %v7153, %v7152
      %v7421 = vpack.c.b16 %v7155, %v7154
      %v7422 = vpack.c.b16 %v7157, %v7156
      %v7423 = vpack.c.b16 %v7159, %v7158
      %v7424 = vpack.c.b16 %v7161, %v7160
      %v7425 = vpack.c.b16 %v7163, %v7162
      %v7426 = vpack.c.b16 %v7165, %v7164
      %v7427 = vpack.c.b16 %v7167, %v7166
      %v7428 = vpack.c.b16 %v7169, %v7168
      %v7429 = vpack.c.b16 %v7171, %v7170
      %v7430 = vpack.c.b16 %v7173, %v7172
      %v7431 = vpack.c.b16 %v7175, %v7174
      %v7432 = vpack.c.b16 %v7177, %v7176
      %v7433 = vpack.c.b16 %v7179, %v7178
      %v7434 = vpack.c.b16 %v7181, %v7180
      %v7435 = vpack.c.b16 %v7183, %v7182
      %v7436 = vpack.c.b16 %v7185, %v7184
      %v7437 = vpack.c.b16 %v7187, %v7186
      %v7438 = vpack.c.b16 %v7189, %v7188
      %v7439 = vpack.c.b16 %v7191, %v7190
      %v7440 = vpack.c.b16 %v7193, %v7192
      %v7441 = vpack.c.b16 %v7195, %v7194
      %v7442 = vpack.c.b16 %v7197, %v7196
      %v7443 = vpack.c.b16 %v7199, %v7198
      %v7444 = vpack.c.b16 %v7201, %v7200
      %v7445 = vpack.c.b16 %v7203, %v7202
      %v7446 = vpack.c.b16 %v7205, %v7204
      %v7447 = vpack.c.b16 %v7207, %v7206
      %v7448 = vpack.c.b16 %v7209, %v7208
      %v7449 = vpack.c.b16 %v7211, %v7210
      %v7450 = vpack.c.b16 %v7213, %v7212
      %v7451 = vpack.c.b16 %v7215, %v7214
      %v7452 = vpack.c.b16 %v7217, %v7216
      %v7453 = vpack.c.b16 %v7219, %v7218
      %v7454 = vpack.c.b16 %v7221, %v7220
      %v7455 = vpack.c.b16 %v7223, %v7222
      %v7456 = vpack.c.b16 %v7225, %v7224
      %v7457 = vpack.c.b16 %v7227, %v7226
      %v7458 = vpack.c.b16 %v7229, %v7228
      %v7459 = vpack.c.b16 %v7231, %v7230
      %v7460 = vpack.c.b16 %v7233, %v7232
      %v7461 = vpack.c.b16 %v7235, %v7234
      %v7462 = vpack.c.b16 %v7237, %v7236
      %v7463 = vpack.c.b16 %v7239, %v7238
      %v7464 = vpack.c.b16 %v7241, %v7240
      %v7465 = vpack.c.b16 %v7243, %v7242
      %v7466 = vpack.c.b16 %v7245, %v7244
      %v7467 = vpack.c.b16 %v7247, %v7246
      %v7468 = vpack.c.b16 %v7249, %v7248
      %v7469 = vpack.c.b16 %v7251, %v7250
      %v7470 = vpack.c.b16 %v7253, %v7252
      %v7471 = vpack.c.b16 %v7255, %v7254
      %v7472 = vpack.c.b16 %v7257, %v7256
      %v7473 = vpack.c.b16 %v7259, %v7258
      %v7474 = vpack.c.b16 %v7261, %v7260
      %v7475 = vpack.c.b16 %v7263, %v7262
      %v7476 = vpack.c.b16 %v7265, %v7264
      %v7477 = vpack.c.b16 %v7267, %v7266
      %v7478 = vpack.c.b16 %v7269, %v7268
      %v7479 = vpack.c.b16 %v7271, %v7270
      %v7480 = vpack.c.b16 %v7273, %v7272
      %v7481 = vpack.c.b16 %v7275, %v7274
      %v7482 = vpack.c.b16 %v7277, %v7276
      %v7483 = vpack.c.b16 %v7279, %v7278
      %v7484 = vpack.c.b16 %v7281, %v7280
      %v7485 = vpack.c.b16 %v7283, %v7282
      %v7486 = vpack.c.b16 %v7285, %v7284
      %v7487 = vpack.c.b16 %v7287, %v7286
      %v7488 = vpack.c.b16 %v7289, %v7288
      %v7489 = vpack.c.b16 %v7291, %v7290
      %v7490 = vpack.c.b16 %v7293, %v7292
      %v7491 = vpack.c.b16 %v7295, %v7294
      %v7492 = vpack.c.b16 %v7297, %v7296
      %v7493 = vpack.c.b16 %v7299, %v7298
      %v7494 = vpack.c.b16 %v7301, %v7300
      %v7495 = vpack.c.b16 %v7303, %v7302
      %v7496 = vpack.c.b16 %v7305, %v7304
      %v7497 = vpack.c.b16 %v7307, %v7306
      %v7498 = vpack.c.b16 %v7309, %v7308
      %v7499 = vpack.c.b16 %v7311, %v7310
      %v7500 = vpack.c.b16 %v7313, %v7312
      %v7501 = vpack.c.b16 %v7315, %v7314
      %v7502 = vpack.c.b16 %v7317, %v7316
      %v7503 = vpack.c.b16 %v7319, %v7318
      %v7504 = vpack.c.b16 %v7321, %v7320
      %v7505 = vpack.c.b16 %v7323, %v7322
      %v7506 = vpack.c.b16 %v7325, %v7324
      %v7507 = vpack.c.b16 %v7327, %v7326
      %v7508 = vpack.c.b16 %v7329, %v7328
      %v7509 = vpack.c.b16 %v7331, %v7330
      %v7510 = vpack.c.b16 %v7333, %v7332
      %v7511 = vpack.c.b16 %v7335, %v7334
      %v7512 = vpack.c.b16 %v7337, %v7336
      %v7513 = vpack.c.b16 %v7339, %v7338
      %v7514 = vpack.c.b16 %v7341, %v7340
      %v7515 = vpack.c.b16 %v7343, %v7342
      %v7516 = vpack.c.b16 %v7345, %v7344
      %v7517 = vpack.c.b16 %v7347, %v7346
      %v7518 = vpack.c.b16 %v7349, %v7348
      %v7519 = vpack.c.b16 %v7351, %v7350
      %v7520 = vpack.c.b16 %v7353, %v7352
      %v7521 = vpack.c.b16 %v7355, %v7354
      %v7522 = vpack.c.b16 %v7357, %v7356
      %v7523 = vpack.c.b16 %v7359, %v7358
      %v7524 = vpack.c.b16 %v7361, %v7360
      %v7525 = vpack.c.b16 %v7363, %v7362
      %v7526 = vpack.c.b16 %v7365, %v7364
      %v7527 = vpack.c.b16 %v7367, %v7366
      %7688 = vst [vmem:[%s263] sm:$0xff] %v7368
      %7689 = vst [vmem:[%s263 + $0x8] sm:$0xff] %v7369
      %7690 = vst [vmem:[%s263 + $0x10] sm:$0xff] %v7370
      %7691 = vst [vmem:[%s263 + $0x18] sm:$0xff] %v7371
      %7692 = vst [vmem:[%s263 + $0x20] sm:$0xff] %v7372
      %7693 = vst [vmem:[%s263 + $0x28] sm:$0xff] %v7373
      %7694 = vst [vmem:[%s263 + $0x30] sm:$0xff] %v7374
      %7695 = vst [vmem:[%s263 + $0x38] sm:$0xff] %v7375
      %7696 = vst [vmem:[%s263 + $0x40] sm:$0xff] %v7376
      %7697 = vst [vmem:[%s263 + $0x48] sm:$0xff] %v7377
      %7698 = vst [vmem:[%s263 + $0x50] sm:$0xff] %v7378
      %7699 = vst [vmem:[%s263 + $0x58] sm:$0xff] %v7379
      %7700 = vst [vmem:[%s263 + $0x60] sm:$0xff] %v7380
      %7701 = vst [vmem:[%s263 + $0x68] sm:$0xff] %v7381
      %7702 = vst [vmem:[%s263 + $0x70] sm:$0xff] %v7382
      %7703 = vst [vmem:[%s263 + $0x78] sm:$0xff] %v7383
      %7704 = vst [vmem:[%s263 + $0x80] sm:$0xff] %v7384
      %7705 = vst [vmem:[%s263 + $0x88] sm:$0xff] %v7385
      %7706 = vst [vmem:[%s263 + $0x90] sm:$0xff] %v7386
      %7707 = vst [vmem:[%s263 + $0x98] sm:$0xff] %v7387
      %7708 = vst [vmem:[%s263 + $0xa0] sm:$0xff] %v7388
      %7709 = vst [vmem:[%s263 + $0xa8] sm:$0xff] %v7389
      %7710 = vst [vmem:[%s263 + $0xb0] sm:$0xff] %v7390
      %7711 = vst [vmem:[%s263 + $0xb8] sm:$0xff] %v7391
      %7712 = vst [vmem:[%s263 + $0xc0] sm:$0xff] %v7392
      %7713 = vst [vmem:[%s263 + $0xc8] sm:$0xff] %v7393
      %7714 = vst [vmem:[%s263 + $0xd0] sm:$0xff] %v7394
      %7715 = vst [vmem:[%s263 + $0xd8] sm:$0xff] %v7395
      %7716 = vst [vmem:[%s263 + $0xe0] sm:$0xff] %v7396
      %7717 = vst [vmem:[%s263 + $0xe8] sm:$0xff] %v7397
      %7718 = vst [vmem:[%s263 + $0xf0] sm:$0xff] %v7398
      %7719 = vst [vmem:[%s263 + $0xf8] sm:$0xff] %v7399
      %7720 = vst [vmem:[%s263 + $0x100] sm:$0xff] %v7400
      %7721 = vst [vmem:[%s263 + $0x108] sm:$0xff] %v7401
      %7722 = vst [vmem:[%s263 + $0x110] sm:$0xff] %v7402
      %7723 = vst [vmem:[%s263 + $0x118] sm:$0xff] %v7403
      %7724 = vst [vmem:[%s263 + $0x120] sm:$0xff] %v7404
      %7725 = vst [vmem:[%s263 + $0x128] sm:$0xff] %v7405
      %7726 = vst [vmem:[%s263 + $0x130] sm:$0xff] %v7406
      %7727 = vst [vmem:[%s263 + $0x138] sm:$0xff] %v7407
      %7728 = vst [vmem:[%s263 + $0x140] sm:$0xff] %v7408
      %7729 = vst [vmem:[%s263 + $0x148] sm:$0xff] %v7409
      %7730 = vst [vmem:[%s263 + $0x150] sm:$0xff] %v7410
      %7731 = vst [vmem:[%s263 + $0x158] sm:$0xff] %v7411
      %7732 = vst [vmem:[%s263 + $0x160] sm:$0xff] %v7412
      %7733 = vst [vmem:[%s263 + $0x168] sm:$0xff] %v7413
      %7734 = vst [vmem:[%s263 + $0x170] sm:$0xff] %v7414
      %7735 = vst [vmem:[%s263 + $0x178] sm:$0xff] %v7415
      %7736 = vst [vmem:[%s263 + $0x180] sm:$0xff] %v7416
      %7737 = vst [vmem:[%s263 + $0x188] sm:$0xff] %v7417
      %7738 = vst [vmem:[%s263 + $0x190] sm:$0xff] %v7418
      %7739 = vst [vmem:[%s263 + $0x198] sm:$0xff] %v7419
      %7740 = vst [vmem:[%s263 + $0x1a0] sm:$0xff] %v7420
      %7741 = vst [vmem:[%s263 + $0x1a8] sm:$0xff] %v7421
      %7742 = vst [vmem:[%s263 + $0x1b0] sm:$0xff] %v7422
      %7743 = vst [vmem:[%s263 + $0x1b8] sm:$0xff] %v7423
      %7744 = vst [vmem:[%s263 + $0x1c0] sm:$0xff] %v7424
      %7745 = vst [vmem:[%s263 + $0x1c8] sm:$0xff] %v7425
      %7746 = vst [vmem:[%s263 + $0x1d0] sm:$0xff] %v7426
      %7747 = vst [vmem:[%s263 + $0x1d8] sm:$0xff] %v7427
      %7748 = vst [vmem:[%s263 + $0x1e0] sm:$0xff] %v7428
      %7749 = vst [vmem:[%s263 + $0x1e8] sm:$0xff] %v7429
      %7750 = vst [vmem:[%s263 + $0x1f0] sm:$0xff] %v7430
      %7751 = vst [vmem:[%s263 + $0x1f8] sm:$0xff] %v7431
      %7752 = vst [vmem:[%s263 + $0x200] sm:$0xff] %v7432
      %7753 = vst [vmem:[%s263 + $0x208] sm:$0xff] %v7433
      %7754 = vst [vmem:[%s263 + $0x210] sm:$0xff] %v7434
      %7755 = vst [vmem:[%s263 + $0x218] sm:$0xff] %v7435
      %7756 = vst [vmem:[%s263 + $0x220] sm:$0xff] %v7436
      %7757 = vst [vmem:[%s263 + $0x228] sm:$0xff] %v7437
      %7758 = vst [vmem:[%s263 + $0x230] sm:$0xff] %v7438
      %7759 = vst [vmem:[%s263 + $0x238] sm:$0xff] %v7439
      %7760 = vst [vmem:[%s263 + $0x240] sm:$0xff] %v7440
      %7761 = vst [vmem:[%s263 + $0x248] sm:$0xff] %v7441
      %7762 = vst [vmem:[%s263 + $0x250] sm:$0xff] %v7442
      %7763 = vst [vmem:[%s263 + $0x258] sm:$0xff] %v7443
      %7764 = vst [vmem:[%s263 + $0x260] sm:$0xff] %v7444
      %7765 = vst [vmem:[%s263 + $0x268] sm:$0xff] %v7445
      %7766 = vst [vmem:[%s263 + $0x270] sm:$0xff] %v7446
      %7767 = vst [vmem:[%s263 + $0x278] sm:$0xff] %v7447
      %7768 = vst [vmem:[%s263 + $0x280] sm:$0xff] %v7448
      %7769 = vst [vmem:[%s263 + $0x288] sm:$0xff] %v7449
      %7770 = vst [vmem:[%s263 + $0x290] sm:$0xff] %v7450
      %7771 = vst [vmem:[%s263 + $0x298] sm:$0xff] %v7451
      %7772 = vst [vmem:[%s263 + $0x2a0] sm:$0xff] %v7452
      %7773 = vst [vmem:[%s263 + $0x2a8] sm:$0xff] %v7453
      %7774 = vst [vmem:[%s263 + $0x2b0] sm:$0xff] %v7454
      %7775 = vst [vmem:[%s263 + $0x2b8] sm:$0xff] %v7455
      %7776 = vst [vmem:[%s263 + $0x2c0] sm:$0xff] %v7456
      %7777 = vst [vmem:[%s263 + $0x2c8] sm:$0xff] %v7457
      %7778 = vst [vmem:[%s263 + $0x2d0] sm:$0xff] %v7458
      %7779 = vst [vmem:[%s263 + $0x2d8] sm:$0xff] %v7459
      %7780 = vst [vmem:[%s263 + $0x2e0] sm:$0xff] %v7460
      %7781 = vst [vmem:[%s263 + $0x2e8] sm:$0xff] %v7461
      %7782 = vst [vmem:[%s263 + $0x2f0] sm:$0xff] %v7462
      %7783 = vst [vmem:[%s263 + $0x2f8] sm:$0xff] %v7463
      %7784 = vst [vmem:[%s263 + $0x300] sm:$0xff] %v7464
      %7785 = vst [vmem:[%s263 + $0x308] sm:$0xff] %v7465
      %7786 = vst [vmem:[%s263 + $0x310] sm:$0xff] %v7466
      %7787 = vst [vmem:[%s263 + $0x318] sm:$0xff] %v7467
      %7788 = vst [vmem:[%s263 + $0x320] sm:$0xff] %v7468
      %7789 = vst [vmem:[%s263 + $0x328] sm:$0xff] %v7469
      %7790 = vst [vmem:[%s263 + $0x330] sm:$0xff] %v7470
      %7791 = vst [vmem:[%s263 + $0x338] sm:$0xff] %v7471
      %7792 = vst [vmem:[%s263 + $0x340] sm:$0xff] %v7472
      %7793 = vst [vmem:[%s263 + $0x348] sm:$0xff] %v7473
      %7794 = vst [vmem:[%s263 + $0x350] sm:$0xff] %v7474
      %7795 = vst [vmem:[%s263 + $0x358] sm:$0xff] %v7475
      %7796 = vst [vmem:[%s263 + $0x360] sm:$0xff] %v7476
      %7797 = vst [vmem:[%s263 + $0x368] sm:$0xff] %v7477
      %7798 = vst [vmem:[%s263 + $0x370] sm:$0xff] %v7478
      %7799 = vst [vmem:[%s263 + $0x378] sm:$0xff] %v7479
      %7800 = vst [vmem:[%s263 + $0x380] sm:$0xff] %v7480
      %7801 = vst [vmem:[%s263 + $0x388] sm:$0xff] %v7481
      %7802 = vst [vmem:[%s263 + $0x390] sm:$0xff] %v7482
      %7803 = vst [vmem:[%s263 + $0x398] sm:$0xff] %v7483
      %7804 = vst [vmem:[%s263 + $0x3a0] sm:$0xff] %v7484
      %7805 = vst [vmem:[%s263 + $0x3a8] sm:$0xff] %v7485
      %7806 = vst [vmem:[%s263 + $0x3b0] sm:$0xff] %v7486
      %7807 = vst [vmem:[%s263 + $0x3b8] sm:$0xff] %v7487
      %7808 = vst [vmem:[%s263 + $0x3c0] sm:$0xff] %v7488
      %7809 = vst [vmem:[%s263 + $0x3c8] sm:$0xff] %v7489
      %7810 = vst [vmem:[%s263 + $0x3d0] sm:$0xff] %v7490
      %7811 = vst [vmem:[%s263 + $0x3d8] sm:$0xff] %v7491
      %7812 = vst [vmem:[%s263 + $0x3e0] sm:$0xff] %v7492
      %7813 = vst [vmem:[%s263 + $0x3e8] sm:$0xff] %v7493
      %7814 = vst [vmem:[%s263 + $0x3f0] sm:$0xff] %v7494
      %7815 = vst [vmem:[%s263 + $0x3f8] sm:$0xff] %v7495
      %7816 = vst [vmem:[%s263 + $0x400] sm:$0xff] %v7496
      %7817 = vst [vmem:[%s263 + $0x408] sm:$0xff] %v7497
      %7818 = vst [vmem:[%s263 + $0x410] sm:$0xff] %v7498
      %7819 = vst [vmem:[%s263 + $0x418] sm:$0xff] %v7499
      %7820 = vst [vmem:[%s263 + $0x420] sm:$0xff] %v7500
      %7821 = vst [vmem:[%s263 + $0x428] sm:$0xff] %v7501
      %7822 = vst [vmem:[%s263 + $0x430] sm:$0xff] %v7502
      %7823 = vst [vmem:[%s263 + $0x438] sm:$0xff] %v7503
      %7824 = vst [vmem:[%s263 + $0x440] sm:$0xff] %v7504
      %7825 = vst [vmem:[%s263 + $0x448] sm:$0xff] %v7505
      %7826 = vst [vmem:[%s263 + $0x450] sm:$0xff] %v7506
      %7827 = vst [vmem:[%s263 + $0x458] sm:$0xff] %v7507
      %7828 = vst [vmem:[%s263 + $0x460] sm:$0xff] %v7508
      %7829 = vst [vmem:[%s263 + $0x468] sm:$0xff] %v7509
      %7830 = vst [vmem:[%s263 + $0x470] sm:$0xff] %v7510
      %7831 = vst [vmem:[%s263 + $0x478] sm:$0xff] %v7511
      %7832 = vst [vmem:[%s263 + $0x480] sm:$0xff] %v7512
      %7833 = vst [vmem:[%s263 + $0x488] sm:$0xff] %v7513
      %7834 = vst [vmem:[%s263 + $0x490] sm:$0xff] %v7514
      %7835 = vst [vmem:[%s263 + $0x498] sm:$0xff] %v7515
      %7836 = vst [vmem:[%s263 + $0x4a0] sm:$0xff] %v7516
      %7837 = vst [vmem:[%s263 + $0x4a8] sm:$0xff] %v7517
      %7838 = vst [vmem:[%s263 + $0x4b0] sm:$0xff] %v7518
      %7839 = vst [vmem:[%s263 + $0x4b8] sm:$0xff] %v7519
      %7840 = vst [vmem:[%s263 + $0x4c0] sm:$0xff] %v7520
      %7841 = vst [vmem:[%s263 + $0x4c8] sm:$0xff] %v7521
      %7842 = vst [vmem:[%s263 + $0x4d0] sm:$0xff] %v7522
      %7843 = vst [vmem:[%s263 + $0x4d8] sm:$0xff] %v7523
      %7844 = vst [vmem:[%s263 + $0x4e0] sm:$0xff] %v7524
      %7845 = vst [vmem:[%s263 + $0x4e8] sm:$0xff] %v7525
      %7846 = vst [vmem:[%s263 + $0x4f0] sm:$0xff] %v7526
      %7847 = vst [vmem:[%s263 + $0x4f8] sm:$0xff] %v7527
      %s7848 = smul.u32 2, %s22
      %p7849 = scmp.lt.s32.totalorder %s21, 1
      %s7850 = scalar_select %p7849, %s21, 1
      %p7851 = scmp.lt.s32.totalorder %s7848, 1
      %s7852 = scalar_select %p7851, %s7848, 1
      %s7853 = smul.addr %s7850, 320
      %s7854 = sadd.s32 %s7852, %s7853
      %s7855 = smul.addr %s7854, 4
      %s7856 = scalar_lea.vmem %s5, %s7855
      // Predicated region
      $region41: #{spatial_feature_extractor_head.1} parent=39 // pred_check
        %p7857 = pneg %p161
      $region42: #{spatial_feature_extractor_head.1} parent=39 // pred_check_branch
        %7859 = sbr.rel (%p7857) target = $region44
      $region43: #{spatial_feature_extractor_head.1} parent=39 // pred_region
        %s7860 = smul.u32 2, %s22
      $region44: #{spatial_feature_extractor_head.1} parent=39 // pred_fallthru
        _
    $region40: #{spatial_feature_extractor_head.1} parent=5 // pred_fallthru
      _
    %p7861 = scmp.le.s32.totalorder 2, %s12
    // Predicated region
    $region45: #{spatial_feature_extractor_head.1} parent=5 // pred_check
      %p7862 = pneg %p7861
    $region46: #{spatial_feature_extractor_head.1} parent=5 // pred_check_branch
      %7864 = sbr.rel (%p7862) target = $region48
    $region47: #{spatial_feature_extractor_head.1} parent=5 // pred_region
      %s7865 = ssub.s32 %s12, 2
      // Predicated region
      $region49: #{spatial_feature_extractor_head.1} parent=47 // pred_check
        %p7866 = pneg %p167
      $region50: #{spatial_feature_extractor_head.1} parent=47 // pred_check_branch
        %7868 = sbr.rel (%p7866) target = $region52
      $region51: #{spatial_feature_extractor_head.1} parent=47 // pred_region
        %s7869 = smul.u32 2, %s24
        %p7870 = scmp.lt.s32.totalorder %s23, 1
        %s7871 = scalar_select %p7870, %s23, 1
        %p7872 = scmp.lt.s32.totalorder %s7869, 1
        %s7873 = scalar_select %p7872, %s7869, 1
        %s7874 = smul.addr %s7871, 320
        %s7875 = sadd.s32 %s7873, %s7874
        %s7876 = smul.addr %s7875, 4
        %s7877 = scalar_lea.vmem %s5, %s7876
      $region52: #{spatial_feature_extractor_head.1} parent=47 // pred_fallthru
        _
    $region48: #{spatial_feature_extractor_head.1} parent=5 // pred_fallthru
      _
  $region6: #{spatial_feature_extractor_head.1} parent=0 // loop_footer
    %s16 = sadd.s32 1, %s12
  $region7: #{spatial_feature_extractor_head.1} parent=0 // loop_footer_branch
    %11 = sbr.rel target = $region3
  $region8: #{spatial_feature_extractor_head.1} parent=0 // loop_exit
    _

</llo_original>
